<compile_context>
chip_gen: v7x
topology: tpu7x:2x2x1
jax: 0.10.0
libtpu: 0.0.40
codegen_flags: <defaults>
</compile_context>

<pallas_src>
import functools
import math

import jax
import jax.numpy as jnp
import numpy as np
from jax import lax
from jax.experimental import pallas as pl
from jax.experimental.pallas import tpu as pltpu

LANES = 128                                           # f32 vreg lane width
_PL_RECIPROCAL = getattr(pl, "reciprocal", None)      # fallback for older jax


# ----------------------------------------------------------------------------
# Fused kernel: Dunkin / Thomson-Haskell Rayleigh determinant
#   - e00[f]      : determinant at the observed (vlist[f], tlist[f]) points
#                   (carried in the reserved lane 0 of the first chunk)
#   - dmin/dmax[f]: running min/max over the candidate velocities Clist
# grid = (F_pad // f_tile, n_c_steps); each step iterates n_sub 128-lane chunks
# (port of surfdisp96 dltar4 / var / dnka / normc)
# ----------------------------------------------------------------------------
def _dunkin_minmax_kernel(inv_c_ref, omega_ref, inv_omega_ref, inv_v_ref,
                          d_ref, b_ref, rho_ref, rho2_ref,
                          inv_a_ref, inv_b_ref, inv_rho_ref, inv_rho2_ref,
                          e00_ref, dmin_ref, dmax_ref,
                          *, nlayers, n_sub, f_tile):
    cj = pl.program_id(1)

    omega = omega_ref[...]          # (Ft, 1)   angular frequency per period
    inv_omega = inv_omega_ref[...]  # (Ft, 1)

    def dunkin(inv_c):
        """Dunkin compound-matrix determinant at wvno = omega * inv_c."""
        wvno = omega * inv_c        # (Ft, 128)
        wvno2 = wvno * wvno

        def layer_cols(m):
            # Narrow (Ft,1) per-layer quantities (layer constants are SMEM
            # scalars, reciprocals precomputed host-side); no explicit
            # broadcast_to -- implicit broadcast at first full-width use.
            xka = omega * inv_a_ref[m]
            xkb = omega * inv_b_ref[m]
            t = b_ref[m] * inv_omega
            gammk = 2.0 * t * t
            return xka, xkb, gammk

        # ---- E vector of the bottom half-space ------------------------------
        M = nlayers - 1
        xka, xkb, gammk = layer_cols(M)
        ra = jnp.sqrt((wvno + xka) * jnp.abs(wvno - xka))
        rb = jnp.sqrt((wvno + xkb) * jnp.abs(wvno - xkb))
        gam = gammk * wvno2
        gamm1 = gam - 1.0
        rarb = ra * rb
        rho_m = rho_ref[M]
        e0 = rho2_ref[M] * (gamm1 * gamm1 - gam * gammk * rarb)
        e1 = -(rho_m * ra)
        e2 = rho_m * (gamm1 - gammk * rarb)
        e3 = rho_m * rb
        e4 = wvno2 - rarb

        # ---- propagate the compound matrix through the layers (llw == -1) ---
        # TODO(synk): water-layer branch of dltar4 (llw == 0) not implemented.
        # NOTE: static unroll (nlayers small & known); switch to lax.fori_loop
        # carrying (e0..e4) if nlayers grows beyond ~12.
        for m in range(nlayers - 2, -1, -1):
            dpth = d_ref[m]
            rho_m = rho_ref[m]
            rho2_m = rho2_ref[m]
            irho = inv_rho_ref[m]
            irho2 = inv_rho2_ref[m]

            xka, xkb, gammk = layer_cols(m)
            gam = gammk * wvno2
            gamm1 = gam - 1.0
            ra2 = (wvno + xka) * jnp.abs(wvno - xka)
            rb2 = (wvno + xkb) * jnp.abs(wvno - xkb)
            # rsqrt (EUP slot) + multiply; kills the full-width w/y divides.
            inv_ra = lax.rsqrt(jnp.where(ra2 == 0.0, 1.0, ra2))
            inv_rb = lax.rsqrt(jnp.where(rb2 == 0.0, 1.0, rb2))
            ra = ra2 * inv_ra               # == sqrt(ra2); exactly 0 at ra2 == 0
            rb = rb2 * inv_rb
            p = ra * dpth
            q = rb * dpth

            # ---- var(): layer eigenfunction products ------------------------
            # P-wave
            sinp = jnp.sin(p)
            facp = jnp.where(p < 16.0, jnp.exp(-2.0 * p), 0.0)
            sinp_ev = (1.0 - facp) * 0.5
            lt_p = wvno < xka
            eq_p = wvno == xka
            pex = jnp.where(lt_p | eq_p, 0.0, p)
            cosp = jnp.where(lt_p, jnp.cos(p),
                             jnp.where(eq_p, 1.0, (1.0 + facp) * 0.5))
            w = jnp.where(lt_p, sinp * inv_ra,
                          jnp.where(eq_p, dpth, sinp_ev * inv_ra))
            x = jnp.where(lt_p, -ra * sinp, jnp.where(eq_p, 0.0, ra * sinp_ev))
            # S-wave
            sinq = jnp.sin(q)
            facq = jnp.where(q < 16.0, jnp.exp(-2.0 * q), 0.0)
            sinq_ev = (1.0 - facq) * 0.5
            lt_s = wvno < xkb
            eq_s = wvno == xkb
            sex = jnp.where(lt_s | eq_s, 0.0, q)
            cosq = jnp.where(lt_s, jnp.cos(q),
                             jnp.where(eq_s, 1.0, (1.0 + facq) * 0.5))
            y = jnp.where(lt_s, sinq * inv_rb,
                          jnp.where(eq_s, dpth, sinq_ev * inv_rb))
            z = jnp.where(lt_s, -rb * sinq, jnp.where(eq_s, 0.0, rb * sinq_ev))

            exa = pex + sex
            a0 = jnp.where(exa < 60.0, jnp.exp(-exa), 0.0)
            cpcq = cosp * cosq
            cpy = cosp * y
            cpz = cosp * z
            cqw = cosq * w
            cqx = cosq * x
            xy = x * y
            xz = x * z
            wy = w * y
            wz = w * z

            # ---- dnka(): Dunkin's 5x5 compound matrix -----------------------
            twgm1 = gam + gamm1
            gmgmk = gam * gammk
            gmgm1 = gam * gamm1
            gm1sq = gamm1 * gamm1
            a0pq = a0 - cpcq
            tt = -2.0 * wvno2

            ca00 = cpcq - 2.0 * gmgm1 * a0pq - gmgmk * xz - wvno2 * gm1sq * wy
            ca01 = (wvno2 * cpy - cqx) * irho
            ca02 = -((twgm1 * a0pq + gammk * xz + wvno2 * gamm1 * wy) * irho)
            ca03 = (cpz - wvno2 * cqw) * irho
            ca04 = -((2.0 * wvno2 * a0pq + xz + wvno2 * wvno2 * wy) * irho2)

            ca10 = (gmgmk * cpz - gm1sq * cqw) * rho_m
            ca11 = cpcq
            ca12 = gammk * cpz - gamm1 * cqw
            ca13 = -wz
            ca14 = ca03

            ca30 = (gm1sq * cpy - gmgmk * cqx) * rho_m
            ca31 = -xy
            ca32 = gamm1 * cpy - gammk * cqx
            ca33 = ca11
            ca34 = ca01

            ca40 = -((2.0 * gmgmk * gm1sq * a0pq + gmgmk * gmgmk * xz
                      + gm1sq * gm1sq * wy) * rho2_m)
            ca41 = ca30
            ca42 = -((gammk * gamm1 * twgm1 * a0pq + gam * gammk * gammk * xz
                      + gamm1 * gm1sq * wy) * rho_m)
            ca43 = ca10
            ca44 = ca00

            ca20 = tt * ca42
            ca21 = tt * ca32
            ca22 = a0 + 2.0 * (cpcq - ca00)
            ca23 = tt * ca12
            ca24 = tt * ca02

            # ee = e @ ca
            ee0 = e0 * ca00 + e1 * ca10 + e2 * ca20 + e3 * ca30 + e4 * ca40
            ee1 = e0 * ca01 + e1 * ca11 + e2 * ca21 + e3 * ca31 + e4 * ca41
            ee2 = e0 * ca02 + e1 * ca12 + e2 * ca22 + e3 * ca32 + e4 * ca42
            ee3 = e0 * ca03 + e1 * ca13 + e2 * ca23 + e3 * ca33 + e4 * ca43
            ee4 = e0 * ca04 + e1 * ca14 + e2 * ca24 + e3 * ca34 + e4 * ca44

            # ---- normc(): normalize by the max-abs component ----------------
            t1 = jnp.maximum(
                jnp.maximum(jnp.maximum(jnp.abs(ee0), jnp.abs(ee1)),
                            jnp.maximum(jnp.abs(ee2), jnp.abs(ee3))),
                jnp.abs(ee4))
            t1 = jnp.where(t1 < 1e-30, 1.0, t1)   # (1e-40 in the f64 reference)
            if _PL_RECIPROCAL is not None:
                # EUP-slot approx reciprocal + one Newton step (~f32-exact) in
                # place of the VALU divide expansion.
                inv0 = _PL_RECIPROCAL(t1, approx=True)
                inv = inv0 * (2.0 - t1 * inv0)
            else:
                inv = 1.0 / t1
            e0 = ee0 * inv
            e1 = ee1 * inv
            e2 = ee2 * inv
            e3 = ee3 * inv
            e4 = ee4 * inv
        return e0

    # ---- sub-chunk 0: carries the observed point in lane 0 (cj == 0 only) ---
    lane = lax.broadcasted_iota(jnp.int32, (f_tile, LANES), 1)
    obs_col = (lane == 0) & (cj == 0)
    det0 = dunkin(jnp.where(obs_col, inv_v_ref[...], inv_c_ref[0]))
    rmin0 = jnp.min(jnp.where(obs_col, jnp.inf, det0), axis=-1, keepdims=True)
    rmax0 = jnp.max(jnp.where(obs_col, -jnp.inf, det0), axis=-1, keepdims=True)

    @pl.when(cj == 0)
    def _():
        e00_ref[...] = det0[:, 0:1]
        dmin_ref[...] = rmin0
        dmax_ref[...] = rmax0

    @pl.when(cj > 0)
    def _():
        dmin_ref[...] = jnp.minimum(dmin_ref[...], rmin0)
        dmax_ref[...] = jnp.maximum(dmax_ref[...], rmax0)

    # ---- remaining 128-lane sub-chunks of this candidate block --------------
    if n_sub > 1:
        def body(k, carry):
            det = dunkin(inv_c_ref[k])          # dynamic index on untiled axis
            dmin_ref[...] = jnp.minimum(dmin_ref[...],
                                        jnp.min(det, axis=-1, keepdims=True))
            dmax_ref[...] = jnp.maximum(dmax_ref[...],
                                        jnp.max(det, axis=-1, keepdims=True))
            return carry
        lax.fori_loop(1, n_sub, body, 0)


def dltar_e00_minmax(vlist, tlist, clist, d, a, b, rho, *, f_tile=8, c_block=512):
    """Returns (e00[F], dmin[F], dmax[F]) for a single layered model.

    e00[f]       = Dunkin determinant at (vlist[f], tlist[f])
    dmin/dmax[f] = min/max over c in clist of the determinant at (c, tlist[f])
    """
    vlist = jnp.asarray(vlist, jnp.float32).reshape(-1)
    tlist = jnp.asarray(tlist, jnp.float32).reshape(-1)
    clist = jnp.asarray(clist, jnp.float32).reshape(-1)
    d = jnp.asarray(d, jnp.float32).reshape(-1)
    a = jnp.asarray(a, jnp.float32).reshape(-1)
    b = jnp.asarray(b, jnp.float32).reshape(-1)
    rho = jnp.asarray(rho, jnp.float32).reshape(-1)

    F = vlist.shape[0]
    C = clist.shape[0]
    N = d.shape[0]
    F_pad = pl.cdiv(F, f_tile) * f_tile

    # Candidate-axis layout: lane 0 of the very first chunk is a reserved slot
    # the kernel overwrites per-row with 1/vlist[f]; candidates occupy lanes
    # 1..C; edge-padding replicates the last candidate (min/max unaffected).
    width = C + 1
    n_chunks = pl.cdiv(width, LANES)                       # 128-lane sub-chunks
    n_sub = max(1, min(max(1, int(c_block) // LANES), n_chunks))
    n_c_steps = pl.cdiv(n_chunks, n_sub)                   # c-axis grid steps
    rows = n_c_steps * n_sub
    C_pad = rows * LANES

    tpad = jnp.pad(tlist, (0, F_pad - F), mode='edge')
    vpad = jnp.pad(vlist, (0, F_pad - F), mode='edge')
    cpad = jnp.pad(clist, (1, C_pad - width), mode='edge')

    # Host-side hoists: reciprocals so the kernel hot path is multiply-only.
    omega = jnp.maximum(2.0 * math.pi / tpad, 1e-4).reshape(F_pad, 1)
    inv_omega = 1.0 / omega
    inv_v = (1.0 / vpad).reshape(F_pad, 1)
    inv_c = (1.0 / cpad).reshape(rows, 1, LANES)   # chunks on an untiled axis
    rho2 = rho * rho
    inv_a = 1.0 / a
    inv_b = 1.0 / b
    inv_rho = 1.0 / rho
    inv_rho2 = 1.0 / rho2

    grid = (F_pad // f_tile, n_c_steps)
    smem = pl.BlockSpec(memory_space=pltpu.MemorySpace.SMEM)   # layer scalars
    col = pl.BlockSpec((f_tile, 1), lambda fi, cj: (fi, 0))

    kernel = functools.partial(_dunkin_minmax_kernel,
                               nlayers=N, n_sub=n_sub, f_tile=f_tile)
    e00, dmin, dmax = pl.pallas_call(
        kernel,
        out_shape=(jax.ShapeDtypeStruct((F_pad, 1), jnp.float32),) * 3,
        grid=grid,
        in_specs=[
            pl.BlockSpec((n_sub, 1, LANES), lambda fi, cj: (cj, 0, 0)),  # 1/Clist
            col, col, col,                                  # omega, 1/omega, 1/vlist
            smem, smem, smem, smem,                         # d, b, rho, rho^2
            smem, smem, smem, smem,                         # 1/a, 1/b, 1/rho, 1/rho^2
        ],
        out_specs=(col, col, col),
        compiler_params=pltpu.CompilerParams(
            dimension_semantics=("parallel", "arbitrary")),
    )(inv_c, omega, inv_omega, inv_v,
      d, b, rho, rho2, inv_a, inv_b, inv_rho, inv_rho2)
    return e00[:F, 0], dmin[:F, 0], dmax[:F, 0]


# ----------------------------------------------------------------------------
# Module port: gpu_iter_cal_grad (single 1-D layered model, scalar misfit)
# ----------------------------------------------------------------------------
class GpuIterCalGrad:
    """JAX/Pallas port of ADsurf gpu_iter_cal_grad (rayleigh / dunkin, llw == -1)."""

    def __init__(self, d, a, b, rho, Clist, damp, compress=True, normalized=True,
                 compress_method='exp', inversion_method='vs',
                 initial_method='Brocher', vp_vs_ratio=1.732, AK135_data=None,
                 f_tile=8, c_block=512):
        self.d = jnp.asarray(d, jnp.float32).reshape(-1)
        self.a = jnp.asarray(a, jnp.float32).reshape(-1)
        self.b = jnp.asarray(b, jnp.float32).reshape(-1)      # trainable "parameter"
        self.rho = jnp.asarray(rho, jnp.float32).reshape(-1)
        self.Clist = jnp.asarray(Clist, jnp.float32).reshape(-1)
        self.damp = float(damp)
        self.compress = compress
        self.normalized = normalized
        self.compress_method = compress_method
        self.inversion_method = inversion_method
        self.initial_method = initial_method
        self.vp_vs_ratio = vp_vs_ratio
        # f_tile fills the 8 sublanes of a vreg; c_block sets how many candidate
        # lanes each grid step covers (iterated as 128-lane sub-chunks in-kernel
        # so the per-op working shape stays exactly 1 vreg).  The real tiling
        # ceiling is the 64-entry vreg file (identical on v5e/v6e/v7x), NOT
        # VMEM: the kernel footprint is a few KiB, so don't bump raw tile sizes;
        # sweep c_block (512..1024) to amortize the ~0.35us per-grid-step cost.
        # TODO(synk): on v7x (2 TensorCores), when F fits a single f-tile the
        # "parallel" fi axis has one step and the second core idles; splitting
        # the candidate set across a leading parallel axis (per-shard dmin/dmax
        # combined outside) would recover up to ~2x there.
        self.f_tile = f_tile
        self.c_block = c_block

        self.llw = 0 if float(self.b[0]) <= 0.0 else -1
        if self.llw == 0:
            # TODO(synk): water-layer path (llw == 0) of dltar4 not implemented.
            raise NotImplementedError("water layer (llw == 0) not supported")

        nL = self.d.shape[0]
        L0 = (np.diag(-np.ones(nL - 1), 1) + np.diag(-np.ones(nL - 1), -1)
              + np.diag(2.0 * np.ones(nL)))
        L0[0, 0] = 1.0
        L0[nL - 1, nL - 1] = 1.0
        self.L = jnp.asarray(L0, jnp.float32)

    def _vp_rho(self):
        b = self.b
        if self.initial_method == 'Brocher':
            a = (0.9409 + 2.0947 * b - 0.8206 * b ** 2
                 + 0.2683 * b ** 3 - 0.0251 * b ** 4)
            rho = (1.6612 * a - 0.4721 * a ** 2 + 0.0671 * a ** 3
                   - 0.0043 * a ** 4 + 0.000106 * a ** 5)
            return a, rho
        if self.initial_method == 'Constant':
            return b * self.vp_vs_ratio, self.rho
        # TODO(synk): 'USArray' AK135 nearest-neighbour table lookup not implemented.
        return self.a, self.rho

    def __call__(self, vlist, tlist):
        vlist = jnp.asarray(vlist, jnp.float32).reshape(-1)
        tlist = jnp.asarray(tlist, jnp.float32).reshape(-1)
        a, rho = self._vp_rho()

        need_norm = self.compress and self.normalized
        # When normalization over Clist is not needed, run a single (dummy)
        # candidate lane so no F x C work is wasted.
        clist = self.Clist if need_norm else self.Clist[:1]

        e00, dmin, dmax = dltar_e00_minmax(
            vlist, tlist, clist, self.d, a, self.b, rho,
            f_tile=self.f_tile, c_block=self.c_block)

        # --- tiny finalize (O(F + N^2)) in plain jnp --------------------------
        if self.compress:
            if self.normalized:
                # NOTE: no epsilon guard on (dmax - dmin), matching the torch
                # reference (a flat determinant over Clist yields inf/nan there too).
                e00 = e00 / (dmax - dmin)
                if self.compress_method == 'log':
                    e00 = jnp.log(jnp.abs(e00) + 1.0)
                elif self.compress_method == 'exp':
                    e00 = jnp.power(0.1, jnp.abs(e00)) - 1.0
                    # (torch reference also compresses `det`; that value is unused)
            else:
                e00 = jnp.power(0.1, jnp.abs(e00)) - 1.0
        e_all = jnp.sum(jnp.abs(e00)) / e00.shape[0]

        if self.damp > 0.0:
            m_norm = self.damp * (self.L @ self.b) / self.b.shape[0]
            e_all = e_all + jnp.sum(jnp.abs(m_norm))
        return e_all                                  # scalar


# ----------------------------------------------------------------------------
if __name__ == "__main__":
    key = jax.random.PRNGKey(0)
    N, F, C = 8, 8, 40          # layers, observed periods, candidate velocities
    k1, k2, k3 = jax.random.split(key, 3)

    d = 0.5 + jax.random.uniform(k1, (N,), jnp.float32)                    # km
    b = jnp.sort(1.5 + 2.0 * jax.random.uniform(k2, (N,), jnp.float32))    # vs km/s
    a = 1.732 * b                                                          # placeholder vp
    rho = 2.0 + 0.1 * b                                                    # placeholder rho
    Clist = jnp.linspace(1.2, 4.2, C, dtype=jnp.float32)
    tlist = jnp.linspace(0.5, 5.0, F, dtype=jnp.float32)                   # periods [s]
    vlist = 1.8 + 1.5 * jax.random.uniform(k3, (F,), jnp.float32)          # observed c

    model = GpuIterCalGrad(d, a, b, rho, Clist, damp=1.0, compress=True,
                           normalized=True, compress_method='exp',
                           inversion_method='vs', initial_method='Brocher',
                           vp_vs_ratio=1.732)

    out = jax.block_until_ready(model(vlist, tlist))
    assert out.shape == (), out.shape
    assert bool(jnp.isfinite(out))
    print("KERNEL_OK")
</pallas_src>

<mosaic_0001>
module attributes {stable_mosaic.version = 11 : i64} {
  func.func @_dunkin_minmax_kernel(%arg0: i32, %arg1: i32, %arg2: memref<1x1x128xf32, #tpu.memory_space<vmem>>, %arg3: memref<8x1xf32, #tpu.memory_space<vmem>>, %arg4: memref<8x1xf32, #tpu.memory_space<vmem>>, %arg5: memref<8x1xf32, #tpu.memory_space<vmem>>, %arg6: memref<8xf32, #tpu.memory_space<smem>>, %arg7: memref<8xf32, #tpu.memory_space<smem>>, %arg8: memref<8xf32, #tpu.memory_space<smem>>, %arg9: memref<8xf32, #tpu.memory_space<smem>>, %arg10: memref<8xf32, #tpu.memory_space<smem>>, %arg11: memref<8xf32, #tpu.memory_space<smem>>, %arg12: memref<8xf32, #tpu.memory_space<smem>>, %arg13: memref<8xf32, #tpu.memory_space<smem>>, %arg14: memref<8x1xf32, #tpu.memory_space<vmem>>, %arg15: memref<8x1xf32, #tpu.memory_space<vmem>>, %arg16: memref<8x1xf32, #tpu.memory_space<vmem>>) attributes {dimension_semantics = [#tpu.dimension_semantics<parallel>, #tpu.dimension_semantics<arbitrary>], iteration_bounds = array<i64: 1, 1>, scalar_prefetch = 0 : i64, scratch_operands = 0 : i64, tpu.core_type = #tpu.core_type<tc>, window_params = [{transform_indices = @transform_0, window_bounds = array<i64: 1, 1, 128>}, {transform_indices = @transform_1, window_bounds = array<i64: 8, 1>}, {transform_indices = @transform_2, window_bounds = array<i64: 8, 1>}, {transform_indices = @transform_3, window_bounds = array<i64: 8, 1>}, {transform_indices = @transform_4, window_bounds = array<i64: 8>}, {transform_indices = @transform_5, window_bounds = array<i64: 8>}, {transform_indices = @transform_6, window_bounds = array<i64: 8>}, {transform_indices = @transform_7, window_bounds = array<i64: 8>}, {transform_indices = @transform_8, window_bounds = array<i64: 8>}, {transform_indices = @transform_9, window_bounds = array<i64: 8>}, {transform_indices = @transform_10, window_bounds = array<i64: 8>}, {transform_indices = @transform_11, window_bounds = array<i64: 8>}, {transform_indices = @transform_12, window_bounds = array<i64: 8, 1>}, {transform_indices = @transform_13, window_bounds = array<i64: 8, 1>}, {transform_indices = @transform_14, window_bounds = array<i64: 8, 1>}]} {
    %c0 = arith.constant 0 : index
    %c0_0 = arith.constant 0 : index
    %0 = vector.load %arg3[%c0, %c0_0] : memref<8x1xf32, #tpu.memory_space<vmem>>, vector<8x1xf32>
    %c0_1 = arith.constant 0 : index
    %c0_2 = arith.constant 0 : index
    %1 = vector.load %arg4[%c0_1, %c0_2] : memref<8x1xf32, #tpu.memory_space<vmem>>, vector<8x1xf32>
    %2 = tpu.iota {dimensions = array<i32: 1>} : vector<8x128xi32>
    %c0_i32 = arith.constant 0 : i32
    %3 = vector.broadcast %c0_i32 : i32 to vector<8x128xi32>
    %4 = arith.cmpi eq, %2, %3 : vector<8x128xi32>
    %c0_i32_3 = arith.constant 0 : i32
    %5 = arith.cmpi eq, %arg1, %c0_i32_3 : i32
    %6 = vector.broadcast %5 : i1 to vector<8x128xi1>
    %7 = arith.andi %4, %6 : vector<8x128xi1>
    %c0_4 = arith.constant 0 : index
    %c0_5 = arith.constant 0 : index
    %8 = vector.load %arg5[%c0_4, %c0_5] : memref<8x1xf32, #tpu.memory_space<vmem>>, vector<8x1xf32>
    %c0_6 = arith.constant 0 : index
    %c0_7 = arith.constant 0 : index
    %c0_8 = arith.constant 0 : index
    %9 = vector.load %arg2[%c0_6, %c0_7, %c0_8] : memref<1x1x128xf32, #tpu.memory_space<vmem>>, vector<1x1x128xf32>
    %10 = vector.shape_cast %9 : vector<1x1x128xf32> to vector<1x128xf32>
    %11 = vector.shape_cast %8 : vector<8x1xf32> to vector<8x1xf32>
    %12 = vector.broadcast %11 : vector<8x1xf32> to vector<8x128xf32>
    %13 = vector.shape_cast %10 : vector<1x128xf32> to vector<1x128xf32>
    %14 = vector.broadcast %13 : vector<1x128xf32> to vector<8x128xf32>
    %15 = arith.select %7, %12, %14 : vector<8x128xi1>, vector<8x128xf32>
    %16 = vector.broadcast %0 : vector<8x1xf32> to vector<8x128xf32>
    %17 = arith.mulf %16, %15 : vector<8x128xf32>
    %18 = arith.mulf %17, %17 : vector<8x128xf32>
    %c7 = arith.constant 7 : index
    %19 = memref.load %arg10[%c7] : memref<8xf32, #tpu.memory_space<smem>>
    %20 = vector.broadcast %19 : f32 to vector<8x1xf32>
    %21 = arith.mulf %0, %20 : vector<8x1xf32>
    %c7_9 = arith.constant 7 : index
    %22 = memref.load %arg11[%c7_9] : memref<8xf32, #tpu.memory_space<smem>>
    %23 = vector.broadcast %22 : f32 to vector<8x1xf32>
    %24 = arith.mulf %0, %23 : vector<8x1xf32>
    %c7_10 = arith.constant 7 : index
    %25 = memref.load %arg7[%c7_10] : memref<8xf32, #tpu.memory_space<smem>>
    %26 = vector.broadcast %25 : f32 to vector<8x1xf32>
    %27 = arith.mulf %26, %1 : vector<8x1xf32>
    %cst = arith.constant 2.000000e+00 : f32
    %28 = vector.broadcast %cst : f32 to vector<8x1xf32>
    %29 = arith.mulf %28, %27 : vector<8x1xf32>
    %30 = arith.mulf %29, %27 : vector<8x1xf32>
    %31 = vector.broadcast %21 : vector<8x1xf32> to vector<8x128xf32>
    %32 = arith.addf %17, %31 : vector<8x128xf32>
    %33 = vector.broadcast %21 : vector<8x1xf32> to vector<8x128xf32>
    %34 = arith.subf %17, %33 : vector<8x128xf32>
    %35 = math.absf %34 : vector<8x128xf32>
    %36 = arith.mulf %32, %35 : vector<8x128xf32>
    %37 = math.sqrt %36 : vector<8x128xf32>
    %38 = vector.broadcast %24 : vector<8x1xf32> to vector<8x128xf32>
    %39 = arith.addf %17, %38 : vector<8x128xf32>
    %40 = vector.broadcast %24 : vector<8x1xf32> to vector<8x128xf32>
    %41 = arith.subf %17, %40 : vector<8x128xf32>
    %42 = math.absf %41 : vector<8x128xf32>
    %43 = arith.mulf %39, %42 : vector<8x128xf32>
    %44 = math.sqrt %43 : vector<8x128xf32>
    %45 = vector.broadcast %30 : vector<8x1xf32> to vector<8x128xf32>
    %46 = arith.mulf %45, %18 : vector<8x128xf32>
    %cst_11 = arith.constant 1.000000e+00 : f32
    %47 = vector.broadcast %cst_11 : f32 to vector<8x128xf32>
    %48 = arith.subf %46, %47 : vector<8x128xf32>
    %49 = arith.mulf %37, %44 : vector<8x128xf32>
    %c7_12 = arith.constant 7 : index
    %50 = memref.load %arg8[%c7_12] : memref<8xf32, #tpu.memory_space<smem>>
    %c7_13 = arith.constant 7 : index
    %51 = memref.load %arg9[%c7_13] : memref<8xf32, #tpu.memory_space<smem>>
    %52 = arith.mulf %48, %48 : vector<8x128xf32>
    %53 = vector.broadcast %30 : vector<8x1xf32> to vector<8x128xf32>
    %54 = arith.mulf %46, %53 : vector<8x128xf32>
    %55 = arith.mulf %54, %49 : vector<8x128xf32>
    %56 = arith.subf %52, %55 : vector<8x128xf32>
    %57 = vector.broadcast %51 : f32 to vector<8x128xf32>
    %58 = arith.mulf %57, %56 : vector<8x128xf32>
    %59 = vector.broadcast %50 : f32 to vector<8x128xf32>
    %60 = arith.mulf %59, %37 : vector<8x128xf32>
    %cst_14 = arith.constant 0.000000e+00 : f32
    %61 = vector.broadcast %cst_14 : f32 to vector<8x128xf32>
    %62 = arith.subf %61, %60 : vector<8x128xf32>
    %63 = vector.broadcast %30 : vector<8x1xf32> to vector<8x128xf32>
    %64 = arith.mulf %63, %49 : vector<8x128xf32>
    %65 = arith.subf %48, %64 : vector<8x128xf32>
    %66 = vector.broadcast %50 : f32 to vector<8x128xf32>
    %67 = arith.mulf %66, %65 : vector<8x128xf32>
    %68 = vector.broadcast %50 : f32 to vector<8x128xf32>
    %69 = arith.mulf %68, %44 : vector<8x128xf32>
    %70 = arith.subf %18, %49 : vector<8x128xf32>
    %c6 = arith.constant 6 : index
    %71 = memref.load %arg6[%c6] : memref<8xf32, #tpu.memory_space<smem>>
    %c6_15 = arith.constant 6 : index
    %72 = memref.load %arg8[%c6_15] : memref<8xf32, #tpu.memory_space<smem>>
    %c6_16 = arith.constant 6 : index
    %73 = memref.load %arg9[%c6_16] : memref<8xf32, #tpu.memory_space<smem>>
    %c6_17 = arith.constant 6 : index
    %74 = memref.load %arg12[%c6_17] : memref<8xf32, #tpu.memory_space<smem>>
    %c6_18 = arith.constant 6 : index
    %75 = memref.load %arg13[%c6_18] : memref<8xf32, #tpu.memory_space<smem>>
    %c6_19 = arith.constant 6 : index
    %76 = memref.load %arg10[%c6_19] : memref<8xf32, #tpu.memory_space<smem>>
    %77 = vector.broadcast %76 : f32 to vector<8x1xf32>
    %78 = arith.mulf %0, %77 : vector<8x1xf32>
    %c6_20 = arith.constant 6 : index
    %79 = memref.load %arg11[%c6_20] : memref<8xf32, #tpu.memory_space<smem>>
    %80 = vector.broadcast %79 : f32 to vector<8x1xf32>
    %81 = arith.mulf %0, %80 : vector<8x1xf32>
    %c6_21 = arith.constant 6 : index
    %82 = memref.load %arg7[%c6_21] : memref<8xf32, #tpu.memory_space<smem>>
    %83 = vector.broadcast %82 : f32 to vector<8x1xf32>
    %84 = arith.mulf %83, %1 : vector<8x1xf32>
    %cst_22 = arith.constant 2.000000e+00 : f32
    %85 = vector.broadcast %cst_22 : f32 to vector<8x1xf32>
    %86 = arith.mulf %85, %84 : vector<8x1xf32>
    %87 = arith.mulf %86, %84 : vector<8x1xf32>
    %88 = vector.broadcast %87 : vector<8x1xf32> to vector<8x128xf32>
    %89 = arith.mulf %88, %18 : vector<8x128xf32>
    %cst_23 = arith.constant 1.000000e+00 : f32
    %90 = vector.broadcast %cst_23 : f32 to vector<8x128xf32>
    %91 = arith.subf %89, %90 : vector<8x128xf32>
    %92 = vector.broadcast %78 : vector<8x1xf32> to vector<8x128xf32>
    %93 = arith.addf %17, %92 : vector<8x128xf32>
    %94 = vector.broadcast %78 : vector<8x1xf32> to vector<8x128xf32>
    %95 = arith.subf %17, %94 : vector<8x128xf32>
    %96 = math.absf %95 : vector<8x128xf32>
    %97 = arith.mulf %93, %96 : vector<8x128xf32>
    %98 = vector.broadcast %81 : vector<8x1xf32> to vector<8x128xf32>
    %99 = arith.addf %17, %98 : vector<8x128xf32>
    %100 = vector.broadcast %81 : vector<8x1xf32> to vector<8x128xf32>
    %101 = arith.subf %17, %100 : vector<8x128xf32>
    %102 = math.absf %101 : vector<8x128xf32>
    %103 = arith.mulf %99, %102 : vector<8x128xf32>
    %cst_24 = arith.constant 0.000000e+00 : f32
    %104 = vector.broadcast %cst_24 : f32 to vector<8x128xf32>
    %105 = arith.cmpf oeq, %97, %104 : vector<8x128xf32>
    %cst_25 = arith.constant 1.000000e+00 : f32
    %106 = vector.broadcast %cst_25 : f32 to vector<8x128xf32>
    %107 = arith.select %105, %106, %97 : vector<8x128xi1>, vector<8x128xf32>
    %108 = math.rsqrt %107 : vector<8x128xf32>
    %cst_26 = arith.constant 0.000000e+00 : f32
    %109 = vector.broadcast %cst_26 : f32 to vector<8x128xf32>
    %110 = arith.cmpf oeq, %103, %109 : vector<8x128xf32>
    %cst_27 = arith.constant 1.000000e+00 : f32
    %111 = vector.broadcast %cst_27 : f32 to vector<8x128xf32>
    %112 = arith.select %110, %111, %103 : vector<8x128xi1>, vector<8x128xf32>
    %113 = math.rsqrt %112 : vector<8x128xf32>
    %114 = arith.mulf %97, %108 : vector<8x128xf32>
    %115 = arith.mulf %103, %113 : vector<8x128xf32>
    %116 = vector.broadcast %71 : f32 to vector<8x128xf32>
    %117 = arith.mulf %114, %116 : vector<8x128xf32>
    %118 = vector.broadcast %71 : f32 to vector<8x128xf32>
    %119 = arith.mulf %115, %118 : vector<8x128xf32>
    %120 = math.sin %117 : vector<8x128xf32>
    %cst_28 = arith.constant 1.600000e+01 : f32
    %121 = vector.broadcast %cst_28 : f32 to vector<8x128xf32>
    %122 = arith.cmpf olt, %117, %121 : vector<8x128xf32>
    %cst_29 = arith.constant -2.000000e+00 : f32
    %123 = vector.broadcast %cst_29 : f32 to vector<8x128xf32>
    %124 = arith.mulf %123, %117 : vector<8x128xf32>
    %125 = math.exp %124 : vector<8x128xf32>
    %cst_30 = arith.constant 0.000000e+00 : f32
    %126 = vector.broadcast %cst_30 : f32 to vector<8x128xf32>
    %127 = arith.select %122, %125, %126 : vector<8x128xi1>, vector<8x128xf32>
    %cst_31 = arith.constant 1.000000e+00 : f32
    %128 = vector.broadcast %cst_31 : f32 to vector<8x128xf32>
    %129 = arith.subf %128, %127 : vector<8x128xf32>
    %cst_32 = arith.constant 5.000000e-01 : f32
    %130 = vector.broadcast %cst_32 : f32 to vector<8x128xf32>
    %131 = arith.mulf %129, %130 : vector<8x128xf32>
    %132 = vector.broadcast %78 : vector<8x1xf32> to vector<8x128xf32>
    %133 = arith.cmpf olt, %17, %132 : vector<8x128xf32>
    %134 = vector.broadcast %78 : vector<8x1xf32> to vector<8x128xf32>
    %135 = arith.cmpf oeq, %17, %134 : vector<8x128xf32>
    %136 = arith.ori %133, %135 : vector<8x128xi1>
    %cst_33 = arith.constant 0.000000e+00 : f32
    %137 = vector.broadcast %cst_33 : f32 to vector<8x128xf32>
    %138 = arith.select %136, %137, %117 : vector<8x128xi1>, vector<8x128xf32>
    %139 = math.cos %117 : vector<8x128xf32>
    %cst_34 = arith.constant 1.000000e+00 : f32
    %140 = vector.broadcast %cst_34 : f32 to vector<8x128xf32>
    %141 = arith.addf %140, %127 : vector<8x128xf32>
    %cst_35 = arith.constant 5.000000e-01 : f32
    %142 = vector.broadcast %cst_35 : f32 to vector<8x128xf32>
    %143 = arith.mulf %141, %142 : vector<8x128xf32>
    %cst_36 = arith.constant 1.000000e+00 : f32
    %144 = vector.broadcast %cst_36 : f32 to vector<8x128xf32>
    %145 = arith.select %135, %144, %143 : vector<8x128xi1>, vector<8x128xf32>
    %146 = arith.select %133, %139, %145 : vector<8x128xi1>, vector<8x128xf32>
    %147 = arith.mulf %120, %108 : vector<8x128xf32>
    %148 = arith.mulf %131, %108 : vector<8x128xf32>
    %149 = vector.broadcast %71 : f32 to vector<8x128xf32>
    %150 = arith.select %135, %149, %148 : vector<8x128xi1>, vector<8x128xf32>
    %151 = arith.select %133, %147, %150 : vector<8x128xi1>, vector<8x128xf32>
    %cst_37 = arith.constant 0.000000e+00 : f32
    %152 = vector.broadcast %cst_37 : f32 to vector<8x128xf32>
    %153 = arith.subf %152, %114 : vector<8x128xf32>
    %154 = arith.mulf %153, %120 : vector<8x128xf32>
    %155 = arith.mulf %114, %131 : vector<8x128xf32>
    %cst_38 = arith.constant 0.000000e+00 : f32
    %156 = vector.broadcast %cst_38 : f32 to vector<8x128xf32>
    %157 = arith.select %135, %156, %155 : vector<8x128xi1>, vector<8x128xf32>
    %158 = arith.select %133, %154, %157 : vector<8x128xi1>, vector<8x128xf32>
    %159 = math.sin %119 : vector<8x128xf32>
    %cst_39 = arith.constant 1.600000e+01 : f32
    %160 = vector.broadcast %cst_39 : f32 to vector<8x128xf32>
    %161 = arith.cmpf olt, %119, %160 : vector<8x128xf32>
    %cst_40 = arith.constant -2.000000e+00 : f32
    %162 = vector.broadcast %cst_40 : f32 to vector<8x128xf32>
    %163 = arith.mulf %162, %119 : vector<8x128xf32>
    %164 = math.exp %163 : vector<8x128xf32>
    %cst_41 = arith.constant 0.000000e+00 : f32
    %165 = vector.broadcast %cst_41 : f32 to vector<8x128xf32>
    %166 = arith.select %161, %164, %165 : vector<8x128xi1>, vector<8x128xf32>
    %cst_42 = arith.constant 1.000000e+00 : f32
    %167 = vector.broadcast %cst_42 : f32 to vector<8x128xf32>
    %168 = arith.subf %167, %166 : vector<8x128xf32>
    %cst_43 = arith.constant 5.000000e-01 : f32
    %169 = vector.broadcast %cst_43 : f32 to vector<8x128xf32>
    %170 = arith.mulf %168, %169 : vector<8x128xf32>
    %171 = vector.broadcast %81 : vector<8x1xf32> to vector<8x128xf32>
    %172 = arith.cmpf olt, %17, %171 : vector<8x128xf32>
    %173 = vector.broadcast %81 : vector<8x1xf32> to vector<8x128xf32>
    %174 = arith.cmpf oeq, %17, %173 : vector<8x128xf32>
    %175 = arith.ori %172, %174 : vector<8x128xi1>
    %cst_44 = arith.constant 0.000000e+00 : f32
    %176 = vector.broadcast %cst_44 : f32 to vector<8x128xf32>
    %177 = arith.select %175, %176, %119 : vector<8x128xi1>, vector<8x128xf32>
    %178 = math.cos %119 : vector<8x128xf32>
    %cst_45 = arith.constant 1.000000e+00 : f32
    %179 = vector.broadcast %cst_45 : f32 to vector<8x128xf32>
    %180 = arith.addf %179, %166 : vector<8x128xf32>
    %cst_46 = arith.constant 5.000000e-01 : f32
    %181 = vector.broadcast %cst_46 : f32 to vector<8x128xf32>
    %182 = arith.mulf %180, %181 : vector<8x128xf32>
    %cst_47 = arith.constant 1.000000e+00 : f32
    %183 = vector.broadcast %cst_47 : f32 to vector<8x128xf32>
    %184 = arith.select %174, %183, %182 : vector<8x128xi1>, vector<8x128xf32>
    %185 = arith.select %172, %178, %184 : vector<8x128xi1>, vector<8x128xf32>
    %186 = arith.mulf %159, %113 : vector<8x128xf32>
    %187 = arith.mulf %170, %113 : vector<8x128xf32>
    %188 = vector.broadcast %71 : f32 to vector<8x128xf32>
    %189 = arith.select %174, %188, %187 : vector<8x128xi1>, vector<8x128xf32>
    %190 = arith.select %172, %186, %189 : vector<8x128xi1>, vector<8x128xf32>
    %cst_48 = arith.constant 0.000000e+00 : f32
    %191 = vector.broadcast %cst_48 : f32 to vector<8x128xf32>
    %192 = arith.subf %191, %115 : vector<8x128xf32>
    %193 = arith.mulf %192, %159 : vector<8x128xf32>
    %194 = arith.mulf %115, %170 : vector<8x128xf32>
    %cst_49 = arith.constant 0.000000e+00 : f32
    %195 = vector.broadcast %cst_49 : f32 to vector<8x128xf32>
    %196 = arith.select %174, %195, %194 : vector<8x128xi1>, vector<8x128xf32>
    %197 = arith.select %172, %193, %196 : vector<8x128xi1>, vector<8x128xf32>
    %198 = arith.addf %138, %177 : vector<8x128xf32>
    %cst_50 = arith.constant 6.000000e+01 : f32
    %199 = vector.broadcast %cst_50 : f32 to vector<8x128xf32>
    %200 = arith.cmpf olt, %198, %199 : vector<8x128xf32>
    %cst_51 = arith.constant 0.000000e+00 : f32
    %201 = vector.broadcast %cst_51 : f32 to vector<8x128xf32>
    %202 = arith.subf %201, %198 : vector<8x128xf32>
    %203 = math.exp %202 : vector<8x128xf32>
    %cst_52 = arith.constant 0.000000e+00 : f32
    %204 = vector.broadcast %cst_52 : f32 to vector<8x128xf32>
    %205 = arith.select %200, %203, %204 : vector<8x128xi1>, vector<8x128xf32>
    %206 = arith.mulf %146, %185 : vector<8x128xf32>
    %207 = arith.mulf %146, %190 : vector<8x128xf32>
    %208 = arith.mulf %146, %197 : vector<8x128xf32>
    %209 = arith.mulf %185, %151 : vector<8x128xf32>
    %210 = arith.mulf %185, %158 : vector<8x128xf32>
    %211 = arith.mulf %158, %190 : vector<8x128xf32>
    %212 = arith.mulf %158, %197 : vector<8x128xf32>
    %213 = arith.mulf %151, %190 : vector<8x128xf32>
    %214 = arith.mulf %151, %197 : vector<8x128xf32>
    %215 = arith.addf %89, %91 : vector<8x128xf32>
    %216 = vector.broadcast %87 : vector<8x1xf32> to vector<8x128xf32>
    %217 = arith.mulf %89, %216 : vector<8x128xf32>
    %218 = arith.mulf %89, %91 : vector<8x128xf32>
    %219 = arith.mulf %91, %91 : vector<8x128xf32>
    %220 = arith.subf %205, %206 : vector<8x128xf32>
    %cst_53 = arith.constant -2.000000e+00 : f32
    %221 = vector.broadcast %cst_53 : f32 to vector<8x128xf32>
    %222 = arith.mulf %221, %18 : vector<8x128xf32>
    %cst_54 = arith.constant 2.000000e+00 : f32
    %223 = vector.broadcast %cst_54 : f32 to vector<8x128xf32>
    %224 = arith.mulf %223, %218 : vector<8x128xf32>
    %225 = arith.mulf %224, %220 : vector<8x128xf32>
    %226 = arith.subf %206, %225 : vector<8x128xf32>
    %227 = arith.mulf %217, %212 : vector<8x128xf32>
    %228 = arith.subf %226, %227 : vector<8x128xf32>
    %229 = arith.mulf %18, %219 : vector<8x128xf32>
    %230 = arith.mulf %229, %213 : vector<8x128xf32>
    %231 = arith.subf %228, %230 : vector<8x128xf32>
    %232 = arith.mulf %18, %207 : vector<8x128xf32>
    %233 = arith.subf %232, %210 : vector<8x128xf32>
    %234 = vector.broadcast %74 : f32 to vector<8x128xf32>
    %235 = arith.mulf %233, %234 : vector<8x128xf32>
    %236 = arith.mulf %215, %220 : vector<8x128xf32>
    %237 = vector.broadcast %87 : vector<8x1xf32> to vector<8x128xf32>
    %238 = arith.mulf %237, %212 : vector<8x128xf32>
    %239 = arith.addf %236, %238 : vector<8x128xf32>
    %240 = arith.mulf %18, %91 : vector<8x128xf32>
    %241 = arith.mulf %240, %213 : vector<8x128xf32>
    %242 = arith.addf %239, %241 : vector<8x128xf32>
    %243 = vector.broadcast %74 : f32 to vector<8x128xf32>
    %244 = arith.mulf %242, %243 : vector<8x128xf32>
    %cst_55 = arith.constant 0.000000e+00 : f32
    %245 = vector.broadcast %cst_55 : f32 to vector<8x128xf32>
    %246 = arith.subf %245, %244 : vector<8x128xf32>
    %247 = arith.mulf %18, %209 : vector<8x128xf32>
    %248 = arith.subf %208, %247 : vector<8x128xf32>
    %249 = vector.broadcast %74 : f32 to vector<8x128xf32>
    %250 = arith.mulf %248, %249 : vector<8x128xf32>
    %cst_56 = arith.constant 2.000000e+00 : f32
    %251 = vector.broadcast %cst_56 : f32 to vector<8x128xf32>
    %252 = arith.mulf %251, %18 : vector<8x128xf32>
    %253 = arith.mulf %252, %220 : vector<8x128xf32>
    %254 = arith.addf %253, %212 : vector<8x128xf32>
    %255 = arith.mulf %18, %18 : vector<8x128xf32>
    %256 = arith.mulf %255, %213 : vector<8x128xf32>
    %257 = arith.addf %254, %256 : vector<8x128xf32>
    %258 = vector.broadcast %75 : f32 to vector<8x128xf32>
    %259 = arith.mulf %257, %258 : vector<8x128xf32>
    %cst_57 = arith.constant 0.000000e+00 : f32
    %260 = vector.broadcast %cst_57 : f32 to vector<8x128xf32>
    %261 = arith.subf %260, %259 : vector<8x128xf32>
    %262 = arith.mulf %217, %208 : vector<8x128xf32>
    %263 = arith.mulf %219, %209 : vector<8x128xf32>
    %264 = arith.subf %262, %263 : vector<8x128xf32>
    %265 = vector.broadcast %72 : f32 to vector<8x128xf32>
    %266 = arith.mulf %264, %265 : vector<8x128xf32>
    %267 = vector.broadcast %87 : vector<8x1xf32> to vector<8x128xf32>
    %268 = arith.mulf %267, %208 : vector<8x128xf32>
    %269 = arith.mulf %91, %209 : vector<8x128xf32>
    %270 = arith.subf %268, %269 : vector<8x128xf32>
    %cst_58 = arith.constant 0.000000e+00 : f32
    %271 = vector.broadcast %cst_58 : f32 to vector<8x128xf32>
    %272 = arith.subf %271, %214 : vector<8x128xf32>
    %273 = arith.mulf %219, %207 : vector<8x128xf32>
    %274 = arith.mulf %217, %210 : vector<8x128xf32>
    %275 = arith.subf %273, %274 : vector<8x128xf32>
    %276 = vector.broadcast %72 : f32 to vector<8x128xf32>
    %277 = arith.mulf %275, %276 : vector<8x128xf32>
    %cst_59 = arith.constant 0.000000e+00 : f32
    %278 = vector.broadcast %cst_59 : f32 to vector<8x128xf32>
    %279 = arith.subf %278, %211 : vector<8x128xf32>
    %280 = arith.mulf %91, %207 : vector<8x128xf32>
    %281 = vector.broadcast %87 : vector<8x1xf32> to vector<8x128xf32>
    %282 = arith.mulf %281, %210 : vector<8x128xf32>
    %283 = arith.subf %280, %282 : vector<8x128xf32>
    %cst_60 = arith.constant 2.000000e+00 : f32
    %284 = vector.broadcast %cst_60 : f32 to vector<8x128xf32>
    %285 = arith.mulf %284, %217 : vector<8x128xf32>
    %286 = arith.mulf %285, %219 : vector<8x128xf32>
    %287 = arith.mulf %286, %220 : vector<8x128xf32>
    %288 = arith.mulf %217, %217 : vector<8x128xf32>
    %289 = arith.mulf %288, %212 : vector<8x128xf32>
    %290 = arith.addf %287, %289 : vector<8x128xf32>
    %291 = arith.mulf %219, %219 : vector<8x128xf32>
    %292 = arith.mulf %291, %213 : vector<8x128xf32>
    %293 = arith.addf %290, %292 : vector<8x128xf32>
    %294 = vector.broadcast %73 : f32 to vector<8x128xf32>
    %295 = arith.mulf %293, %294 : vector<8x128xf32>
    %cst_61 = arith.constant 0.000000e+00 : f32
    %296 = vector.broadcast %cst_61 : f32 to vector<8x128xf32>
    %297 = arith.subf %296, %295 : vector<8x128xf32>
    %298 = vector.broadcast %87 : vector<8x1xf32> to vector<8x128xf32>
    %299 = arith.mulf %298, %91 : vector<8x128xf32>
    %300 = arith.mulf %299, %215 : vector<8x128xf32>
    %301 = arith.mulf %300, %220 : vector<8x128xf32>
    %302 = vector.broadcast %87 : vector<8x1xf32> to vector<8x128xf32>
    %303 = arith.mulf %89, %302 : vector<8x128xf32>
    %304 = vector.broadcast %87 : vector<8x1xf32> to vector<8x128xf32>
    %305 = arith.mulf %303, %304 : vector<8x128xf32>
    %306 = arith.mulf %305, %212 : vector<8x128xf32>
    %307 = arith.addf %301, %306 : vector<8x128xf32>
    %308 = arith.mulf %91, %219 : vector<8x128xf32>
    %309 = arith.mulf %308, %213 : vector<8x128xf32>
    %310 = arith.addf %307, %309 : vector<8x128xf32>
    %311 = vector.broadcast %72 : f32 to vector<8x128xf32>
    %312 = arith.mulf %310, %311 : vector<8x128xf32>
    %cst_62 = arith.constant 0.000000e+00 : f32
    %313 = vector.broadcast %cst_62 : f32 to vector<8x128xf32>
    %314 = arith.subf %313, %312 : vector<8x128xf32>
    %315 = arith.mulf %222, %314 : vector<8x128xf32>
    %316 = arith.mulf %222, %283 : vector<8x128xf32>
    %317 = arith.subf %206, %231 : vector<8x128xf32>
    %cst_63 = arith.constant 2.000000e+00 : f32
    %318 = vector.broadcast %cst_63 : f32 to vector<8x128xf32>
    %319 = arith.mulf %318, %317 : vector<8x128xf32>
    %320 = arith.addf %205, %319 : vector<8x128xf32>
    %321 = arith.mulf %222, %270 : vector<8x128xf32>
    %322 = arith.mulf %222, %246 : vector<8x128xf32>
    %323 = arith.mulf %58, %231 : vector<8x128xf32>
    %324 = arith.mulf %62, %266 : vector<8x128xf32>
    %325 = arith.addf %323, %324 : vector<8x128xf32>
    %326 = arith.mulf %67, %315 : vector<8x128xf32>
    %327 = arith.addf %325, %326 : vector<8x128xf32>
    %328 = arith.mulf %69, %277 : vector<8x128xf32>
    %329 = arith.addf %327, %328 : vector<8x128xf32>
    %330 = arith.mulf %70, %297 : vector<8x128xf32>
    %331 = arith.addf %329, %330 : vector<8x128xf32>
    %332 = arith.mulf %58, %235 : vector<8x128xf32>
    %333 = arith.mulf %62, %206 : vector<8x128xf32>
    %334 = arith.addf %332, %333 : vector<8x128xf32>
    %335 = arith.mulf %67, %316 : vector<8x128xf32>
    %336 = arith.addf %334, %335 : vector<8x128xf32>
    %337 = arith.mulf %69, %279 : vector<8x128xf32>
    %338 = arith.addf %336, %337 : vector<8x128xf32>
    %339 = arith.mulf %70, %277 : vector<8x128xf32>
    %340 = arith.addf %338, %339 : vector<8x128xf32>
    %341 = arith.mulf %58, %246 : vector<8x128xf32>
    %342 = arith.mulf %62, %270 : vector<8x128xf32>
    %343 = arith.addf %341, %342 : vector<8x128xf32>
    %344 = arith.mulf %67, %320 : vector<8x128xf32>
    %345 = arith.addf %343, %344 : vector<8x128xf32>
    %346 = arith.mulf %69, %283 : vector<8x128xf32>
    %347 = arith.addf %345, %346 : vector<8x128xf32>
    %348 = arith.mulf %70, %314 : vector<8x128xf32>
    %349 = arith.addf %347, %348 : vector<8x128xf32>
    %350 = arith.mulf %58, %250 : vector<8x128xf32>
    %351 = arith.mulf %62, %272 : vector<8x128xf32>
    %352 = arith.addf %350, %351 : vector<8x128xf32>
    %353 = arith.mulf %67, %321 : vector<8x128xf32>
    %354 = arith.addf %352, %353 : vector<8x128xf32>
    %355 = arith.mulf %69, %206 : vector<8x128xf32>
    %356 = arith.addf %354, %355 : vector<8x128xf32>
    %357 = arith.mulf %70, %266 : vector<8x128xf32>
    %358 = arith.addf %356, %357 : vector<8x128xf32>
    %359 = arith.mulf %58, %261 : vector<8x128xf32>
    %360 = arith.mulf %62, %250 : vector<8x128xf32>
    %361 = arith.addf %359, %360 : vector<8x128xf32>
    %362 = arith.mulf %67, %322 : vector<8x128xf32>
    %363 = arith.addf %361, %362 : vector<8x128xf32>
    %364 = arith.mulf %69, %235 : vector<8x128xf32>
    %365 = arith.addf %363, %364 : vector<8x128xf32>
    %366 = arith.mulf %70, %231 : vector<8x128xf32>
    %367 = arith.addf %365, %366 : vector<8x128xf32>
    %368 = math.absf %331 : vector<8x128xf32>
    %369 = math.absf %340 : vector<8x128xf32>
    %370 = arith.maximumf %368, %369 : vector<8x128xf32>
    %371 = math.absf %349 : vector<8x128xf32>
    %372 = math.absf %358 : vector<8x128xf32>
    %373 = arith.maximumf %371, %372 : vector<8x128xf32>
    %374 = arith.maximumf %370, %373 : vector<8x128xf32>
    %375 = math.absf %367 : vector<8x128xf32>
    %376 = arith.maximumf %374, %375 : vector<8x128xf32>
    %cst_64 = arith.constant 1.000000e-30 : f32
    %377 = vector.broadcast %cst_64 : f32 to vector<8x128xf32>
    %378 = arith.cmpf olt, %376, %377 : vector<8x128xf32>
    %cst_65 = arith.constant 1.000000e+00 : f32
    %379 = vector.broadcast %cst_65 : f32 to vector<8x128xf32>
    %380 = arith.select %378, %379, %376 : vector<8x128xi1>, vector<8x128xf32>
    %381 = tpu.reciprocal %380 {approx = true} : vector<8x128xf32> -> vector<8x128xf32>
    %382 = arith.mulf %380, %381 : vector<8x128xf32>
    %cst_66 = arith.constant 2.000000e+00 : f32
    %383 = vector.broadcast %cst_66 : f32 to vector<8x128xf32>
    %384 = arith.subf %383, %382 : vector<8x128xf32>
    %385 = arith.mulf %381, %384 : vector<8x128xf32>
    %386 = arith.mulf %331, %385 : vector<8x128xf32>
    %387 = arith.mulf %340, %385 : vector<8x128xf32>
    %388 = arith.mulf %349, %385 : vector<8x128xf32>
    %389 = arith.mulf %358, %385 : vector<8x128xf32>
    %390 = arith.mulf %367, %385 : vector<8x128xf32>
    %c5 = arith.constant 5 : index
    %391 = memref.load %arg6[%c5] : memref<8xf32, #tpu.memory_space<smem>>
    %c5_67 = arith.constant 5 : index
    %392 = memref.load %arg8[%c5_67] : memref<8xf32, #tpu.memory_space<smem>>
    %c5_68 = arith.constant 5 : index
    %393 = memref.load %arg9[%c5_68] : memref<8xf32, #tpu.memory_space<smem>>
    %c5_69 = arith.constant 5 : index
    %394 = memref.load %arg12[%c5_69] : memref<8xf32, #tpu.memory_space<smem>>
    %c5_70 = arith.constant 5 : index
    %395 = memref.load %arg13[%c5_70] : memref<8xf32, #tpu.memory_space<smem>>
    %c5_71 = arith.constant 5 : index
    %396 = memref.load %arg10[%c5_71] : memref<8xf32, #tpu.memory_space<smem>>
    %397 = vector.broadcast %396 : f32 to vector<8x1xf32>
    %398 = arith.mulf %0, %397 : vector<8x1xf32>
    %c5_72 = arith.constant 5 : index
    %399 = memref.load %arg11[%c5_72] : memref<8xf32, #tpu.memory_space<smem>>
    %400 = vector.broadcast %399 : f32 to vector<8x1xf32>
    %401 = arith.mulf %0, %400 : vector<8x1xf32>
    %c5_73 = arith.constant 5 : index
    %402 = memref.load %arg7[%c5_73] : memref<8xf32, #tpu.memory_space<smem>>
    %403 = vector.broadcast %402 : f32 to vector<8x1xf32>
    %404 = arith.mulf %403, %1 : vector<8x1xf32>
    %cst_74 = arith.constant 2.000000e+00 : f32
    %405 = vector.broadcast %cst_74 : f32 to vector<8x1xf32>
    %406 = arith.mulf %405, %404 : vector<8x1xf32>
    %407 = arith.mulf %406, %404 : vector<8x1xf32>
    %408 = vector.broadcast %407 : vector<8x1xf32> to vector<8x128xf32>
    %409 = arith.mulf %408, %18 : vector<8x128xf32>
    %cst_75 = arith.constant 1.000000e+00 : f32
    %410 = vector.broadcast %cst_75 : f32 to vector<8x128xf32>
    %411 = arith.subf %409, %410 : vector<8x128xf32>
    %412 = vector.broadcast %398 : vector<8x1xf32> to vector<8x128xf32>
    %413 = arith.addf %17, %412 : vector<8x128xf32>
    %414 = vector.broadcast %398 : vector<8x1xf32> to vector<8x128xf32>
    %415 = arith.subf %17, %414 : vector<8x128xf32>
    %416 = math.absf %415 : vector<8x128xf32>
    %417 = arith.mulf %413, %416 : vector<8x128xf32>
    %418 = vector.broadcast %401 : vector<8x1xf32> to vector<8x128xf32>
    %419 = arith.addf %17, %418 : vector<8x128xf32>
    %420 = vector.broadcast %401 : vector<8x1xf32> to vector<8x128xf32>
    %421 = arith.subf %17, %420 : vector<8x128xf32>
    %422 = math.absf %421 : vector<8x128xf32>
    %423 = arith.mulf %419, %422 : vector<8x128xf32>
    %cst_76 = arith.constant 0.000000e+00 : f32
    %424 = vector.broadcast %cst_76 : f32 to vector<8x128xf32>
    %425 = arith.cmpf oeq, %417, %424 : vector<8x128xf32>
    %cst_77 = arith.constant 1.000000e+00 : f32
    %426 = vector.broadcast %cst_77 : f32 to vector<8x128xf32>
    %427 = arith.select %425, %426, %417 : vector<8x128xi1>, vector<8x128xf32>
    %428 = math.rsqrt %427 : vector<8x128xf32>
    %cst_78 = arith.constant 0.000000e+00 : f32
    %429 = vector.broadcast %cst_78 : f32 to vector<8x128xf32>
    %430 = arith.cmpf oeq, %423, %429 : vector<8x128xf32>
    %cst_79 = arith.constant 1.000000e+00 : f32
    %431 = vector.broadcast %cst_79 : f32 to vector<8x128xf32>
    %432 = arith.select %430, %431, %423 : vector<8x128xi1>, vector<8x128xf32>
    %433 = math.rsqrt %432 : vector<8x128xf32>
    %434 = arith.mulf %417, %428 : vector<8x128xf32>
    %435 = arith.mulf %423, %433 : vector<8x128xf32>
    %436 = vector.broadcast %391 : f32 to vector<8x128xf32>
    %437 = arith.mulf %434, %436 : vector<8x128xf32>
    %438 = vector.broadcast %391 : f32 to vector<8x128xf32>
    %439 = arith.mulf %435, %438 : vector<8x128xf32>
    %440 = math.sin %437 : vector<8x128xf32>
    %cst_80 = arith.constant 1.600000e+01 : f32
    %441 = vector.broadcast %cst_80 : f32 to vector<8x128xf32>
    %442 = arith.cmpf olt, %437, %441 : vector<8x128xf32>
    %cst_81 = arith.constant -2.000000e+00 : f32
    %443 = vector.broadcast %cst_81 : f32 to vector<8x128xf32>
    %444 = arith.mulf %443, %437 : vector<8x128xf32>
    %445 = math.exp %444 : vector<8x128xf32>
    %cst_82 = arith.constant 0.000000e+00 : f32
    %446 = vector.broadcast %cst_82 : f32 to vector<8x128xf32>
    %447 = arith.select %442, %445, %446 : vector<8x128xi1>, vector<8x128xf32>
    %cst_83 = arith.constant 1.000000e+00 : f32
    %448 = vector.broadcast %cst_83 : f32 to vector<8x128xf32>
    %449 = arith.subf %448, %447 : vector<8x128xf32>
    %cst_84 = arith.constant 5.000000e-01 : f32
    %450 = vector.broadcast %cst_84 : f32 to vector<8x128xf32>
    %451 = arith.mulf %449, %450 : vector<8x128xf32>
    %452 = vector.broadcast %398 : vector<8x1xf32> to vector<8x128xf32>
    %453 = arith.cmpf olt, %17, %452 : vector<8x128xf32>
    %454 = vector.broadcast %398 : vector<8x1xf32> to vector<8x128xf32>
    %455 = arith.cmpf oeq, %17, %454 : vector<8x128xf32>
    %456 = arith.ori %453, %455 : vector<8x128xi1>
    %cst_85 = arith.constant 0.000000e+00 : f32
    %457 = vector.broadcast %cst_85 : f32 to vector<8x128xf32>
    %458 = arith.select %456, %457, %437 : vector<8x128xi1>, vector<8x128xf32>
    %459 = math.cos %437 : vector<8x128xf32>
    %cst_86 = arith.constant 1.000000e+00 : f32
    %460 = vector.broadcast %cst_86 : f32 to vector<8x128xf32>
    %461 = arith.addf %460, %447 : vector<8x128xf32>
    %cst_87 = arith.constant 5.000000e-01 : f32
    %462 = vector.broadcast %cst_87 : f32 to vector<8x128xf32>
    %463 = arith.mulf %461, %462 : vector<8x128xf32>
    %cst_88 = arith.constant 1.000000e+00 : f32
    %464 = vector.broadcast %cst_88 : f32 to vector<8x128xf32>
    %465 = arith.select %455, %464, %463 : vector<8x128xi1>, vector<8x128xf32>
    %466 = arith.select %453, %459, %465 : vector<8x128xi1>, vector<8x128xf32>
    %467 = arith.mulf %440, %428 : vector<8x128xf32>
    %468 = arith.mulf %451, %428 : vector<8x128xf32>
    %469 = vector.broadcast %391 : f32 to vector<8x128xf32>
    %470 = arith.select %455, %469, %468 : vector<8x128xi1>, vector<8x128xf32>
    %471 = arith.select %453, %467, %470 : vector<8x128xi1>, vector<8x128xf32>
    %cst_89 = arith.constant 0.000000e+00 : f32
    %472 = vector.broadcast %cst_89 : f32 to vector<8x128xf32>
    %473 = arith.subf %472, %434 : vector<8x128xf32>
    %474 = arith.mulf %473, %440 : vector<8x128xf32>
    %475 = arith.mulf %434, %451 : vector<8x128xf32>
    %cst_90 = arith.constant 0.000000e+00 : f32
    %476 = vector.broadcast %cst_90 : f32 to vector<8x128xf32>
    %477 = arith.select %455, %476, %475 : vector<8x128xi1>, vector<8x128xf32>
    %478 = arith.select %453, %474, %477 : vector<8x128xi1>, vector<8x128xf32>
    %479 = math.sin %439 : vector<8x128xf32>
    %cst_91 = arith.constant 1.600000e+01 : f32
    %480 = vector.broadcast %cst_91 : f32 to vector<8x128xf32>
    %481 = arith.cmpf olt, %439, %480 : vector<8x128xf32>
    %cst_92 = arith.constant -2.000000e+00 : f32
    %482 = vector.broadcast %cst_92 : f32 to vector<8x128xf32>
    %483 = arith.mulf %482, %439 : vector<8x128xf32>
    %484 = math.exp %483 : vector<8x128xf32>
    %cst_93 = arith.constant 0.000000e+00 : f32
    %485 = vector.broadcast %cst_93 : f32 to vector<8x128xf32>
    %486 = arith.select %481, %484, %485 : vector<8x128xi1>, vector<8x128xf32>
    %cst_94 = arith.constant 1.000000e+00 : f32
    %487 = vector.broadcast %cst_94 : f32 to vector<8x128xf32>
    %488 = arith.subf %487, %486 : vector<8x128xf32>
    %cst_95 = arith.constant 5.000000e-01 : f32
    %489 = vector.broadcast %cst_95 : f32 to vector<8x128xf32>
    %490 = arith.mulf %488, %489 : vector<8x128xf32>
    %491 = vector.broadcast %401 : vector<8x1xf32> to vector<8x128xf32>
    %492 = arith.cmpf olt, %17, %491 : vector<8x128xf32>
    %493 = vector.broadcast %401 : vector<8x1xf32> to vector<8x128xf32>
    %494 = arith.cmpf oeq, %17, %493 : vector<8x128xf32>
    %495 = arith.ori %492, %494 : vector<8x128xi1>
    %cst_96 = arith.constant 0.000000e+00 : f32
    %496 = vector.broadcast %cst_96 : f32 to vector<8x128xf32>
    %497 = arith.select %495, %496, %439 : vector<8x128xi1>, vector<8x128xf32>
    %498 = math.cos %439 : vector<8x128xf32>
    %cst_97 = arith.constant 1.000000e+00 : f32
    %499 = vector.broadcast %cst_97 : f32 to vector<8x128xf32>
    %500 = arith.addf %499, %486 : vector<8x128xf32>
    %cst_98 = arith.constant 5.000000e-01 : f32
    %501 = vector.broadcast %cst_98 : f32 to vector<8x128xf32>
    %502 = arith.mulf %500, %501 : vector<8x128xf32>
    %cst_99 = arith.constant 1.000000e+00 : f32
    %503 = vector.broadcast %cst_99 : f32 to vector<8x128xf32>
    %504 = arith.select %494, %503, %502 : vector<8x128xi1>, vector<8x128xf32>
    %505 = arith.select %492, %498, %504 : vector<8x128xi1>, vector<8x128xf32>
    %506 = arith.mulf %479, %433 : vector<8x128xf32>
    %507 = arith.mulf %490, %433 : vector<8x128xf32>
    %508 = vector.broadcast %391 : f32 to vector<8x128xf32>
    %509 = arith.select %494, %508, %507 : vector<8x128xi1>, vector<8x128xf32>
    %510 = arith.select %492, %506, %509 : vector<8x128xi1>, vector<8x128xf32>
    %cst_100 = arith.constant 0.000000e+00 : f32
    %511 = vector.broadcast %cst_100 : f32 to vector<8x128xf32>
    %512 = arith.subf %511, %435 : vector<8x128xf32>
    %513 = arith.mulf %512, %479 : vector<8x128xf32>
    %514 = arith.mulf %435, %490 : vector<8x128xf32>
    %cst_101 = arith.constant 0.000000e+00 : f32
    %515 = vector.broadcast %cst_101 : f32 to vector<8x128xf32>
    %516 = arith.select %494, %515, %514 : vector<8x128xi1>, vector<8x128xf32>
    %517 = arith.select %492, %513, %516 : vector<8x128xi1>, vector<8x128xf32>
    %518 = arith.addf %458, %497 : vector<8x128xf32>
    %cst_102 = arith.constant 6.000000e+01 : f32
    %519 = vector.broadcast %cst_102 : f32 to vector<8x128xf32>
    %520 = arith.cmpf olt, %518, %519 : vector<8x128xf32>
    %cst_103 = arith.constant 0.000000e+00 : f32
    %521 = vector.broadcast %cst_103 : f32 to vector<8x128xf32>
    %522 = arith.subf %521, %518 : vector<8x128xf32>
    %523 = math.exp %522 : vector<8x128xf32>
    %cst_104 = arith.constant 0.000000e+00 : f32
    %524 = vector.broadcast %cst_104 : f32 to vector<8x128xf32>
    %525 = arith.select %520, %523, %524 : vector<8x128xi1>, vector<8x128xf32>
    %526 = arith.mulf %466, %505 : vector<8x128xf32>
    %527 = arith.mulf %466, %510 : vector<8x128xf32>
    %528 = arith.mulf %466, %517 : vector<8x128xf32>
    %529 = arith.mulf %505, %471 : vector<8x128xf32>
    %530 = arith.mulf %505, %478 : vector<8x128xf32>
    %531 = arith.mulf %478, %510 : vector<8x128xf32>
    %532 = arith.mulf %478, %517 : vector<8x128xf32>
    %533 = arith.mulf %471, %510 : vector<8x128xf32>
    %534 = arith.mulf %471, %517 : vector<8x128xf32>
    %535 = arith.addf %409, %411 : vector<8x128xf32>
    %536 = vector.broadcast %407 : vector<8x1xf32> to vector<8x128xf32>
    %537 = arith.mulf %409, %536 : vector<8x128xf32>
    %538 = arith.mulf %409, %411 : vector<8x128xf32>
    %539 = arith.mulf %411, %411 : vector<8x128xf32>
    %540 = arith.subf %525, %526 : vector<8x128xf32>
    %cst_105 = arith.constant -2.000000e+00 : f32
    %541 = vector.broadcast %cst_105 : f32 to vector<8x128xf32>
    %542 = arith.mulf %541, %18 : vector<8x128xf32>
    %cst_106 = arith.constant 2.000000e+00 : f32
    %543 = vector.broadcast %cst_106 : f32 to vector<8x128xf32>
    %544 = arith.mulf %543, %538 : vector<8x128xf32>
    %545 = arith.mulf %544, %540 : vector<8x128xf32>
    %546 = arith.subf %526, %545 : vector<8x128xf32>
    %547 = arith.mulf %537, %532 : vector<8x128xf32>
    %548 = arith.subf %546, %547 : vector<8x128xf32>
    %549 = arith.mulf %18, %539 : vector<8x128xf32>
    %550 = arith.mulf %549, %533 : vector<8x128xf32>
    %551 = arith.subf %548, %550 : vector<8x128xf32>
    %552 = arith.mulf %18, %527 : vector<8x128xf32>
    %553 = arith.subf %552, %530 : vector<8x128xf32>
    %554 = vector.broadcast %394 : f32 to vector<8x128xf32>
    %555 = arith.mulf %553, %554 : vector<8x128xf32>
    %556 = arith.mulf %535, %540 : vector<8x128xf32>
    %557 = vector.broadcast %407 : vector<8x1xf32> to vector<8x128xf32>
    %558 = arith.mulf %557, %532 : vector<8x128xf32>
    %559 = arith.addf %556, %558 : vector<8x128xf32>
    %560 = arith.mulf %18, %411 : vector<8x128xf32>
    %561 = arith.mulf %560, %533 : vector<8x128xf32>
    %562 = arith.addf %559, %561 : vector<8x128xf32>
    %563 = vector.broadcast %394 : f32 to vector<8x128xf32>
    %564 = arith.mulf %562, %563 : vector<8x128xf32>
    %cst_107 = arith.constant 0.000000e+00 : f32
    %565 = vector.broadcast %cst_107 : f32 to vector<8x128xf32>
    %566 = arith.subf %565, %564 : vector<8x128xf32>
    %567 = arith.mulf %18, %529 : vector<8x128xf32>
    %568 = arith.subf %528, %567 : vector<8x128xf32>
    %569 = vector.broadcast %394 : f32 to vector<8x128xf32>
    %570 = arith.mulf %568, %569 : vector<8x128xf32>
    %cst_108 = arith.constant 2.000000e+00 : f32
    %571 = vector.broadcast %cst_108 : f32 to vector<8x128xf32>
    %572 = arith.mulf %571, %18 : vector<8x128xf32>
    %573 = arith.mulf %572, %540 : vector<8x128xf32>
    %574 = arith.addf %573, %532 : vector<8x128xf32>
    %575 = arith.mulf %18, %18 : vector<8x128xf32>
    %576 = arith.mulf %575, %533 : vector<8x128xf32>
    %577 = arith.addf %574, %576 : vector<8x128xf32>
    %578 = vector.broadcast %395 : f32 to vector<8x128xf32>
    %579 = arith.mulf %577, %578 : vector<8x128xf32>
    %cst_109 = arith.constant 0.000000e+00 : f32
    %580 = vector.broadcast %cst_109 : f32 to vector<8x128xf32>
    %581 = arith.subf %580, %579 : vector<8x128xf32>
    %582 = arith.mulf %537, %528 : vector<8x128xf32>
    %583 = arith.mulf %539, %529 : vector<8x128xf32>
    %584 = arith.subf %582, %583 : vector<8x128xf32>
    %585 = vector.broadcast %392 : f32 to vector<8x128xf32>
    %586 = arith.mulf %584, %585 : vector<8x128xf32>
    %587 = vector.broadcast %407 : vector<8x1xf32> to vector<8x128xf32>
    %588 = arith.mulf %587, %528 : vector<8x128xf32>
    %589 = arith.mulf %411, %529 : vector<8x128xf32>
    %590 = arith.subf %588, %589 : vector<8x128xf32>
    %cst_110 = arith.constant 0.000000e+00 : f32
    %591 = vector.broadcast %cst_110 : f32 to vector<8x128xf32>
    %592 = arith.subf %591, %534 : vector<8x128xf32>
    %593 = arith.mulf %539, %527 : vector<8x128xf32>
    %594 = arith.mulf %537, %530 : vector<8x128xf32>
    %595 = arith.subf %593, %594 : vector<8x128xf32>
    %596 = vector.broadcast %392 : f32 to vector<8x128xf32>
    %597 = arith.mulf %595, %596 : vector<8x128xf32>
    %cst_111 = arith.constant 0.000000e+00 : f32
    %598 = vector.broadcast %cst_111 : f32 to vector<8x128xf32>
    %599 = arith.subf %598, %531 : vector<8x128xf32>
    %600 = arith.mulf %411, %527 : vector<8x128xf32>
    %601 = vector.broadcast %407 : vector<8x1xf32> to vector<8x128xf32>
    %602 = arith.mulf %601, %530 : vector<8x128xf32>
    %603 = arith.subf %600, %602 : vector<8x128xf32>
    %cst_112 = arith.constant 2.000000e+00 : f32
    %604 = vector.broadcast %cst_112 : f32 to vector<8x128xf32>
    %605 = arith.mulf %604, %537 : vector<8x128xf32>
    %606 = arith.mulf %605, %539 : vector<8x128xf32>
    %607 = arith.mulf %606, %540 : vector<8x128xf32>
    %608 = arith.mulf %537, %537 : vector<8x128xf32>
    %609 = arith.mulf %608, %532 : vector<8x128xf32>
    %610 = arith.addf %607, %609 : vector<8x128xf32>
    %611 = arith.mulf %539, %539 : vector<8x128xf32>
    %612 = arith.mulf %611, %533 : vector<8x128xf32>
    %613 = arith.addf %610, %612 : vector<8x128xf32>
    %614 = vector.broadcast %393 : f32 to vector<8x128xf32>
    %615 = arith.mulf %613, %614 : vector<8x128xf32>
    %cst_113 = arith.constant 0.000000e+00 : f32
    %616 = vector.broadcast %cst_113 : f32 to vector<8x128xf32>
    %617 = arith.subf %616, %615 : vector<8x128xf32>
    %618 = vector.broadcast %407 : vector<8x1xf32> to vector<8x128xf32>
    %619 = arith.mulf %618, %411 : vector<8x128xf32>
    %620 = arith.mulf %619, %535 : vector<8x128xf32>
    %621 = arith.mulf %620, %540 : vector<8x128xf32>
    %622 = vector.broadcast %407 : vector<8x1xf32> to vector<8x128xf32>
    %623 = arith.mulf %409, %622 : vector<8x128xf32>
    %624 = vector.broadcast %407 : vector<8x1xf32> to vector<8x128xf32>
    %625 = arith.mulf %623, %624 : vector<8x128xf32>
    %626 = arith.mulf %625, %532 : vector<8x128xf32>
    %627 = arith.addf %621, %626 : vector<8x128xf32>
    %628 = arith.mulf %411, %539 : vector<8x128xf32>
    %629 = arith.mulf %628, %533 : vector<8x128xf32>
    %630 = arith.addf %627, %629 : vector<8x128xf32>
    %631 = vector.broadcast %392 : f32 to vector<8x128xf32>
    %632 = arith.mulf %630, %631 : vector<8x128xf32>
    %cst_114 = arith.constant 0.000000e+00 : f32
    %633 = vector.broadcast %cst_114 : f32 to vector<8x128xf32>
    %634 = arith.subf %633, %632 : vector<8x128xf32>
    %635 = arith.mulf %542, %634 : vector<8x128xf32>
    %636 = arith.mulf %542, %603 : vector<8x128xf32>
    %637 = arith.subf %526, %551 : vector<8x128xf32>
    %cst_115 = arith.constant 2.000000e+00 : f32
    %638 = vector.broadcast %cst_115 : f32 to vector<8x128xf32>
    %639 = arith.mulf %638, %637 : vector<8x128xf32>
    %640 = arith.addf %525, %639 : vector<8x128xf32>
    %641 = arith.mulf %542, %590 : vector<8x128xf32>
    %642 = arith.mulf %542, %566 : vector<8x128xf32>
    %643 = arith.mulf %386, %551 : vector<8x128xf32>
    %644 = arith.mulf %387, %586 : vector<8x128xf32>
    %645 = arith.addf %643, %644 : vector<8x128xf32>
    %646 = arith.mulf %388, %635 : vector<8x128xf32>
    %647 = arith.addf %645, %646 : vector<8x128xf32>
    %648 = arith.mulf %389, %597 : vector<8x128xf32>
    %649 = arith.addf %647, %648 : vector<8x128xf32>
    %650 = arith.mulf %390, %617 : vector<8x128xf32>
    %651 = arith.addf %649, %650 : vector<8x128xf32>
    %652 = arith.mulf %386, %555 : vector<8x128xf32>
    %653 = arith.mulf %387, %526 : vector<8x128xf32>
    %654 = arith.addf %652, %653 : vector<8x128xf32>
    %655 = arith.mulf %388, %636 : vector<8x128xf32>
    %656 = arith.addf %654, %655 : vector<8x128xf32>
    %657 = arith.mulf %389, %599 : vector<8x128xf32>
    %658 = arith.addf %656, %657 : vector<8x128xf32>
    %659 = arith.mulf %390, %597 : vector<8x128xf32>
    %660 = arith.addf %658, %659 : vector<8x128xf32>
    %661 = arith.mulf %386, %566 : vector<8x128xf32>
    %662 = arith.mulf %387, %590 : vector<8x128xf32>
    %663 = arith.addf %661, %662 : vector<8x128xf32>
    %664 = arith.mulf %388, %640 : vector<8x128xf32>
    %665 = arith.addf %663, %664 : vector<8x128xf32>
    %666 = arith.mulf %389, %603 : vector<8x128xf32>
    %667 = arith.addf %665, %666 : vector<8x128xf32>
    %668 = arith.mulf %390, %634 : vector<8x128xf32>
    %669 = arith.addf %667, %668 : vector<8x128xf32>
    %670 = arith.mulf %386, %570 : vector<8x128xf32>
    %671 = arith.mulf %387, %592 : vector<8x128xf32>
    %672 = arith.addf %670, %671 : vector<8x128xf32>
    %673 = arith.mulf %388, %641 : vector<8x128xf32>
    %674 = arith.addf %672, %673 : vector<8x128xf32>
    %675 = arith.mulf %389, %526 : vector<8x128xf32>
    %676 = arith.addf %674, %675 : vector<8x128xf32>
    %677 = arith.mulf %390, %586 : vector<8x128xf32>
    %678 = arith.addf %676, %677 : vector<8x128xf32>
    %679 = arith.mulf %386, %581 : vector<8x128xf32>
    %680 = arith.mulf %387, %570 : vector<8x128xf32>
    %681 = arith.addf %679, %680 : vector<8x128xf32>
    %682 = arith.mulf %388, %642 : vector<8x128xf32>
    %683 = arith.addf %681, %682 : vector<8x128xf32>
    %684 = arith.mulf %389, %555 : vector<8x128xf32>
    %685 = arith.addf %683, %684 : vector<8x128xf32>
    %686 = arith.mulf %390, %551 : vector<8x128xf32>
    %687 = arith.addf %685, %686 : vector<8x128xf32>
    %688 = math.absf %651 : vector<8x128xf32>
    %689 = math.absf %660 : vector<8x128xf32>
    %690 = arith.maximumf %688, %689 : vector<8x128xf32>
    %691 = math.absf %669 : vector<8x128xf32>
    %692 = math.absf %678 : vector<8x128xf32>
    %693 = arith.maximumf %691, %692 : vector<8x128xf32>
    %694 = arith.maximumf %690, %693 : vector<8x128xf32>
    %695 = math.absf %687 : vector<8x128xf32>
    %696 = arith.maximumf %694, %695 : vector<8x128xf32>
    %cst_116 = arith.constant 1.000000e-30 : f32
    %697 = vector.broadcast %cst_116 : f32 to vector<8x128xf32>
    %698 = arith.cmpf olt, %696, %697 : vector<8x128xf32>
    %cst_117 = arith.constant 1.000000e+00 : f32
    %699 = vector.broadcast %cst_117 : f32 to vector<8x128xf32>
    %700 = arith.select %698, %699, %696 : vector<8x128xi1>, vector<8x128xf32>
    %701 = tpu.reciprocal %700 {approx = true} : vector<8x128xf32> -> vector<8x128xf32>
    %702 = arith.mulf %700, %701 : vector<8x128xf32>
    %cst_118 = arith.constant 2.000000e+00 : f32
    %703 = vector.broadcast %cst_118 : f32 to vector<8x128xf32>
    %704 = arith.subf %703, %702 : vector<8x128xf32>
    %705 = arith.mulf %701, %704 : vector<8x128xf32>
    %706 = arith.mulf %651, %705 : vector<8x128xf32>
    %707 = arith.mulf %660, %705 : vector<8x128xf32>
    %708 = arith.mulf %669, %705 : vector<8x128xf32>
    %709 = arith.mulf %678, %705 : vector<8x128xf32>
    %710 = arith.mulf %687, %705 : vector<8x128xf32>
    %c4 = arith.constant 4 : index
    %711 = memref.load %arg6[%c4] : memref<8xf32, #tpu.memory_space<smem>>
    %c4_119 = arith.constant 4 : index
    %712 = memref.load %arg8[%c4_119] : memref<8xf32, #tpu.memory_space<smem>>
    %c4_120 = arith.constant 4 : index
    %713 = memref.load %arg9[%c4_120] : memref<8xf32, #tpu.memory_space<smem>>
    %c4_121 = arith.constant 4 : index
    %714 = memref.load %arg12[%c4_121] : memref<8xf32, #tpu.memory_space<smem>>
    %c4_122 = arith.constant 4 : index
    %715 = memref.load %arg13[%c4_122] : memref<8xf32, #tpu.memory_space<smem>>
    %c4_123 = arith.constant 4 : index
    %716 = memref.load %arg10[%c4_123] : memref<8xf32, #tpu.memory_space<smem>>
    %717 = vector.broadcast %716 : f32 to vector<8x1xf32>
    %718 = arith.mulf %0, %717 : vector<8x1xf32>
    %c4_124 = arith.constant 4 : index
    %719 = memref.load %arg11[%c4_124] : memref<8xf32, #tpu.memory_space<smem>>
    %720 = vector.broadcast %719 : f32 to vector<8x1xf32>
    %721 = arith.mulf %0, %720 : vector<8x1xf32>
    %c4_125 = arith.constant 4 : index
    %722 = memref.load %arg7[%c4_125] : memref<8xf32, #tpu.memory_space<smem>>
    %723 = vector.broadcast %722 : f32 to vector<8x1xf32>
    %724 = arith.mulf %723, %1 : vector<8x1xf32>
    %cst_126 = arith.constant 2.000000e+00 : f32
    %725 = vector.broadcast %cst_126 : f32 to vector<8x1xf32>
    %726 = arith.mulf %725, %724 : vector<8x1xf32>
    %727 = arith.mulf %726, %724 : vector<8x1xf32>
    %728 = vector.broadcast %727 : vector<8x1xf32> to vector<8x128xf32>
    %729 = arith.mulf %728, %18 : vector<8x128xf32>
    %cst_127 = arith.constant 1.000000e+00 : f32
    %730 = vector.broadcast %cst_127 : f32 to vector<8x128xf32>
    %731 = arith.subf %729, %730 : vector<8x128xf32>
    %732 = vector.broadcast %718 : vector<8x1xf32> to vector<8x128xf32>
    %733 = arith.addf %17, %732 : vector<8x128xf32>
    %734 = vector.broadcast %718 : vector<8x1xf32> to vector<8x128xf32>
    %735 = arith.subf %17, %734 : vector<8x128xf32>
    %736 = math.absf %735 : vector<8x128xf32>
    %737 = arith.mulf %733, %736 : vector<8x128xf32>
    %738 = vector.broadcast %721 : vector<8x1xf32> to vector<8x128xf32>
    %739 = arith.addf %17, %738 : vector<8x128xf32>
    %740 = vector.broadcast %721 : vector<8x1xf32> to vector<8x128xf32>
    %741 = arith.subf %17, %740 : vector<8x128xf32>
    %742 = math.absf %741 : vector<8x128xf32>
    %743 = arith.mulf %739, %742 : vector<8x128xf32>
    %cst_128 = arith.constant 0.000000e+00 : f32
    %744 = vector.broadcast %cst_128 : f32 to vector<8x128xf32>
    %745 = arith.cmpf oeq, %737, %744 : vector<8x128xf32>
    %cst_129 = arith.constant 1.000000e+00 : f32
    %746 = vector.broadcast %cst_129 : f32 to vector<8x128xf32>
    %747 = arith.select %745, %746, %737 : vector<8x128xi1>, vector<8x128xf32>
    %748 = math.rsqrt %747 : vector<8x128xf32>
    %cst_130 = arith.constant 0.000000e+00 : f32
    %749 = vector.broadcast %cst_130 : f32 to vector<8x128xf32>
    %750 = arith.cmpf oeq, %743, %749 : vector<8x128xf32>
    %cst_131 = arith.constant 1.000000e+00 : f32
    %751 = vector.broadcast %cst_131 : f32 to vector<8x128xf32>
    %752 = arith.select %750, %751, %743 : vector<8x128xi1>, vector<8x128xf32>
    %753 = math.rsqrt %752 : vector<8x128xf32>
    %754 = arith.mulf %737, %748 : vector<8x128xf32>
    %755 = arith.mulf %743, %753 : vector<8x128xf32>
    %756 = vector.broadcast %711 : f32 to vector<8x128xf32>
    %757 = arith.mulf %754, %756 : vector<8x128xf32>
    %758 = vector.broadcast %711 : f32 to vector<8x128xf32>
    %759 = arith.mulf %755, %758 : vector<8x128xf32>
    %760 = math.sin %757 : vector<8x128xf32>
    %cst_132 = arith.constant 1.600000e+01 : f32
    %761 = vector.broadcast %cst_132 : f32 to vector<8x128xf32>
    %762 = arith.cmpf olt, %757, %761 : vector<8x128xf32>
    %cst_133 = arith.constant -2.000000e+00 : f32
    %763 = vector.broadcast %cst_133 : f32 to vector<8x128xf32>
    %764 = arith.mulf %763, %757 : vector<8x128xf32>
    %765 = math.exp %764 : vector<8x128xf32>
    %cst_134 = arith.constant 0.000000e+00 : f32
    %766 = vector.broadcast %cst_134 : f32 to vector<8x128xf32>
    %767 = arith.select %762, %765, %766 : vector<8x128xi1>, vector<8x128xf32>
    %cst_135 = arith.constant 1.000000e+00 : f32
    %768 = vector.broadcast %cst_135 : f32 to vector<8x128xf32>
    %769 = arith.subf %768, %767 : vector<8x128xf32>
    %cst_136 = arith.constant 5.000000e-01 : f32
    %770 = vector.broadcast %cst_136 : f32 to vector<8x128xf32>
    %771 = arith.mulf %769, %770 : vector<8x128xf32>
    %772 = vector.broadcast %718 : vector<8x1xf32> to vector<8x128xf32>
    %773 = arith.cmpf olt, %17, %772 : vector<8x128xf32>
    %774 = vector.broadcast %718 : vector<8x1xf32> to vector<8x128xf32>
    %775 = arith.cmpf oeq, %17, %774 : vector<8x128xf32>
    %776 = arith.ori %773, %775 : vector<8x128xi1>
    %cst_137 = arith.constant 0.000000e+00 : f32
    %777 = vector.broadcast %cst_137 : f32 to vector<8x128xf32>
    %778 = arith.select %776, %777, %757 : vector<8x128xi1>, vector<8x128xf32>
    %779 = math.cos %757 : vector<8x128xf32>
    %cst_138 = arith.constant 1.000000e+00 : f32
    %780 = vector.broadcast %cst_138 : f32 to vector<8x128xf32>
    %781 = arith.addf %780, %767 : vector<8x128xf32>
    %cst_139 = arith.constant 5.000000e-01 : f32
    %782 = vector.broadcast %cst_139 : f32 to vector<8x128xf32>
    %783 = arith.mulf %781, %782 : vector<8x128xf32>
    %cst_140 = arith.constant 1.000000e+00 : f32
    %784 = vector.broadcast %cst_140 : f32 to vector<8x128xf32>
    %785 = arith.select %775, %784, %783 : vector<8x128xi1>, vector<8x128xf32>
    %786 = arith.select %773, %779, %785 : vector<8x128xi1>, vector<8x128xf32>
    %787 = arith.mulf %760, %748 : vector<8x128xf32>
    %788 = arith.mulf %771, %748 : vector<8x128xf32>
    %789 = vector.broadcast %711 : f32 to vector<8x128xf32>
    %790 = arith.select %775, %789, %788 : vector<8x128xi1>, vector<8x128xf32>
    %791 = arith.select %773, %787, %790 : vector<8x128xi1>, vector<8x128xf32>
    %cst_141 = arith.constant 0.000000e+00 : f32
    %792 = vector.broadcast %cst_141 : f32 to vector<8x128xf32>
    %793 = arith.subf %792, %754 : vector<8x128xf32>
    %794 = arith.mulf %793, %760 : vector<8x128xf32>
    %795 = arith.mulf %754, %771 : vector<8x128xf32>
    %cst_142 = arith.constant 0.000000e+00 : f32
    %796 = vector.broadcast %cst_142 : f32 to vector<8x128xf32>
    %797 = arith.select %775, %796, %795 : vector<8x128xi1>, vector<8x128xf32>
    %798 = arith.select %773, %794, %797 : vector<8x128xi1>, vector<8x128xf32>
    %799 = math.sin %759 : vector<8x128xf32>
    %cst_143 = arith.constant 1.600000e+01 : f32
    %800 = vector.broadcast %cst_143 : f32 to vector<8x128xf32>
    %801 = arith.cmpf olt, %759, %800 : vector<8x128xf32>
    %cst_144 = arith.constant -2.000000e+00 : f32
    %802 = vector.broadcast %cst_144 : f32 to vector<8x128xf32>
    %803 = arith.mulf %802, %759 : vector<8x128xf32>
    %804 = math.exp %803 : vector<8x128xf32>
    %cst_145 = arith.constant 0.000000e+00 : f32
    %805 = vector.broadcast %cst_145 : f32 to vector<8x128xf32>
    %806 = arith.select %801, %804, %805 : vector<8x128xi1>, vector<8x128xf32>
    %cst_146 = arith.constant 1.000000e+00 : f32
    %807 = vector.broadcast %cst_146 : f32 to vector<8x128xf32>
    %808 = arith.subf %807, %806 : vector<8x128xf32>
    %cst_147 = arith.constant 5.000000e-01 : f32
    %809 = vector.broadcast %cst_147 : f32 to vector<8x128xf32>
    %810 = arith.mulf %808, %809 : vector<8x128xf32>
    %811 = vector.broadcast %721 : vector<8x1xf32> to vector<8x128xf32>
    %812 = arith.cmpf olt, %17, %811 : vector<8x128xf32>
    %813 = vector.broadcast %721 : vector<8x1xf32> to vector<8x128xf32>
    %814 = arith.cmpf oeq, %17, %813 : vector<8x128xf32>
    %815 = arith.ori %812, %814 : vector<8x128xi1>
    %cst_148 = arith.constant 0.000000e+00 : f32
    %816 = vector.broadcast %cst_148 : f32 to vector<8x128xf32>
    %817 = arith.select %815, %816, %759 : vector<8x128xi1>, vector<8x128xf32>
    %818 = math.cos %759 : vector<8x128xf32>
    %cst_149 = arith.constant 1.000000e+00 : f32
    %819 = vector.broadcast %cst_149 : f32 to vector<8x128xf32>
    %820 = arith.addf %819, %806 : vector<8x128xf32>
    %cst_150 = arith.constant 5.000000e-01 : f32
    %821 = vector.broadcast %cst_150 : f32 to vector<8x128xf32>
    %822 = arith.mulf %820, %821 : vector<8x128xf32>
    %cst_151 = arith.constant 1.000000e+00 : f32
    %823 = vector.broadcast %cst_151 : f32 to vector<8x128xf32>
    %824 = arith.select %814, %823, %822 : vector<8x128xi1>, vector<8x128xf32>
    %825 = arith.select %812, %818, %824 : vector<8x128xi1>, vector<8x128xf32>
    %826 = arith.mulf %799, %753 : vector<8x128xf32>
    %827 = arith.mulf %810, %753 : vector<8x128xf32>
    %828 = vector.broadcast %711 : f32 to vector<8x128xf32>
    %829 = arith.select %814, %828, %827 : vector<8x128xi1>, vector<8x128xf32>
    %830 = arith.select %812, %826, %829 : vector<8x128xi1>, vector<8x128xf32>
    %cst_152 = arith.constant 0.000000e+00 : f32
    %831 = vector.broadcast %cst_152 : f32 to vector<8x128xf32>
    %832 = arith.subf %831, %755 : vector<8x128xf32>
    %833 = arith.mulf %832, %799 : vector<8x128xf32>
    %834 = arith.mulf %755, %810 : vector<8x128xf32>
    %cst_153 = arith.constant 0.000000e+00 : f32
    %835 = vector.broadcast %cst_153 : f32 to vector<8x128xf32>
    %836 = arith.select %814, %835, %834 : vector<8x128xi1>, vector<8x128xf32>
    %837 = arith.select %812, %833, %836 : vector<8x128xi1>, vector<8x128xf32>
    %838 = arith.addf %778, %817 : vector<8x128xf32>
    %cst_154 = arith.constant 6.000000e+01 : f32
    %839 = vector.broadcast %cst_154 : f32 to vector<8x128xf32>
    %840 = arith.cmpf olt, %838, %839 : vector<8x128xf32>
    %cst_155 = arith.constant 0.000000e+00 : f32
    %841 = vector.broadcast %cst_155 : f32 to vector<8x128xf32>
    %842 = arith.subf %841, %838 : vector<8x128xf32>
    %843 = math.exp %842 : vector<8x128xf32>
    %cst_156 = arith.constant 0.000000e+00 : f32
    %844 = vector.broadcast %cst_156 : f32 to vector<8x128xf32>
    %845 = arith.select %840, %843, %844 : vector<8x128xi1>, vector<8x128xf32>
    %846 = arith.mulf %786, %825 : vector<8x128xf32>
    %847 = arith.mulf %786, %830 : vector<8x128xf32>
    %848 = arith.mulf %786, %837 : vector<8x128xf32>
    %849 = arith.mulf %825, %791 : vector<8x128xf32>
    %850 = arith.mulf %825, %798 : vector<8x128xf32>
    %851 = arith.mulf %798, %830 : vector<8x128xf32>
    %852 = arith.mulf %798, %837 : vector<8x128xf32>
    %853 = arith.mulf %791, %830 : vector<8x128xf32>
    %854 = arith.mulf %791, %837 : vector<8x128xf32>
    %855 = arith.addf %729, %731 : vector<8x128xf32>
    %856 = vector.broadcast %727 : vector<8x1xf32> to vector<8x128xf32>
    %857 = arith.mulf %729, %856 : vector<8x128xf32>
    %858 = arith.mulf %729, %731 : vector<8x128xf32>
    %859 = arith.mulf %731, %731 : vector<8x128xf32>
    %860 = arith.subf %845, %846 : vector<8x128xf32>
    %cst_157 = arith.constant -2.000000e+00 : f32
    %861 = vector.broadcast %cst_157 : f32 to vector<8x128xf32>
    %862 = arith.mulf %861, %18 : vector<8x128xf32>
    %cst_158 = arith.constant 2.000000e+00 : f32
    %863 = vector.broadcast %cst_158 : f32 to vector<8x128xf32>
    %864 = arith.mulf %863, %858 : vector<8x128xf32>
    %865 = arith.mulf %864, %860 : vector<8x128xf32>
    %866 = arith.subf %846, %865 : vector<8x128xf32>
    %867 = arith.mulf %857, %852 : vector<8x128xf32>
    %868 = arith.subf %866, %867 : vector<8x128xf32>
    %869 = arith.mulf %18, %859 : vector<8x128xf32>
    %870 = arith.mulf %869, %853 : vector<8x128xf32>
    %871 = arith.subf %868, %870 : vector<8x128xf32>
    %872 = arith.mulf %18, %847 : vector<8x128xf32>
    %873 = arith.subf %872, %850 : vector<8x128xf32>
    %874 = vector.broadcast %714 : f32 to vector<8x128xf32>
    %875 = arith.mulf %873, %874 : vector<8x128xf32>
    %876 = arith.mulf %855, %860 : vector<8x128xf32>
    %877 = vector.broadcast %727 : vector<8x1xf32> to vector<8x128xf32>
    %878 = arith.mulf %877, %852 : vector<8x128xf32>
    %879 = arith.addf %876, %878 : vector<8x128xf32>
    %880 = arith.mulf %18, %731 : vector<8x128xf32>
    %881 = arith.mulf %880, %853 : vector<8x128xf32>
    %882 = arith.addf %879, %881 : vector<8x128xf32>
    %883 = vector.broadcast %714 : f32 to vector<8x128xf32>
    %884 = arith.mulf %882, %883 : vector<8x128xf32>
    %cst_159 = arith.constant 0.000000e+00 : f32
    %885 = vector.broadcast %cst_159 : f32 to vector<8x128xf32>
    %886 = arith.subf %885, %884 : vector<8x128xf32>
    %887 = arith.mulf %18, %849 : vector<8x128xf32>
    %888 = arith.subf %848, %887 : vector<8x128xf32>
    %889 = vector.broadcast %714 : f32 to vector<8x128xf32>
    %890 = arith.mulf %888, %889 : vector<8x128xf32>
    %cst_160 = arith.constant 2.000000e+00 : f32
    %891 = vector.broadcast %cst_160 : f32 to vector<8x128xf32>
    %892 = arith.mulf %891, %18 : vector<8x128xf32>
    %893 = arith.mulf %892, %860 : vector<8x128xf32>
    %894 = arith.addf %893, %852 : vector<8x128xf32>
    %895 = arith.mulf %18, %18 : vector<8x128xf32>
    %896 = arith.mulf %895, %853 : vector<8x128xf32>
    %897 = arith.addf %894, %896 : vector<8x128xf32>
    %898 = vector.broadcast %715 : f32 to vector<8x128xf32>
    %899 = arith.mulf %897, %898 : vector<8x128xf32>
    %cst_161 = arith.constant 0.000000e+00 : f32
    %900 = vector.broadcast %cst_161 : f32 to vector<8x128xf32>
    %901 = arith.subf %900, %899 : vector<8x128xf32>
    %902 = arith.mulf %857, %848 : vector<8x128xf32>
    %903 = arith.mulf %859, %849 : vector<8x128xf32>
    %904 = arith.subf %902, %903 : vector<8x128xf32>
    %905 = vector.broadcast %712 : f32 to vector<8x128xf32>
    %906 = arith.mulf %904, %905 : vector<8x128xf32>
    %907 = vector.broadcast %727 : vector<8x1xf32> to vector<8x128xf32>
    %908 = arith.mulf %907, %848 : vector<8x128xf32>
    %909 = arith.mulf %731, %849 : vector<8x128xf32>
    %910 = arith.subf %908, %909 : vector<8x128xf32>
    %cst_162 = arith.constant 0.000000e+00 : f32
    %911 = vector.broadcast %cst_162 : f32 to vector<8x128xf32>
    %912 = arith.subf %911, %854 : vector<8x128xf32>
    %913 = arith.mulf %859, %847 : vector<8x128xf32>
    %914 = arith.mulf %857, %850 : vector<8x128xf32>
    %915 = arith.subf %913, %914 : vector<8x128xf32>
    %916 = vector.broadcast %712 : f32 to vector<8x128xf32>
    %917 = arith.mulf %915, %916 : vector<8x128xf32>
    %cst_163 = arith.constant 0.000000e+00 : f32
    %918 = vector.broadcast %cst_163 : f32 to vector<8x128xf32>
    %919 = arith.subf %918, %851 : vector<8x128xf32>
    %920 = arith.mulf %731, %847 : vector<8x128xf32>
    %921 = vector.broadcast %727 : vector<8x1xf32> to vector<8x128xf32>
    %922 = arith.mulf %921, %850 : vector<8x128xf32>
    %923 = arith.subf %920, %922 : vector<8x128xf32>
    %cst_164 = arith.constant 2.000000e+00 : f32
    %924 = vector.broadcast %cst_164 : f32 to vector<8x128xf32>
    %925 = arith.mulf %924, %857 : vector<8x128xf32>
    %926 = arith.mulf %925, %859 : vector<8x128xf32>
    %927 = arith.mulf %926, %860 : vector<8x128xf32>
    %928 = arith.mulf %857, %857 : vector<8x128xf32>
    %929 = arith.mulf %928, %852 : vector<8x128xf32>
    %930 = arith.addf %927, %929 : vector<8x128xf32>
    %931 = arith.mulf %859, %859 : vector<8x128xf32>
    %932 = arith.mulf %931, %853 : vector<8x128xf32>
    %933 = arith.addf %930, %932 : vector<8x128xf32>
    %934 = vector.broadcast %713 : f32 to vector<8x128xf32>
    %935 = arith.mulf %933, %934 : vector<8x128xf32>
    %cst_165 = arith.constant 0.000000e+00 : f32
    %936 = vector.broadcast %cst_165 : f32 to vector<8x128xf32>
    %937 = arith.subf %936, %935 : vector<8x128xf32>
    %938 = vector.broadcast %727 : vector<8x1xf32> to vector<8x128xf32>
    %939 = arith.mulf %938, %731 : vector<8x128xf32>
    %940 = arith.mulf %939, %855 : vector<8x128xf32>
    %941 = arith.mulf %940, %860 : vector<8x128xf32>
    %942 = vector.broadcast %727 : vector<8x1xf32> to vector<8x128xf32>
    %943 = arith.mulf %729, %942 : vector<8x128xf32>
    %944 = vector.broadcast %727 : vector<8x1xf32> to vector<8x128xf32>
    %945 = arith.mulf %943, %944 : vector<8x128xf32>
    %946 = arith.mulf %945, %852 : vector<8x128xf32>
    %947 = arith.addf %941, %946 : vector<8x128xf32>
    %948 = arith.mulf %731, %859 : vector<8x128xf32>
    %949 = arith.mulf %948, %853 : vector<8x128xf32>
    %950 = arith.addf %947, %949 : vector<8x128xf32>
    %951 = vector.broadcast %712 : f32 to vector<8x128xf32>
    %952 = arith.mulf %950, %951 : vector<8x128xf32>
    %cst_166 = arith.constant 0.000000e+00 : f32
    %953 = vector.broadcast %cst_166 : f32 to vector<8x128xf32>
    %954 = arith.subf %953, %952 : vector<8x128xf32>
    %955 = arith.mulf %862, %954 : vector<8x128xf32>
    %956 = arith.mulf %862, %923 : vector<8x128xf32>
    %957 = arith.subf %846, %871 : vector<8x128xf32>
    %cst_167 = arith.constant 2.000000e+00 : f32
    %958 = vector.broadcast %cst_167 : f32 to vector<8x128xf32>
    %959 = arith.mulf %958, %957 : vector<8x128xf32>
    %960 = arith.addf %845, %959 : vector<8x128xf32>
    %961 = arith.mulf %862, %910 : vector<8x128xf32>
    %962 = arith.mulf %862, %886 : vector<8x128xf32>
    %963 = arith.mulf %706, %871 : vector<8x128xf32>
    %964 = arith.mulf %707, %906 : vector<8x128xf32>
    %965 = arith.addf %963, %964 : vector<8x128xf32>
    %966 = arith.mulf %708, %955 : vector<8x128xf32>
    %967 = arith.addf %965, %966 : vector<8x128xf32>
    %968 = arith.mulf %709, %917 : vector<8x128xf32>
    %969 = arith.addf %967, %968 : vector<8x128xf32>
    %970 = arith.mulf %710, %937 : vector<8x128xf32>
    %971 = arith.addf %969, %970 : vector<8x128xf32>
    %972 = arith.mulf %706, %875 : vector<8x128xf32>
    %973 = arith.mulf %707, %846 : vector<8x128xf32>
    %974 = arith.addf %972, %973 : vector<8x128xf32>
    %975 = arith.mulf %708, %956 : vector<8x128xf32>
    %976 = arith.addf %974, %975 : vector<8x128xf32>
    %977 = arith.mulf %709, %919 : vector<8x128xf32>
    %978 = arith.addf %976, %977 : vector<8x128xf32>
    %979 = arith.mulf %710, %917 : vector<8x128xf32>
    %980 = arith.addf %978, %979 : vector<8x128xf32>
    %981 = arith.mulf %706, %886 : vector<8x128xf32>
    %982 = arith.mulf %707, %910 : vector<8x128xf32>
    %983 = arith.addf %981, %982 : vector<8x128xf32>
    %984 = arith.mulf %708, %960 : vector<8x128xf32>
    %985 = arith.addf %983, %984 : vector<8x128xf32>
    %986 = arith.mulf %709, %923 : vector<8x128xf32>
    %987 = arith.addf %985, %986 : vector<8x128xf32>
    %988 = arith.mulf %710, %954 : vector<8x128xf32>
    %989 = arith.addf %987, %988 : vector<8x128xf32>
    %990 = arith.mulf %706, %890 : vector<8x128xf32>
    %991 = arith.mulf %707, %912 : vector<8x128xf32>
    %992 = arith.addf %990, %991 : vector<8x128xf32>
    %993 = arith.mulf %708, %961 : vector<8x128xf32>
    %994 = arith.addf %992, %993 : vector<8x128xf32>
    %995 = arith.mulf %709, %846 : vector<8x128xf32>
    %996 = arith.addf %994, %995 : vector<8x128xf32>
    %997 = arith.mulf %710, %906 : vector<8x128xf32>
    %998 = arith.addf %996, %997 : vector<8x128xf32>
    %999 = arith.mulf %706, %901 : vector<8x128xf32>
    %1000 = arith.mulf %707, %890 : vector<8x128xf32>
    %1001 = arith.addf %999, %1000 : vector<8x128xf32>
    %1002 = arith.mulf %708, %962 : vector<8x128xf32>
    %1003 = arith.addf %1001, %1002 : vector<8x128xf32>
    %1004 = arith.mulf %709, %875 : vector<8x128xf32>
    %1005 = arith.addf %1003, %1004 : vector<8x128xf32>
    %1006 = arith.mulf %710, %871 : vector<8x128xf32>
    %1007 = arith.addf %1005, %1006 : vector<8x128xf32>
    %1008 = math.absf %971 : vector<8x128xf32>
    %1009 = math.absf %980 : vector<8x128xf32>
    %1010 = arith.maximumf %1008, %1009 : vector<8x128xf32>
    %1011 = math.absf %989 : vector<8x128xf32>
    %1012 = math.absf %998 : vector<8x128xf32>
    %1013 = arith.maximumf %1011, %1012 : vector<8x128xf32>
    %1014 = arith.maximumf %1010, %1013 : vector<8x128xf32>
    %1015 = math.absf %1007 : vector<8x128xf32>
    %1016 = arith.maximumf %1014, %1015 : vector<8x128xf32>
    %cst_168 = arith.constant 1.000000e-30 : f32
    %1017 = vector.broadcast %cst_168 : f32 to vector<8x128xf32>
    %1018 = arith.cmpf olt, %1016, %1017 : vector<8x128xf32>
    %cst_169 = arith.constant 1.000000e+00 : f32
    %1019 = vector.broadcast %cst_169 : f32 to vector<8x128xf32>
    %1020 = arith.select %1018, %1019, %1016 : vector<8x128xi1>, vector<8x128xf32>
    %1021 = tpu.reciprocal %1020 {approx = true} : vector<8x128xf32> -> vector<8x128xf32>
    %1022 = arith.mulf %1020, %1021 : vector<8x128xf32>
    %cst_170 = arith.constant 2.000000e+00 : f32
    %1023 = vector.broadcast %cst_170 : f32 to vector<8x128xf32>
    %1024 = arith.subf %1023, %1022 : vector<8x128xf32>
    %1025 = arith.mulf %1021, %1024 : vector<8x128xf32>
    %1026 = arith.mulf %971, %1025 : vector<8x128xf32>
    %1027 = arith.mulf %980, %1025 : vector<8x128xf32>
    %1028 = arith.mulf %989, %1025 : vector<8x128xf32>
    %1029 = arith.mulf %998, %1025 : vector<8x128xf32>
    %1030 = arith.mulf %1007, %1025 : vector<8x128xf32>
    %c3 = arith.constant 3 : index
    %1031 = memref.load %arg6[%c3] : memref<8xf32, #tpu.memory_space<smem>>
    %c3_171 = arith.constant 3 : index
    %1032 = memref.load %arg8[%c3_171] : memref<8xf32, #tpu.memory_space<smem>>
    %c3_172 = arith.constant 3 : index
    %1033 = memref.load %arg9[%c3_172] : memref<8xf32, #tpu.memory_space<smem>>
    %c3_173 = arith.constant 3 : index
    %1034 = memref.load %arg12[%c3_173] : memref<8xf32, #tpu.memory_space<smem>>
    %c3_174 = arith.constant 3 : index
    %1035 = memref.load %arg13[%c3_174] : memref<8xf32, #tpu.memory_space<smem>>
    %c3_175 = arith.constant 3 : index
    %1036 = memref.load %arg10[%c3_175] : memref<8xf32, #tpu.memory_space<smem>>
    %1037 = vector.broadcast %1036 : f32 to vector<8x1xf32>
    %1038 = arith.mulf %0, %1037 : vector<8x1xf32>
    %c3_176 = arith.constant 3 : index
    %1039 = memref.load %arg11[%c3_176] : memref<8xf32, #tpu.memory_space<smem>>
    %1040 = vector.broadcast %1039 : f32 to vector<8x1xf32>
    %1041 = arith.mulf %0, %1040 : vector<8x1xf32>
    %c3_177 = arith.constant 3 : index
    %1042 = memref.load %arg7[%c3_177] : memref<8xf32, #tpu.memory_space<smem>>
    %1043 = vector.broadcast %1042 : f32 to vector<8x1xf32>
    %1044 = arith.mulf %1043, %1 : vector<8x1xf32>
    %cst_178 = arith.constant 2.000000e+00 : f32
    %1045 = vector.broadcast %cst_178 : f32 to vector<8x1xf32>
    %1046 = arith.mulf %1045, %1044 : vector<8x1xf32>
    %1047 = arith.mulf %1046, %1044 : vector<8x1xf32>
    %1048 = vector.broadcast %1047 : vector<8x1xf32> to vector<8x128xf32>
    %1049 = arith.mulf %1048, %18 : vector<8x128xf32>
    %cst_179 = arith.constant 1.000000e+00 : f32
    %1050 = vector.broadcast %cst_179 : f32 to vector<8x128xf32>
    %1051 = arith.subf %1049, %1050 : vector<8x128xf32>
    %1052 = vector.broadcast %1038 : vector<8x1xf32> to vector<8x128xf32>
    %1053 = arith.addf %17, %1052 : vector<8x128xf32>
    %1054 = vector.broadcast %1038 : vector<8x1xf32> to vector<8x128xf32>
    %1055 = arith.subf %17, %1054 : vector<8x128xf32>
    %1056 = math.absf %1055 : vector<8x128xf32>
    %1057 = arith.mulf %1053, %1056 : vector<8x128xf32>
    %1058 = vector.broadcast %1041 : vector<8x1xf32> to vector<8x128xf32>
    %1059 = arith.addf %17, %1058 : vector<8x128xf32>
    %1060 = vector.broadcast %1041 : vector<8x1xf32> to vector<8x128xf32>
    %1061 = arith.subf %17, %1060 : vector<8x128xf32>
    %1062 = math.absf %1061 : vector<8x128xf32>
    %1063 = arith.mulf %1059, %1062 : vector<8x128xf32>
    %cst_180 = arith.constant 0.000000e+00 : f32
    %1064 = vector.broadcast %cst_180 : f32 to vector<8x128xf32>
    %1065 = arith.cmpf oeq, %1057, %1064 : vector<8x128xf32>
    %cst_181 = arith.constant 1.000000e+00 : f32
    %1066 = vector.broadcast %cst_181 : f32 to vector<8x128xf32>
    %1067 = arith.select %1065, %1066, %1057 : vector<8x128xi1>, vector<8x128xf32>
    %1068 = math.rsqrt %1067 : vector<8x128xf32>
    %cst_182 = arith.constant 0.000000e+00 : f32
    %1069 = vector.broadcast %cst_182 : f32 to vector<8x128xf32>
    %1070 = arith.cmpf oeq, %1063, %1069 : vector<8x128xf32>
    %cst_183 = arith.constant 1.000000e+00 : f32
    %1071 = vector.broadcast %cst_183 : f32 to vector<8x128xf32>
    %1072 = arith.select %1070, %1071, %1063 : vector<8x128xi1>, vector<8x128xf32>
    %1073 = math.rsqrt %1072 : vector<8x128xf32>
    %1074 = arith.mulf %1057, %1068 : vector<8x128xf32>
    %1075 = arith.mulf %1063, %1073 : vector<8x128xf32>
    %1076 = vector.broadcast %1031 : f32 to vector<8x128xf32>
    %1077 = arith.mulf %1074, %1076 : vector<8x128xf32>
    %1078 = vector.broadcast %1031 : f32 to vector<8x128xf32>
    %1079 = arith.mulf %1075, %1078 : vector<8x128xf32>
    %1080 = math.sin %1077 : vector<8x128xf32>
    %cst_184 = arith.constant 1.600000e+01 : f32
    %1081 = vector.broadcast %cst_184 : f32 to vector<8x128xf32>
    %1082 = arith.cmpf olt, %1077, %1081 : vector<8x128xf32>
    %cst_185 = arith.constant -2.000000e+00 : f32
    %1083 = vector.broadcast %cst_185 : f32 to vector<8x128xf32>
    %1084 = arith.mulf %1083, %1077 : vector<8x128xf32>
    %1085 = math.exp %1084 : vector<8x128xf32>
    %cst_186 = arith.constant 0.000000e+00 : f32
    %1086 = vector.broadcast %cst_186 : f32 to vector<8x128xf32>
    %1087 = arith.select %1082, %1085, %1086 : vector<8x128xi1>, vector<8x128xf32>
    %cst_187 = arith.constant 1.000000e+00 : f32
    %1088 = vector.broadcast %cst_187 : f32 to vector<8x128xf32>
    %1089 = arith.subf %1088, %1087 : vector<8x128xf32>
    %cst_188 = arith.constant 5.000000e-01 : f32
    %1090 = vector.broadcast %cst_188 : f32 to vector<8x128xf32>
    %1091 = arith.mulf %1089, %1090 : vector<8x128xf32>
    %1092 = vector.broadcast %1038 : vector<8x1xf32> to vector<8x128xf32>
    %1093 = arith.cmpf olt, %17, %1092 : vector<8x128xf32>
    %1094 = vector.broadcast %1038 : vector<8x1xf32> to vector<8x128xf32>
    %1095 = arith.cmpf oeq, %17, %1094 : vector<8x128xf32>
    %1096 = arith.ori %1093, %1095 : vector<8x128xi1>
    %cst_189 = arith.constant 0.000000e+00 : f32
    %1097 = vector.broadcast %cst_189 : f32 to vector<8x128xf32>
    %1098 = arith.select %1096, %1097, %1077 : vector<8x128xi1>, vector<8x128xf32>
    %1099 = math.cos %1077 : vector<8x128xf32>
    %cst_190 = arith.constant 1.000000e+00 : f32
    %1100 = vector.broadcast %cst_190 : f32 to vector<8x128xf32>
    %1101 = arith.addf %1100, %1087 : vector<8x128xf32>
    %cst_191 = arith.constant 5.000000e-01 : f32
    %1102 = vector.broadcast %cst_191 : f32 to vector<8x128xf32>
    %1103 = arith.mulf %1101, %1102 : vector<8x128xf32>
    %cst_192 = arith.constant 1.000000e+00 : f32
    %1104 = vector.broadcast %cst_192 : f32 to vector<8x128xf32>
    %1105 = arith.select %1095, %1104, %1103 : vector<8x128xi1>, vector<8x128xf32>
    %1106 = arith.select %1093, %1099, %1105 : vector<8x128xi1>, vector<8x128xf32>
    %1107 = arith.mulf %1080, %1068 : vector<8x128xf32>
    %1108 = arith.mulf %1091, %1068 : vector<8x128xf32>
    %1109 = vector.broadcast %1031 : f32 to vector<8x128xf32>
    %1110 = arith.select %1095, %1109, %1108 : vector<8x128xi1>, vector<8x128xf32>
    %1111 = arith.select %1093, %1107, %1110 : vector<8x128xi1>, vector<8x128xf32>
    %cst_193 = arith.constant 0.000000e+00 : f32
    %1112 = vector.broadcast %cst_193 : f32 to vector<8x128xf32>
    %1113 = arith.subf %1112, %1074 : vector<8x128xf32>
    %1114 = arith.mulf %1113, %1080 : vector<8x128xf32>
    %1115 = arith.mulf %1074, %1091 : vector<8x128xf32>
    %cst_194 = arith.constant 0.000000e+00 : f32
    %1116 = vector.broadcast %cst_194 : f32 to vector<8x128xf32>
    %1117 = arith.select %1095, %1116, %1115 : vector<8x128xi1>, vector<8x128xf32>
    %1118 = arith.select %1093, %1114, %1117 : vector<8x128xi1>, vector<8x128xf32>
    %1119 = math.sin %1079 : vector<8x128xf32>
    %cst_195 = arith.constant 1.600000e+01 : f32
    %1120 = vector.broadcast %cst_195 : f32 to vector<8x128xf32>
    %1121 = arith.cmpf olt, %1079, %1120 : vector<8x128xf32>
    %cst_196 = arith.constant -2.000000e+00 : f32
    %1122 = vector.broadcast %cst_196 : f32 to vector<8x128xf32>
    %1123 = arith.mulf %1122, %1079 : vector<8x128xf32>
    %1124 = math.exp %1123 : vector<8x128xf32>
    %cst_197 = arith.constant 0.000000e+00 : f32
    %1125 = vector.broadcast %cst_197 : f32 to vector<8x128xf32>
    %1126 = arith.select %1121, %1124, %1125 : vector<8x128xi1>, vector<8x128xf32>
    %cst_198 = arith.constant 1.000000e+00 : f32
    %1127 = vector.broadcast %cst_198 : f32 to vector<8x128xf32>
    %1128 = arith.subf %1127, %1126 : vector<8x128xf32>
    %cst_199 = arith.constant 5.000000e-01 : f32
    %1129 = vector.broadcast %cst_199 : f32 to vector<8x128xf32>
    %1130 = arith.mulf %1128, %1129 : vector<8x128xf32>
    %1131 = vector.broadcast %1041 : vector<8x1xf32> to vector<8x128xf32>
    %1132 = arith.cmpf olt, %17, %1131 : vector<8x128xf32>
    %1133 = vector.broadcast %1041 : vector<8x1xf32> to vector<8x128xf32>
    %1134 = arith.cmpf oeq, %17, %1133 : vector<8x128xf32>
    %1135 = arith.ori %1132, %1134 : vector<8x128xi1>
    %cst_200 = arith.constant 0.000000e+00 : f32
    %1136 = vector.broadcast %cst_200 : f32 to vector<8x128xf32>
    %1137 = arith.select %1135, %1136, %1079 : vector<8x128xi1>, vector<8x128xf32>
    %1138 = math.cos %1079 : vector<8x128xf32>
    %cst_201 = arith.constant 1.000000e+00 : f32
    %1139 = vector.broadcast %cst_201 : f32 to vector<8x128xf32>
    %1140 = arith.addf %1139, %1126 : vector<8x128xf32>
    %cst_202 = arith.constant 5.000000e-01 : f32
    %1141 = vector.broadcast %cst_202 : f32 to vector<8x128xf32>
    %1142 = arith.mulf %1140, %1141 : vector<8x128xf32>
    %cst_203 = arith.constant 1.000000e+00 : f32
    %1143 = vector.broadcast %cst_203 : f32 to vector<8x128xf32>
    %1144 = arith.select %1134, %1143, %1142 : vector<8x128xi1>, vector<8x128xf32>
    %1145 = arith.select %1132, %1138, %1144 : vector<8x128xi1>, vector<8x128xf32>
    %1146 = arith.mulf %1119, %1073 : vector<8x128xf32>
    %1147 = arith.mulf %1130, %1073 : vector<8x128xf32>
    %1148 = vector.broadcast %1031 : f32 to vector<8x128xf32>
    %1149 = arith.select %1134, %1148, %1147 : vector<8x128xi1>, vector<8x128xf32>
    %1150 = arith.select %1132, %1146, %1149 : vector<8x128xi1>, vector<8x128xf32>
    %cst_204 = arith.constant 0.000000e+00 : f32
    %1151 = vector.broadcast %cst_204 : f32 to vector<8x128xf32>
    %1152 = arith.subf %1151, %1075 : vector<8x128xf32>
    %1153 = arith.mulf %1152, %1119 : vector<8x128xf32>
    %1154 = arith.mulf %1075, %1130 : vector<8x128xf32>
    %cst_205 = arith.constant 0.000000e+00 : f32
    %1155 = vector.broadcast %cst_205 : f32 to vector<8x128xf32>
    %1156 = arith.select %1134, %1155, %1154 : vector<8x128xi1>, vector<8x128xf32>
    %1157 = arith.select %1132, %1153, %1156 : vector<8x128xi1>, vector<8x128xf32>
    %1158 = arith.addf %1098, %1137 : vector<8x128xf32>
    %cst_206 = arith.constant 6.000000e+01 : f32
    %1159 = vector.broadcast %cst_206 : f32 to vector<8x128xf32>
    %1160 = arith.cmpf olt, %1158, %1159 : vector<8x128xf32>
    %cst_207 = arith.constant 0.000000e+00 : f32
    %1161 = vector.broadcast %cst_207 : f32 to vector<8x128xf32>
    %1162 = arith.subf %1161, %1158 : vector<8x128xf32>
    %1163 = math.exp %1162 : vector<8x128xf32>
    %cst_208 = arith.constant 0.000000e+00 : f32
    %1164 = vector.broadcast %cst_208 : f32 to vector<8x128xf32>
    %1165 = arith.select %1160, %1163, %1164 : vector<8x128xi1>, vector<8x128xf32>
    %1166 = arith.mulf %1106, %1145 : vector<8x128xf32>
    %1167 = arith.mulf %1106, %1150 : vector<8x128xf32>
    %1168 = arith.mulf %1106, %1157 : vector<8x128xf32>
    %1169 = arith.mulf %1145, %1111 : vector<8x128xf32>
    %1170 = arith.mulf %1145, %1118 : vector<8x128xf32>
    %1171 = arith.mulf %1118, %1150 : vector<8x128xf32>
    %1172 = arith.mulf %1118, %1157 : vector<8x128xf32>
    %1173 = arith.mulf %1111, %1150 : vector<8x128xf32>
    %1174 = arith.mulf %1111, %1157 : vector<8x128xf32>
    %1175 = arith.addf %1049, %1051 : vector<8x128xf32>
    %1176 = vector.broadcast %1047 : vector<8x1xf32> to vector<8x128xf32>
    %1177 = arith.mulf %1049, %1176 : vector<8x128xf32>
    %1178 = arith.mulf %1049, %1051 : vector<8x128xf32>
    %1179 = arith.mulf %1051, %1051 : vector<8x128xf32>
    %1180 = arith.subf %1165, %1166 : vector<8x128xf32>
    %cst_209 = arith.constant -2.000000e+00 : f32
    %1181 = vector.broadcast %cst_209 : f32 to vector<8x128xf32>
    %1182 = arith.mulf %1181, %18 : vector<8x128xf32>
    %cst_210 = arith.constant 2.000000e+00 : f32
    %1183 = vector.broadcast %cst_210 : f32 to vector<8x128xf32>
    %1184 = arith.mulf %1183, %1178 : vector<8x128xf32>
    %1185 = arith.mulf %1184, %1180 : vector<8x128xf32>
    %1186 = arith.subf %1166, %1185 : vector<8x128xf32>
    %1187 = arith.mulf %1177, %1172 : vector<8x128xf32>
    %1188 = arith.subf %1186, %1187 : vector<8x128xf32>
    %1189 = arith.mulf %18, %1179 : vector<8x128xf32>
    %1190 = arith.mulf %1189, %1173 : vector<8x128xf32>
    %1191 = arith.subf %1188, %1190 : vector<8x128xf32>
    %1192 = arith.mulf %18, %1167 : vector<8x128xf32>
    %1193 = arith.subf %1192, %1170 : vector<8x128xf32>
    %1194 = vector.broadcast %1034 : f32 to vector<8x128xf32>
    %1195 = arith.mulf %1193, %1194 : vector<8x128xf32>
    %1196 = arith.mulf %1175, %1180 : vector<8x128xf32>
    %1197 = vector.broadcast %1047 : vector<8x1xf32> to vector<8x128xf32>
    %1198 = arith.mulf %1197, %1172 : vector<8x128xf32>
    %1199 = arith.addf %1196, %1198 : vector<8x128xf32>
    %1200 = arith.mulf %18, %1051 : vector<8x128xf32>
    %1201 = arith.mulf %1200, %1173 : vector<8x128xf32>
    %1202 = arith.addf %1199, %1201 : vector<8x128xf32>
    %1203 = vector.broadcast %1034 : f32 to vector<8x128xf32>
    %1204 = arith.mulf %1202, %1203 : vector<8x128xf32>
    %cst_211 = arith.constant 0.000000e+00 : f32
    %1205 = vector.broadcast %cst_211 : f32 to vector<8x128xf32>
    %1206 = arith.subf %1205, %1204 : vector<8x128xf32>
    %1207 = arith.mulf %18, %1169 : vector<8x128xf32>
    %1208 = arith.subf %1168, %1207 : vector<8x128xf32>
    %1209 = vector.broadcast %1034 : f32 to vector<8x128xf32>
    %1210 = arith.mulf %1208, %1209 : vector<8x128xf32>
    %cst_212 = arith.constant 2.000000e+00 : f32
    %1211 = vector.broadcast %cst_212 : f32 to vector<8x128xf32>
    %1212 = arith.mulf %1211, %18 : vector<8x128xf32>
    %1213 = arith.mulf %1212, %1180 : vector<8x128xf32>
    %1214 = arith.addf %1213, %1172 : vector<8x128xf32>
    %1215 = arith.mulf %18, %18 : vector<8x128xf32>
    %1216 = arith.mulf %1215, %1173 : vector<8x128xf32>
    %1217 = arith.addf %1214, %1216 : vector<8x128xf32>
    %1218 = vector.broadcast %1035 : f32 to vector<8x128xf32>
    %1219 = arith.mulf %1217, %1218 : vector<8x128xf32>
    %cst_213 = arith.constant 0.000000e+00 : f32
    %1220 = vector.broadcast %cst_213 : f32 to vector<8x128xf32>
    %1221 = arith.subf %1220, %1219 : vector<8x128xf32>
    %1222 = arith.mulf %1177, %1168 : vector<8x128xf32>
    %1223 = arith.mulf %1179, %1169 : vector<8x128xf32>
    %1224 = arith.subf %1222, %1223 : vector<8x128xf32>
    %1225 = vector.broadcast %1032 : f32 to vector<8x128xf32>
    %1226 = arith.mulf %1224, %1225 : vector<8x128xf32>
    %1227 = vector.broadcast %1047 : vector<8x1xf32> to vector<8x128xf32>
    %1228 = arith.mulf %1227, %1168 : vector<8x128xf32>
    %1229 = arith.mulf %1051, %1169 : vector<8x128xf32>
    %1230 = arith.subf %1228, %1229 : vector<8x128xf32>
    %cst_214 = arith.constant 0.000000e+00 : f32
    %1231 = vector.broadcast %cst_214 : f32 to vector<8x128xf32>
    %1232 = arith.subf %1231, %1174 : vector<8x128xf32>
    %1233 = arith.mulf %1179, %1167 : vector<8x128xf32>
    %1234 = arith.mulf %1177, %1170 : vector<8x128xf32>
    %1235 = arith.subf %1233, %1234 : vector<8x128xf32>
    %1236 = vector.broadcast %1032 : f32 to vector<8x128xf32>
    %1237 = arith.mulf %1235, %1236 : vector<8x128xf32>
    %cst_215 = arith.constant 0.000000e+00 : f32
    %1238 = vector.broadcast %cst_215 : f32 to vector<8x128xf32>
    %1239 = arith.subf %1238, %1171 : vector<8x128xf32>
    %1240 = arith.mulf %1051, %1167 : vector<8x128xf32>
    %1241 = vector.broadcast %1047 : vector<8x1xf32> to vector<8x128xf32>
    %1242 = arith.mulf %1241, %1170 : vector<8x128xf32>
    %1243 = arith.subf %1240, %1242 : vector<8x128xf32>
    %cst_216 = arith.constant 2.000000e+00 : f32
    %1244 = vector.broadcast %cst_216 : f32 to vector<8x128xf32>
    %1245 = arith.mulf %1244, %1177 : vector<8x128xf32>
    %1246 = arith.mulf %1245, %1179 : vector<8x128xf32>
    %1247 = arith.mulf %1246, %1180 : vector<8x128xf32>
    %1248 = arith.mulf %1177, %1177 : vector<8x128xf32>
    %1249 = arith.mulf %1248, %1172 : vector<8x128xf32>
    %1250 = arith.addf %1247, %1249 : vector<8x128xf32>
    %1251 = arith.mulf %1179, %1179 : vector<8x128xf32>
    %1252 = arith.mulf %1251, %1173 : vector<8x128xf32>
    %1253 = arith.addf %1250, %1252 : vector<8x128xf32>
    %1254 = vector.broadcast %1033 : f32 to vector<8x128xf32>
    %1255 = arith.mulf %1253, %1254 : vector<8x128xf32>
    %cst_217 = arith.constant 0.000000e+00 : f32
    %1256 = vector.broadcast %cst_217 : f32 to vector<8x128xf32>
    %1257 = arith.subf %1256, %1255 : vector<8x128xf32>
    %1258 = vector.broadcast %1047 : vector<8x1xf32> to vector<8x128xf32>
    %1259 = arith.mulf %1258, %1051 : vector<8x128xf32>
    %1260 = arith.mulf %1259, %1175 : vector<8x128xf32>
    %1261 = arith.mulf %1260, %1180 : vector<8x128xf32>
    %1262 = vector.broadcast %1047 : vector<8x1xf32> to vector<8x128xf32>
    %1263 = arith.mulf %1049, %1262 : vector<8x128xf32>
    %1264 = vector.broadcast %1047 : vector<8x1xf32> to vector<8x128xf32>
    %1265 = arith.mulf %1263, %1264 : vector<8x128xf32>
    %1266 = arith.mulf %1265, %1172 : vector<8x128xf32>
    %1267 = arith.addf %1261, %1266 : vector<8x128xf32>
    %1268 = arith.mulf %1051, %1179 : vector<8x128xf32>
    %1269 = arith.mulf %1268, %1173 : vector<8x128xf32>
    %1270 = arith.addf %1267, %1269 : vector<8x128xf32>
    %1271 = vector.broadcast %1032 : f32 to vector<8x128xf32>
    %1272 = arith.mulf %1270, %1271 : vector<8x128xf32>
    %cst_218 = arith.constant 0.000000e+00 : f32
    %1273 = vector.broadcast %cst_218 : f32 to vector<8x128xf32>
    %1274 = arith.subf %1273, %1272 : vector<8x128xf32>
    %1275 = arith.mulf %1182, %1274 : vector<8x128xf32>
    %1276 = arith.mulf %1182, %1243 : vector<8x128xf32>
    %1277 = arith.subf %1166, %1191 : vector<8x128xf32>
    %cst_219 = arith.constant 2.000000e+00 : f32
    %1278 = vector.broadcast %cst_219 : f32 to vector<8x128xf32>
    %1279 = arith.mulf %1278, %1277 : vector<8x128xf32>
    %1280 = arith.addf %1165, %1279 : vector<8x128xf32>
    %1281 = arith.mulf %1182, %1230 : vector<8x128xf32>
    %1282 = arith.mulf %1182, %1206 : vector<8x128xf32>
    %1283 = arith.mulf %1026, %1191 : vector<8x128xf32>
    %1284 = arith.mulf %1027, %1226 : vector<8x128xf32>
    %1285 = arith.addf %1283, %1284 : vector<8x128xf32>
    %1286 = arith.mulf %1028, %1275 : vector<8x128xf32>
    %1287 = arith.addf %1285, %1286 : vector<8x128xf32>
    %1288 = arith.mulf %1029, %1237 : vector<8x128xf32>
    %1289 = arith.addf %1287, %1288 : vector<8x128xf32>
    %1290 = arith.mulf %1030, %1257 : vector<8x128xf32>
    %1291 = arith.addf %1289, %1290 : vector<8x128xf32>
    %1292 = arith.mulf %1026, %1195 : vector<8x128xf32>
    %1293 = arith.mulf %1027, %1166 : vector<8x128xf32>
    %1294 = arith.addf %1292, %1293 : vector<8x128xf32>
    %1295 = arith.mulf %1028, %1276 : vector<8x128xf32>
    %1296 = arith.addf %1294, %1295 : vector<8x128xf32>
    %1297 = arith.mulf %1029, %1239 : vector<8x128xf32>
    %1298 = arith.addf %1296, %1297 : vector<8x128xf32>
    %1299 = arith.mulf %1030, %1237 : vector<8x128xf32>
    %1300 = arith.addf %1298, %1299 : vector<8x128xf32>
    %1301 = arith.mulf %1026, %1206 : vector<8x128xf32>
    %1302 = arith.mulf %1027, %1230 : vector<8x128xf32>
    %1303 = arith.addf %1301, %1302 : vector<8x128xf32>
    %1304 = arith.mulf %1028, %1280 : vector<8x128xf32>
    %1305 = arith.addf %1303, %1304 : vector<8x128xf32>
    %1306 = arith.mulf %1029, %1243 : vector<8x128xf32>
    %1307 = arith.addf %1305, %1306 : vector<8x128xf32>
    %1308 = arith.mulf %1030, %1274 : vector<8x128xf32>
    %1309 = arith.addf %1307, %1308 : vector<8x128xf32>
    %1310 = arith.mulf %1026, %1210 : vector<8x128xf32>
    %1311 = arith.mulf %1027, %1232 : vector<8x128xf32>
    %1312 = arith.addf %1310, %1311 : vector<8x128xf32>
    %1313 = arith.mulf %1028, %1281 : vector<8x128xf32>
    %1314 = arith.addf %1312, %1313 : vector<8x128xf32>
    %1315 = arith.mulf %1029, %1166 : vector<8x128xf32>
    %1316 = arith.addf %1314, %1315 : vector<8x128xf32>
    %1317 = arith.mulf %1030, %1226 : vector<8x128xf32>
    %1318 = arith.addf %1316, %1317 : vector<8x128xf32>
    %1319 = arith.mulf %1026, %1221 : vector<8x128xf32>
    %1320 = arith.mulf %1027, %1210 : vector<8x128xf32>
    %1321 = arith.addf %1319, %1320 : vector<8x128xf32>
    %1322 = arith.mulf %1028, %1282 : vector<8x128xf32>
    %1323 = arith.addf %1321, %1322 : vector<8x128xf32>
    %1324 = arith.mulf %1029, %1195 : vector<8x128xf32>
    %1325 = arith.addf %1323, %1324 : vector<8x128xf32>
    %1326 = arith.mulf %1030, %1191 : vector<8x128xf32>
    %1327 = arith.addf %1325, %1326 : vector<8x128xf32>
    %1328 = math.absf %1291 : vector<8x128xf32>
    %1329 = math.absf %1300 : vector<8x128xf32>
    %1330 = arith.maximumf %1328, %1329 : vector<8x128xf32>
    %1331 = math.absf %1309 : vector<8x128xf32>
    %1332 = math.absf %1318 : vector<8x128xf32>
    %1333 = arith.maximumf %1331, %1332 : vector<8x128xf32>
    %1334 = arith.maximumf %1330, %1333 : vector<8x128xf32>
    %1335 = math.absf %1327 : vector<8x128xf32>
    %1336 = arith.maximumf %1334, %1335 : vector<8x128xf32>
    %cst_220 = arith.constant 1.000000e-30 : f32
    %1337 = vector.broadcast %cst_220 : f32 to vector<8x128xf32>
    %1338 = arith.cmpf olt, %1336, %1337 : vector<8x128xf32>
    %cst_221 = arith.constant 1.000000e+00 : f32
    %1339 = vector.broadcast %cst_221 : f32 to vector<8x128xf32>
    %1340 = arith.select %1338, %1339, %1336 : vector<8x128xi1>, vector<8x128xf32>
    %1341 = tpu.reciprocal %1340 {approx = true} : vector<8x128xf32> -> vector<8x128xf32>
    %1342 = arith.mulf %1340, %1341 : vector<8x128xf32>
    %cst_222 = arith.constant 2.000000e+00 : f32
    %1343 = vector.broadcast %cst_222 : f32 to vector<8x128xf32>
    %1344 = arith.subf %1343, %1342 : vector<8x128xf32>
    %1345 = arith.mulf %1341, %1344 : vector<8x128xf32>
    %1346 = arith.mulf %1291, %1345 : vector<8x128xf32>
    %1347 = arith.mulf %1300, %1345 : vector<8x128xf32>
    %1348 = arith.mulf %1309, %1345 : vector<8x128xf32>
    %1349 = arith.mulf %1318, %1345 : vector<8x128xf32>
    %1350 = arith.mulf %1327, %1345 : vector<8x128xf32>
    %c2 = arith.constant 2 : index
    %1351 = memref.load %arg6[%c2] : memref<8xf32, #tpu.memory_space<smem>>
    %c2_223 = arith.constant 2 : index
    %1352 = memref.load %arg8[%c2_223] : memref<8xf32, #tpu.memory_space<smem>>
    %c2_224 = arith.constant 2 : index
    %1353 = memref.load %arg9[%c2_224] : memref<8xf32, #tpu.memory_space<smem>>
    %c2_225 = arith.constant 2 : index
    %1354 = memref.load %arg12[%c2_225] : memref<8xf32, #tpu.memory_space<smem>>
    %c2_226 = arith.constant 2 : index
    %1355 = memref.load %arg13[%c2_226] : memref<8xf32, #tpu.memory_space<smem>>
    %c2_227 = arith.constant 2 : index
    %1356 = memref.load %arg10[%c2_227] : memref<8xf32, #tpu.memory_space<smem>>
    %1357 = vector.broadcast %1356 : f32 to vector<8x1xf32>
    %1358 = arith.mulf %0, %1357 : vector<8x1xf32>
    %c2_228 = arith.constant 2 : index
    %1359 = memref.load %arg11[%c2_228] : memref<8xf32, #tpu.memory_space<smem>>
    %1360 = vector.broadcast %1359 : f32 to vector<8x1xf32>
    %1361 = arith.mulf %0, %1360 : vector<8x1xf32>
    %c2_229 = arith.constant 2 : index
    %1362 = memref.load %arg7[%c2_229] : memref<8xf32, #tpu.memory_space<smem>>
    %1363 = vector.broadcast %1362 : f32 to vector<8x1xf32>
    %1364 = arith.mulf %1363, %1 : vector<8x1xf32>
    %cst_230 = arith.constant 2.000000e+00 : f32
    %1365 = vector.broadcast %cst_230 : f32 to vector<8x1xf32>
    %1366 = arith.mulf %1365, %1364 : vector<8x1xf32>
    %1367 = arith.mulf %1366, %1364 : vector<8x1xf32>
    %1368 = vector.broadcast %1367 : vector<8x1xf32> to vector<8x128xf32>
    %1369 = arith.mulf %1368, %18 : vector<8x128xf32>
    %cst_231 = arith.constant 1.000000e+00 : f32
    %1370 = vector.broadcast %cst_231 : f32 to vector<8x128xf32>
    %1371 = arith.subf %1369, %1370 : vector<8x128xf32>
    %1372 = vector.broadcast %1358 : vector<8x1xf32> to vector<8x128xf32>
    %1373 = arith.addf %17, %1372 : vector<8x128xf32>
    %1374 = vector.broadcast %1358 : vector<8x1xf32> to vector<8x128xf32>
    %1375 = arith.subf %17, %1374 : vector<8x128xf32>
    %1376 = math.absf %1375 : vector<8x128xf32>
    %1377 = arith.mulf %1373, %1376 : vector<8x128xf32>
    %1378 = vector.broadcast %1361 : vector<8x1xf32> to vector<8x128xf32>
    %1379 = arith.addf %17, %1378 : vector<8x128xf32>
    %1380 = vector.broadcast %1361 : vector<8x1xf32> to vector<8x128xf32>
    %1381 = arith.subf %17, %1380 : vector<8x128xf32>
    %1382 = math.absf %1381 : vector<8x128xf32>
    %1383 = arith.mulf %1379, %1382 : vector<8x128xf32>
    %cst_232 = arith.constant 0.000000e+00 : f32
    %1384 = vector.broadcast %cst_232 : f32 to vector<8x128xf32>
    %1385 = arith.cmpf oeq, %1377, %1384 : vector<8x128xf32>
    %cst_233 = arith.constant 1.000000e+00 : f32
    %1386 = vector.broadcast %cst_233 : f32 to vector<8x128xf32>
    %1387 = arith.select %1385, %1386, %1377 : vector<8x128xi1>, vector<8x128xf32>
    %1388 = math.rsqrt %1387 : vector<8x128xf32>
    %cst_234 = arith.constant 0.000000e+00 : f32
    %1389 = vector.broadcast %cst_234 : f32 to vector<8x128xf32>
    %1390 = arith.cmpf oeq, %1383, %1389 : vector<8x128xf32>
    %cst_235 = arith.constant 1.000000e+00 : f32
    %1391 = vector.broadcast %cst_235 : f32 to vector<8x128xf32>
    %1392 = arith.select %1390, %1391, %1383 : vector<8x128xi1>, vector<8x128xf32>
    %1393 = math.rsqrt %1392 : vector<8x128xf32>
    %1394 = arith.mulf %1377, %1388 : vector<8x128xf32>
    %1395 = arith.mulf %1383, %1393 : vector<8x128xf32>
    %1396 = vector.broadcast %1351 : f32 to vector<8x128xf32>
    %1397 = arith.mulf %1394, %1396 : vector<8x128xf32>
    %1398 = vector.broadcast %1351 : f32 to vector<8x128xf32>
    %1399 = arith.mulf %1395, %1398 : vector<8x128xf32>
    %1400 = math.sin %1397 : vector<8x128xf32>
    %cst_236 = arith.constant 1.600000e+01 : f32
    %1401 = vector.broadcast %cst_236 : f32 to vector<8x128xf32>
    %1402 = arith.cmpf olt, %1397, %1401 : vector<8x128xf32>
    %cst_237 = arith.constant -2.000000e+00 : f32
    %1403 = vector.broadcast %cst_237 : f32 to vector<8x128xf32>
    %1404 = arith.mulf %1403, %1397 : vector<8x128xf32>
    %1405 = math.exp %1404 : vector<8x128xf32>
    %cst_238 = arith.constant 0.000000e+00 : f32
    %1406 = vector.broadcast %cst_238 : f32 to vector<8x128xf32>
    %1407 = arith.select %1402, %1405, %1406 : vector<8x128xi1>, vector<8x128xf32>
    %cst_239 = arith.constant 1.000000e+00 : f32
    %1408 = vector.broadcast %cst_239 : f32 to vector<8x128xf32>
    %1409 = arith.subf %1408, %1407 : vector<8x128xf32>
    %cst_240 = arith.constant 5.000000e-01 : f32
    %1410 = vector.broadcast %cst_240 : f32 to vector<8x128xf32>
    %1411 = arith.mulf %1409, %1410 : vector<8x128xf32>
    %1412 = vector.broadcast %1358 : vector<8x1xf32> to vector<8x128xf32>
    %1413 = arith.cmpf olt, %17, %1412 : vector<8x128xf32>
    %1414 = vector.broadcast %1358 : vector<8x1xf32> to vector<8x128xf32>
    %1415 = arith.cmpf oeq, %17, %1414 : vector<8x128xf32>
    %1416 = arith.ori %1413, %1415 : vector<8x128xi1>
    %cst_241 = arith.constant 0.000000e+00 : f32
    %1417 = vector.broadcast %cst_241 : f32 to vector<8x128xf32>
    %1418 = arith.select %1416, %1417, %1397 : vector<8x128xi1>, vector<8x128xf32>
    %1419 = math.cos %1397 : vector<8x128xf32>
    %cst_242 = arith.constant 1.000000e+00 : f32
    %1420 = vector.broadcast %cst_242 : f32 to vector<8x128xf32>
    %1421 = arith.addf %1420, %1407 : vector<8x128xf32>
    %cst_243 = arith.constant 5.000000e-01 : f32
    %1422 = vector.broadcast %cst_243 : f32 to vector<8x128xf32>
    %1423 = arith.mulf %1421, %1422 : vector<8x128xf32>
    %cst_244 = arith.constant 1.000000e+00 : f32
    %1424 = vector.broadcast %cst_244 : f32 to vector<8x128xf32>
    %1425 = arith.select %1415, %1424, %1423 : vector<8x128xi1>, vector<8x128xf32>
    %1426 = arith.select %1413, %1419, %1425 : vector<8x128xi1>, vector<8x128xf32>
    %1427 = arith.mulf %1400, %1388 : vector<8x128xf32>
    %1428 = arith.mulf %1411, %1388 : vector<8x128xf32>
    %1429 = vector.broadcast %1351 : f32 to vector<8x128xf32>
    %1430 = arith.select %1415, %1429, %1428 : vector<8x128xi1>, vector<8x128xf32>
    %1431 = arith.select %1413, %1427, %1430 : vector<8x128xi1>, vector<8x128xf32>
    %cst_245 = arith.constant 0.000000e+00 : f32
    %1432 = vector.broadcast %cst_245 : f32 to vector<8x128xf32>
    %1433 = arith.subf %1432, %1394 : vector<8x128xf32>
    %1434 = arith.mulf %1433, %1400 : vector<8x128xf32>
    %1435 = arith.mulf %1394, %1411 : vector<8x128xf32>
    %cst_246 = arith.constant 0.000000e+00 : f32
    %1436 = vector.broadcast %cst_246 : f32 to vector<8x128xf32>
    %1437 = arith.select %1415, %1436, %1435 : vector<8x128xi1>, vector<8x128xf32>
    %1438 = arith.select %1413, %1434, %1437 : vector<8x128xi1>, vector<8x128xf32>
    %1439 = math.sin %1399 : vector<8x128xf32>
    %cst_247 = arith.constant 1.600000e+01 : f32
    %1440 = vector.broadcast %cst_247 : f32 to vector<8x128xf32>
    %1441 = arith.cmpf olt, %1399, %1440 : vector<8x128xf32>
    %cst_248 = arith.constant -2.000000e+00 : f32
    %1442 = vector.broadcast %cst_248 : f32 to vector<8x128xf32>
    %1443 = arith.mulf %1442, %1399 : vector<8x128xf32>
    %1444 = math.exp %1443 : vector<8x128xf32>
    %cst_249 = arith.constant 0.000000e+00 : f32
    %1445 = vector.broadcast %cst_249 : f32 to vector<8x128xf32>
    %1446 = arith.select %1441, %1444, %1445 : vector<8x128xi1>, vector<8x128xf32>
    %cst_250 = arith.constant 1.000000e+00 : f32
    %1447 = vector.broadcast %cst_250 : f32 to vector<8x128xf32>
    %1448 = arith.subf %1447, %1446 : vector<8x128xf32>
    %cst_251 = arith.constant 5.000000e-01 : f32
    %1449 = vector.broadcast %cst_251 : f32 to vector<8x128xf32>
    %1450 = arith.mulf %1448, %1449 : vector<8x128xf32>
    %1451 = vector.broadcast %1361 : vector<8x1xf32> to vector<8x128xf32>
    %1452 = arith.cmpf olt, %17, %1451 : vector<8x128xf32>
    %1453 = vector.broadcast %1361 : vector<8x1xf32> to vector<8x128xf32>
    %1454 = arith.cmpf oeq, %17, %1453 : vector<8x128xf32>
    %1455 = arith.ori %1452, %1454 : vector<8x128xi1>
    %cst_252 = arith.constant 0.000000e+00 : f32
    %1456 = vector.broadcast %cst_252 : f32 to vector<8x128xf32>
    %1457 = arith.select %1455, %1456, %1399 : vector<8x128xi1>, vector<8x128xf32>
    %1458 = math.cos %1399 : vector<8x128xf32>
    %cst_253 = arith.constant 1.000000e+00 : f32
    %1459 = vector.broadcast %cst_253 : f32 to vector<8x128xf32>
    %1460 = arith.addf %1459, %1446 : vector<8x128xf32>
    %cst_254 = arith.constant 5.000000e-01 : f32
    %1461 = vector.broadcast %cst_254 : f32 to vector<8x128xf32>
    %1462 = arith.mulf %1460, %1461 : vector<8x128xf32>
    %cst_255 = arith.constant 1.000000e+00 : f32
    %1463 = vector.broadcast %cst_255 : f32 to vector<8x128xf32>
    %1464 = arith.select %1454, %1463, %1462 : vector<8x128xi1>, vector<8x128xf32>
    %1465 = arith.select %1452, %1458, %1464 : vector<8x128xi1>, vector<8x128xf32>
    %1466 = arith.mulf %1439, %1393 : vector<8x128xf32>
    %1467 = arith.mulf %1450, %1393 : vector<8x128xf32>
    %1468 = vector.broadcast %1351 : f32 to vector<8x128xf32>
    %1469 = arith.select %1454, %1468, %1467 : vector<8x128xi1>, vector<8x128xf32>
    %1470 = arith.select %1452, %1466, %1469 : vector<8x128xi1>, vector<8x128xf32>
    %cst_256 = arith.constant 0.000000e+00 : f32
    %1471 = vector.broadcast %cst_256 : f32 to vector<8x128xf32>
    %1472 = arith.subf %1471, %1395 : vector<8x128xf32>
    %1473 = arith.mulf %1472, %1439 : vector<8x128xf32>
    %1474 = arith.mulf %1395, %1450 : vector<8x128xf32>
    %cst_257 = arith.constant 0.000000e+00 : f32
    %1475 = vector.broadcast %cst_257 : f32 to vector<8x128xf32>
    %1476 = arith.select %1454, %1475, %1474 : vector<8x128xi1>, vector<8x128xf32>
    %1477 = arith.select %1452, %1473, %1476 : vector<8x128xi1>, vector<8x128xf32>
    %1478 = arith.addf %1418, %1457 : vector<8x128xf32>
    %cst_258 = arith.constant 6.000000e+01 : f32
    %1479 = vector.broadcast %cst_258 : f32 to vector<8x128xf32>
    %1480 = arith.cmpf olt, %1478, %1479 : vector<8x128xf32>
    %cst_259 = arith.constant 0.000000e+00 : f32
    %1481 = vector.broadcast %cst_259 : f32 to vector<8x128xf32>
    %1482 = arith.subf %1481, %1478 : vector<8x128xf32>
    %1483 = math.exp %1482 : vector<8x128xf32>
    %cst_260 = arith.constant 0.000000e+00 : f32
    %1484 = vector.broadcast %cst_260 : f32 to vector<8x128xf32>
    %1485 = arith.select %1480, %1483, %1484 : vector<8x128xi1>, vector<8x128xf32>
    %1486 = arith.mulf %1426, %1465 : vector<8x128xf32>
    %1487 = arith.mulf %1426, %1470 : vector<8x128xf32>
    %1488 = arith.mulf %1426, %1477 : vector<8x128xf32>
    %1489 = arith.mulf %1465, %1431 : vector<8x128xf32>
    %1490 = arith.mulf %1465, %1438 : vector<8x128xf32>
    %1491 = arith.mulf %1438, %1470 : vector<8x128xf32>
    %1492 = arith.mulf %1438, %1477 : vector<8x128xf32>
    %1493 = arith.mulf %1431, %1470 : vector<8x128xf32>
    %1494 = arith.mulf %1431, %1477 : vector<8x128xf32>
    %1495 = arith.addf %1369, %1371 : vector<8x128xf32>
    %1496 = vector.broadcast %1367 : vector<8x1xf32> to vector<8x128xf32>
    %1497 = arith.mulf %1369, %1496 : vector<8x128xf32>
    %1498 = arith.mulf %1369, %1371 : vector<8x128xf32>
    %1499 = arith.mulf %1371, %1371 : vector<8x128xf32>
    %1500 = arith.subf %1485, %1486 : vector<8x128xf32>
    %cst_261 = arith.constant -2.000000e+00 : f32
    %1501 = vector.broadcast %cst_261 : f32 to vector<8x128xf32>
    %1502 = arith.mulf %1501, %18 : vector<8x128xf32>
    %cst_262 = arith.constant 2.000000e+00 : f32
    %1503 = vector.broadcast %cst_262 : f32 to vector<8x128xf32>
    %1504 = arith.mulf %1503, %1498 : vector<8x128xf32>
    %1505 = arith.mulf %1504, %1500 : vector<8x128xf32>
    %1506 = arith.subf %1486, %1505 : vector<8x128xf32>
    %1507 = arith.mulf %1497, %1492 : vector<8x128xf32>
    %1508 = arith.subf %1506, %1507 : vector<8x128xf32>
    %1509 = arith.mulf %18, %1499 : vector<8x128xf32>
    %1510 = arith.mulf %1509, %1493 : vector<8x128xf32>
    %1511 = arith.subf %1508, %1510 : vector<8x128xf32>
    %1512 = arith.mulf %18, %1487 : vector<8x128xf32>
    %1513 = arith.subf %1512, %1490 : vector<8x128xf32>
    %1514 = vector.broadcast %1354 : f32 to vector<8x128xf32>
    %1515 = arith.mulf %1513, %1514 : vector<8x128xf32>
    %1516 = arith.mulf %1495, %1500 : vector<8x128xf32>
    %1517 = vector.broadcast %1367 : vector<8x1xf32> to vector<8x128xf32>
    %1518 = arith.mulf %1517, %1492 : vector<8x128xf32>
    %1519 = arith.addf %1516, %1518 : vector<8x128xf32>
    %1520 = arith.mulf %18, %1371 : vector<8x128xf32>
    %1521 = arith.mulf %1520, %1493 : vector<8x128xf32>
    %1522 = arith.addf %1519, %1521 : vector<8x128xf32>
    %1523 = vector.broadcast %1354 : f32 to vector<8x128xf32>
    %1524 = arith.mulf %1522, %1523 : vector<8x128xf32>
    %cst_263 = arith.constant 0.000000e+00 : f32
    %1525 = vector.broadcast %cst_263 : f32 to vector<8x128xf32>
    %1526 = arith.subf %1525, %1524 : vector<8x128xf32>
    %1527 = arith.mulf %18, %1489 : vector<8x128xf32>
    %1528 = arith.subf %1488, %1527 : vector<8x128xf32>
    %1529 = vector.broadcast %1354 : f32 to vector<8x128xf32>
    %1530 = arith.mulf %1528, %1529 : vector<8x128xf32>
    %cst_264 = arith.constant 2.000000e+00 : f32
    %1531 = vector.broadcast %cst_264 : f32 to vector<8x128xf32>
    %1532 = arith.mulf %1531, %18 : vector<8x128xf32>
    %1533 = arith.mulf %1532, %1500 : vector<8x128xf32>
    %1534 = arith.addf %1533, %1492 : vector<8x128xf32>
    %1535 = arith.mulf %18, %18 : vector<8x128xf32>
    %1536 = arith.mulf %1535, %1493 : vector<8x128xf32>
    %1537 = arith.addf %1534, %1536 : vector<8x128xf32>
    %1538 = vector.broadcast %1355 : f32 to vector<8x128xf32>
    %1539 = arith.mulf %1537, %1538 : vector<8x128xf32>
    %cst_265 = arith.constant 0.000000e+00 : f32
    %1540 = vector.broadcast %cst_265 : f32 to vector<8x128xf32>
    %1541 = arith.subf %1540, %1539 : vector<8x128xf32>
    %1542 = arith.mulf %1497, %1488 : vector<8x128xf32>
    %1543 = arith.mulf %1499, %1489 : vector<8x128xf32>
    %1544 = arith.subf %1542, %1543 : vector<8x128xf32>
    %1545 = vector.broadcast %1352 : f32 to vector<8x128xf32>
    %1546 = arith.mulf %1544, %1545 : vector<8x128xf32>
    %1547 = vector.broadcast %1367 : vector<8x1xf32> to vector<8x128xf32>
    %1548 = arith.mulf %1547, %1488 : vector<8x128xf32>
    %1549 = arith.mulf %1371, %1489 : vector<8x128xf32>
    %1550 = arith.subf %1548, %1549 : vector<8x128xf32>
    %cst_266 = arith.constant 0.000000e+00 : f32
    %1551 = vector.broadcast %cst_266 : f32 to vector<8x128xf32>
    %1552 = arith.subf %1551, %1494 : vector<8x128xf32>
    %1553 = arith.mulf %1499, %1487 : vector<8x128xf32>
    %1554 = arith.mulf %1497, %1490 : vector<8x128xf32>
    %1555 = arith.subf %1553, %1554 : vector<8x128xf32>
    %1556 = vector.broadcast %1352 : f32 to vector<8x128xf32>
    %1557 = arith.mulf %1555, %1556 : vector<8x128xf32>
    %cst_267 = arith.constant 0.000000e+00 : f32
    %1558 = vector.broadcast %cst_267 : f32 to vector<8x128xf32>
    %1559 = arith.subf %1558, %1491 : vector<8x128xf32>
    %1560 = arith.mulf %1371, %1487 : vector<8x128xf32>
    %1561 = vector.broadcast %1367 : vector<8x1xf32> to vector<8x128xf32>
    %1562 = arith.mulf %1561, %1490 : vector<8x128xf32>
    %1563 = arith.subf %1560, %1562 : vector<8x128xf32>
    %cst_268 = arith.constant 2.000000e+00 : f32
    %1564 = vector.broadcast %cst_268 : f32 to vector<8x128xf32>
    %1565 = arith.mulf %1564, %1497 : vector<8x128xf32>
    %1566 = arith.mulf %1565, %1499 : vector<8x128xf32>
    %1567 = arith.mulf %1566, %1500 : vector<8x128xf32>
    %1568 = arith.mulf %1497, %1497 : vector<8x128xf32>
    %1569 = arith.mulf %1568, %1492 : vector<8x128xf32>
    %1570 = arith.addf %1567, %1569 : vector<8x128xf32>
    %1571 = arith.mulf %1499, %1499 : vector<8x128xf32>
    %1572 = arith.mulf %1571, %1493 : vector<8x128xf32>
    %1573 = arith.addf %1570, %1572 : vector<8x128xf32>
    %1574 = vector.broadcast %1353 : f32 to vector<8x128xf32>
    %1575 = arith.mulf %1573, %1574 : vector<8x128xf32>
    %cst_269 = arith.constant 0.000000e+00 : f32
    %1576 = vector.broadcast %cst_269 : f32 to vector<8x128xf32>
    %1577 = arith.subf %1576, %1575 : vector<8x128xf32>
    %1578 = vector.broadcast %1367 : vector<8x1xf32> to vector<8x128xf32>
    %1579 = arith.mulf %1578, %1371 : vector<8x128xf32>
    %1580 = arith.mulf %1579, %1495 : vector<8x128xf32>
    %1581 = arith.mulf %1580, %1500 : vector<8x128xf32>
    %1582 = vector.broadcast %1367 : vector<8x1xf32> to vector<8x128xf32>
    %1583 = arith.mulf %1369, %1582 : vector<8x128xf32>
    %1584 = vector.broadcast %1367 : vector<8x1xf32> to vector<8x128xf32>
    %1585 = arith.mulf %1583, %1584 : vector<8x128xf32>
    %1586 = arith.mulf %1585, %1492 : vector<8x128xf32>
    %1587 = arith.addf %1581, %1586 : vector<8x128xf32>
    %1588 = arith.mulf %1371, %1499 : vector<8x128xf32>
    %1589 = arith.mulf %1588, %1493 : vector<8x128xf32>
    %1590 = arith.addf %1587, %1589 : vector<8x128xf32>
    %1591 = vector.broadcast %1352 : f32 to vector<8x128xf32>
    %1592 = arith.mulf %1590, %1591 : vector<8x128xf32>
    %cst_270 = arith.constant 0.000000e+00 : f32
    %1593 = vector.broadcast %cst_270 : f32 to vector<8x128xf32>
    %1594 = arith.subf %1593, %1592 : vector<8x128xf32>
    %1595 = arith.mulf %1502, %1594 : vector<8x128xf32>
    %1596 = arith.mulf %1502, %1563 : vector<8x128xf32>
    %1597 = arith.subf %1486, %1511 : vector<8x128xf32>
    %cst_271 = arith.constant 2.000000e+00 : f32
    %1598 = vector.broadcast %cst_271 : f32 to vector<8x128xf32>
    %1599 = arith.mulf %1598, %1597 : vector<8x128xf32>
    %1600 = arith.addf %1485, %1599 : vector<8x128xf32>
    %1601 = arith.mulf %1502, %1550 : vector<8x128xf32>
    %1602 = arith.mulf %1502, %1526 : vector<8x128xf32>
    %1603 = arith.mulf %1346, %1511 : vector<8x128xf32>
    %1604 = arith.mulf %1347, %1546 : vector<8x128xf32>
    %1605 = arith.addf %1603, %1604 : vector<8x128xf32>
    %1606 = arith.mulf %1348, %1595 : vector<8x128xf32>
    %1607 = arith.addf %1605, %1606 : vector<8x128xf32>
    %1608 = arith.mulf %1349, %1557 : vector<8x128xf32>
    %1609 = arith.addf %1607, %1608 : vector<8x128xf32>
    %1610 = arith.mulf %1350, %1577 : vector<8x128xf32>
    %1611 = arith.addf %1609, %1610 : vector<8x128xf32>
    %1612 = arith.mulf %1346, %1515 : vector<8x128xf32>
    %1613 = arith.mulf %1347, %1486 : vector<8x128xf32>
    %1614 = arith.addf %1612, %1613 : vector<8x128xf32>
    %1615 = arith.mulf %1348, %1596 : vector<8x128xf32>
    %1616 = arith.addf %1614, %1615 : vector<8x128xf32>
    %1617 = arith.mulf %1349, %1559 : vector<8x128xf32>
    %1618 = arith.addf %1616, %1617 : vector<8x128xf32>
    %1619 = arith.mulf %1350, %1557 : vector<8x128xf32>
    %1620 = arith.addf %1618, %1619 : vector<8x128xf32>
    %1621 = arith.mulf %1346, %1526 : vector<8x128xf32>
    %1622 = arith.mulf %1347, %1550 : vector<8x128xf32>
    %1623 = arith.addf %1621, %1622 : vector<8x128xf32>
    %1624 = arith.mulf %1348, %1600 : vector<8x128xf32>
    %1625 = arith.addf %1623, %1624 : vector<8x128xf32>
    %1626 = arith.mulf %1349, %1563 : vector<8x128xf32>
    %1627 = arith.addf %1625, %1626 : vector<8x128xf32>
    %1628 = arith.mulf %1350, %1594 : vector<8x128xf32>
    %1629 = arith.addf %1627, %1628 : vector<8x128xf32>
    %1630 = arith.mulf %1346, %1530 : vector<8x128xf32>
    %1631 = arith.mulf %1347, %1552 : vector<8x128xf32>
    %1632 = arith.addf %1630, %1631 : vector<8x128xf32>
    %1633 = arith.mulf %1348, %1601 : vector<8x128xf32>
    %1634 = arith.addf %1632, %1633 : vector<8x128xf32>
    %1635 = arith.mulf %1349, %1486 : vector<8x128xf32>
    %1636 = arith.addf %1634, %1635 : vector<8x128xf32>
    %1637 = arith.mulf %1350, %1546 : vector<8x128xf32>
    %1638 = arith.addf %1636, %1637 : vector<8x128xf32>
    %1639 = arith.mulf %1346, %1541 : vector<8x128xf32>
    %1640 = arith.mulf %1347, %1530 : vector<8x128xf32>
    %1641 = arith.addf %1639, %1640 : vector<8x128xf32>
    %1642 = arith.mulf %1348, %1602 : vector<8x128xf32>
    %1643 = arith.addf %1641, %1642 : vector<8x128xf32>
    %1644 = arith.mulf %1349, %1515 : vector<8x128xf32>
    %1645 = arith.addf %1643, %1644 : vector<8x128xf32>
    %1646 = arith.mulf %1350, %1511 : vector<8x128xf32>
    %1647 = arith.addf %1645, %1646 : vector<8x128xf32>
    %1648 = math.absf %1611 : vector<8x128xf32>
    %1649 = math.absf %1620 : vector<8x128xf32>
    %1650 = arith.maximumf %1648, %1649 : vector<8x128xf32>
    %1651 = math.absf %1629 : vector<8x128xf32>
    %1652 = math.absf %1638 : vector<8x128xf32>
    %1653 = arith.maximumf %1651, %1652 : vector<8x128xf32>
    %1654 = arith.maximumf %1650, %1653 : vector<8x128xf32>
    %1655 = math.absf %1647 : vector<8x128xf32>
    %1656 = arith.maximumf %1654, %1655 : vector<8x128xf32>
    %cst_272 = arith.constant 1.000000e-30 : f32
    %1657 = vector.broadcast %cst_272 : f32 to vector<8x128xf32>
    %1658 = arith.cmpf olt, %1656, %1657 : vector<8x128xf32>
    %cst_273 = arith.constant 1.000000e+00 : f32
    %1659 = vector.broadcast %cst_273 : f32 to vector<8x128xf32>
    %1660 = arith.select %1658, %1659, %1656 : vector<8x128xi1>, vector<8x128xf32>
    %1661 = tpu.reciprocal %1660 {approx = true} : vector<8x128xf32> -> vector<8x128xf32>
    %1662 = arith.mulf %1660, %1661 : vector<8x128xf32>
    %cst_274 = arith.constant 2.000000e+00 : f32
    %1663 = vector.broadcast %cst_274 : f32 to vector<8x128xf32>
    %1664 = arith.subf %1663, %1662 : vector<8x128xf32>
    %1665 = arith.mulf %1661, %1664 : vector<8x128xf32>
    %1666 = arith.mulf %1611, %1665 : vector<8x128xf32>
    %1667 = arith.mulf %1620, %1665 : vector<8x128xf32>
    %1668 = arith.mulf %1629, %1665 : vector<8x128xf32>
    %1669 = arith.mulf %1638, %1665 : vector<8x128xf32>
    %1670 = arith.mulf %1647, %1665 : vector<8x128xf32>
    %c1 = arith.constant 1 : index
    %1671 = memref.load %arg6[%c1] : memref<8xf32, #tpu.memory_space<smem>>
    %c1_275 = arith.constant 1 : index
    %1672 = memref.load %arg8[%c1_275] : memref<8xf32, #tpu.memory_space<smem>>
    %c1_276 = arith.constant 1 : index
    %1673 = memref.load %arg9[%c1_276] : memref<8xf32, #tpu.memory_space<smem>>
    %c1_277 = arith.constant 1 : index
    %1674 = memref.load %arg12[%c1_277] : memref<8xf32, #tpu.memory_space<smem>>
    %c1_278 = arith.constant 1 : index
    %1675 = memref.load %arg13[%c1_278] : memref<8xf32, #tpu.memory_space<smem>>
    %c1_279 = arith.constant 1 : index
    %1676 = memref.load %arg10[%c1_279] : memref<8xf32, #tpu.memory_space<smem>>
    %1677 = vector.broadcast %1676 : f32 to vector<8x1xf32>
    %1678 = arith.mulf %0, %1677 : vector<8x1xf32>
    %c1_280 = arith.constant 1 : index
    %1679 = memref.load %arg11[%c1_280] : memref<8xf32, #tpu.memory_space<smem>>
    %1680 = vector.broadcast %1679 : f32 to vector<8x1xf32>
    %1681 = arith.mulf %0, %1680 : vector<8x1xf32>
    %c1_281 = arith.constant 1 : index
    %1682 = memref.load %arg7[%c1_281] : memref<8xf32, #tpu.memory_space<smem>>
    %1683 = vector.broadcast %1682 : f32 to vector<8x1xf32>
    %1684 = arith.mulf %1683, %1 : vector<8x1xf32>
    %cst_282 = arith.constant 2.000000e+00 : f32
    %1685 = vector.broadcast %cst_282 : f32 to vector<8x1xf32>
    %1686 = arith.mulf %1685, %1684 : vector<8x1xf32>
    %1687 = arith.mulf %1686, %1684 : vector<8x1xf32>
    %1688 = vector.broadcast %1687 : vector<8x1xf32> to vector<8x128xf32>
    %1689 = arith.mulf %1688, %18 : vector<8x128xf32>
    %cst_283 = arith.constant 1.000000e+00 : f32
    %1690 = vector.broadcast %cst_283 : f32 to vector<8x128xf32>
    %1691 = arith.subf %1689, %1690 : vector<8x128xf32>
    %1692 = vector.broadcast %1678 : vector<8x1xf32> to vector<8x128xf32>
    %1693 = arith.addf %17, %1692 : vector<8x128xf32>
    %1694 = vector.broadcast %1678 : vector<8x1xf32> to vector<8x128xf32>
    %1695 = arith.subf %17, %1694 : vector<8x128xf32>
    %1696 = math.absf %1695 : vector<8x128xf32>
    %1697 = arith.mulf %1693, %1696 : vector<8x128xf32>
    %1698 = vector.broadcast %1681 : vector<8x1xf32> to vector<8x128xf32>
    %1699 = arith.addf %17, %1698 : vector<8x128xf32>
    %1700 = vector.broadcast %1681 : vector<8x1xf32> to vector<8x128xf32>
    %1701 = arith.subf %17, %1700 : vector<8x128xf32>
    %1702 = math.absf %1701 : vector<8x128xf32>
    %1703 = arith.mulf %1699, %1702 : vector<8x128xf32>
    %cst_284 = arith.constant 0.000000e+00 : f32
    %1704 = vector.broadcast %cst_284 : f32 to vector<8x128xf32>
    %1705 = arith.cmpf oeq, %1697, %1704 : vector<8x128xf32>
    %cst_285 = arith.constant 1.000000e+00 : f32
    %1706 = vector.broadcast %cst_285 : f32 to vector<8x128xf32>
    %1707 = arith.select %1705, %1706, %1697 : vector<8x128xi1>, vector<8x128xf32>
    %1708 = math.rsqrt %1707 : vector<8x128xf32>
    %cst_286 = arith.constant 0.000000e+00 : f32
    %1709 = vector.broadcast %cst_286 : f32 to vector<8x128xf32>
    %1710 = arith.cmpf oeq, %1703, %1709 : vector<8x128xf32>
    %cst_287 = arith.constant 1.000000e+00 : f32
    %1711 = vector.broadcast %cst_287 : f32 to vector<8x128xf32>
    %1712 = arith.select %1710, %1711, %1703 : vector<8x128xi1>, vector<8x128xf32>
    %1713 = math.rsqrt %1712 : vector<8x128xf32>
    %1714 = arith.mulf %1697, %1708 : vector<8x128xf32>
    %1715 = arith.mulf %1703, %1713 : vector<8x128xf32>
    %1716 = vector.broadcast %1671 : f32 to vector<8x128xf32>
    %1717 = arith.mulf %1714, %1716 : vector<8x128xf32>
    %1718 = vector.broadcast %1671 : f32 to vector<8x128xf32>
    %1719 = arith.mulf %1715, %1718 : vector<8x128xf32>
    %1720 = math.sin %1717 : vector<8x128xf32>
    %cst_288 = arith.constant 1.600000e+01 : f32
    %1721 = vector.broadcast %cst_288 : f32 to vector<8x128xf32>
    %1722 = arith.cmpf olt, %1717, %1721 : vector<8x128xf32>
    %cst_289 = arith.constant -2.000000e+00 : f32
    %1723 = vector.broadcast %cst_289 : f32 to vector<8x128xf32>
    %1724 = arith.mulf %1723, %1717 : vector<8x128xf32>
    %1725 = math.exp %1724 : vector<8x128xf32>
    %cst_290 = arith.constant 0.000000e+00 : f32
    %1726 = vector.broadcast %cst_290 : f32 to vector<8x128xf32>
    %1727 = arith.select %1722, %1725, %1726 : vector<8x128xi1>, vector<8x128xf32>
    %cst_291 = arith.constant 1.000000e+00 : f32
    %1728 = vector.broadcast %cst_291 : f32 to vector<8x128xf32>
    %1729 = arith.subf %1728, %1727 : vector<8x128xf32>
    %cst_292 = arith.constant 5.000000e-01 : f32
    %1730 = vector.broadcast %cst_292 : f32 to vector<8x128xf32>
    %1731 = arith.mulf %1729, %1730 : vector<8x128xf32>
    %1732 = vector.broadcast %1678 : vector<8x1xf32> to vector<8x128xf32>
    %1733 = arith.cmpf olt, %17, %1732 : vector<8x128xf32>
    %1734 = vector.broadcast %1678 : vector<8x1xf32> to vector<8x128xf32>
    %1735 = arith.cmpf oeq, %17, %1734 : vector<8x128xf32>
    %1736 = arith.ori %1733, %1735 : vector<8x128xi1>
    %cst_293 = arith.constant 0.000000e+00 : f32
    %1737 = vector.broadcast %cst_293 : f32 to vector<8x128xf32>
    %1738 = arith.select %1736, %1737, %1717 : vector<8x128xi1>, vector<8x128xf32>
    %1739 = math.cos %1717 : vector<8x128xf32>
    %cst_294 = arith.constant 1.000000e+00 : f32
    %1740 = vector.broadcast %cst_294 : f32 to vector<8x128xf32>
    %1741 = arith.addf %1740, %1727 : vector<8x128xf32>
    %cst_295 = arith.constant 5.000000e-01 : f32
    %1742 = vector.broadcast %cst_295 : f32 to vector<8x128xf32>
    %1743 = arith.mulf %1741, %1742 : vector<8x128xf32>
    %cst_296 = arith.constant 1.000000e+00 : f32
    %1744 = vector.broadcast %cst_296 : f32 to vector<8x128xf32>
    %1745 = arith.select %1735, %1744, %1743 : vector<8x128xi1>, vector<8x128xf32>
    %1746 = arith.select %1733, %1739, %1745 : vector<8x128xi1>, vector<8x128xf32>
    %1747 = arith.mulf %1720, %1708 : vector<8x128xf32>
    %1748 = arith.mulf %1731, %1708 : vector<8x128xf32>
    %1749 = vector.broadcast %1671 : f32 to vector<8x128xf32>
    %1750 = arith.select %1735, %1749, %1748 : vector<8x128xi1>, vector<8x128xf32>
    %1751 = arith.select %1733, %1747, %1750 : vector<8x128xi1>, vector<8x128xf32>
    %cst_297 = arith.constant 0.000000e+00 : f32
    %1752 = vector.broadcast %cst_297 : f32 to vector<8x128xf32>
    %1753 = arith.subf %1752, %1714 : vector<8x128xf32>
    %1754 = arith.mulf %1753, %1720 : vector<8x128xf32>
    %1755 = arith.mulf %1714, %1731 : vector<8x128xf32>
    %cst_298 = arith.constant 0.000000e+00 : f32
    %1756 = vector.broadcast %cst_298 : f32 to vector<8x128xf32>
    %1757 = arith.select %1735, %1756, %1755 : vector<8x128xi1>, vector<8x128xf32>
    %1758 = arith.select %1733, %1754, %1757 : vector<8x128xi1>, vector<8x128xf32>
    %1759 = math.sin %1719 : vector<8x128xf32>
    %cst_299 = arith.constant 1.600000e+01 : f32
    %1760 = vector.broadcast %cst_299 : f32 to vector<8x128xf32>
    %1761 = arith.cmpf olt, %1719, %1760 : vector<8x128xf32>
    %cst_300 = arith.constant -2.000000e+00 : f32
    %1762 = vector.broadcast %cst_300 : f32 to vector<8x128xf32>
    %1763 = arith.mulf %1762, %1719 : vector<8x128xf32>
    %1764 = math.exp %1763 : vector<8x128xf32>
    %cst_301 = arith.constant 0.000000e+00 : f32
    %1765 = vector.broadcast %cst_301 : f32 to vector<8x128xf32>
    %1766 = arith.select %1761, %1764, %1765 : vector<8x128xi1>, vector<8x128xf32>
    %cst_302 = arith.constant 1.000000e+00 : f32
    %1767 = vector.broadcast %cst_302 : f32 to vector<8x128xf32>
    %1768 = arith.subf %1767, %1766 : vector<8x128xf32>
    %cst_303 = arith.constant 5.000000e-01 : f32
    %1769 = vector.broadcast %cst_303 : f32 to vector<8x128xf32>
    %1770 = arith.mulf %1768, %1769 : vector<8x128xf32>
    %1771 = vector.broadcast %1681 : vector<8x1xf32> to vector<8x128xf32>
    %1772 = arith.cmpf olt, %17, %1771 : vector<8x128xf32>
    %1773 = vector.broadcast %1681 : vector<8x1xf32> to vector<8x128xf32>
    %1774 = arith.cmpf oeq, %17, %1773 : vector<8x128xf32>
    %1775 = arith.ori %1772, %1774 : vector<8x128xi1>
    %cst_304 = arith.constant 0.000000e+00 : f32
    %1776 = vector.broadcast %cst_304 : f32 to vector<8x128xf32>
    %1777 = arith.select %1775, %1776, %1719 : vector<8x128xi1>, vector<8x128xf32>
    %1778 = math.cos %1719 : vector<8x128xf32>
    %cst_305 = arith.constant 1.000000e+00 : f32
    %1779 = vector.broadcast %cst_305 : f32 to vector<8x128xf32>
    %1780 = arith.addf %1779, %1766 : vector<8x128xf32>
    %cst_306 = arith.constant 5.000000e-01 : f32
    %1781 = vector.broadcast %cst_306 : f32 to vector<8x128xf32>
    %1782 = arith.mulf %1780, %1781 : vector<8x128xf32>
    %cst_307 = arith.constant 1.000000e+00 : f32
    %1783 = vector.broadcast %cst_307 : f32 to vector<8x128xf32>
    %1784 = arith.select %1774, %1783, %1782 : vector<8x128xi1>, vector<8x128xf32>
    %1785 = arith.select %1772, %1778, %1784 : vector<8x128xi1>, vector<8x128xf32>
    %1786 = arith.mulf %1759, %1713 : vector<8x128xf32>
    %1787 = arith.mulf %1770, %1713 : vector<8x128xf32>
    %1788 = vector.broadcast %1671 : f32 to vector<8x128xf32>
    %1789 = arith.select %1774, %1788, %1787 : vector<8x128xi1>, vector<8x128xf32>
    %1790 = arith.select %1772, %1786, %1789 : vector<8x128xi1>, vector<8x128xf32>
    %cst_308 = arith.constant 0.000000e+00 : f32
    %1791 = vector.broadcast %cst_308 : f32 to vector<8x128xf32>
    %1792 = arith.subf %1791, %1715 : vector<8x128xf32>
    %1793 = arith.mulf %1792, %1759 : vector<8x128xf32>
    %1794 = arith.mulf %1715, %1770 : vector<8x128xf32>
    %cst_309 = arith.constant 0.000000e+00 : f32
    %1795 = vector.broadcast %cst_309 : f32 to vector<8x128xf32>
    %1796 = arith.select %1774, %1795, %1794 : vector<8x128xi1>, vector<8x128xf32>
    %1797 = arith.select %1772, %1793, %1796 : vector<8x128xi1>, vector<8x128xf32>
    %1798 = arith.addf %1738, %1777 : vector<8x128xf32>
    %cst_310 = arith.constant 6.000000e+01 : f32
    %1799 = vector.broadcast %cst_310 : f32 to vector<8x128xf32>
    %1800 = arith.cmpf olt, %1798, %1799 : vector<8x128xf32>
    %cst_311 = arith.constant 0.000000e+00 : f32
    %1801 = vector.broadcast %cst_311 : f32 to vector<8x128xf32>
    %1802 = arith.subf %1801, %1798 : vector<8x128xf32>
    %1803 = math.exp %1802 : vector<8x128xf32>
    %cst_312 = arith.constant 0.000000e+00 : f32
    %1804 = vector.broadcast %cst_312 : f32 to vector<8x128xf32>
    %1805 = arith.select %1800, %1803, %1804 : vector<8x128xi1>, vector<8x128xf32>
    %1806 = arith.mulf %1746, %1785 : vector<8x128xf32>
    %1807 = arith.mulf %1746, %1790 : vector<8x128xf32>
    %1808 = arith.mulf %1746, %1797 : vector<8x128xf32>
    %1809 = arith.mulf %1785, %1751 : vector<8x128xf32>
    %1810 = arith.mulf %1785, %1758 : vector<8x128xf32>
    %1811 = arith.mulf %1758, %1790 : vector<8x128xf32>
    %1812 = arith.mulf %1758, %1797 : vector<8x128xf32>
    %1813 = arith.mulf %1751, %1790 : vector<8x128xf32>
    %1814 = arith.mulf %1751, %1797 : vector<8x128xf32>
    %1815 = arith.addf %1689, %1691 : vector<8x128xf32>
    %1816 = vector.broadcast %1687 : vector<8x1xf32> to vector<8x128xf32>
    %1817 = arith.mulf %1689, %1816 : vector<8x128xf32>
    %1818 = arith.mulf %1689, %1691 : vector<8x128xf32>
    %1819 = arith.mulf %1691, %1691 : vector<8x128xf32>
    %1820 = arith.subf %1805, %1806 : vector<8x128xf32>
    %cst_313 = arith.constant -2.000000e+00 : f32
    %1821 = vector.broadcast %cst_313 : f32 to vector<8x128xf32>
    %1822 = arith.mulf %1821, %18 : vector<8x128xf32>
    %cst_314 = arith.constant 2.000000e+00 : f32
    %1823 = vector.broadcast %cst_314 : f32 to vector<8x128xf32>
    %1824 = arith.mulf %1823, %1818 : vector<8x128xf32>
    %1825 = arith.mulf %1824, %1820 : vector<8x128xf32>
    %1826 = arith.subf %1806, %1825 : vector<8x128xf32>
    %1827 = arith.mulf %1817, %1812 : vector<8x128xf32>
    %1828 = arith.subf %1826, %1827 : vector<8x128xf32>
    %1829 = arith.mulf %18, %1819 : vector<8x128xf32>
    %1830 = arith.mulf %1829, %1813 : vector<8x128xf32>
    %1831 = arith.subf %1828, %1830 : vector<8x128xf32>
    %1832 = arith.mulf %18, %1807 : vector<8x128xf32>
    %1833 = arith.subf %1832, %1810 : vector<8x128xf32>
    %1834 = vector.broadcast %1674 : f32 to vector<8x128xf32>
    %1835 = arith.mulf %1833, %1834 : vector<8x128xf32>
    %1836 = arith.mulf %1815, %1820 : vector<8x128xf32>
    %1837 = vector.broadcast %1687 : vector<8x1xf32> to vector<8x128xf32>
    %1838 = arith.mulf %1837, %1812 : vector<8x128xf32>
    %1839 = arith.addf %1836, %1838 : vector<8x128xf32>
    %1840 = arith.mulf %18, %1691 : vector<8x128xf32>
    %1841 = arith.mulf %1840, %1813 : vector<8x128xf32>
    %1842 = arith.addf %1839, %1841 : vector<8x128xf32>
    %1843 = vector.broadcast %1674 : f32 to vector<8x128xf32>
    %1844 = arith.mulf %1842, %1843 : vector<8x128xf32>
    %cst_315 = arith.constant 0.000000e+00 : f32
    %1845 = vector.broadcast %cst_315 : f32 to vector<8x128xf32>
    %1846 = arith.subf %1845, %1844 : vector<8x128xf32>
    %1847 = arith.mulf %18, %1809 : vector<8x128xf32>
    %1848 = arith.subf %1808, %1847 : vector<8x128xf32>
    %1849 = vector.broadcast %1674 : f32 to vector<8x128xf32>
    %1850 = arith.mulf %1848, %1849 : vector<8x128xf32>
    %cst_316 = arith.constant 2.000000e+00 : f32
    %1851 = vector.broadcast %cst_316 : f32 to vector<8x128xf32>
    %1852 = arith.mulf %1851, %18 : vector<8x128xf32>
    %1853 = arith.mulf %1852, %1820 : vector<8x128xf32>
    %1854 = arith.addf %1853, %1812 : vector<8x128xf32>
    %1855 = arith.mulf %18, %18 : vector<8x128xf32>
    %1856 = arith.mulf %1855, %1813 : vector<8x128xf32>
    %1857 = arith.addf %1854, %1856 : vector<8x128xf32>
    %1858 = vector.broadcast %1675 : f32 to vector<8x128xf32>
    %1859 = arith.mulf %1857, %1858 : vector<8x128xf32>
    %cst_317 = arith.constant 0.000000e+00 : f32
    %1860 = vector.broadcast %cst_317 : f32 to vector<8x128xf32>
    %1861 = arith.subf %1860, %1859 : vector<8x128xf32>
    %1862 = arith.mulf %1817, %1808 : vector<8x128xf32>
    %1863 = arith.mulf %1819, %1809 : vector<8x128xf32>
    %1864 = arith.subf %1862, %1863 : vector<8x128xf32>
    %1865 = vector.broadcast %1672 : f32 to vector<8x128xf32>
    %1866 = arith.mulf %1864, %1865 : vector<8x128xf32>
    %1867 = vector.broadcast %1687 : vector<8x1xf32> to vector<8x128xf32>
    %1868 = arith.mulf %1867, %1808 : vector<8x128xf32>
    %1869 = arith.mulf %1691, %1809 : vector<8x128xf32>
    %1870 = arith.subf %1868, %1869 : vector<8x128xf32>
    %cst_318 = arith.constant 0.000000e+00 : f32
    %1871 = vector.broadcast %cst_318 : f32 to vector<8x128xf32>
    %1872 = arith.subf %1871, %1814 : vector<8x128xf32>
    %1873 = arith.mulf %1819, %1807 : vector<8x128xf32>
    %1874 = arith.mulf %1817, %1810 : vector<8x128xf32>
    %1875 = arith.subf %1873, %1874 : vector<8x128xf32>
    %1876 = vector.broadcast %1672 : f32 to vector<8x128xf32>
    %1877 = arith.mulf %1875, %1876 : vector<8x128xf32>
    %cst_319 = arith.constant 0.000000e+00 : f32
    %1878 = vector.broadcast %cst_319 : f32 to vector<8x128xf32>
    %1879 = arith.subf %1878, %1811 : vector<8x128xf32>
    %1880 = arith.mulf %1691, %1807 : vector<8x128xf32>
    %1881 = vector.broadcast %1687 : vector<8x1xf32> to vector<8x128xf32>
    %1882 = arith.mulf %1881, %1810 : vector<8x128xf32>
    %1883 = arith.subf %1880, %1882 : vector<8x128xf32>
    %cst_320 = arith.constant 2.000000e+00 : f32
    %1884 = vector.broadcast %cst_320 : f32 to vector<8x128xf32>
    %1885 = arith.mulf %1884, %1817 : vector<8x128xf32>
    %1886 = arith.mulf %1885, %1819 : vector<8x128xf32>
    %1887 = arith.mulf %1886, %1820 : vector<8x128xf32>
    %1888 = arith.mulf %1817, %1817 : vector<8x128xf32>
    %1889 = arith.mulf %1888, %1812 : vector<8x128xf32>
    %1890 = arith.addf %1887, %1889 : vector<8x128xf32>
    %1891 = arith.mulf %1819, %1819 : vector<8x128xf32>
    %1892 = arith.mulf %1891, %1813 : vector<8x128xf32>
    %1893 = arith.addf %1890, %1892 : vector<8x128xf32>
    %1894 = vector.broadcast %1673 : f32 to vector<8x128xf32>
    %1895 = arith.mulf %1893, %1894 : vector<8x128xf32>
    %cst_321 = arith.constant 0.000000e+00 : f32
    %1896 = vector.broadcast %cst_321 : f32 to vector<8x128xf32>
    %1897 = arith.subf %1896, %1895 : vector<8x128xf32>
    %1898 = vector.broadcast %1687 : vector<8x1xf32> to vector<8x128xf32>
    %1899 = arith.mulf %1898, %1691 : vector<8x128xf32>
    %1900 = arith.mulf %1899, %1815 : vector<8x128xf32>
    %1901 = arith.mulf %1900, %1820 : vector<8x128xf32>
    %1902 = vector.broadcast %1687 : vector<8x1xf32> to vector<8x128xf32>
    %1903 = arith.mulf %1689, %1902 : vector<8x128xf32>
    %1904 = vector.broadcast %1687 : vector<8x1xf32> to vector<8x128xf32>
    %1905 = arith.mulf %1903, %1904 : vector<8x128xf32>
    %1906 = arith.mulf %1905, %1812 : vector<8x128xf32>
    %1907 = arith.addf %1901, %1906 : vector<8x128xf32>
    %1908 = arith.mulf %1691, %1819 : vector<8x128xf32>
    %1909 = arith.mulf %1908, %1813 : vector<8x128xf32>
    %1910 = arith.addf %1907, %1909 : vector<8x128xf32>
    %1911 = vector.broadcast %1672 : f32 to vector<8x128xf32>
    %1912 = arith.mulf %1910, %1911 : vector<8x128xf32>
    %cst_322 = arith.constant 0.000000e+00 : f32
    %1913 = vector.broadcast %cst_322 : f32 to vector<8x128xf32>
    %1914 = arith.subf %1913, %1912 : vector<8x128xf32>
    %1915 = arith.mulf %1822, %1914 : vector<8x128xf32>
    %1916 = arith.mulf %1822, %1883 : vector<8x128xf32>
    %1917 = arith.subf %1806, %1831 : vector<8x128xf32>
    %cst_323 = arith.constant 2.000000e+00 : f32
    %1918 = vector.broadcast %cst_323 : f32 to vector<8x128xf32>
    %1919 = arith.mulf %1918, %1917 : vector<8x128xf32>
    %1920 = arith.addf %1805, %1919 : vector<8x128xf32>
    %1921 = arith.mulf %1822, %1870 : vector<8x128xf32>
    %1922 = arith.mulf %1822, %1846 : vector<8x128xf32>
    %1923 = arith.mulf %1666, %1831 : vector<8x128xf32>
    %1924 = arith.mulf %1667, %1866 : vector<8x128xf32>
    %1925 = arith.addf %1923, %1924 : vector<8x128xf32>
    %1926 = arith.mulf %1668, %1915 : vector<8x128xf32>
    %1927 = arith.addf %1925, %1926 : vector<8x128xf32>
    %1928 = arith.mulf %1669, %1877 : vector<8x128xf32>
    %1929 = arith.addf %1927, %1928 : vector<8x128xf32>
    %1930 = arith.mulf %1670, %1897 : vector<8x128xf32>
    %1931 = arith.addf %1929, %1930 : vector<8x128xf32>
    %1932 = arith.mulf %1666, %1835 : vector<8x128xf32>
    %1933 = arith.mulf %1667, %1806 : vector<8x128xf32>
    %1934 = arith.addf %1932, %1933 : vector<8x128xf32>
    %1935 = arith.mulf %1668, %1916 : vector<8x128xf32>
    %1936 = arith.addf %1934, %1935 : vector<8x128xf32>
    %1937 = arith.mulf %1669, %1879 : vector<8x128xf32>
    %1938 = arith.addf %1936, %1937 : vector<8x128xf32>
    %1939 = arith.mulf %1670, %1877 : vector<8x128xf32>
    %1940 = arith.addf %1938, %1939 : vector<8x128xf32>
    %1941 = arith.mulf %1666, %1846 : vector<8x128xf32>
    %1942 = arith.mulf %1667, %1870 : vector<8x128xf32>
    %1943 = arith.addf %1941, %1942 : vector<8x128xf32>
    %1944 = arith.mulf %1668, %1920 : vector<8x128xf32>
    %1945 = arith.addf %1943, %1944 : vector<8x128xf32>
    %1946 = arith.mulf %1669, %1883 : vector<8x128xf32>
    %1947 = arith.addf %1945, %1946 : vector<8x128xf32>
    %1948 = arith.mulf %1670, %1914 : vector<8x128xf32>
    %1949 = arith.addf %1947, %1948 : vector<8x128xf32>
    %1950 = arith.mulf %1666, %1850 : vector<8x128xf32>
    %1951 = arith.mulf %1667, %1872 : vector<8x128xf32>
    %1952 = arith.addf %1950, %1951 : vector<8x128xf32>
    %1953 = arith.mulf %1668, %1921 : vector<8x128xf32>
    %1954 = arith.addf %1952, %1953 : vector<8x128xf32>
    %1955 = arith.mulf %1669, %1806 : vector<8x128xf32>
    %1956 = arith.addf %1954, %1955 : vector<8x128xf32>
    %1957 = arith.mulf %1670, %1866 : vector<8x128xf32>
    %1958 = arith.addf %1956, %1957 : vector<8x128xf32>
    %1959 = arith.mulf %1666, %1861 : vector<8x128xf32>
    %1960 = arith.mulf %1667, %1850 : vector<8x128xf32>
    %1961 = arith.addf %1959, %1960 : vector<8x128xf32>
    %1962 = arith.mulf %1668, %1922 : vector<8x128xf32>
    %1963 = arith.addf %1961, %1962 : vector<8x128xf32>
    %1964 = arith.mulf %1669, %1835 : vector<8x128xf32>
    %1965 = arith.addf %1963, %1964 : vector<8x128xf32>
    %1966 = arith.mulf %1670, %1831 : vector<8x128xf32>
    %1967 = arith.addf %1965, %1966 : vector<8x128xf32>
    %1968 = math.absf %1931 : vector<8x128xf32>
    %1969 = math.absf %1940 : vector<8x128xf32>
    %1970 = arith.maximumf %1968, %1969 : vector<8x128xf32>
    %1971 = math.absf %1949 : vector<8x128xf32>
    %1972 = math.absf %1958 : vector<8x128xf32>
    %1973 = arith.maximumf %1971, %1972 : vector<8x128xf32>
    %1974 = arith.maximumf %1970, %1973 : vector<8x128xf32>
    %1975 = math.absf %1967 : vector<8x128xf32>
    %1976 = arith.maximumf %1974, %1975 : vector<8x128xf32>
    %cst_324 = arith.constant 1.000000e-30 : f32
    %1977 = vector.broadcast %cst_324 : f32 to vector<8x128xf32>
    %1978 = arith.cmpf olt, %1976, %1977 : vector<8x128xf32>
    %cst_325 = arith.constant 1.000000e+00 : f32
    %1979 = vector.broadcast %cst_325 : f32 to vector<8x128xf32>
    %1980 = arith.select %1978, %1979, %1976 : vector<8x128xi1>, vector<8x128xf32>
    %1981 = tpu.reciprocal %1980 {approx = true} : vector<8x128xf32> -> vector<8x128xf32>
    %1982 = arith.mulf %1980, %1981 : vector<8x128xf32>
    %cst_326 = arith.constant 2.000000e+00 : f32
    %1983 = vector.broadcast %cst_326 : f32 to vector<8x128xf32>
    %1984 = arith.subf %1983, %1982 : vector<8x128xf32>
    %1985 = arith.mulf %1981, %1984 : vector<8x128xf32>
    %1986 = arith.mulf %1931, %1985 : vector<8x128xf32>
    %1987 = arith.mulf %1940, %1985 : vector<8x128xf32>
    %1988 = arith.mulf %1949, %1985 : vector<8x128xf32>
    %1989 = arith.mulf %1958, %1985 : vector<8x128xf32>
    %1990 = arith.mulf %1967, %1985 : vector<8x128xf32>
    %c0_327 = arith.constant 0 : index
    %1991 = memref.load %arg6[%c0_327] : memref<8xf32, #tpu.memory_space<smem>>
    %c0_328 = arith.constant 0 : index
    %1992 = memref.load %arg8[%c0_328] : memref<8xf32, #tpu.memory_space<smem>>
    %c0_329 = arith.constant 0 : index
    %1993 = memref.load %arg9[%c0_329] : memref<8xf32, #tpu.memory_space<smem>>
    %c0_330 = arith.constant 0 : index
    %1994 = memref.load %arg12[%c0_330] : memref<8xf32, #tpu.memory_space<smem>>
    %c0_331 = arith.constant 0 : index
    %1995 = memref.load %arg13[%c0_331] : memref<8xf32, #tpu.memory_space<smem>>
    %c0_332 = arith.constant 0 : index
    %1996 = memref.load %arg10[%c0_332] : memref<8xf32, #tpu.memory_space<smem>>
    %1997 = vector.broadcast %1996 : f32 to vector<8x1xf32>
    %1998 = arith.mulf %0, %1997 : vector<8x1xf32>
    %c0_333 = arith.constant 0 : index
    %1999 = memref.load %arg11[%c0_333] : memref<8xf32, #tpu.memory_space<smem>>
    %2000 = vector.broadcast %1999 : f32 to vector<8x1xf32>
    %2001 = arith.mulf %0, %2000 : vector<8x1xf32>
    %c0_334 = arith.constant 0 : index
    %2002 = memref.load %arg7[%c0_334] : memref<8xf32, #tpu.memory_space<smem>>
    %2003 = vector.broadcast %2002 : f32 to vector<8x1xf32>
    %2004 = arith.mulf %2003, %1 : vector<8x1xf32>
    %cst_335 = arith.constant 2.000000e+00 : f32
    %2005 = vector.broadcast %cst_335 : f32 to vector<8x1xf32>
    %2006 = arith.mulf %2005, %2004 : vector<8x1xf32>
    %2007 = arith.mulf %2006, %2004 : vector<8x1xf32>
    %2008 = vector.broadcast %2007 : vector<8x1xf32> to vector<8x128xf32>
    %2009 = arith.mulf %2008, %18 : vector<8x128xf32>
    %cst_336 = arith.constant 1.000000e+00 : f32
    %2010 = vector.broadcast %cst_336 : f32 to vector<8x128xf32>
    %2011 = arith.subf %2009, %2010 : vector<8x128xf32>
    %2012 = vector.broadcast %1998 : vector<8x1xf32> to vector<8x128xf32>
    %2013 = arith.addf %17, %2012 : vector<8x128xf32>
    %2014 = vector.broadcast %1998 : vector<8x1xf32> to vector<8x128xf32>
    %2015 = arith.subf %17, %2014 : vector<8x128xf32>
    %2016 = math.absf %2015 : vector<8x128xf32>
    %2017 = arith.mulf %2013, %2016 : vector<8x128xf32>
    %2018 = vector.broadcast %2001 : vector<8x1xf32> to vector<8x128xf32>
    %2019 = arith.addf %17, %2018 : vector<8x128xf32>
    %2020 = vector.broadcast %2001 : vector<8x1xf32> to vector<8x128xf32>
    %2021 = arith.subf %17, %2020 : vector<8x128xf32>
    %2022 = math.absf %2021 : vector<8x128xf32>
    %2023 = arith.mulf %2019, %2022 : vector<8x128xf32>
    %cst_337 = arith.constant 0.000000e+00 : f32
    %2024 = vector.broadcast %cst_337 : f32 to vector<8x128xf32>
    %2025 = arith.cmpf oeq, %2017, %2024 : vector<8x128xf32>
    %cst_338 = arith.constant 1.000000e+00 : f32
    %2026 = vector.broadcast %cst_338 : f32 to vector<8x128xf32>
    %2027 = arith.select %2025, %2026, %2017 : vector<8x128xi1>, vector<8x128xf32>
    %2028 = math.rsqrt %2027 : vector<8x128xf32>
    %cst_339 = arith.constant 0.000000e+00 : f32
    %2029 = vector.broadcast %cst_339 : f32 to vector<8x128xf32>
    %2030 = arith.cmpf oeq, %2023, %2029 : vector<8x128xf32>
    %cst_340 = arith.constant 1.000000e+00 : f32
    %2031 = vector.broadcast %cst_340 : f32 to vector<8x128xf32>
    %2032 = arith.select %2030, %2031, %2023 : vector<8x128xi1>, vector<8x128xf32>
    %2033 = math.rsqrt %2032 : vector<8x128xf32>
    %2034 = arith.mulf %2017, %2028 : vector<8x128xf32>
    %2035 = arith.mulf %2023, %2033 : vector<8x128xf32>
    %2036 = vector.broadcast %1991 : f32 to vector<8x128xf32>
    %2037 = arith.mulf %2034, %2036 : vector<8x128xf32>
    %2038 = vector.broadcast %1991 : f32 to vector<8x128xf32>
    %2039 = arith.mulf %2035, %2038 : vector<8x128xf32>
    %2040 = math.sin %2037 : vector<8x128xf32>
    %cst_341 = arith.constant 1.600000e+01 : f32
    %2041 = vector.broadcast %cst_341 : f32 to vector<8x128xf32>
    %2042 = arith.cmpf olt, %2037, %2041 : vector<8x128xf32>
    %cst_342 = arith.constant -2.000000e+00 : f32
    %2043 = vector.broadcast %cst_342 : f32 to vector<8x128xf32>
    %2044 = arith.mulf %2043, %2037 : vector<8x128xf32>
    %2045 = math.exp %2044 : vector<8x128xf32>
    %cst_343 = arith.constant 0.000000e+00 : f32
    %2046 = vector.broadcast %cst_343 : f32 to vector<8x128xf32>
    %2047 = arith.select %2042, %2045, %2046 : vector<8x128xi1>, vector<8x128xf32>
    %cst_344 = arith.constant 1.000000e+00 : f32
    %2048 = vector.broadcast %cst_344 : f32 to vector<8x128xf32>
    %2049 = arith.subf %2048, %2047 : vector<8x128xf32>
    %cst_345 = arith.constant 5.000000e-01 : f32
    %2050 = vector.broadcast %cst_345 : f32 to vector<8x128xf32>
    %2051 = arith.mulf %2049, %2050 : vector<8x128xf32>
    %2052 = vector.broadcast %1998 : vector<8x1xf32> to vector<8x128xf32>
    %2053 = arith.cmpf olt, %17, %2052 : vector<8x128xf32>
    %2054 = vector.broadcast %1998 : vector<8x1xf32> to vector<8x128xf32>
    %2055 = arith.cmpf oeq, %17, %2054 : vector<8x128xf32>
    %2056 = arith.ori %2053, %2055 : vector<8x128xi1>
    %cst_346 = arith.constant 0.000000e+00 : f32
    %2057 = vector.broadcast %cst_346 : f32 to vector<8x128xf32>
    %2058 = arith.select %2056, %2057, %2037 : vector<8x128xi1>, vector<8x128xf32>
    %2059 = math.cos %2037 : vector<8x128xf32>
    %cst_347 = arith.constant 1.000000e+00 : f32
    %2060 = vector.broadcast %cst_347 : f32 to vector<8x128xf32>
    %2061 = arith.addf %2060, %2047 : vector<8x128xf32>
    %cst_348 = arith.constant 5.000000e-01 : f32
    %2062 = vector.broadcast %cst_348 : f32 to vector<8x128xf32>
    %2063 = arith.mulf %2061, %2062 : vector<8x128xf32>
    %cst_349 = arith.constant 1.000000e+00 : f32
    %2064 = vector.broadcast %cst_349 : f32 to vector<8x128xf32>
    %2065 = arith.select %2055, %2064, %2063 : vector<8x128xi1>, vector<8x128xf32>
    %2066 = arith.select %2053, %2059, %2065 : vector<8x128xi1>, vector<8x128xf32>
    %2067 = arith.mulf %2040, %2028 : vector<8x128xf32>
    %2068 = arith.mulf %2051, %2028 : vector<8x128xf32>
    %2069 = vector.broadcast %1991 : f32 to vector<8x128xf32>
    %2070 = arith.select %2055, %2069, %2068 : vector<8x128xi1>, vector<8x128xf32>
    %2071 = arith.select %2053, %2067, %2070 : vector<8x128xi1>, vector<8x128xf32>
    %cst_350 = arith.constant 0.000000e+00 : f32
    %2072 = vector.broadcast %cst_350 : f32 to vector<8x128xf32>
    %2073 = arith.subf %2072, %2034 : vector<8x128xf32>
    %2074 = arith.mulf %2073, %2040 : vector<8x128xf32>
    %2075 = arith.mulf %2034, %2051 : vector<8x128xf32>
    %cst_351 = arith.constant 0.000000e+00 : f32
    %2076 = vector.broadcast %cst_351 : f32 to vector<8x128xf32>
    %2077 = arith.select %2055, %2076, %2075 : vector<8x128xi1>, vector<8x128xf32>
    %2078 = arith.select %2053, %2074, %2077 : vector<8x128xi1>, vector<8x128xf32>
    %2079 = math.sin %2039 : vector<8x128xf32>
    %cst_352 = arith.constant 1.600000e+01 : f32
    %2080 = vector.broadcast %cst_352 : f32 to vector<8x128xf32>
    %2081 = arith.cmpf olt, %2039, %2080 : vector<8x128xf32>
    %cst_353 = arith.constant -2.000000e+00 : f32
    %2082 = vector.broadcast %cst_353 : f32 to vector<8x128xf32>
    %2083 = arith.mulf %2082, %2039 : vector<8x128xf32>
    %2084 = math.exp %2083 : vector<8x128xf32>
    %cst_354 = arith.constant 0.000000e+00 : f32
    %2085 = vector.broadcast %cst_354 : f32 to vector<8x128xf32>
    %2086 = arith.select %2081, %2084, %2085 : vector<8x128xi1>, vector<8x128xf32>
    %cst_355 = arith.constant 1.000000e+00 : f32
    %2087 = vector.broadcast %cst_355 : f32 to vector<8x128xf32>
    %2088 = arith.subf %2087, %2086 : vector<8x128xf32>
    %cst_356 = arith.constant 5.000000e-01 : f32
    %2089 = vector.broadcast %cst_356 : f32 to vector<8x128xf32>
    %2090 = arith.mulf %2088, %2089 : vector<8x128xf32>
    %2091 = vector.broadcast %2001 : vector<8x1xf32> to vector<8x128xf32>
    %2092 = arith.cmpf olt, %17, %2091 : vector<8x128xf32>
    %2093 = vector.broadcast %2001 : vector<8x1xf32> to vector<8x128xf32>
    %2094 = arith.cmpf oeq, %17, %2093 : vector<8x128xf32>
    %2095 = arith.ori %2092, %2094 : vector<8x128xi1>
    %cst_357 = arith.constant 0.000000e+00 : f32
    %2096 = vector.broadcast %cst_357 : f32 to vector<8x128xf32>
    %2097 = arith.select %2095, %2096, %2039 : vector<8x128xi1>, vector<8x128xf32>
    %2098 = math.cos %2039 : vector<8x128xf32>
    %cst_358 = arith.constant 1.000000e+00 : f32
    %2099 = vector.broadcast %cst_358 : f32 to vector<8x128xf32>
    %2100 = arith.addf %2099, %2086 : vector<8x128xf32>
    %cst_359 = arith.constant 5.000000e-01 : f32
    %2101 = vector.broadcast %cst_359 : f32 to vector<8x128xf32>
    %2102 = arith.mulf %2100, %2101 : vector<8x128xf32>
    %cst_360 = arith.constant 1.000000e+00 : f32
    %2103 = vector.broadcast %cst_360 : f32 to vector<8x128xf32>
    %2104 = arith.select %2094, %2103, %2102 : vector<8x128xi1>, vector<8x128xf32>
    %2105 = arith.select %2092, %2098, %2104 : vector<8x128xi1>, vector<8x128xf32>
    %2106 = arith.mulf %2079, %2033 : vector<8x128xf32>
    %2107 = arith.mulf %2090, %2033 : vector<8x128xf32>
    %2108 = vector.broadcast %1991 : f32 to vector<8x128xf32>
    %2109 = arith.select %2094, %2108, %2107 : vector<8x128xi1>, vector<8x128xf32>
    %2110 = arith.select %2092, %2106, %2109 : vector<8x128xi1>, vector<8x128xf32>
    %cst_361 = arith.constant 0.000000e+00 : f32
    %2111 = vector.broadcast %cst_361 : f32 to vector<8x128xf32>
    %2112 = arith.subf %2111, %2035 : vector<8x128xf32>
    %2113 = arith.mulf %2112, %2079 : vector<8x128xf32>
    %2114 = arith.mulf %2035, %2090 : vector<8x128xf32>
    %cst_362 = arith.constant 0.000000e+00 : f32
    %2115 = vector.broadcast %cst_362 : f32 to vector<8x128xf32>
    %2116 = arith.select %2094, %2115, %2114 : vector<8x128xi1>, vector<8x128xf32>
    %2117 = arith.select %2092, %2113, %2116 : vector<8x128xi1>, vector<8x128xf32>
    %2118 = arith.addf %2058, %2097 : vector<8x128xf32>
    %cst_363 = arith.constant 6.000000e+01 : f32
    %2119 = vector.broadcast %cst_363 : f32 to vector<8x128xf32>
    %2120 = arith.cmpf olt, %2118, %2119 : vector<8x128xf32>
    %cst_364 = arith.constant 0.000000e+00 : f32
    %2121 = vector.broadcast %cst_364 : f32 to vector<8x128xf32>
    %2122 = arith.subf %2121, %2118 : vector<8x128xf32>
    %2123 = math.exp %2122 : vector<8x128xf32>
    %cst_365 = arith.constant 0.000000e+00 : f32
    %2124 = vector.broadcast %cst_365 : f32 to vector<8x128xf32>
    %2125 = arith.select %2120, %2123, %2124 : vector<8x128xi1>, vector<8x128xf32>
    %2126 = arith.mulf %2066, %2105 : vector<8x128xf32>
    %2127 = arith.mulf %2066, %2110 : vector<8x128xf32>
    %2128 = arith.mulf %2066, %2117 : vector<8x128xf32>
    %2129 = arith.mulf %2105, %2071 : vector<8x128xf32>
    %2130 = arith.mulf %2105, %2078 : vector<8x128xf32>
    %2131 = arith.mulf %2078, %2110 : vector<8x128xf32>
    %2132 = arith.mulf %2078, %2117 : vector<8x128xf32>
    %2133 = arith.mulf %2071, %2110 : vector<8x128xf32>
    %2134 = arith.mulf %2071, %2117 : vector<8x128xf32>
    %2135 = arith.addf %2009, %2011 : vector<8x128xf32>
    %2136 = vector.broadcast %2007 : vector<8x1xf32> to vector<8x128xf32>
    %2137 = arith.mulf %2009, %2136 : vector<8x128xf32>
    %2138 = arith.mulf %2009, %2011 : vector<8x128xf32>
    %2139 = arith.mulf %2011, %2011 : vector<8x128xf32>
    %2140 = arith.subf %2125, %2126 : vector<8x128xf32>
    %cst_366 = arith.constant -2.000000e+00 : f32
    %2141 = vector.broadcast %cst_366 : f32 to vector<8x128xf32>
    %2142 = arith.mulf %2141, %18 : vector<8x128xf32>
    %cst_367 = arith.constant 2.000000e+00 : f32
    %2143 = vector.broadcast %cst_367 : f32 to vector<8x128xf32>
    %2144 = arith.mulf %2143, %2138 : vector<8x128xf32>
    %2145 = arith.mulf %2144, %2140 : vector<8x128xf32>
    %2146 = arith.subf %2126, %2145 : vector<8x128xf32>
    %2147 = arith.mulf %2137, %2132 : vector<8x128xf32>
    %2148 = arith.subf %2146, %2147 : vector<8x128xf32>
    %2149 = arith.mulf %18, %2139 : vector<8x128xf32>
    %2150 = arith.mulf %2149, %2133 : vector<8x128xf32>
    %2151 = arith.subf %2148, %2150 : vector<8x128xf32>
    %2152 = arith.mulf %18, %2127 : vector<8x128xf32>
    %2153 = arith.subf %2152, %2130 : vector<8x128xf32>
    %2154 = vector.broadcast %1994 : f32 to vector<8x128xf32>
    %2155 = arith.mulf %2153, %2154 : vector<8x128xf32>
    %2156 = arith.mulf %2135, %2140 : vector<8x128xf32>
    %2157 = vector.broadcast %2007 : vector<8x1xf32> to vector<8x128xf32>
    %2158 = arith.mulf %2157, %2132 : vector<8x128xf32>
    %2159 = arith.addf %2156, %2158 : vector<8x128xf32>
    %2160 = arith.mulf %18, %2011 : vector<8x128xf32>
    %2161 = arith.mulf %2160, %2133 : vector<8x128xf32>
    %2162 = arith.addf %2159, %2161 : vector<8x128xf32>
    %2163 = vector.broadcast %1994 : f32 to vector<8x128xf32>
    %2164 = arith.mulf %2162, %2163 : vector<8x128xf32>
    %cst_368 = arith.constant 0.000000e+00 : f32
    %2165 = vector.broadcast %cst_368 : f32 to vector<8x128xf32>
    %2166 = arith.subf %2165, %2164 : vector<8x128xf32>
    %2167 = arith.mulf %18, %2129 : vector<8x128xf32>
    %2168 = arith.subf %2128, %2167 : vector<8x128xf32>
    %2169 = vector.broadcast %1994 : f32 to vector<8x128xf32>
    %2170 = arith.mulf %2168, %2169 : vector<8x128xf32>
    %cst_369 = arith.constant 2.000000e+00 : f32
    %2171 = vector.broadcast %cst_369 : f32 to vector<8x128xf32>
    %2172 = arith.mulf %2171, %18 : vector<8x128xf32>
    %2173 = arith.mulf %2172, %2140 : vector<8x128xf32>
    %2174 = arith.addf %2173, %2132 : vector<8x128xf32>
    %2175 = arith.mulf %18, %18 : vector<8x128xf32>
    %2176 = arith.mulf %2175, %2133 : vector<8x128xf32>
    %2177 = arith.addf %2174, %2176 : vector<8x128xf32>
    %2178 = vector.broadcast %1995 : f32 to vector<8x128xf32>
    %2179 = arith.mulf %2177, %2178 : vector<8x128xf32>
    %cst_370 = arith.constant 0.000000e+00 : f32
    %2180 = vector.broadcast %cst_370 : f32 to vector<8x128xf32>
    %2181 = arith.subf %2180, %2179 : vector<8x128xf32>
    %2182 = arith.mulf %2137, %2128 : vector<8x128xf32>
    %2183 = arith.mulf %2139, %2129 : vector<8x128xf32>
    %2184 = arith.subf %2182, %2183 : vector<8x128xf32>
    %2185 = vector.broadcast %1992 : f32 to vector<8x128xf32>
    %2186 = arith.mulf %2184, %2185 : vector<8x128xf32>
    %2187 = vector.broadcast %2007 : vector<8x1xf32> to vector<8x128xf32>
    %2188 = arith.mulf %2187, %2128 : vector<8x128xf32>
    %2189 = arith.mulf %2011, %2129 : vector<8x128xf32>
    %2190 = arith.subf %2188, %2189 : vector<8x128xf32>
    %cst_371 = arith.constant 0.000000e+00 : f32
    %2191 = vector.broadcast %cst_371 : f32 to vector<8x128xf32>
    %2192 = arith.subf %2191, %2134 : vector<8x128xf32>
    %2193 = arith.mulf %2139, %2127 : vector<8x128xf32>
    %2194 = arith.mulf %2137, %2130 : vector<8x128xf32>
    %2195 = arith.subf %2193, %2194 : vector<8x128xf32>
    %2196 = vector.broadcast %1992 : f32 to vector<8x128xf32>
    %2197 = arith.mulf %2195, %2196 : vector<8x128xf32>
    %cst_372 = arith.constant 0.000000e+00 : f32
    %2198 = vector.broadcast %cst_372 : f32 to vector<8x128xf32>
    %2199 = arith.subf %2198, %2131 : vector<8x128xf32>
    %2200 = arith.mulf %2011, %2127 : vector<8x128xf32>
    %2201 = vector.broadcast %2007 : vector<8x1xf32> to vector<8x128xf32>
    %2202 = arith.mulf %2201, %2130 : vector<8x128xf32>
    %2203 = arith.subf %2200, %2202 : vector<8x128xf32>
    %cst_373 = arith.constant 2.000000e+00 : f32
    %2204 = vector.broadcast %cst_373 : f32 to vector<8x128xf32>
    %2205 = arith.mulf %2204, %2137 : vector<8x128xf32>
    %2206 = arith.mulf %2205, %2139 : vector<8x128xf32>
    %2207 = arith.mulf %2206, %2140 : vector<8x128xf32>
    %2208 = arith.mulf %2137, %2137 : vector<8x128xf32>
    %2209 = arith.mulf %2208, %2132 : vector<8x128xf32>
    %2210 = arith.addf %2207, %2209 : vector<8x128xf32>
    %2211 = arith.mulf %2139, %2139 : vector<8x128xf32>
    %2212 = arith.mulf %2211, %2133 : vector<8x128xf32>
    %2213 = arith.addf %2210, %2212 : vector<8x128xf32>
    %2214 = vector.broadcast %1993 : f32 to vector<8x128xf32>
    %2215 = arith.mulf %2213, %2214 : vector<8x128xf32>
    %cst_374 = arith.constant 0.000000e+00 : f32
    %2216 = vector.broadcast %cst_374 : f32 to vector<8x128xf32>
    %2217 = arith.subf %2216, %2215 : vector<8x128xf32>
    %2218 = vector.broadcast %2007 : vector<8x1xf32> to vector<8x128xf32>
    %2219 = arith.mulf %2218, %2011 : vector<8x128xf32>
    %2220 = arith.mulf %2219, %2135 : vector<8x128xf32>
    %2221 = arith.mulf %2220, %2140 : vector<8x128xf32>
    %2222 = vector.broadcast %2007 : vector<8x1xf32> to vector<8x128xf32>
    %2223 = arith.mulf %2009, %2222 : vector<8x128xf32>
    %2224 = vector.broadcast %2007 : vector<8x1xf32> to vector<8x128xf32>
    %2225 = arith.mulf %2223, %2224 : vector<8x128xf32>
    %2226 = arith.mulf %2225, %2132 : vector<8x128xf32>
    %2227 = arith.addf %2221, %2226 : vector<8x128xf32>
    %2228 = arith.mulf %2011, %2139 : vector<8x128xf32>
    %2229 = arith.mulf %2228, %2133 : vector<8x128xf32>
    %2230 = arith.addf %2227, %2229 : vector<8x128xf32>
    %2231 = vector.broadcast %1992 : f32 to vector<8x128xf32>
    %2232 = arith.mulf %2230, %2231 : vector<8x128xf32>
    %cst_375 = arith.constant 0.000000e+00 : f32
    %2233 = vector.broadcast %cst_375 : f32 to vector<8x128xf32>
    %2234 = arith.subf %2233, %2232 : vector<8x128xf32>
    %2235 = arith.mulf %2142, %2234 : vector<8x128xf32>
    %2236 = arith.mulf %2142, %2203 : vector<8x128xf32>
    %2237 = arith.subf %2126, %2151 : vector<8x128xf32>
    %cst_376 = arith.constant 2.000000e+00 : f32
    %2238 = vector.broadcast %cst_376 : f32 to vector<8x128xf32>
    %2239 = arith.mulf %2238, %2237 : vector<8x128xf32>
    %2240 = arith.addf %2125, %2239 : vector<8x128xf32>
    %2241 = arith.mulf %2142, %2190 : vector<8x128xf32>
    %2242 = arith.mulf %2142, %2166 : vector<8x128xf32>
    %2243 = arith.mulf %1986, %2151 : vector<8x128xf32>
    %2244 = arith.mulf %1987, %2186 : vector<8x128xf32>
    %2245 = arith.addf %2243, %2244 : vector<8x128xf32>
    %2246 = arith.mulf %1988, %2235 : vector<8x128xf32>
    %2247 = arith.addf %2245, %2246 : vector<8x128xf32>
    %2248 = arith.mulf %1989, %2197 : vector<8x128xf32>
    %2249 = arith.addf %2247, %2248 : vector<8x128xf32>
    %2250 = arith.mulf %1990, %2217 : vector<8x128xf32>
    %2251 = arith.addf %2249, %2250 : vector<8x128xf32>
    %2252 = arith.mulf %1986, %2155 : vector<8x128xf32>
    %2253 = arith.mulf %1987, %2126 : vector<8x128xf32>
    %2254 = arith.addf %2252, %2253 : vector<8x128xf32>
    %2255 = arith.mulf %1988, %2236 : vector<8x128xf32>
    %2256 = arith.addf %2254, %2255 : vector<8x128xf32>
    %2257 = arith.mulf %1989, %2199 : vector<8x128xf32>
    %2258 = arith.addf %2256, %2257 : vector<8x128xf32>
    %2259 = arith.mulf %1990, %2197 : vector<8x128xf32>
    %2260 = arith.addf %2258, %2259 : vector<8x128xf32>
    %2261 = arith.mulf %1986, %2166 : vector<8x128xf32>
    %2262 = arith.mulf %1987, %2190 : vector<8x128xf32>
    %2263 = arith.addf %2261, %2262 : vector<8x128xf32>
    %2264 = arith.mulf %1988, %2240 : vector<8x128xf32>
    %2265 = arith.addf %2263, %2264 : vector<8x128xf32>
    %2266 = arith.mulf %1989, %2203 : vector<8x128xf32>
    %2267 = arith.addf %2265, %2266 : vector<8x128xf32>
    %2268 = arith.mulf %1990, %2234 : vector<8x128xf32>
    %2269 = arith.addf %2267, %2268 : vector<8x128xf32>
    %2270 = arith.mulf %1986, %2170 : vector<8x128xf32>
    %2271 = arith.mulf %1987, %2192 : vector<8x128xf32>
    %2272 = arith.addf %2270, %2271 : vector<8x128xf32>
    %2273 = arith.mulf %1988, %2241 : vector<8x128xf32>
    %2274 = arith.addf %2272, %2273 : vector<8x128xf32>
    %2275 = arith.mulf %1989, %2126 : vector<8x128xf32>
    %2276 = arith.addf %2274, %2275 : vector<8x128xf32>
    %2277 = arith.mulf %1990, %2186 : vector<8x128xf32>
    %2278 = arith.addf %2276, %2277 : vector<8x128xf32>
    %2279 = arith.mulf %1986, %2181 : vector<8x128xf32>
    %2280 = arith.mulf %1987, %2170 : vector<8x128xf32>
    %2281 = arith.addf %2279, %2280 : vector<8x128xf32>
    %2282 = arith.mulf %1988, %2242 : vector<8x128xf32>
    %2283 = arith.addf %2281, %2282 : vector<8x128xf32>
    %2284 = arith.mulf %1989, %2155 : vector<8x128xf32>
    %2285 = arith.addf %2283, %2284 : vector<8x128xf32>
    %2286 = arith.mulf %1990, %2151 : vector<8x128xf32>
    %2287 = arith.addf %2285, %2286 : vector<8x128xf32>
    %2288 = math.absf %2251 : vector<8x128xf32>
    %2289 = math.absf %2260 : vector<8x128xf32>
    %2290 = arith.maximumf %2288, %2289 : vector<8x128xf32>
    %2291 = math.absf %2269 : vector<8x128xf32>
    %2292 = math.absf %2278 : vector<8x128xf32>
    %2293 = arith.maximumf %2291, %2292 : vector<8x128xf32>
    %2294 = arith.maximumf %2290, %2293 : vector<8x128xf32>
    %2295 = math.absf %2287 : vector<8x128xf32>
    %2296 = arith.maximumf %2294, %2295 : vector<8x128xf32>
    %cst_377 = arith.constant 1.000000e-30 : f32
    %2297 = vector.broadcast %cst_377 : f32 to vector<8x128xf32>
    %2298 = arith.cmpf olt, %2296, %2297 : vector<8x128xf32>
    %cst_378 = arith.constant 1.000000e+00 : f32
    %2299 = vector.broadcast %cst_378 : f32 to vector<8x128xf32>
    %2300 = arith.select %2298, %2299, %2296 : vector<8x128xi1>, vector<8x128xf32>
    %2301 = tpu.reciprocal %2300 {approx = true} : vector<8x128xf32> -> vector<8x128xf32>
    %2302 = arith.mulf %2300, %2301 : vector<8x128xf32>
    %cst_379 = arith.constant 2.000000e+00 : f32
    %2303 = vector.broadcast %cst_379 : f32 to vector<8x128xf32>
    %2304 = arith.subf %2303, %2302 : vector<8x128xf32>
    %2305 = arith.mulf %2301, %2304 : vector<8x128xf32>
    %2306 = arith.mulf %2251, %2305 : vector<8x128xf32>
    %cst_380 = arith.constant 0x7F800000 : f32
    %2307 = vector.broadcast %cst_380 : f32 to vector<8x128xf32>
    %2308 = arith.select %7, %2307, %2306 : vector<8x128xi1>, vector<8x128xf32>
    %cst_381 = arith.constant dense<0x7F800000> : vector<8xf32>
    %2309 = vector.multi_reduction <minimumf>, %2308, %cst_381 [1] : vector<8x128xf32> to vector<8xf32>
    %2310 = vector.shape_cast %2309 : vector<8xf32> to vector<8x1xf32>
    %cst_382 = arith.constant 0xFF800000 : f32
    %2311 = vector.broadcast %cst_382 : f32 to vector<8x128xf32>
    %2312 = arith.select %7, %2311, %2306 : vector<8x128xi1>, vector<8x128xf32>
    %cst_383 = arith.constant dense<0xFF800000> : vector<8xf32>
    %2313 = vector.multi_reduction <maximumf>, %2312, %cst_383 [1] : vector<8x128xf32> to vector<8xf32>
    %2314 = vector.shape_cast %2313 : vector<8xf32> to vector<8x1xf32>
    %c0_i32_384 = arith.constant 0 : i32
    %2315 = arith.cmpi eq, %arg1, %c0_i32_384 : i32
    %2316 = arith.extui %2315 : i1 to i32
    %c0_i32_385 = arith.constant 0 : i32
    %2317 = arith.cmpi ne, %2316, %c0_i32_385 : i32
    scf.if %2317 {
      %2321 = vector.extract_strided_slice %2306 {offsets = [0, 0], sizes = [8, 1], strides = [1, 1]} : vector<8x128xf32> to vector<8x1xf32>
      %c0_388 = arith.constant 0 : index
      %c0_389 = arith.constant 0 : index
      %2322 = vector.load %arg14[%c0_388, %c0_389] : memref<8x1xf32, #tpu.memory_space<vmem>>, vector<8x1xf32>
      tpu.vector_store %arg14[%c0_388, %c0_389], %2321 {strides = array<i32>} : memref<8x1xf32, #tpu.memory_space<vmem>>, vector<8x1xf32>,
      %c0_390 = arith.constant 0 : index
      %c0_391 = arith.constant 0 : index
      %2323 = vector.load %arg15[%c0_390, %c0_391] : memref<8x1xf32, #tpu.memory_space<vmem>>, vector<8x1xf32>
      tpu.vector_store %arg15[%c0_390, %c0_391], %2310 {strides = array<i32>} : memref<8x1xf32, #tpu.memory_space<vmem>>, vector<8x1xf32>,
      %c0_392 = arith.constant 0 : index
      %c0_393 = arith.constant 0 : index
      %2324 = vector.load %arg16[%c0_392, %c0_393] : memref<8x1xf32, #tpu.memory_space<vmem>>, vector<8x1xf32>
      tpu.vector_store %arg16[%c0_392, %c0_393], %2314 {strides = array<i32>} : memref<8x1xf32, #tpu.memory_space<vmem>>, vector<8x1xf32>,
    } else {
    }
    %c0_i32_386 = arith.constant 0 : i32
    %2318 = arith.cmpi sgt, %arg1, %c0_i32_386 : i32
    %2319 = arith.extui %2318 : i1 to i32
    %c0_i32_387 = arith.constant 0 : i32
    %2320 = arith.cmpi ne, %2319, %c0_i32_387 : i32
    scf.if %2320 {
      %c0_388 = arith.constant 0 : index
      %c0_389 = arith.constant 0 : index
      %2321 = vector.load %arg15[%c0_388, %c0_389] : memref<8x1xf32, #tpu.memory_space<vmem>>, vector<8x1xf32>
      %2322 = arith.minimumf %2321, %2310 : vector<8x1xf32>
      %c0_390 = arith.constant 0 : index
      %c0_391 = arith.constant 0 : index
      %2323 = vector.load %arg15[%c0_390, %c0_391] : memref<8x1xf32, #tpu.memory_space<vmem>>, vector<8x1xf32>
      tpu.vector_store %arg15[%c0_390, %c0_391], %2322 {strides = array<i32>} : memref<8x1xf32, #tpu.memory_space<vmem>>, vector<8x1xf32>,
      %c0_392 = arith.constant 0 : index
      %c0_393 = arith.constant 0 : index
      %2324 = vector.load %arg16[%c0_392, %c0_393] : memref<8x1xf32, #tpu.memory_space<vmem>>, vector<8x1xf32>
      %2325 = arith.maximumf %2324, %2314 : vector<8x1xf32>
      %c0_394 = arith.constant 0 : index
      %c0_395 = arith.constant 0 : index
      %2326 = vector.load %arg16[%c0_394, %c0_395] : memref<8x1xf32, #tpu.memory_space<vmem>>, vector<8x1xf32>
      tpu.vector_store %arg16[%c0_394, %c0_395], %2325 {strides = array<i32>} : memref<8x1xf32, #tpu.memory_space<vmem>>, vector<8x1xf32>,
    } else {
    }
    return
  }
  func.func @transform_0(%arg0: i32, %arg1: i32) -> (i32, i32, i32) {
    %c0_i32 = arith.constant 0 : i32
    %c0_i32_0 = arith.constant 0 : i32
    %c0_i32_1 = arith.constant 0 : i32
    return %arg1, %c0_i32, %c0_i32_0 : i32, i32, i32
  }
  func.func @transform_1(%arg0: i32, %arg1: i32) -> (i32, i32) {
    %c0_i32 = arith.constant 0 : i32
    %c0_i32_0 = arith.constant 0 : i32
    return %arg0, %c0_i32 : i32, i32
  }
  func.func @transform_2(%arg0: i32, %arg1: i32) -> (i32, i32) {
    %c0_i32 = arith.constant 0 : i32
    %c0_i32_0 = arith.constant 0 : i32
    return %arg0, %c0_i32 : i32, i32
  }
  func.func @transform_3(%arg0: i32, %arg1: i32) -> (i32, i32) {
    %c0_i32 = arith.constant 0 : i32
    %c0_i32_0 = arith.constant 0 : i32
    return %arg0, %c0_i32 : i32, i32
  }
  func.func @transform_4(%arg0: i32, %arg1: i32) -> i32 {
    %c0_i32 = arith.constant 0 : i32
    %c0_i32_0 = arith.constant 0 : i32
    return %c0_i32 : i32
  }
  func.func @transform_5(%arg0: i32, %arg1: i32) -> i32 {
    %c0_i32 = arith.constant 0 : i32
    %c0_i32_0 = arith.constant 0 : i32
    return %c0_i32 : i32
  }
  func.func @transform_6(%arg0: i32, %arg1: i32) -> i32 {
    %c0_i32 = arith.constant 0 : i32
    %c0_i32_0 = arith.constant 0 : i32
    return %c0_i32 : i32
  }
  func.func @transform_7(%arg0: i32, %arg1: i32) -> i32 {
    %c0_i32 = arith.constant 0 : i32
    %c0_i32_0 = arith.constant 0 : i32
    return %c0_i32 : i32
  }
  func.func @transform_8(%arg0: i32, %arg1: i32) -> i32 {
    %c0_i32 = arith.constant 0 : i32
    %c0_i32_0 = arith.constant 0 : i32
    return %c0_i32 : i32
  }
  func.func @transform_9(%arg0: i32, %arg1: i32) -> i32 {
    %c0_i32 = arith.constant 0 : i32
    %c0_i32_0 = arith.constant 0 : i32
    return %c0_i32 : i32
  }
  func.func @transform_10(%arg0: i32, %arg1: i32) -> i32 {
    %c0_i32 = arith.constant 0 : i32
    %c0_i32_0 = arith.constant 0 : i32
    return %c0_i32 : i32
  }
  func.func @transform_11(%arg0: i32, %arg1: i32) -> i32 {
    %c0_i32 = arith.constant 0 : i32
    %c0_i32_0 = arith.constant 0 : i32
    return %c0_i32 : i32
  }
  func.func @transform_12(%arg0: i32, %arg1: i32) -> (i32, i32) {
    %c0_i32 = arith.constant 0 : i32
    %c0_i32_0 = arith.constant 0 : i32
    return %arg0, %c0_i32 : i32, i32
  }
  func.func @transform_13(%arg0: i32, %arg1: i32) -> (i32, i32) {
    %c0_i32 = arith.constant 0 : i32
    %c0_i32_0 = arith.constant 0 : i32
    return %arg0, %c0_i32 : i32, i32
  }
  func.func @transform_14(%arg0: i32, %arg1: i32) -> (i32, i32) {
    %c0_i32 = arith.constant 0 : i32
    %c0_i32_0 = arith.constant 0 : i32
    return %arg0, %c0_i32 : i32, i32
  }
}

</mosaic_0001>

<llo_original>
// kernel: tpu_custom_call.1
$region0: #{tpu_custom_call.1}
  #allocation0 [shape = 'u32[]', space=smem, size = 0x4, offset = 0x4, fixed_abs, tag = 'smem constant byte address 0x4 - core index']
  #allocation1 [shape = 'u32[144,128]{1,0:T(1,128)}', space=vmem, size = 0x12000, scoped, tag = 'internal scratch']
  %s0 = inlined_call_operand.vmem [shape: f32[1,1,128], index: 0, kind: input, shape index: {}]
  %s1 = inlined_call_operand.vmem [shape: f32[8,1], index: 1, kind: input, shape index: {}]
  %s2 = inlined_call_operand.vmem [shape: f32[8,1], index: 2, kind: input, shape index: {}]
  %s3 = inlined_call_operand.vmem [shape: f32[8,1], index: 3, kind: input, shape index: {}]
  %s4 = inlined_call_operand.vmem [shape: f32[8], index: 4, kind: input, shape index: {}]
  %s5 = inlined_call_operand.vmem [shape: f32[8], index: 5, kind: input, shape index: {}]
  %s6 = inlined_call_operand.vmem [shape: f32[8], index: 6, kind: input, shape index: {}]
  %s7 = inlined_call_operand.vmem [shape: f32[8], index: 7, kind: input, shape index: {}]
  %s8 = inlined_call_operand.vmem [shape: f32[8], index: 8, kind: input, shape index: {}]
  %s9 = inlined_call_operand.vmem [shape: f32[8], index: 9, kind: input, shape index: {}]
  %s10 = inlined_call_operand.vmem [shape: f32[8], index: 10, kind: input, shape index: {}]
  %s11 = inlined_call_operand.vmem [shape: f32[8], index: 11, kind: input, shape index: {}]
  %s12 = inlined_call_operand.vmem [shape: f32[8,1], index: 12, kind: output, shape index: {0}]
  %s13 = inlined_call_operand.vmem [shape: f32[8,1], index: 13, kind: output, shape index: {1}]
  %s14 = inlined_call_operand.vmem [shape: f32[8,1], index: 14, kind: output, shape index: {2}]
  %15 = xla_tuple %s12, %s13, %s14
  %s16 = sld [smem:[#allocation0]]
  $region114: #{tpu_custom_call.1} parent=0
    _
  %s18 = ssub.s32 1, %s16
  %s19 = scalar_select 0, %s18, %s16
  $region1: #{tpu_custom_call.1} parent=0
    #allocation2 [shape = 'u8[512]{0}', space=smem, size = 0x200, scoped, tag = 'input window, operand 4, single buffered']
    #allocation3 [shape = 's32[1]{0}', space=sflag, size = 0x4, scoped, tag = 'scoped memory for tpu_custom_call.1']
    #allocation4 [shape = 'u8[512]{0}', space=smem, size = 0x200, scoped, tag = 'input window, operand 5, single buffered']
    #allocation5 [shape = 's32[1]{0}', space=sflag, size = 0x4, scoped, tag = 'scoped memory for tpu_custom_call.1']
    #allocation6 [shape = 'u8[512]{0}', space=smem, size = 0x200, scoped, tag = 'input window, operand 6, single buffered']
    #allocation7 [shape = 'u8[512]{0}', space=smem, size = 0x200, scoped, tag = 'input window, operand 7, single buffered']
    #allocation8 [shape = 's32[1]{0}', space=sflag, size = 0x4, scoped, tag = 'scoped memory for tpu_custom_call.1']
    #allocation9 [shape = 'u8[512]{0}', space=smem, size = 0x200, scoped, tag = 'input window, operand 8, single buffered']
    #allocation10 [shape = 'u8[512]{0}', space=smem, size = 0x200, scoped, tag = 'input window, operand 9, single buffered']
    #allocation11 [shape = 's32[1]{0}', space=sflag, size = 0x4, scoped, tag = 'scoped memory for tpu_custom_call.1']
    #allocation12 [shape = 'u8[512]{0}', space=smem, size = 0x200, scoped, tag = 'input window, operand 10, single buffered']
    #allocation13 [shape = 'u8[512]{0}', space=smem, size = 0x200, scoped, tag = 'input window, operand 11, single buffered']
    #allocation14 [shape = 's32[1]{0}', space=sflag, size = 0x4, scoped, tag = 'scoped memory for tpu_custom_call.1']
    %20 = vsyncpa [#allocation3], 0
    %21 = vsyncpa [#allocation5], 0
    %22 = vsyncpa [#allocation8], 0
    %23 = vsyncpa [#allocation11], 0
    %24 = vsyncpa [#allocation14], 0
    // Predicated region
    $region2: #{tpu_custom_call.1} parent=1 // pred_check
      _
    $region3: #{tpu_custom_call.1} parent=1 // pred_check_branch
      %26 = sbr.rel (0) target = $region5
    $region4: #{tpu_custom_call.1} parent=1 // pred_region
      _
    $region5: #{tpu_custom_call.1} parent=1 // pred_fallthru
      _
    // Predicated region
    $region6: #{tpu_custom_call.1} parent=1 // pred_check
      _
    $region7: #{tpu_custom_call.1} parent=1 // pred_check_branch
      %28 = sbr.rel (0) target = $region9
    $region8: #{tpu_custom_call.1} parent=1 // pred_region
      _
    $region9: #{tpu_custom_call.1} parent=1 // pred_fallthru
      _
    // Predicated region
    $region10: #{tpu_custom_call.1} parent=1 // pred_check
      _
    $region11: #{tpu_custom_call.1} parent=1 // pred_check_branch
      %30 = sbr.rel (0) target = $region13
    $region12: #{tpu_custom_call.1} parent=1 // pred_region
      _
    $region13: #{tpu_custom_call.1} parent=1 // pred_fallthru
      _
    // Predicated region
    $region14: #{tpu_custom_call.1} parent=1 // pred_check
      _
    $region15: #{tpu_custom_call.1} parent=1 // pred_check_branch
      %32 = sbr.rel (0) target = $region17
    $region16: #{tpu_custom_call.1} parent=1 // pred_region
      _
    $region17: #{tpu_custom_call.1} parent=1 // pred_fallthru
      _
    // Predicated region
    $region18: #{tpu_custom_call.1} parent=1 // pred_check
      _
    $region19: #{tpu_custom_call.1} parent=1 // pred_check_branch
      %34 = sbr.rel (0) target = $region21
    $region20: #{tpu_custom_call.1} parent=1 // pred_region
      %s36 = ssub.s32 16, 16
      %37 = vsyncadd [#allocation3], %s36
      %s39 = sshll.u32 %s4, 4
      %s40 = int_to_ptr.vmem [resolvable:$true] %s39
      %42 = dma.vmem_to_smem %s40, 16, [#allocation2], [#allocation3]
    $region21: #{tpu_custom_call.1} parent=1 // pred_fallthru
      _
    // Predicated region
    $region22: #{tpu_custom_call.1} parent=1 // pred_check
      _
    $region23: #{tpu_custom_call.1} parent=1 // pred_check_branch
      %44 = sbr.rel (0) target = $region25
    $region24: #{tpu_custom_call.1} parent=1 // pred_region
      %s46 = ssub.s32 16, 16
      %47 = vsyncadd [#allocation5], %s46
      %s49 = sshll.u32 %s5, 4
      %s50 = int_to_ptr.vmem [resolvable:$true] %s49
      %52 = dma.vmem_to_smem %s50, 16, [#allocation4], [#allocation5]
    $region25: #{tpu_custom_call.1} parent=1 // pred_fallthru
      _
    // Predicated region
    $region26: #{tpu_custom_call.1} parent=1 // pred_check
      _
    $region27: #{tpu_custom_call.1} parent=1 // pred_check_branch
      %54 = sbr.rel (0) target = $region29
    $region28: #{tpu_custom_call.1} parent=1 // pred_region
      %s56 = ssub.s32 16, 16
      %57 = vsyncadd [#allocation5], %s56
      %s59 = sshll.u32 %s6, 4
      %s60 = int_to_ptr.vmem [resolvable:$true] %s59
      %62 = dma.vmem_to_smem %s60, 16, [#allocation6], [#allocation5]
    $region29: #{tpu_custom_call.1} parent=1 // pred_fallthru
      _
    // Predicated region
    $region30: #{tpu_custom_call.1} parent=1 // pred_check
      _
    $region31: #{tpu_custom_call.1} parent=1 // pred_check_branch
      %64 = sbr.rel (0) target = $region33
    $region32: #{tpu_custom_call.1} parent=1 // pred_region
      %s66 = ssub.s32 16, 16
      %67 = vsyncadd [#allocation8], %s66
      %s69 = sshll.u32 %s7, 4
      %s70 = int_to_ptr.vmem [resolvable:$true] %s69
      %72 = dma.vmem_to_smem %s70, 16, [#allocation7], [#allocation8]
    $region33: #{tpu_custom_call.1} parent=1 // pred_fallthru
      _
    // Predicated region
    $region34: #{tpu_custom_call.1} parent=1 // pred_check
      _
    $region35: #{tpu_custom_call.1} parent=1 // pred_check_branch
      %74 = sbr.rel (0) target = $region37
    $region36: #{tpu_custom_call.1} parent=1 // pred_region
      %s76 = ssub.s32 16, 16
      %77 = vsyncadd [#allocation8], %s76
      %s79 = sshll.u32 %s8, 4
      %s80 = int_to_ptr.vmem [resolvable:$true] %s79
      %82 = dma.vmem_to_smem %s80, 16, [#allocation9], [#allocation8]
    $region37: #{tpu_custom_call.1} parent=1 // pred_fallthru
      _
    // Predicated region
    $region38: #{tpu_custom_call.1} parent=1 // pred_check
      _
    $region39: #{tpu_custom_call.1} parent=1 // pred_check_branch
      %84 = sbr.rel (0) target = $region41
    $region40: #{tpu_custom_call.1} parent=1 // pred_region
      %s86 = ssub.s32 16, 16
      %87 = vsyncadd [#allocation11], %s86
      %s89 = sshll.u32 %s9, 4
      %s90 = int_to_ptr.vmem [resolvable:$true] %s89
      %92 = dma.vmem_to_smem %s90, 16, [#allocation10], [#allocation11]
    $region41: #{tpu_custom_call.1} parent=1 // pred_fallthru
      _
    // Predicated region
    $region42: #{tpu_custom_call.1} parent=1 // pred_check
      _
    $region43: #{tpu_custom_call.1} parent=1 // pred_check_branch
      %94 = sbr.rel (0) target = $region45
    $region44: #{tpu_custom_call.1} parent=1 // pred_region
      %s96 = ssub.s32 16, 16
      %97 = vsyncadd [#allocation11], %s96
      %s99 = sshll.u32 %s10, 4
      %s100 = int_to_ptr.vmem [resolvable:$true] %s99
      %102 = dma.vmem_to_smem %s100, 16, [#allocation12], [#allocation11]
    $region45: #{tpu_custom_call.1} parent=1 // pred_fallthru
      _
    // Predicated region
    $region46: #{tpu_custom_call.1} parent=1 // pred_check
      _
    $region47: #{tpu_custom_call.1} parent=1 // pred_check_branch
      %104 = sbr.rel (0) target = $region49
    $region48: #{tpu_custom_call.1} parent=1 // pred_region
      %s106 = ssub.s32 16, 16
      %107 = vsyncadd [#allocation14], %s106
      %s109 = sshll.u32 %s11, 4
      %s110 = int_to_ptr.vmem [resolvable:$true] %s109
      %112 = dma.vmem_to_smem %s110, 16, [#allocation13], [#allocation14]
    $region49: #{tpu_custom_call.1} parent=1 // pred_fallthru
      _
    // Predicated region
    $region50: #{tpu_custom_call.1} parent=1 // pred_check
      _
    $region51: #{tpu_custom_call.1} parent=1 // pred_check_branch
      %114 = sbr.rel (0) target = $region53
    $region52: #{tpu_custom_call.1} parent=1 // pred_region
      %115 = dma.done [#allocation3], 16
    $region53: #{tpu_custom_call.1} parent=1 // pred_fallthru
      _
    // Predicated region
    $region54: #{tpu_custom_call.1} parent=1 // pred_check
      _
    $region55: #{tpu_custom_call.1} parent=1 // pred_check_branch
      %117 = sbr.rel (0) target = $region57
    $region56: #{tpu_custom_call.1} parent=1 // pred_region
      %118 = dma.done [#allocation5], 16
    $region57: #{tpu_custom_call.1} parent=1 // pred_fallthru
      _
    // Predicated region
    $region58: #{tpu_custom_call.1} parent=1 // pred_check
      _
    $region59: #{tpu_custom_call.1} parent=1 // pred_check_branch
      %120 = sbr.rel (0) target = $region61
    $region60: #{tpu_custom_call.1} parent=1 // pred_region
      %121 = dma.done [#allocation5], 16
    $region61: #{tpu_custom_call.1} parent=1 // pred_fallthru
      _
    // Predicated region
    $region62: #{tpu_custom_call.1} parent=1 // pred_check
      _
    $region63: #{tpu_custom_call.1} parent=1 // pred_check_branch
      %123 = sbr.rel (0) target = $region65
    $region64: #{tpu_custom_call.1} parent=1 // pred_region
      %124 = dma.done [#allocation8], 16
    $region65: #{tpu_custom_call.1} parent=1 // pred_fallthru
      _
    // Predicated region
    $region66: #{tpu_custom_call.1} parent=1 // pred_check
      _
    $region67: #{tpu_custom_call.1} parent=1 // pred_check_branch
      %126 = sbr.rel (0) target = $region69
    $region68: #{tpu_custom_call.1} parent=1 // pred_region
      %127 = dma.done [#allocation8], 16
    $region69: #{tpu_custom_call.1} parent=1 // pred_fallthru
      _
    // Predicated region
    $region70: #{tpu_custom_call.1} parent=1 // pred_check
      _
    $region71: #{tpu_custom_call.1} parent=1 // pred_check_branch
      %129 = sbr.rel (0) target = $region73
    $region72: #{tpu_custom_call.1} parent=1 // pred_region
      %130 = dma.done [#allocation11], 16
    $region73: #{tpu_custom_call.1} parent=1 // pred_fallthru
      _
    // Predicated region
    $region74: #{tpu_custom_call.1} parent=1 // pred_check
      _
    $region75: #{tpu_custom_call.1} parent=1 // pred_check_branch
      %132 = sbr.rel (0) target = $region77
    $region76: #{tpu_custom_call.1} parent=1 // pred_region
      %133 = dma.done [#allocation11], 16
    $region77: #{tpu_custom_call.1} parent=1 // pred_fallthru
      _
    // Predicated region
    $region78: #{tpu_custom_call.1} parent=1 // pred_check
      _
    $region79: #{tpu_custom_call.1} parent=1 // pred_check_branch
      %135 = sbr.rel (0) target = $region81
    $region80: #{tpu_custom_call.1} parent=1 // pred_region
      %136 = dma.done [#allocation14], 16
    $region81: #{tpu_custom_call.1} parent=1 // pred_fallthru
      _
    %137 = sfence
    %v138 = vld [vmem:[%s1] sm:$0xff]
    %v139 = vld [vmem:[%s2] sm:$0xff]
    %v140 = vlaneseq
    %v141 = vand.u32 %v140, 127
    %vm142 = vcmp.eq.s32.totalorder %v141, 0
    %p143 = scmp.eq.s32.totalorder 0, 0
    %s144 = scalar_select %p143, 1, 0
    %v145 = vstv %s144
    %vm146 = vcmp.eq.s32.totalorder %v145, 1
    %vm147 = vmand %vm142, %vm146
    %v148 = vld [vmem:[%s3] sm:$0xff]
    %v149 = vld [vmem:[%s0] sm:$0x1]
    %151 = vset.pattern.permute.xlu0 0
    %152 = vperm.xlu0 %151, %v148
    %v153 = vpop.permute.xlu0 %152
    %v156 = vlaneseq
    %v157 = vshrl.u32 %v156, 7
    %v158 = vsub.s32 0, %v157
    %v159 = vrot.slane %v149, %v158
    %v161 = vsel %vm147, %v153, %v159
    %163 = vset.pattern.permute.xlu0 0
    %164 = vperm.xlu0 %163, %v138
    %v165 = vpop.permute.xlu0 %164
    %v167 = vmul.f32 %v165, %v161
    %v168 = vmul.f32 %v167, %v167
    %s169 = sld [smem:[#allocation9 + $0x7]]
    %v170 = vstv %s169
    %v171 = vmul.f32 %v138, %v170
    %s172 = sld [smem:[#allocation10 + $0x7]]
    %v173 = vstv %s172
    %v174 = vmul.f32 %v138, %v173
    %s175 = sld [smem:[#allocation4 + $0x7]]
    %v176 = vstv %s175
    %v177 = vmul.f32 %v176, %v139
    %v178 = vmul.f32 %v177, 2.0
    %v179 = vmul.f32 %v178, %v177
    %181 = vset.pattern.permute.xlu0 0
    %182 = vperm.xlu0 %181, %v171
    %v183 = vpop.permute.xlu0 %182
    %v185 = vadd.f32 %v167, %v183
    %v186 = vsub.f32 %v167, %v183
    %v187 = vand.u32 2147483647, %v186
    %v188 = vmul.f32 %v185, %v187
    %v189 = vrsqrt.pop %v188
    %v190 = vmul.f32 %v188, %v189
    %vm191 = vcmp.eq.f32.partialorder %v188, inf
    %v192 = vsel %vm191, %v188, %v190
    %vm193 = vcmp.eq.f32.partialorder %v188, 0.0
    %v194 = vand.u32 %v188, 2147483648
    %v195 = vsel %vm193, %v194, %v192
    %197 = vset.pattern.permute.xlu0 0
    %198 = vperm.xlu0 %197, %v174
    %v199 = vpop.permute.xlu0 %198
    %v201 = vadd.f32 %v167, %v199
    %v202 = vsub.f32 %v167, %v199
    %v203 = vand.u32 2147483647, %v202
    %v204 = vmul.f32 %v201, %v203
    %v205 = vrsqrt.pop %v204
    %v206 = vmul.f32 %v204, %v205
    %vm207 = vcmp.eq.f32.partialorder %v204, inf
    %v208 = vsel %vm207, %v204, %v206
    %vm209 = vcmp.eq.f32.partialorder %v204, 0.0
    %v210 = vand.u32 %v204, 2147483648
    %v211 = vsel %vm209, %v210, %v208
    %213 = vset.pattern.permute.xlu0 0
    %214 = vperm.xlu0 %213, %v179
    %v215 = vpop.permute.xlu0 %214
    %v217 = vmul.f32 %v215, %v168
    %v218 = vsub.f32 %v217, 1.0
    %v219 = vmul.f32 %v195, %v211
    %s220 = sld [smem:[#allocation6 + $0x7]]
    %s221 = sld [smem:[#allocation7 + $0x7]]
    %v222 = vmul.f32 %v218, %v218
    %v223 = vmul.f32 %v217, %v215
    %v224 = vmul.f32 %v223, %v219
    %v225 = vsub.f32 %v222, %v224
    %v226 = vstv %s221
    %v227 = vmul.f32 %v226, %v225
    %v228 = vstv %s220
    %v229 = vmul.f32 %v228, %v195
    %v230 = vsub.f32 0.0, %v229
    %v231 = vmul.f32 %v215, %v219
    %v232 = vsub.f32 %v218, %v231
    %v233 = vmul.f32 %v228, %v232
    %v234 = vmul.f32 %v228, %v211
    %v235 = vsub.f32 %v168, %v219
    %s236 = sld [smem:[#allocation2 + $0x6]]
    %s237 = sld [smem:[#allocation6 + $0x6]]
    %s238 = sld [smem:[#allocation7 + $0x6]]
    %s239 = sld [smem:[#allocation12 + $0x6]]
    %s240 = sld [smem:[#allocation13 + $0x6]]
    %s241 = sld [smem:[#allocation9 + $0x6]]
    %v242 = vstv %s241
    %v243 = vmul.f32 %v138, %v242
    %s244 = sld [smem:[#allocation10 + $0x6]]
    %v245 = vstv %s244
    %v246 = vmul.f32 %v138, %v245
    %s247 = sld [smem:[#allocation4 + $0x6]]
    %v248 = vstv %s247
    %v249 = vmul.f32 %v248, %v139
    %v250 = vmul.f32 %v249, 2.0
    %v251 = vmul.f32 %v250, %v249
    %253 = vset.pattern.permute.xlu0 0
    %254 = vperm.xlu0 %253, %v251
    %v255 = vpop.permute.xlu0 %254
    %v257 = vmul.f32 %v255, %v168
    %v258 = vsub.f32 %v257, 1.0
    %260 = vset.pattern.permute.xlu0 0
    %261 = vperm.xlu0 %260, %v243
    %v262 = vpop.permute.xlu0 %261
    %v264 = vadd.f32 %v167, %v262
    %v265 = vsub.f32 %v167, %v262
    %v266 = vand.u32 2147483647, %v265
    %v267 = vmul.f32 %v264, %v266
    %269 = vset.pattern.permute.xlu0 0
    %270 = vperm.xlu0 %269, %v246
    %v271 = vpop.permute.xlu0 %270
    %v273 = vadd.f32 %v167, %v271
    %v274 = vsub.f32 %v167, %v271
    %v275 = vand.u32 2147483647, %v274
    %v276 = vmul.f32 %v273, %v275
    %vm277 = vcmp.eq.f32.partialorder %v267, 0.0
    %v278 = vsel %vm277, 1.0, %v267
    %v279 = vrsqrt.pop %v278
    %vm280 = vcmp.eq.f32.partialorder %v276, 0.0
    %v281 = vsel %vm280, 1.0, %v276
    %v282 = vrsqrt.pop %v281
    %v283 = vmul.f32 %v267, %v279
    %v284 = vmul.f32 %v276, %v282
    %v285 = vstv %s236
    %v286 = vmul.f32 %v283, %v285
    %v287 = vmul.f32 %v284, %v285
    %v288 = vand.u32 2147483647, %v286
    %vm289 = vcmp.le.f32.partialorder %v288, 0.7853982
    %vm290 = vcmp.lt.s32.totalorder %v286, 0
    %v291 = vand.u32 %v286, 2139095040
    %v292 = vshrl.u32 %v291, 23
    %v293 = vsub.s32 %v292, 127
    %v294 = vand.u32 2147483647, %v286
    %v295 = vand.u32 %v294, 8388607
    %v296 = vor.u32 %v295, 8388608
    %v297 = vsub.s32 0, %v296
    %v298 = vadd.s32 %v293, 1
    %vm299 = vcmp.gt.s32.totalorder %v298, 0
    %v300 = vsel %vm299, %v298, 0
    %v301 = vshrl.u32 %v300, 5
    %v302 = vand.u32 %v300, 31
    %v303 = vsub.s32 32, %v302
    %v304 = vshrl.u32 683565275, %v303
    %v305 = vshll.u32 683565275, %v302
    %v306 = vshrl.u32 2475754826, %v303
    %v307 = vor.u32 %v305, %v306
    %v308 = vshll.u32 2475754826, %v302
    %v309 = vshrl.u32 2131351028, %v303
    %v310 = vor.u32 %v308, %v309
    %v311 = vshll.u32 2131351028, %v302
    %v312 = vshrl.u32 2102212464, %v303
    %v313 = vor.u32 %v311, %v312
    %v314 = vshll.u32 2102212464, %v302
    %v315 = vshrl.u32 920167782, %v303
    %v316 = vor.u32 %v314, %v315
    %v317 = vshll.u32 920167782, %v302
    %v318 = vshrl.u32 1326507024, %v303
    %v319 = vor.u32 %v317, %v318
    %vm320 = vcmp.lt.s32.totalorder %v301, 1
    %vm321 = vcmp.lt.s32.totalorder %v301, 2
    %vm322 = vcmp.lt.s32.totalorder %v301, 3
    %vm323 = vcmp.lt.s32.totalorder %v301, 4
    %v324 = vsel %vm320, %v304, %v307
    %v325 = vsel %vm323, %v313, 2102212464
    %v326 = vsel %vm322, %v310, %v325
    %v327 = vsel %vm321, %v324, %v326
    %v328 = vsel %vm320, %v307, %v310
    %v329 = vsel %vm323, %v316, 920167782
    %v330 = vsel %vm322, %v313, %v329
    %v331 = vsel %vm321, %v328, %v330
    %v332 = vsel %vm320, %v310, %v313
    %v333 = vsel %vm323, %v319, 1326507024
    %v334 = vsel %vm322, %v316, %v333
    %v335 = vsel %vm321, %v332, %v334
    %v336 = vshll.u32 %v296, 8
    %v337 = vmul.u32.u64.compose %v336, %v335
    %v338 = vextract.low.u32 %v337
    %v339 = vextract.high.u32 %v337
    %v340 = vmul.u32.u64.compose %v336, %v331
    %v341 = vextract.low.u32 %v340
    %v342 = vextract.high.u32 %v340
    %v343 = vmul.u32 %v336, %v327
    %v344 = vadd.s32 %v339, %v341
    %vm345 = vc.u32 %v339, %v341
    %v346 = vadd.s32 %v342, 1
    %v347 = vsel %vm345, %v346, %v342
    %v348 = vadd.s32 %v343, %v347
    %v349 = vadd.s32 %v348, 536870912
    %v350 = vshrl.u32 %v349, 30
    %v351 = vshll.u32 %v350, 30
    %v352 = vsub.s32 %v348, %v351
    %vm353 = vcmp.lt.s32.totalorder %v352, 0
    %v354 = vsub.s32 0, %v352
    %v355 = vsel %vm353, %v354, %v352
    %v356 = vclz %v355
    %v357 = vsub.s32 %v356, 2
    %vm358 = vcmp.gt.s32.totalorder 0, %v357
    %v359 = vsel %vm358, 0, %v357
    %v360 = vsub.s32 32, %v359
    %v361 = vshll.u32 %v352, %v359
    %v362 = vshrl.u32 %v344, %v360
    %v363 = vor.u32 %v361, %v362
    %v364 = vsub.s32 4294967266, %v359
    %v365 = vadd.s32 %v364, 127
    %v366 = vshll.u32 %v365, 23
    %v367 = vor.u32 4788187, %v366
    %v368 = vand.u32 2147483647, %v367
    %v370 = vcvt.s32.f32 %v363
    %v371 = vmul.f32 %v370, %v368
    %v372 = vxor.u32 %v371, 2147483648
    %v373 = vsel %vm290, %v372, %v371
    %v374 = vsub.s32 4, %v350
    %v375 = vsel %vm290, %v374, %v350
    %v376 = vsel %vm289, %v286, %v373
    %v377 = vsel %vm289, 0, %v375
    %v378 = vcosq.f32.pop %v376
    %v379 = vsinq.f32.pop %v376
    %vm380 = vweird.f32 %v286
    %v381 = vadd.s32 %v377, 3
    %v382 = vand.u32 %v381, 3
    %vm383 = vcmp.lt.s32.totalorder %v382, 2
    %vm384 = vcmp.eq.s32.totalorder %v382, 0
    %v385 = vxor.u32 %v379, 2147483648
    %v386 = vsel %vm384, %v378, %v385
    %vm387 = vcmp.eq.s32.totalorder %v382, 2
    %v388 = vxor.u32 %v378, 2147483648
    %v389 = vsel %vm387, %v388, %v379
    %v390 = vsel %vm383, %v386, %v389
    %v391 = vsel %vm380, nan, %v390
    %vm392 = vcmp.lt.f32.partialorder %v286, 16.0
    %v393 = vmul.f32 %v286, -2.0
    %v394 = vmul.f32 %v393, 1.442695
    %v395 = vpow.pop %v394
    %v396 = vsel %vm392, %v395, 0.0
    %v397 = vsub.f32 1.0, %v396
    %v398 = vmul.f32 %v397, 0.5
    %vm399 = vcmp.lt.f32.partialorder %v167, %v262
    %vm400 = vcmp.eq.f32.partialorder %v167, %v262
    %vm401 = vmor %vm399, %vm400
    %v402 = vsel %vm401, 0.0, %v286
    %v403 = vand.u32 2147483647, %v286
    %vm404 = vcmp.le.f32.partialorder %v403, 0.7853982
    %vm405 = vcmp.lt.s32.totalorder %v286, 0
    %v406 = vand.u32 %v286, 2139095040
    %v407 = vshrl.u32 %v406, 23
    %v408 = vsub.s32 %v407, 127
    %v409 = vand.u32 2147483647, %v286
    %v410 = vand.u32 %v409, 8388607
    %v411 = vor.u32 %v410, 8388608
    %v412 = vsub.s32 0, %v411
    %v413 = vadd.s32 %v408, 1
    %vm414 = vcmp.gt.s32.totalorder %v413, 0
    %v415 = vsel %vm414, %v413, 0
    %v416 = vshrl.u32 %v415, 5
    %v417 = vand.u32 %v415, 31
    %v418 = vsub.s32 32, %v417
    %v419 = vshrl.u32 683565275, %v418
    %v420 = vshll.u32 683565275, %v417
    %v421 = vshrl.u32 2475754826, %v418
    %v422 = vor.u32 %v420, %v421
    %v423 = vshll.u32 2475754826, %v417
    %v424 = vshrl.u32 2131351028, %v418
    %v425 = vor.u32 %v423, %v424
    %v426 = vshll.u32 2131351028, %v417
    %v427 = vshrl.u32 2102212464, %v418
    %v428 = vor.u32 %v426, %v427
    %v429 = vshll.u32 2102212464, %v417
    %v430 = vshrl.u32 920167782, %v418
    %v431 = vor.u32 %v429, %v430
    %v432 = vshll.u32 920167782, %v417
    %v433 = vshrl.u32 1326507024, %v418
    %v434 = vor.u32 %v432, %v433
    %vm435 = vcmp.lt.s32.totalorder %v416, 1
    %vm436 = vcmp.lt.s32.totalorder %v416, 2
    %vm437 = vcmp.lt.s32.totalorder %v416, 3
    %vm438 = vcmp.lt.s32.totalorder %v416, 4
    %v439 = vsel %vm435, %v419, %v422
    %v440 = vsel %vm438, %v428, 2102212464
    %v441 = vsel %vm437, %v425, %v440
    %v442 = vsel %vm436, %v439, %v441
    %v443 = vsel %vm435, %v422, %v425
    %v444 = vsel %vm438, %v431, 920167782
    %v445 = vsel %vm437, %v428, %v444
    %v446 = vsel %vm436, %v443, %v445
    %v447 = vsel %vm435, %v425, %v428
    %v448 = vsel %vm438, %v434, 1326507024
    %v449 = vsel %vm437, %v431, %v448
    %v450 = vsel %vm436, %v447, %v449
    %v451 = vshll.u32 %v411, 8
    %v452 = vmul.u32.u64.compose %v451, %v450
    %v453 = vextract.low.u32 %v452
    %v454 = vextract.high.u32 %v452
    %v455 = vmul.u32.u64.compose %v451, %v446
    %v456 = vextract.low.u32 %v455
    %v457 = vextract.high.u32 %v455
    %v458 = vmul.u32 %v451, %v442
    %v459 = vadd.s32 %v454, %v456
    %vm460 = vc.u32 %v454, %v456
    %v461 = vadd.s32 %v457, 1
    %v462 = vsel %vm460, %v461, %v457
    %v463 = vadd.s32 %v458, %v462
    %v464 = vadd.s32 %v463, 536870912
    %v465 = vshrl.u32 %v464, 30
    %v466 = vshll.u32 %v465, 30
    %v467 = vsub.s32 %v463, %v466
    %vm468 = vcmp.lt.s32.totalorder %v467, 0
    %v469 = vsub.s32 0, %v467
    %v470 = vsel %vm468, %v469, %v467
    %v471 = vclz %v470
    %v472 = vsub.s32 %v471, 2
    %vm473 = vcmp.gt.s32.totalorder 0, %v472
    %v474 = vsel %vm473, 0, %v472
    %v475 = vsub.s32 32, %v474
    %v476 = vshll.u32 %v467, %v474
    %v477 = vshrl.u32 %v459, %v475
    %v478 = vor.u32 %v476, %v477
    %v479 = vsub.s32 4294967266, %v474
    %v480 = vadd.s32 %v479, 127
    %v481 = vshll.u32 %v480, 23
    %v482 = vor.u32 4788187, %v481
    %v483 = vand.u32 2147483647, %v482
    %v485 = vcvt.s32.f32 %v478
    %v486 = vmul.f32 %v485, %v483
    %v487 = vxor.u32 %v486, 2147483648
    %v488 = vsel %vm405, %v487, %v486
    %v489 = vsub.s32 4, %v465
    %v490 = vsel %vm405, %v489, %v465
    %v491 = vsel %vm404, %v286, %v488
    %v492 = vsel %vm404, 0, %v490
    %v493 = vcosq.f32.pop %v491
    %v494 = vsinq.f32.pop %v491
    %vm495 = vweird.f32 %v286
    %v496 = vand.u32 %v492, 3
    %vm497 = vcmp.lt.s32.totalorder %v496, 2
    %vm498 = vcmp.eq.s32.totalorder %v496, 0
    %v499 = vxor.u32 %v494, 2147483648
    %v500 = vsel %vm498, %v493, %v499
    %vm501 = vcmp.eq.s32.totalorder %v496, 2
    %v502 = vxor.u32 %v493, 2147483648
    %v503 = vsel %vm501, %v502, %v494
    %v504 = vsel %vm497, %v500, %v503
    %v505 = vsel %vm495, nan, %v504
    %v506 = vadd.f32 %v396, 1.0
    %v507 = vmul.f32 %v506, 0.5
    %v508 = vsel %vm400, 1.0, %v507
    %v509 = vsel %vm399, %v505, %v508
    %v510 = vmul.f32 %v391, %v279
    %v511 = vmul.f32 %v398, %v279
    %v512 = vsel %vm400, %v285, %v511
    %v513 = vsel %vm399, %v510, %v512
    %v514 = vsub.f32 0.0, %v283
    %v515 = vmul.f32 %v514, %v391
    %v516 = vmul.f32 %v283, %v398
    %v517 = vsel %vm400, 0.0, %v516
    %v518 = vsel %vm399, %v515, %v517
    %v519 = vand.u32 2147483647, %v287
    %vm520 = vcmp.le.f32.partialorder %v519, 0.7853982
    %vm521 = vcmp.lt.s32.totalorder %v287, 0
    %v522 = vand.u32 %v287, 2139095040
    %v523 = vshrl.u32 %v522, 23
    %v524 = vsub.s32 %v523, 127
    %v525 = vand.u32 2147483647, %v287
    %v526 = vand.u32 %v525, 8388607
    %v527 = vor.u32 %v526, 8388608
    %v528 = vsub.s32 0, %v527
    %v529 = vadd.s32 %v524, 1
    %vm530 = vcmp.gt.s32.totalorder %v529, 0
    %v531 = vsel %vm530, %v529, 0
    %v532 = vshrl.u32 %v531, 5
    %v533 = vand.u32 %v531, 31
    %v534 = vsub.s32 32, %v533
    %v535 = vshrl.u32 683565275, %v534
    %v536 = vshll.u32 683565275, %v533
    %v537 = vshrl.u32 2475754826, %v534
    %v538 = vor.u32 %v536, %v537
    %v539 = vshll.u32 2475754826, %v533
    %v540 = vshrl.u32 2131351028, %v534
    %v541 = vor.u32 %v539, %v540
    %v542 = vshll.u32 2131351028, %v533
    %v543 = vshrl.u32 2102212464, %v534
    %v544 = vor.u32 %v542, %v543
    %v545 = vshll.u32 2102212464, %v533
    %v546 = vshrl.u32 920167782, %v534
    %v547 = vor.u32 %v545, %v546
    %v548 = vshll.u32 920167782, %v533
    %v549 = vshrl.u32 1326507024, %v534
    %v550 = vor.u32 %v548, %v549
    %vm551 = vcmp.lt.s32.totalorder %v532, 1
    %vm552 = vcmp.lt.s32.totalorder %v532, 2
    %vm553 = vcmp.lt.s32.totalorder %v532, 3
    %vm554 = vcmp.lt.s32.totalorder %v532, 4
    %v555 = vsel %vm551, %v535, %v538
    %v556 = vsel %vm554, %v544, 2102212464
    %v557 = vsel %vm553, %v541, %v556
    %v558 = vsel %vm552, %v555, %v557
    %v559 = vsel %vm551, %v538, %v541
    %v560 = vsel %vm554, %v547, 920167782
    %v561 = vsel %vm553, %v544, %v560
    %v562 = vsel %vm552, %v559, %v561
    %v563 = vsel %vm551, %v541, %v544
    %v564 = vsel %vm554, %v550, 1326507024
    %v565 = vsel %vm553, %v547, %v564
    %v566 = vsel %vm552, %v563, %v565
    %v567 = vshll.u32 %v527, 8
    %v568 = vmul.u32.u64.compose %v567, %v566
    %v569 = vextract.low.u32 %v568
    %v570 = vextract.high.u32 %v568
    %v571 = vmul.u32.u64.compose %v567, %v562
    %v572 = vextract.low.u32 %v571
    %v573 = vextract.high.u32 %v571
    %v574 = vmul.u32 %v567, %v558
    %v575 = vadd.s32 %v570, %v572
    %vm576 = vc.u32 %v570, %v572
    %v577 = vadd.s32 %v573, 1
    %v578 = vsel %vm576, %v577, %v573
    %v579 = vadd.s32 %v574, %v578
    %v580 = vadd.s32 %v579, 536870912
    %v581 = vshrl.u32 %v580, 30
    %v582 = vshll.u32 %v581, 30
    %v583 = vsub.s32 %v579, %v582
    %vm584 = vcmp.lt.s32.totalorder %v583, 0
    %v585 = vsub.s32 0, %v583
    %v586 = vsel %vm584, %v585, %v583
    %v587 = vclz %v586
    %v588 = vsub.s32 %v587, 2
    %vm589 = vcmp.gt.s32.totalorder 0, %v588
    %v590 = vsel %vm589, 0, %v588
    %v591 = vsub.s32 32, %v590
    %v592 = vshll.u32 %v583, %v590
    %v593 = vshrl.u32 %v575, %v591
    %v594 = vor.u32 %v592, %v593
    %v595 = vsub.s32 4294967266, %v590
    %v596 = vadd.s32 %v595, 127
    %v597 = vshll.u32 %v596, 23
    %v598 = vor.u32 4788187, %v597
    %v599 = vand.u32 2147483647, %v598
    %v601 = vcvt.s32.f32 %v594
    %v602 = vmul.f32 %v601, %v599
    %v603 = vxor.u32 %v602, 2147483648
    %v604 = vsel %vm521, %v603, %v602
    %v605 = vsub.s32 4, %v581
    %v606 = vsel %vm521, %v605, %v581
    %v607 = vsel %vm520, %v287, %v604
    %v608 = vsel %vm520, 0, %v606
    %v609 = vcosq.f32.pop %v607
    %v610 = vsinq.f32.pop %v607
    %vm611 = vweird.f32 %v287
    %v612 = vadd.s32 %v608, 3
    %v613 = vand.u32 %v612, 3
    %vm614 = vcmp.lt.s32.totalorder %v613, 2
    %vm615 = vcmp.eq.s32.totalorder %v613, 0
    %v616 = vxor.u32 %v610, 2147483648
    %v617 = vsel %vm615, %v609, %v616
    %vm618 = vcmp.eq.s32.totalorder %v613, 2
    %v619 = vxor.u32 %v609, 2147483648
    %v620 = vsel %vm618, %v619, %v610
    %v621 = vsel %vm614, %v617, %v620
    %v622 = vsel %vm611, nan, %v621
    %vm623 = vcmp.lt.f32.partialorder %v287, 16.0
    %v624 = vmul.f32 %v287, -2.0
    %v625 = vmul.f32 %v624, 1.442695
    %v626 = vpow.pop %v625
    %v627 = vsel %vm623, %v626, 0.0
    %v628 = vsub.f32 1.0, %v627
    %v629 = vmul.f32 %v628, 0.5
    %vm630 = vcmp.lt.f32.partialorder %v167, %v271
    %vm631 = vcmp.eq.f32.partialorder %v167, %v271
    %vm632 = vmor %vm630, %vm631
    %v633 = vsel %vm632, 0.0, %v287
    %v634 = vand.u32 2147483647, %v287
    %vm635 = vcmp.le.f32.partialorder %v634, 0.7853982
    %vm636 = vcmp.lt.s32.totalorder %v287, 0
    %v637 = vand.u32 %v287, 2139095040
    %v638 = vshrl.u32 %v637, 23
    %v639 = vsub.s32 %v638, 127
    %v640 = vand.u32 2147483647, %v287
    %v641 = vand.u32 %v640, 8388607
    %v642 = vor.u32 %v641, 8388608
    %v643 = vsub.s32 0, %v642
    %v644 = vadd.s32 %v639, 1
    %vm645 = vcmp.gt.s32.totalorder %v644, 0
    %v646 = vsel %vm645, %v644, 0
    %v647 = vshrl.u32 %v646, 5
    %v648 = vand.u32 %v646, 31
    %v649 = vsub.s32 32, %v648
    %v650 = vshrl.u32 683565275, %v649
    %v651 = vshll.u32 683565275, %v648
    %v652 = vshrl.u32 2475754826, %v649
    %v653 = vor.u32 %v651, %v652
    %v654 = vshll.u32 2475754826, %v648
    %v655 = vshrl.u32 2131351028, %v649
    %v656 = vor.u32 %v654, %v655
    %v657 = vshll.u32 2131351028, %v648
    %v658 = vshrl.u32 2102212464, %v649
    %v659 = vor.u32 %v657, %v658
    %v660 = vshll.u32 2102212464, %v648
    %v661 = vshrl.u32 920167782, %v649
    %v662 = vor.u32 %v660, %v661
    %v663 = vshll.u32 920167782, %v648
    %v664 = vshrl.u32 1326507024, %v649
    %v665 = vor.u32 %v663, %v664
    %vm666 = vcmp.lt.s32.totalorder %v647, 1
    %vm667 = vcmp.lt.s32.totalorder %v647, 2
    %vm668 = vcmp.lt.s32.totalorder %v647, 3
    %vm669 = vcmp.lt.s32.totalorder %v647, 4
    %v670 = vsel %vm666, %v650, %v653
    %v671 = vsel %vm669, %v659, 2102212464
    %v672 = vsel %vm668, %v656, %v671
    %v673 = vsel %vm667, %v670, %v672
    %v674 = vsel %vm666, %v653, %v656
    %v675 = vsel %vm669, %v662, 920167782
    %v676 = vsel %vm668, %v659, %v675
    %v677 = vsel %vm667, %v674, %v676
    %v678 = vsel %vm666, %v656, %v659
    %v679 = vsel %vm669, %v665, 1326507024
    %v680 = vsel %vm668, %v662, %v679
    %v681 = vsel %vm667, %v678, %v680
    %v682 = vshll.u32 %v642, 8
    %v683 = vmul.u32.u64.compose %v682, %v681
    %v684 = vextract.low.u32 %v683
    %v685 = vextract.high.u32 %v683
    %v686 = vmul.u32.u64.compose %v682, %v677
    %v687 = vextract.low.u32 %v686
    %v688 = vextract.high.u32 %v686
    %v689 = vmul.u32 %v682, %v673
    %v690 = vadd.s32 %v685, %v687
    %vm691 = vc.u32 %v685, %v687
    %v692 = vadd.s32 %v688, 1
    %v693 = vsel %vm691, %v692, %v688
    %v694 = vadd.s32 %v689, %v693
    %v695 = vadd.s32 %v694, 536870912
    %v696 = vshrl.u32 %v695, 30
    %v697 = vshll.u32 %v696, 30
    %v698 = vsub.s32 %v694, %v697
    %vm699 = vcmp.lt.s32.totalorder %v698, 0
    %v700 = vsub.s32 0, %v698
    %v701 = vsel %vm699, %v700, %v698
    %v702 = vclz %v701
    %v703 = vsub.s32 %v702, 2
    %vm704 = vcmp.gt.s32.totalorder 0, %v703
    %v705 = vsel %vm704, 0, %v703
    %v706 = vsub.s32 32, %v705
    %v707 = vshll.u32 %v698, %v705
    %v708 = vshrl.u32 %v690, %v706
    %v709 = vor.u32 %v707, %v708
    %v710 = vsub.s32 4294967266, %v705
    %v711 = vadd.s32 %v710, 127
    %v712 = vshll.u32 %v711, 23
    %v713 = vor.u32 4788187, %v712
    %v714 = vand.u32 2147483647, %v713
    %v716 = vcvt.s32.f32 %v709
    %v717 = vmul.f32 %v716, %v714
    %v718 = vxor.u32 %v717, 2147483648
    %v719 = vsel %vm636, %v718, %v717
    %v720 = vsub.s32 4, %v696
    %v721 = vsel %vm636, %v720, %v696
    %v722 = vsel %vm635, %v287, %v719
    %v723 = vsel %vm635, 0, %v721
    %v724 = vcosq.f32.pop %v722
    %v725 = vsinq.f32.pop %v722
    %vm726 = vweird.f32 %v287
    %v727 = vand.u32 %v723, 3
    %vm728 = vcmp.lt.s32.totalorder %v727, 2
    %vm729 = vcmp.eq.s32.totalorder %v727, 0
    %v730 = vxor.u32 %v725, 2147483648
    %v731 = vsel %vm729, %v724, %v730
    %vm732 = vcmp.eq.s32.totalorder %v727, 2
    %v733 = vxor.u32 %v724, 2147483648
    %v734 = vsel %vm732, %v733, %v725
    %v735 = vsel %vm728, %v731, %v734
    %v736 = vsel %vm726, nan, %v735
    %v737 = vadd.f32 %v627, 1.0
    %v738 = vmul.f32 %v737, 0.5
    %v739 = vsel %vm631, 1.0, %v738
    %v740 = vsel %vm630, %v736, %v739
    %v741 = vmul.f32 %v622, %v282
    %v742 = vmul.f32 %v629, %v282
    %v743 = vsel %vm631, %v285, %v742
    %v744 = vsel %vm630, %v741, %v743
    %v745 = vsub.f32 0.0, %v284
    %v746 = vmul.f32 %v745, %v622
    %v747 = vmul.f32 %v284, %v629
    %v748 = vsel %vm631, 0.0, %v747
    %v749 = vsel %vm630, %v746, %v748
    %v750 = vadd.f32 %v402, %v633
    %vm751 = vcmp.lt.f32.partialorder %v750, 60.0
    %v752 = vsub.f32 0.0, %v750
    %v753 = vmul.f32 %v752, 1.442695
    %v754 = vpow.pop %v753
    %v755 = vsel %vm751, %v754, 0.0
    %v756 = vmul.f32 %v509, %v740
    %v757 = vmul.f32 %v509, %v744
    %v758 = vmul.f32 %v509, %v749
    %v759 = vmul.f32 %v740, %v513
    %v760 = vmul.f32 %v740, %v518
    %v761 = vmul.f32 %v518, %v744
    %v762 = vmul.f32 %v518, %v749
    %v763 = vmul.f32 %v513, %v744
    %v764 = vmul.f32 %v513, %v749
    %v765 = vadd.f32 %v257, %v258
    %v766 = vmul.f32 %v257, %v255
    %v767 = vmul.f32 %v257, %v258
    %v768 = vmul.f32 %v258, %v258
    %v769 = vsub.f32 %v755, %v756
    %v770 = vmul.f32 %v168, -2.0
    %v771 = vmul.f32 %v767, 2.0
    %v772 = vmul.f32 %v771, %v769
    %v773 = vsub.f32 %v756, %v772
    %v774 = vmul.f32 %v766, %v762
    %v775 = vsub.f32 %v773, %v774
    %v776 = vmul.f32 %v168, %v768
    %v777 = vmul.f32 %v776, %v763
    %v778 = vsub.f32 %v775, %v777
    %v779 = vmul.f32 %v168, %v757
    %v780 = vsub.f32 %v779, %v760
    %v781 = vstv %s239
    %v782 = vmul.f32 %v780, %v781
    %v783 = vmul.f32 %v765, %v769
    %v784 = vmul.f32 %v255, %v762
    %v785 = vadd.f32 %v783, %v784
    %v786 = vmul.f32 %v168, %v258
    %v787 = vmul.f32 %v786, %v763
    %v788 = vadd.f32 %v785, %v787
    %v789 = vmul.f32 %v788, %v781
    %v790 = vsub.f32 0.0, %v789
    %v791 = vmul.f32 %v168, %v759
    %v792 = vsub.f32 %v758, %v791
    %v793 = vmul.f32 %v792, %v781
    %v794 = vmul.f32 %v168, 2.0
    %v795 = vmul.f32 %v794, %v769
    %v796 = vadd.f32 %v795, %v762
    %v797 = vmul.f32 %v168, %v168
    %v798 = vmul.f32 %v797, %v763
    %v799 = vadd.f32 %v796, %v798
    %v800 = vstv %s240
    %v801 = vmul.f32 %v799, %v800
    %v802 = vsub.f32 0.0, %v801
    %v803 = vmul.f32 %v766, %v758
    %v804 = vmul.f32 %v768, %v759
    %v805 = vsub.f32 %v803, %v804
    %v806 = vstv %s237
    %v807 = vmul.f32 %v805, %v806
    %v808 = vmul.f32 %v255, %v758
    %v809 = vmul.f32 %v258, %v759
    %v810 = vsub.f32 %v808, %v809
    %v811 = vsub.f32 0.0, %v764
    %v812 = vmul.f32 %v768, %v757
    %v813 = vmul.f32 %v766, %v760
    %v814 = vsub.f32 %v812, %v813
    %v815 = vmul.f32 %v814, %v806
    %v816 = vsub.f32 0.0, %v761
    %v817 = vmul.f32 %v258, %v757
    %v818 = vmul.f32 %v255, %v760
    %v819 = vsub.f32 %v817, %v818
    %v820 = vmul.f32 %v766, 2.0
    %v821 = vmul.f32 %v820, %v768
    %v822 = vmul.f32 %v821, %v769
    %v823 = vmul.f32 %v766, %v766
    %v824 = vmul.f32 %v823, %v762
    %v825 = vadd.f32 %v822, %v824
    %v826 = vmul.f32 %v768, %v768
    %v827 = vmul.f32 %v826, %v763
    %v828 = vadd.f32 %v825, %v827
    %v829 = vstv %s238
    %v830 = vmul.f32 %v828, %v829
    %v831 = vsub.f32 0.0, %v830
    %v832 = vmul.f32 %v255, %v258
    %v833 = vmul.f32 %v832, %v765
    %v834 = vmul.f32 %v833, %v769
    %v835 = vmul.f32 %v766, %v255
    %v836 = vmul.f32 %v835, %v762
    %v837 = vadd.f32 %v834, %v836
    %v838 = vmul.f32 %v258, %v768
    %v839 = vmul.f32 %v838, %v763
    %v840 = vadd.f32 %v837, %v839
    %v841 = vmul.f32 %v840, %v806
    %v842 = vsub.f32 0.0, %v841
    %v843 = vmul.f32 %v770, %v842
    %v844 = vmul.f32 %v770, %v819
    %v845 = vsub.f32 %v756, %v778
    %v846 = vmul.f32 %v845, 2.0
    %v847 = vadd.f32 %v755, %v846
    %v848 = vmul.f32 %v770, %v810
    %v849 = vmul.f32 %v770, %v790
    %v850 = vmul.f32 %v227, %v778
    %v851 = vmul.f32 %v230, %v807
    %v852 = vadd.f32 %v850, %v851
    %v853 = vmul.f32 %v233, %v843
    %v854 = vadd.f32 %v852, %v853
    %v855 = vmul.f32 %v234, %v815
    %v856 = vadd.f32 %v854, %v855
    %v857 = vmul.f32 %v235, %v831
    %v858 = vadd.f32 %v856, %v857
    %v859 = vmul.f32 %v227, %v782
    %v860 = vmul.f32 %v230, %v756
    %v861 = vadd.f32 %v859, %v860
    %v862 = vmul.f32 %v233, %v844
    %v863 = vadd.f32 %v861, %v862
    %v864 = vmul.f32 %v234, %v816
    %v865 = vadd.f32 %v863, %v864
    %v866 = vmul.f32 %v235, %v815
    %v867 = vadd.f32 %v865, %v866
    %v868 = vmul.f32 %v227, %v790
    %v869 = vmul.f32 %v230, %v810
    %v870 = vadd.f32 %v868, %v869
    %v871 = vmul.f32 %v233, %v847
    %v872 = vadd.f32 %v870, %v871
    %v873 = vmul.f32 %v234, %v819
    %v874 = vadd.f32 %v872, %v873
    %v875 = vmul.f32 %v235, %v842
    %v876 = vadd.f32 %v874, %v875
    %v877 = vmul.f32 %v227, %v793
    %v878 = vmul.f32 %v230, %v811
    %v879 = vadd.f32 %v877, %v878
    %v880 = vmul.f32 %v233, %v848
    %v881 = vadd.f32 %v879, %v880
    %v882 = vmul.f32 %v234, %v756
    %v883 = vadd.f32 %v881, %v882
    %v884 = vmul.f32 %v235, %v807
    %v885 = vadd.f32 %v883, %v884
    %v886 = vmul.f32 %v227, %v802
    %v887 = vmul.f32 %v230, %v793
    %v888 = vadd.f32 %v886, %v887
    %v889 = vmul.f32 %v233, %v849
    %v890 = vadd.f32 %v888, %v889
    %v891 = vmul.f32 %v234, %v782
    %v892 = vadd.f32 %v890, %v891
    %v893 = vmul.f32 %v235, %v778
    %v894 = vadd.f32 %v892, %v893
    %v895 = vand.u32 2147483647, %v858
    %v896 = vand.u32 2147483647, %v867
    %v897 = vmax.f32 %v895, %v896
    %v898 = vand.u32 2147483647, %v876
    %v899 = vand.u32 2147483647, %v885
    %v900 = vmax.f32 %v898, %v899
    %v901 = vmax.f32 %v897, %v900
    %v902 = vand.u32 2147483647, %v894
    %v903 = vmax.f32 %v901, %v902
    %vm904 = vcmp.lt.f32.partialorder %v903, 1e-30
    %v905 = vsel %vm904, 1.0, %v903
    %v906 = vrcp.pop %v905
    %v907 = vmul.f32 %v905, %v906
    %v908 = vsub.f32 2.0, %v907
    %v909 = vmul.f32 %v906, %v908
    %v910 = vmul.f32 %v858, %v909
    %v911 = vmul.f32 %v867, %v909
    %v912 = vmul.f32 %v876, %v909
    %v913 = vmul.f32 %v885, %v909
    %v914 = vmul.f32 %v894, %v909
    %s915 = sld [smem:[#allocation2 + $0x5]]
    %s916 = sld [smem:[#allocation6 + $0x5]]
    %s917 = sld [smem:[#allocation7 + $0x5]]
    %s918 = sld [smem:[#allocation12 + $0x5]]
    %s919 = sld [smem:[#allocation13 + $0x5]]
    %s920 = sld [smem:[#allocation9 + $0x5]]
    %v921 = vstv %s920
    %v922 = vmul.f32 %v138, %v921
    %s923 = sld [smem:[#allocation10 + $0x5]]
    %v924 = vstv %s923
    %v925 = vmul.f32 %v138, %v924
    %s926 = sld [smem:[#allocation4 + $0x5]]
    %v927 = vstv %s926
    %v928 = vmul.f32 %v927, %v139
    %v929 = vmul.f32 %v928, 2.0
    %v930 = vmul.f32 %v929, %v928
    %932 = vset.pattern.permute.xlu0 0
    %933 = vperm.xlu0 %932, %v930
    %v934 = vpop.permute.xlu0 %933
    %v936 = vmul.f32 %v934, %v168
    %v937 = vsub.f32 %v936, 1.0
    %939 = vset.pattern.permute.xlu0 0
    %940 = vperm.xlu0 %939, %v922
    %v941 = vpop.permute.xlu0 %940
    %v943 = vadd.f32 %v167, %v941
    %v944 = vsub.f32 %v167, %v941
    %v945 = vand.u32 2147483647, %v944
    %v946 = vmul.f32 %v943, %v945
    %948 = vset.pattern.permute.xlu0 0
    %949 = vperm.xlu0 %948, %v925
    %v950 = vpop.permute.xlu0 %949
    %v952 = vadd.f32 %v167, %v950
    %v953 = vsub.f32 %v167, %v950
    %v954 = vand.u32 2147483647, %v953
    %v955 = vmul.f32 %v952, %v954
    %vm956 = vcmp.eq.f32.partialorder %v946, 0.0
    %v957 = vsel %vm956, 1.0, %v946
    %v958 = vrsqrt.pop %v957
    %vm959 = vcmp.eq.f32.partialorder %v955, 0.0
    %v960 = vsel %vm959, 1.0, %v955
    %v961 = vrsqrt.pop %v960
    %v962 = vmul.f32 %v946, %v958
    %v963 = vmul.f32 %v955, %v961
    %v964 = vstv %s915
    %v965 = vmul.f32 %v962, %v964
    %v966 = vmul.f32 %v963, %v964
    %v967 = vand.u32 2147483647, %v965
    %vm968 = vcmp.le.f32.partialorder %v967, 0.7853982
    %vm969 = vcmp.lt.s32.totalorder %v965, 0
    %v970 = vand.u32 %v965, 2139095040
    %v971 = vshrl.u32 %v970, 23
    %v972 = vsub.s32 %v971, 127
    %v973 = vand.u32 2147483647, %v965
    %v974 = vand.u32 %v973, 8388607
    %v975 = vor.u32 %v974, 8388608
    %v976 = vsub.s32 0, %v975
    %v977 = vadd.s32 %v972, 1
    %vm978 = vcmp.gt.s32.totalorder %v977, 0
    %v979 = vsel %vm978, %v977, 0
    %v980 = vshrl.u32 %v979, 5
    %v981 = vand.u32 %v979, 31
    %v982 = vsub.s32 32, %v981
    %v983 = vshrl.u32 683565275, %v982
    %v984 = vshll.u32 683565275, %v981
    %v985 = vshrl.u32 2475754826, %v982
    %v986 = vor.u32 %v984, %v985
    %v987 = vshll.u32 2475754826, %v981
    %v988 = vshrl.u32 2131351028, %v982
    %v989 = vor.u32 %v987, %v988
    %v990 = vshll.u32 2131351028, %v981
    %v991 = vshrl.u32 2102212464, %v982
    %v992 = vor.u32 %v990, %v991
    %v993 = vshll.u32 2102212464, %v981
    %v994 = vshrl.u32 920167782, %v982
    %v995 = vor.u32 %v993, %v994
    %v996 = vshll.u32 920167782, %v981
    %v997 = vshrl.u32 1326507024, %v982
    %v998 = vor.u32 %v996, %v997
    %vm999 = vcmp.lt.s32.totalorder %v980, 1
    %vm1000 = vcmp.lt.s32.totalorder %v980, 2
    %vm1001 = vcmp.lt.s32.totalorder %v980, 3
    %vm1002 = vcmp.lt.s32.totalorder %v980, 4
    %v1003 = vsel %vm999, %v983, %v986
    %v1004 = vsel %vm1002, %v992, 2102212464
    %v1005 = vsel %vm1001, %v989, %v1004
    %v1006 = vsel %vm1000, %v1003, %v1005
    %v1007 = vsel %vm999, %v986, %v989
    %v1008 = vsel %vm1002, %v995, 920167782
    %v1009 = vsel %vm1001, %v992, %v1008
    %v1010 = vsel %vm1000, %v1007, %v1009
    %v1011 = vsel %vm999, %v989, %v992
    %v1012 = vsel %vm1002, %v998, 1326507024
    %v1013 = vsel %vm1001, %v995, %v1012
    %v1014 = vsel %vm1000, %v1011, %v1013
    %v1015 = vshll.u32 %v975, 8
    %v1016 = vmul.u32.u64.compose %v1015, %v1014
    %v1017 = vextract.low.u32 %v1016
    %v1018 = vextract.high.u32 %v1016
    %v1019 = vmul.u32.u64.compose %v1015, %v1010
    %v1020 = vextract.low.u32 %v1019
    %v1021 = vextract.high.u32 %v1019
    %v1022 = vmul.u32 %v1015, %v1006
    %v1023 = vadd.s32 %v1018, %v1020
    %vm1024 = vc.u32 %v1018, %v1020
    %v1025 = vadd.s32 %v1021, 1
    %v1026 = vsel %vm1024, %v1025, %v1021
    %v1027 = vadd.s32 %v1022, %v1026
    %v1028 = vadd.s32 %v1027, 536870912
    %v1029 = vshrl.u32 %v1028, 30
    %v1030 = vshll.u32 %v1029, 30
    %v1031 = vsub.s32 %v1027, %v1030
    %vm1032 = vcmp.lt.s32.totalorder %v1031, 0
    %v1033 = vsub.s32 0, %v1031
    %v1034 = vsel %vm1032, %v1033, %v1031
    %v1035 = vclz %v1034
    %v1036 = vsub.s32 %v1035, 2
    %vm1037 = vcmp.gt.s32.totalorder 0, %v1036
    %v1038 = vsel %vm1037, 0, %v1036
    %v1039 = vsub.s32 32, %v1038
    %v1040 = vshll.u32 %v1031, %v1038
    %v1041 = vshrl.u32 %v1023, %v1039
    %v1042 = vor.u32 %v1040, %v1041
    %v1043 = vsub.s32 4294967266, %v1038
    %v1044 = vadd.s32 %v1043, 127
    %v1045 = vshll.u32 %v1044, 23
    %v1046 = vor.u32 4788187, %v1045
    %v1047 = vand.u32 2147483647, %v1046
    %v1049 = vcvt.s32.f32 %v1042
    %v1050 = vmul.f32 %v1049, %v1047
    %v1051 = vxor.u32 %v1050, 2147483648
    %v1052 = vsel %vm969, %v1051, %v1050
    %v1053 = vsub.s32 4, %v1029
    %v1054 = vsel %vm969, %v1053, %v1029
    %v1055 = vsel %vm968, %v965, %v1052
    %v1056 = vsel %vm968, 0, %v1054
    %v1057 = vcosq.f32.pop %v1055
    %v1058 = vsinq.f32.pop %v1055
    %vm1059 = vweird.f32 %v965
    %v1060 = vadd.s32 %v1056, 3
    %v1061 = vand.u32 %v1060, 3
    %vm1062 = vcmp.lt.s32.totalorder %v1061, 2
    %vm1063 = vcmp.eq.s32.totalorder %v1061, 0
    %v1064 = vxor.u32 %v1058, 2147483648
    %v1065 = vsel %vm1063, %v1057, %v1064
    %vm1066 = vcmp.eq.s32.totalorder %v1061, 2
    %v1067 = vxor.u32 %v1057, 2147483648
    %v1068 = vsel %vm1066, %v1067, %v1058
    %v1069 = vsel %vm1062, %v1065, %v1068
    %v1070 = vsel %vm1059, nan, %v1069
    %vm1071 = vcmp.lt.f32.partialorder %v965, 16.0
    %v1072 = vmul.f32 %v965, -2.0
    %v1073 = vmul.f32 %v1072, 1.442695
    %v1074 = vpow.pop %v1073
    %v1075 = vsel %vm1071, %v1074, 0.0
    %v1076 = vsub.f32 1.0, %v1075
    %v1077 = vmul.f32 %v1076, 0.5
    %vm1078 = vcmp.lt.f32.partialorder %v167, %v941
    %vm1079 = vcmp.eq.f32.partialorder %v167, %v941
    %vm1080 = vmor %vm1078, %vm1079
    %v1081 = vsel %vm1080, 0.0, %v965
    %v1082 = vand.u32 2147483647, %v965
    %vm1083 = vcmp.le.f32.partialorder %v1082, 0.7853982
    %vm1084 = vcmp.lt.s32.totalorder %v965, 0
    %v1085 = vand.u32 %v965, 2139095040
    %v1086 = vshrl.u32 %v1085, 23
    %v1087 = vsub.s32 %v1086, 127
    %v1088 = vand.u32 2147483647, %v965
    %v1089 = vand.u32 %v1088, 8388607
    %v1090 = vor.u32 %v1089, 8388608
    %v1091 = vsub.s32 0, %v1090
    %v1092 = vadd.s32 %v1087, 1
    %vm1093 = vcmp.gt.s32.totalorder %v1092, 0
    %v1094 = vsel %vm1093, %v1092, 0
    %v1095 = vshrl.u32 %v1094, 5
    %v1096 = vand.u32 %v1094, 31
    %v1097 = vsub.s32 32, %v1096
    %v1098 = vshrl.u32 683565275, %v1097
    %v1099 = vshll.u32 683565275, %v1096
    %v1100 = vshrl.u32 2475754826, %v1097
    %v1101 = vor.u32 %v1099, %v1100
    %v1102 = vshll.u32 2475754826, %v1096
    %v1103 = vshrl.u32 2131351028, %v1097
    %v1104 = vor.u32 %v1102, %v1103
    %v1105 = vshll.u32 2131351028, %v1096
    %v1106 = vshrl.u32 2102212464, %v1097
    %v1107 = vor.u32 %v1105, %v1106
    %v1108 = vshll.u32 2102212464, %v1096
    %v1109 = vshrl.u32 920167782, %v1097
    %v1110 = vor.u32 %v1108, %v1109
    %v1111 = vshll.u32 920167782, %v1096
    %v1112 = vshrl.u32 1326507024, %v1097
    %v1113 = vor.u32 %v1111, %v1112
    %vm1114 = vcmp.lt.s32.totalorder %v1095, 1
    %vm1115 = vcmp.lt.s32.totalorder %v1095, 2
    %vm1116 = vcmp.lt.s32.totalorder %v1095, 3
    %vm1117 = vcmp.lt.s32.totalorder %v1095, 4
    %v1118 = vsel %vm1114, %v1098, %v1101
    %v1119 = vsel %vm1117, %v1107, 2102212464
    %v1120 = vsel %vm1116, %v1104, %v1119
    %v1121 = vsel %vm1115, %v1118, %v1120
    %v1122 = vsel %vm1114, %v1101, %v1104
    %v1123 = vsel %vm1117, %v1110, 920167782
    %v1124 = vsel %vm1116, %v1107, %v1123
    %v1125 = vsel %vm1115, %v1122, %v1124
    %v1126 = vsel %vm1114, %v1104, %v1107
    %v1127 = vsel %vm1117, %v1113, 1326507024
    %v1128 = vsel %vm1116, %v1110, %v1127
    %v1129 = vsel %vm1115, %v1126, %v1128
    %v1130 = vshll.u32 %v1090, 8
    %v1131 = vmul.u32.u64.compose %v1130, %v1129
    %v1132 = vextract.low.u32 %v1131
    %v1133 = vextract.high.u32 %v1131
    %v1134 = vmul.u32.u64.compose %v1130, %v1125
    %v1135 = vextract.low.u32 %v1134
    %v1136 = vextract.high.u32 %v1134
    %v1137 = vmul.u32 %v1130, %v1121
    %v1138 = vadd.s32 %v1133, %v1135
    %vm1139 = vc.u32 %v1133, %v1135
    %v1140 = vadd.s32 %v1136, 1
    %v1141 = vsel %vm1139, %v1140, %v1136
    %v1142 = vadd.s32 %v1137, %v1141
    %v1143 = vadd.s32 %v1142, 536870912
    %v1144 = vshrl.u32 %v1143, 30
    %v1145 = vshll.u32 %v1144, 30
    %v1146 = vsub.s32 %v1142, %v1145
    %vm1147 = vcmp.lt.s32.totalorder %v1146, 0
    %v1148 = vsub.s32 0, %v1146
    %v1149 = vsel %vm1147, %v1148, %v1146
    %v1150 = vclz %v1149
    %v1151 = vsub.s32 %v1150, 2
    %vm1152 = vcmp.gt.s32.totalorder 0, %v1151
    %v1153 = vsel %vm1152, 0, %v1151
    %v1154 = vsub.s32 32, %v1153
    %v1155 = vshll.u32 %v1146, %v1153
    %v1156 = vshrl.u32 %v1138, %v1154
    %v1157 = vor.u32 %v1155, %v1156
    %v1158 = vsub.s32 4294967266, %v1153
    %v1159 = vadd.s32 %v1158, 127
    %v1160 = vshll.u32 %v1159, 23
    %v1161 = vor.u32 4788187, %v1160
    %v1162 = vand.u32 2147483647, %v1161
    %v1164 = vcvt.s32.f32 %v1157
    %v1165 = vmul.f32 %v1164, %v1162
    %v1166 = vxor.u32 %v1165, 2147483648
    %v1167 = vsel %vm1084, %v1166, %v1165
    %v1168 = vsub.s32 4, %v1144
    %v1169 = vsel %vm1084, %v1168, %v1144
    %v1170 = vsel %vm1083, %v965, %v1167
    %v1171 = vsel %vm1083, 0, %v1169
    %v1172 = vcosq.f32.pop %v1170
    %v1173 = vsinq.f32.pop %v1170
    %vm1174 = vweird.f32 %v965
    %v1175 = vand.u32 %v1171, 3
    %vm1176 = vcmp.lt.s32.totalorder %v1175, 2
    %vm1177 = vcmp.eq.s32.totalorder %v1175, 0
    %v1178 = vxor.u32 %v1173, 2147483648
    %v1179 = vsel %vm1177, %v1172, %v1178
    %vm1180 = vcmp.eq.s32.totalorder %v1175, 2
    %v1181 = vxor.u32 %v1172, 2147483648
    %v1182 = vsel %vm1180, %v1181, %v1173
    %v1183 = vsel %vm1176, %v1179, %v1182
    %v1184 = vsel %vm1174, nan, %v1183
    %v1185 = vadd.f32 %v1075, 1.0
    %v1186 = vmul.f32 %v1185, 0.5
    %v1187 = vsel %vm1079, 1.0, %v1186
    %v1188 = vsel %vm1078, %v1184, %v1187
    %v1189 = vmul.f32 %v1070, %v958
    %v1190 = vmul.f32 %v1077, %v958
    %v1191 = vsel %vm1079, %v964, %v1190
    %v1192 = vsel %vm1078, %v1189, %v1191
    %v1193 = vsub.f32 0.0, %v962
    %v1194 = vmul.f32 %v1193, %v1070
    %v1195 = vmul.f32 %v962, %v1077
    %v1196 = vsel %vm1079, 0.0, %v1195
    %v1197 = vsel %vm1078, %v1194, %v1196
    %v1198 = vand.u32 2147483647, %v966
    %vm1199 = vcmp.le.f32.partialorder %v1198, 0.7853982
    %vm1200 = vcmp.lt.s32.totalorder %v966, 0
    %v1201 = vand.u32 %v966, 2139095040
    %v1202 = vshrl.u32 %v1201, 23
    %v1203 = vsub.s32 %v1202, 127
    %v1204 = vand.u32 2147483647, %v966
    %v1205 = vand.u32 %v1204, 8388607
    %v1206 = vor.u32 %v1205, 8388608
    %v1207 = vsub.s32 0, %v1206
    %v1208 = vadd.s32 %v1203, 1
    %vm1209 = vcmp.gt.s32.totalorder %v1208, 0
    %v1210 = vsel %vm1209, %v1208, 0
    %v1211 = vshrl.u32 %v1210, 5
    %v1212 = vand.u32 %v1210, 31
    %v1213 = vsub.s32 32, %v1212
    %v1214 = vshrl.u32 683565275, %v1213
    %v1215 = vshll.u32 683565275, %v1212
    %v1216 = vshrl.u32 2475754826, %v1213
    %v1217 = vor.u32 %v1215, %v1216
    %v1218 = vshll.u32 2475754826, %v1212
    %v1219 = vshrl.u32 2131351028, %v1213
    %v1220 = vor.u32 %v1218, %v1219
    %v1221 = vshll.u32 2131351028, %v1212
    %v1222 = vshrl.u32 2102212464, %v1213
    %v1223 = vor.u32 %v1221, %v1222
    %v1224 = vshll.u32 2102212464, %v1212
    %v1225 = vshrl.u32 920167782, %v1213
    %v1226 = vor.u32 %v1224, %v1225
    %v1227 = vshll.u32 920167782, %v1212
    %v1228 = vshrl.u32 1326507024, %v1213
    %v1229 = vor.u32 %v1227, %v1228
    %vm1230 = vcmp.lt.s32.totalorder %v1211, 1
    %vm1231 = vcmp.lt.s32.totalorder %v1211, 2
    %vm1232 = vcmp.lt.s32.totalorder %v1211, 3
    %vm1233 = vcmp.lt.s32.totalorder %v1211, 4
    %v1234 = vsel %vm1230, %v1214, %v1217
    %v1235 = vsel %vm1233, %v1223, 2102212464
    %v1236 = vsel %vm1232, %v1220, %v1235
    %v1237 = vsel %vm1231, %v1234, %v1236
    %v1238 = vsel %vm1230, %v1217, %v1220
    %v1239 = vsel %vm1233, %v1226, 920167782
    %v1240 = vsel %vm1232, %v1223, %v1239
    %v1241 = vsel %vm1231, %v1238, %v1240
    %v1242 = vsel %vm1230, %v1220, %v1223
    %v1243 = vsel %vm1233, %v1229, 1326507024
    %v1244 = vsel %vm1232, %v1226, %v1243
    %v1245 = vsel %vm1231, %v1242, %v1244
    %v1246 = vshll.u32 %v1206, 8
    %v1247 = vmul.u32.u64.compose %v1246, %v1245
    %v1248 = vextract.low.u32 %v1247
    %v1249 = vextract.high.u32 %v1247
    %v1250 = vmul.u32.u64.compose %v1246, %v1241
    %v1251 = vextract.low.u32 %v1250
    %v1252 = vextract.high.u32 %v1250
    %v1253 = vmul.u32 %v1246, %v1237
    %v1254 = vadd.s32 %v1249, %v1251
    %vm1255 = vc.u32 %v1249, %v1251
    %v1256 = vadd.s32 %v1252, 1
    %v1257 = vsel %vm1255, %v1256, %v1252
    %v1258 = vadd.s32 %v1253, %v1257
    %v1259 = vadd.s32 %v1258, 536870912
    %v1260 = vshrl.u32 %v1259, 30
    %v1261 = vshll.u32 %v1260, 30
    %v1262 = vsub.s32 %v1258, %v1261
    %vm1263 = vcmp.lt.s32.totalorder %v1262, 0
    %v1264 = vsub.s32 0, %v1262
    %v1265 = vsel %vm1263, %v1264, %v1262
    %v1266 = vclz %v1265
    %v1267 = vsub.s32 %v1266, 2
    %vm1268 = vcmp.gt.s32.totalorder 0, %v1267
    %v1269 = vsel %vm1268, 0, %v1267
    %v1270 = vsub.s32 32, %v1269
    %v1271 = vshll.u32 %v1262, %v1269
    %v1272 = vshrl.u32 %v1254, %v1270
    %v1273 = vor.u32 %v1271, %v1272
    %v1274 = vsub.s32 4294967266, %v1269
    %v1275 = vadd.s32 %v1274, 127
    %v1276 = vshll.u32 %v1275, 23
    %v1277 = vor.u32 4788187, %v1276
    %v1278 = vand.u32 2147483647, %v1277
    %v1280 = vcvt.s32.f32 %v1273
    %v1281 = vmul.f32 %v1280, %v1278
    %v1282 = vxor.u32 %v1281, 2147483648
    %v1283 = vsel %vm1200, %v1282, %v1281
    %v1284 = vsub.s32 4, %v1260
    %v1285 = vsel %vm1200, %v1284, %v1260
    %v1286 = vsel %vm1199, %v966, %v1283
    %v1287 = vsel %vm1199, 0, %v1285
    %v1288 = vcosq.f32.pop %v1286
    %v1289 = vsinq.f32.pop %v1286
    %vm1290 = vweird.f32 %v966
    %v1291 = vadd.s32 %v1287, 3
    %v1292 = vand.u32 %v1291, 3
    %vm1293 = vcmp.lt.s32.totalorder %v1292, 2
    %vm1294 = vcmp.eq.s32.totalorder %v1292, 0
    %v1295 = vxor.u32 %v1289, 2147483648
    %v1296 = vsel %vm1294, %v1288, %v1295
    %vm1297 = vcmp.eq.s32.totalorder %v1292, 2
    %v1298 = vxor.u32 %v1288, 2147483648
    %v1299 = vsel %vm1297, %v1298, %v1289
    %v1300 = vsel %vm1293, %v1296, %v1299
    %v1301 = vsel %vm1290, nan, %v1300
    %vm1302 = vcmp.lt.f32.partialorder %v966, 16.0
    %v1303 = vmul.f32 %v966, -2.0
    %v1304 = vmul.f32 %v1303, 1.442695
    %v1305 = vpow.pop %v1304
    %v1306 = vsel %vm1302, %v1305, 0.0
    %v1307 = vsub.f32 1.0, %v1306
    %v1308 = vmul.f32 %v1307, 0.5
    %vm1309 = vcmp.lt.f32.partialorder %v167, %v950
    %vm1310 = vcmp.eq.f32.partialorder %v167, %v950
    %vm1311 = vmor %vm1309, %vm1310
    %v1312 = vsel %vm1311, 0.0, %v966
    %v1313 = vand.u32 2147483647, %v966
    %vm1314 = vcmp.le.f32.partialorder %v1313, 0.7853982
    %vm1315 = vcmp.lt.s32.totalorder %v966, 0
    %v1316 = vand.u32 %v966, 2139095040
    %v1317 = vshrl.u32 %v1316, 23
    %v1318 = vsub.s32 %v1317, 127
    %v1319 = vand.u32 2147483647, %v966
    %v1320 = vand.u32 %v1319, 8388607
    %v1321 = vor.u32 %v1320, 8388608
    %v1322 = vsub.s32 0, %v1321
    %v1323 = vadd.s32 %v1318, 1
    %vm1324 = vcmp.gt.s32.totalorder %v1323, 0
    %v1325 = vsel %vm1324, %v1323, 0
    %v1326 = vshrl.u32 %v1325, 5
    %v1327 = vand.u32 %v1325, 31
    %v1328 = vsub.s32 32, %v1327
    %v1329 = vshrl.u32 683565275, %v1328
    %v1330 = vshll.u32 683565275, %v1327
    %v1331 = vshrl.u32 2475754826, %v1328
    %v1332 = vor.u32 %v1330, %v1331
    %v1333 = vshll.u32 2475754826, %v1327
    %v1334 = vshrl.u32 2131351028, %v1328
    %v1335 = vor.u32 %v1333, %v1334
    %v1336 = vshll.u32 2131351028, %v1327
    %v1337 = vshrl.u32 2102212464, %v1328
    %v1338 = vor.u32 %v1336, %v1337
    %v1339 = vshll.u32 2102212464, %v1327
    %v1340 = vshrl.u32 920167782, %v1328
    %v1341 = vor.u32 %v1339, %v1340
    %v1342 = vshll.u32 920167782, %v1327
    %v1343 = vshrl.u32 1326507024, %v1328
    %v1344 = vor.u32 %v1342, %v1343
    %vm1345 = vcmp.lt.s32.totalorder %v1326, 1
    %vm1346 = vcmp.lt.s32.totalorder %v1326, 2
    %vm1347 = vcmp.lt.s32.totalorder %v1326, 3
    %vm1348 = vcmp.lt.s32.totalorder %v1326, 4
    %v1349 = vsel %vm1345, %v1329, %v1332
    %v1350 = vsel %vm1348, %v1338, 2102212464
    %v1351 = vsel %vm1347, %v1335, %v1350
    %v1352 = vsel %vm1346, %v1349, %v1351
    %v1353 = vsel %vm1345, %v1332, %v1335
    %v1354 = vsel %vm1348, %v1341, 920167782
    %v1355 = vsel %vm1347, %v1338, %v1354
    %v1356 = vsel %vm1346, %v1353, %v1355
    %v1357 = vsel %vm1345, %v1335, %v1338
    %v1358 = vsel %vm1348, %v1344, 1326507024
    %v1359 = vsel %vm1347, %v1341, %v1358
    %v1360 = vsel %vm1346, %v1357, %v1359
    %v1361 = vshll.u32 %v1321, 8
    %v1362 = vmul.u32.u64.compose %v1361, %v1360
    %v1363 = vextract.low.u32 %v1362
    %v1364 = vextract.high.u32 %v1362
    %v1365 = vmul.u32.u64.compose %v1361, %v1356
    %v1366 = vextract.low.u32 %v1365
    %v1367 = vextract.high.u32 %v1365
    %v1368 = vmul.u32 %v1361, %v1352
    %v1369 = vadd.s32 %v1364, %v1366
    %vm1370 = vc.u32 %v1364, %v1366
    %v1371 = vadd.s32 %v1367, 1
    %v1372 = vsel %vm1370, %v1371, %v1367
    %v1373 = vadd.s32 %v1368, %v1372
    %v1374 = vadd.s32 %v1373, 536870912
    %v1375 = vshrl.u32 %v1374, 30
    %v1376 = vshll.u32 %v1375, 30
    %v1377 = vsub.s32 %v1373, %v1376
    %vm1378 = vcmp.lt.s32.totalorder %v1377, 0
    %v1379 = vsub.s32 0, %v1377
    %v1380 = vsel %vm1378, %v1379, %v1377
    %v1381 = vclz %v1380
    %v1382 = vsub.s32 %v1381, 2
    %vm1383 = vcmp.gt.s32.totalorder 0, %v1382
    %v1384 = vsel %vm1383, 0, %v1382
    %v1385 = vsub.s32 32, %v1384
    %v1386 = vshll.u32 %v1377, %v1384
    %v1387 = vshrl.u32 %v1369, %v1385
    %v1388 = vor.u32 %v1386, %v1387
    %v1389 = vsub.s32 4294967266, %v1384
    %v1390 = vadd.s32 %v1389, 127
    %v1391 = vshll.u32 %v1390, 23
    %v1392 = vor.u32 4788187, %v1391
    %v1393 = vand.u32 2147483647, %v1392
    %v1395 = vcvt.s32.f32 %v1388
    %v1396 = vmul.f32 %v1395, %v1393
    %v1397 = vxor.u32 %v1396, 2147483648
    %v1398 = vsel %vm1315, %v1397, %v1396
    %v1399 = vsub.s32 4, %v1375
    %v1400 = vsel %vm1315, %v1399, %v1375
    %v1401 = vsel %vm1314, %v966, %v1398
    %v1402 = vsel %vm1314, 0, %v1400
    %v1403 = vcosq.f32.pop %v1401
    %v1404 = vsinq.f32.pop %v1401
    %vm1405 = vweird.f32 %v966
    %v1406 = vand.u32 %v1402, 3
    %vm1407 = vcmp.lt.s32.totalorder %v1406, 2
    %vm1408 = vcmp.eq.s32.totalorder %v1406, 0
    %v1409 = vxor.u32 %v1404, 2147483648
    %v1410 = vsel %vm1408, %v1403, %v1409
    %vm1411 = vcmp.eq.s32.totalorder %v1406, 2
    %v1412 = vxor.u32 %v1403, 2147483648
    %v1413 = vsel %vm1411, %v1412, %v1404
    %v1414 = vsel %vm1407, %v1410, %v1413
    %v1415 = vsel %vm1405, nan, %v1414
    %v1416 = vadd.f32 %v1306, 1.0
    %v1417 = vmul.f32 %v1416, 0.5
    %v1418 = vsel %vm1310, 1.0, %v1417
    %v1419 = vsel %vm1309, %v1415, %v1418
    %v1420 = vmul.f32 %v1301, %v961
    %v1421 = vmul.f32 %v1308, %v961
    %v1422 = vsel %vm1310, %v964, %v1421
    %v1423 = vsel %vm1309, %v1420, %v1422
    %v1424 = vsub.f32 0.0, %v963
    %v1425 = vmul.f32 %v1424, %v1301
    %v1426 = vmul.f32 %v963, %v1308
    %v1427 = vsel %vm1310, 0.0, %v1426
    %v1428 = vsel %vm1309, %v1425, %v1427
    %v1429 = vadd.f32 %v1081, %v1312
    %vm1430 = vcmp.lt.f32.partialorder %v1429, 60.0
    %v1431 = vsub.f32 0.0, %v1429
    %v1432 = vmul.f32 %v1431, 1.442695
    %v1433 = vpow.pop %v1432
    %v1434 = vsel %vm1430, %v1433, 0.0
    %v1435 = vmul.f32 %v1188, %v1419
    %v1436 = vmul.f32 %v1188, %v1423
    %v1437 = vmul.f32 %v1188, %v1428
    %v1438 = vmul.f32 %v1419, %v1192
    %v1439 = vmul.f32 %v1419, %v1197
    %v1440 = vmul.f32 %v1197, %v1423
    %v1441 = vmul.f32 %v1197, %v1428
    %v1442 = vmul.f32 %v1192, %v1423
    %v1443 = vmul.f32 %v1192, %v1428
    %v1444 = vadd.f32 %v936, %v937
    %v1445 = vmul.f32 %v936, %v934
    %v1446 = vmul.f32 %v936, %v937
    %v1447 = vmul.f32 %v937, %v937
    %v1448 = vsub.f32 %v1434, %v1435
    %v1449 = vmul.f32 %v1446, 2.0
    %v1450 = vmul.f32 %v1449, %v1448
    %v1451 = vsub.f32 %v1435, %v1450
    %v1452 = vmul.f32 %v1445, %v1441
    %v1453 = vsub.f32 %v1451, %v1452
    %v1454 = vmul.f32 %v168, %v1447
    %v1455 = vmul.f32 %v1454, %v1442
    %v1456 = vsub.f32 %v1453, %v1455
    %v1457 = vmul.f32 %v168, %v1436
    %v1458 = vsub.f32 %v1457, %v1439
    %v1459 = vstv %s918
    %v1460 = vmul.f32 %v1458, %v1459
    %v1461 = vmul.f32 %v1444, %v1448
    %v1462 = vmul.f32 %v934, %v1441
    %v1463 = vadd.f32 %v1461, %v1462
    %v1464 = vmul.f32 %v168, %v937
    %v1465 = vmul.f32 %v1464, %v1442
    %v1466 = vadd.f32 %v1463, %v1465
    %v1467 = vmul.f32 %v1466, %v1459
    %v1468 = vsub.f32 0.0, %v1467
    %v1469 = vmul.f32 %v168, %v1438
    %v1470 = vsub.f32 %v1437, %v1469
    %v1471 = vmul.f32 %v1470, %v1459
    %v1472 = vmul.f32 %v794, %v1448
    %v1473 = vadd.f32 %v1472, %v1441
    %v1474 = vmul.f32 %v797, %v1442
    %v1475 = vadd.f32 %v1473, %v1474
    %v1476 = vstv %s919
    %v1477 = vmul.f32 %v1475, %v1476
    %v1478 = vsub.f32 0.0, %v1477
    %v1479 = vmul.f32 %v1445, %v1437
    %v1480 = vmul.f32 %v1447, %v1438
    %v1481 = vsub.f32 %v1479, %v1480
    %v1482 = vstv %s916
    %v1483 = vmul.f32 %v1481, %v1482
    %v1484 = vmul.f32 %v934, %v1437
    %v1485 = vmul.f32 %v937, %v1438
    %v1486 = vsub.f32 %v1484, %v1485
    %v1487 = vsub.f32 0.0, %v1443
    %v1488 = vmul.f32 %v1447, %v1436
    %v1489 = vmul.f32 %v1445, %v1439
    %v1490 = vsub.f32 %v1488, %v1489
    %v1491 = vmul.f32 %v1490, %v1482
    %v1492 = vsub.f32 0.0, %v1440
    %v1493 = vmul.f32 %v937, %v1436
    %v1494 = vmul.f32 %v934, %v1439
    %v1495 = vsub.f32 %v1493, %v1494
    %v1496 = vmul.f32 %v1445, 2.0
    %v1497 = vmul.f32 %v1496, %v1447
    %v1498 = vmul.f32 %v1497, %v1448
    %v1499 = vmul.f32 %v1445, %v1445
    %v1500 = vmul.f32 %v1499, %v1441
    %v1501 = vadd.f32 %v1498, %v1500
    %v1502 = vmul.f32 %v1447, %v1447
    %v1503 = vmul.f32 %v1502, %v1442
    %v1504 = vadd.f32 %v1501, %v1503
    %v1505 = vstv %s917
    %v1506 = vmul.f32 %v1504, %v1505
    %v1507 = vsub.f32 0.0, %v1506
    %v1508 = vmul.f32 %v934, %v937
    %v1509 = vmul.f32 %v1508, %v1444
    %v1510 = vmul.f32 %v1509, %v1448
    %v1511 = vmul.f32 %v1445, %v934
    %v1512 = vmul.f32 %v1511, %v1441
    %v1513 = vadd.f32 %v1510, %v1512
    %v1514 = vmul.f32 %v937, %v1447
    %v1515 = vmul.f32 %v1514, %v1442
    %v1516 = vadd.f32 %v1513, %v1515
    %v1517 = vmul.f32 %v1516, %v1482
    %v1518 = vsub.f32 0.0, %v1517
    %v1519 = vmul.f32 %v770, %v1518
    %v1520 = vmul.f32 %v770, %v1495
    %v1521 = vsub.f32 %v1435, %v1456
    %v1522 = vmul.f32 %v1521, 2.0
    %v1523 = vadd.f32 %v1434, %v1522
    %v1524 = vmul.f32 %v770, %v1486
    %v1525 = vmul.f32 %v770, %v1468
    %v1526 = vmul.f32 %v910, %v1456
    %v1527 = vmul.f32 %v911, %v1483
    %v1528 = vadd.f32 %v1526, %v1527
    %v1529 = vmul.f32 %v912, %v1519
    %v1530 = vadd.f32 %v1528, %v1529
    %v1531 = vmul.f32 %v913, %v1491
    %v1532 = vadd.f32 %v1530, %v1531
    %v1533 = vmul.f32 %v914, %v1507
    %v1534 = vadd.f32 %v1532, %v1533
    %v1535 = vmul.f32 %v910, %v1460
    %v1536 = vmul.f32 %v911, %v1435
    %v1537 = vadd.f32 %v1535, %v1536
    %v1538 = vmul.f32 %v912, %v1520
    %v1539 = vadd.f32 %v1537, %v1538
    %v1540 = vmul.f32 %v913, %v1492
    %v1541 = vadd.f32 %v1539, %v1540
    %v1542 = vmul.f32 %v914, %v1491
    %v1543 = vadd.f32 %v1541, %v1542
    %v1544 = vmul.f32 %v910, %v1468
    %v1545 = vmul.f32 %v911, %v1486
    %v1546 = vadd.f32 %v1544, %v1545
    %v1547 = vmul.f32 %v912, %v1523
    %v1548 = vadd.f32 %v1546, %v1547
    %v1549 = vmul.f32 %v913, %v1495
    %v1550 = vadd.f32 %v1548, %v1549
    %v1551 = vmul.f32 %v914, %v1518
    %v1552 = vadd.f32 %v1550, %v1551
    %v1553 = vmul.f32 %v910, %v1471
    %v1554 = vmul.f32 %v911, %v1487
    %v1555 = vadd.f32 %v1553, %v1554
    %v1556 = vmul.f32 %v912, %v1524
    %v1557 = vadd.f32 %v1555, %v1556
    %v1558 = vmul.f32 %v913, %v1435
    %v1559 = vadd.f32 %v1557, %v1558
    %v1560 = vmul.f32 %v914, %v1483
    %v1561 = vadd.f32 %v1559, %v1560
    %v1562 = vmul.f32 %v910, %v1478
    %v1563 = vmul.f32 %v911, %v1471
    %v1564 = vadd.f32 %v1562, %v1563
    %v1565 = vmul.f32 %v912, %v1525
    %v1566 = vadd.f32 %v1564, %v1565
    %v1567 = vmul.f32 %v913, %v1460
    %v1568 = vadd.f32 %v1566, %v1567
    %v1569 = vmul.f32 %v914, %v1456
    %v1570 = vadd.f32 %v1568, %v1569
    %v1571 = vand.u32 2147483647, %v1534
    %v1572 = vand.u32 2147483647, %v1543
    %v1573 = vmax.f32 %v1571, %v1572
    %v1574 = vand.u32 2147483647, %v1552
    %v1575 = vand.u32 2147483647, %v1561
    %v1576 = vmax.f32 %v1574, %v1575
    %v1577 = vmax.f32 %v1573, %v1576
    %v1578 = vand.u32 2147483647, %v1570
    %v1579 = vmax.f32 %v1577, %v1578
    %vm1580 = vcmp.lt.f32.partialorder %v1579, 1e-30
    %v1581 = vsel %vm1580, 1.0, %v1579
    %v1582 = vrcp.pop %v1581
    %v1583 = vmul.f32 %v1581, %v1582
    %v1584 = vsub.f32 2.0, %v1583
    %v1585 = vmul.f32 %v1582, %v1584
    %v1586 = vmul.f32 %v1534, %v1585
    %v1587 = vmul.f32 %v1543, %v1585
    %v1588 = vmul.f32 %v1552, %v1585
    %v1589 = vmul.f32 %v1561, %v1585
    %v1590 = vmul.f32 %v1570, %v1585
    %s1591 = sld [smem:[#allocation2 + $0x4]]
    %s1592 = sld [smem:[#allocation6 + $0x4]]
    %s1593 = sld [smem:[#allocation7 + $0x4]]
    %s1594 = sld [smem:[#allocation12 + $0x4]]
    %s1595 = sld [smem:[#allocation13 + $0x4]]
    %s1596 = sld [smem:[#allocation9 + $0x4]]
    %v1597 = vstv %s1596
    %v1598 = vmul.f32 %v138, %v1597
    %s1599 = sld [smem:[#allocation10 + $0x4]]
    %v1600 = vstv %s1599
    %v1601 = vmul.f32 %v138, %v1600
    %s1602 = sld [smem:[#allocation4 + $0x4]]
    %v1603 = vstv %s1602
    %v1604 = vmul.f32 %v1603, %v139
    %v1605 = vmul.f32 %v1604, 2.0
    %v1606 = vmul.f32 %v1605, %v1604
    %1608 = vset.pattern.permute.xlu0 0
    %1609 = vperm.xlu0 %1608, %v1606
    %v1610 = vpop.permute.xlu0 %1609
    %v1612 = vmul.f32 %v1610, %v168
    %v1613 = vsub.f32 %v1612, 1.0
    %1615 = vset.pattern.permute.xlu0 0
    %1616 = vperm.xlu0 %1615, %v1598
    %v1617 = vpop.permute.xlu0 %1616
    %v1619 = vadd.f32 %v167, %v1617
    %v1620 = vsub.f32 %v167, %v1617
    %v1621 = vand.u32 2147483647, %v1620
    %v1622 = vmul.f32 %v1619, %v1621
    %1624 = vset.pattern.permute.xlu0 0
    %1625 = vperm.xlu0 %1624, %v1601
    %v1626 = vpop.permute.xlu0 %1625
    %v1628 = vadd.f32 %v167, %v1626
    %v1629 = vsub.f32 %v167, %v1626
    %v1630 = vand.u32 2147483647, %v1629
    %v1631 = vmul.f32 %v1628, %v1630
    %vm1632 = vcmp.eq.f32.partialorder %v1622, 0.0
    %v1633 = vsel %vm1632, 1.0, %v1622
    %v1634 = vrsqrt.pop %v1633
    %vm1635 = vcmp.eq.f32.partialorder %v1631, 0.0
    %v1636 = vsel %vm1635, 1.0, %v1631
    %v1637 = vrsqrt.pop %v1636
    %v1638 = vmul.f32 %v1622, %v1634
    %v1639 = vmul.f32 %v1631, %v1637
    %v1640 = vstv %s1591
    %v1641 = vmul.f32 %v1638, %v1640
    %v1642 = vmul.f32 %v1639, %v1640
    %v1643 = vand.u32 2147483647, %v1641
    %vm1644 = vcmp.le.f32.partialorder %v1643, 0.7853982
    %vm1645 = vcmp.lt.s32.totalorder %v1641, 0
    %v1646 = vand.u32 %v1641, 2139095040
    %v1647 = vshrl.u32 %v1646, 23
    %v1648 = vsub.s32 %v1647, 127
    %v1649 = vand.u32 2147483647, %v1641
    %v1650 = vand.u32 %v1649, 8388607
    %v1651 = vor.u32 %v1650, 8388608
    %v1652 = vsub.s32 0, %v1651
    %v1653 = vadd.s32 %v1648, 1
    %vm1654 = vcmp.gt.s32.totalorder %v1653, 0
    %v1655 = vsel %vm1654, %v1653, 0
    %v1656 = vshrl.u32 %v1655, 5
    %v1657 = vand.u32 %v1655, 31
    %v1658 = vsub.s32 32, %v1657
    %v1659 = vshrl.u32 683565275, %v1658
    %v1660 = vshll.u32 683565275, %v1657
    %v1661 = vshrl.u32 2475754826, %v1658
    %v1662 = vor.u32 %v1660, %v1661
    %v1663 = vshll.u32 2475754826, %v1657
    %v1664 = vshrl.u32 2131351028, %v1658
    %v1665 = vor.u32 %v1663, %v1664
    %v1666 = vshll.u32 2131351028, %v1657
    %v1667 = vshrl.u32 2102212464, %v1658
    %v1668 = vor.u32 %v1666, %v1667
    %v1669 = vshll.u32 2102212464, %v1657
    %v1670 = vshrl.u32 920167782, %v1658
    %v1671 = vor.u32 %v1669, %v1670
    %v1672 = vshll.u32 920167782, %v1657
    %v1673 = vshrl.u32 1326507024, %v1658
    %v1674 = vor.u32 %v1672, %v1673
    %vm1675 = vcmp.lt.s32.totalorder %v1656, 1
    %vm1676 = vcmp.lt.s32.totalorder %v1656, 2
    %vm1677 = vcmp.lt.s32.totalorder %v1656, 3
    %vm1678 = vcmp.lt.s32.totalorder %v1656, 4
    %v1679 = vsel %vm1675, %v1659, %v1662
    %v1680 = vsel %vm1678, %v1668, 2102212464
    %v1681 = vsel %vm1677, %v1665, %v1680
    %v1682 = vsel %vm1676, %v1679, %v1681
    %v1683 = vsel %vm1675, %v1662, %v1665
    %v1684 = vsel %vm1678, %v1671, 920167782
    %v1685 = vsel %vm1677, %v1668, %v1684
    %v1686 = vsel %vm1676, %v1683, %v1685
    %v1687 = vsel %vm1675, %v1665, %v1668
    %v1688 = vsel %vm1678, %v1674, 1326507024
    %v1689 = vsel %vm1677, %v1671, %v1688
    %v1690 = vsel %vm1676, %v1687, %v1689
    %v1691 = vshll.u32 %v1651, 8
    %v1692 = vmul.u32.u64.compose %v1691, %v1690
    %v1693 = vextract.low.u32 %v1692
    %v1694 = vextract.high.u32 %v1692
    %v1695 = vmul.u32.u64.compose %v1691, %v1686
    %v1696 = vextract.low.u32 %v1695
    %v1697 = vextract.high.u32 %v1695
    %v1698 = vmul.u32 %v1691, %v1682
    %v1699 = vadd.s32 %v1694, %v1696
    %vm1700 = vc.u32 %v1694, %v1696
    %v1701 = vadd.s32 %v1697, 1
    %v1702 = vsel %vm1700, %v1701, %v1697
    %v1703 = vadd.s32 %v1698, %v1702
    %v1704 = vadd.s32 %v1703, 536870912
    %v1705 = vshrl.u32 %v1704, 30
    %v1706 = vshll.u32 %v1705, 30
    %v1707 = vsub.s32 %v1703, %v1706
    %vm1708 = vcmp.lt.s32.totalorder %v1707, 0
    %v1709 = vsub.s32 0, %v1707
    %v1710 = vsel %vm1708, %v1709, %v1707
    %v1711 = vclz %v1710
    %v1712 = vsub.s32 %v1711, 2
    %vm1713 = vcmp.gt.s32.totalorder 0, %v1712
    %v1714 = vsel %vm1713, 0, %v1712
    %v1715 = vsub.s32 32, %v1714
    %v1716 = vshll.u32 %v1707, %v1714
    %v1717 = vshrl.u32 %v1699, %v1715
    %v1718 = vor.u32 %v1716, %v1717
    %v1719 = vsub.s32 4294967266, %v1714
    %v1720 = vadd.s32 %v1719, 127
    %v1721 = vshll.u32 %v1720, 23
    %v1722 = vor.u32 4788187, %v1721
    %v1723 = vand.u32 2147483647, %v1722
    %v1725 = vcvt.s32.f32 %v1718
    %v1726 = vmul.f32 %v1725, %v1723
    %v1727 = vxor.u32 %v1726, 2147483648
    %v1728 = vsel %vm1645, %v1727, %v1726
    %v1729 = vsub.s32 4, %v1705
    %v1730 = vsel %vm1645, %v1729, %v1705
    %v1731 = vsel %vm1644, %v1641, %v1728
    %v1732 = vsel %vm1644, 0, %v1730
    %v1733 = vcosq.f32.pop %v1731
    %v1734 = vsinq.f32.pop %v1731
    %vm1735 = vweird.f32 %v1641
    %v1736 = vadd.s32 %v1732, 3
    %v1737 = vand.u32 %v1736, 3
    %vm1738 = vcmp.lt.s32.totalorder %v1737, 2
    %vm1739 = vcmp.eq.s32.totalorder %v1737, 0
    %v1740 = vxor.u32 %v1734, 2147483648
    %v1741 = vsel %vm1739, %v1733, %v1740
    %vm1742 = vcmp.eq.s32.totalorder %v1737, 2
    %v1743 = vxor.u32 %v1733, 2147483648
    %v1744 = vsel %vm1742, %v1743, %v1734
    %v1745 = vsel %vm1738, %v1741, %v1744
    %v1746 = vsel %vm1735, nan, %v1745
    %vm1747 = vcmp.lt.f32.partialorder %v1641, 16.0
    %v1748 = vmul.f32 %v1641, -2.0
    %v1749 = vmul.f32 %v1748, 1.442695
    %v1750 = vpow.pop %v1749
    %v1751 = vsel %vm1747, %v1750, 0.0
    %v1752 = vsub.f32 1.0, %v1751
    %v1753 = vmul.f32 %v1752, 0.5
    %vm1754 = vcmp.lt.f32.partialorder %v167, %v1617
    %vm1755 = vcmp.eq.f32.partialorder %v167, %v1617
    %vm1756 = vmor %vm1754, %vm1755
    %v1757 = vsel %vm1756, 0.0, %v1641
    %v1758 = vand.u32 2147483647, %v1641
    %vm1759 = vcmp.le.f32.partialorder %v1758, 0.7853982
    %vm1760 = vcmp.lt.s32.totalorder %v1641, 0
    %v1761 = vand.u32 %v1641, 2139095040
    %v1762 = vshrl.u32 %v1761, 23
    %v1763 = vsub.s32 %v1762, 127
    %v1764 = vand.u32 2147483647, %v1641
    %v1765 = vand.u32 %v1764, 8388607
    %v1766 = vor.u32 %v1765, 8388608
    %v1767 = vsub.s32 0, %v1766
    %v1768 = vadd.s32 %v1763, 1
    %vm1769 = vcmp.gt.s32.totalorder %v1768, 0
    %v1770 = vsel %vm1769, %v1768, 0
    %v1771 = vshrl.u32 %v1770, 5
    %v1772 = vand.u32 %v1770, 31
    %v1773 = vsub.s32 32, %v1772
    %v1774 = vshrl.u32 683565275, %v1773
    %v1775 = vshll.u32 683565275, %v1772
    %v1776 = vshrl.u32 2475754826, %v1773
    %v1777 = vor.u32 %v1775, %v1776
    %v1778 = vshll.u32 2475754826, %v1772
    %v1779 = vshrl.u32 2131351028, %v1773
    %v1780 = vor.u32 %v1778, %v1779
    %v1781 = vshll.u32 2131351028, %v1772
    %v1782 = vshrl.u32 2102212464, %v1773
    %v1783 = vor.u32 %v1781, %v1782
    %v1784 = vshll.u32 2102212464, %v1772
    %v1785 = vshrl.u32 920167782, %v1773
    %v1786 = vor.u32 %v1784, %v1785
    %v1787 = vshll.u32 920167782, %v1772
    %v1788 = vshrl.u32 1326507024, %v1773
    %v1789 = vor.u32 %v1787, %v1788
    %vm1790 = vcmp.lt.s32.totalorder %v1771, 1
    %vm1791 = vcmp.lt.s32.totalorder %v1771, 2
    %vm1792 = vcmp.lt.s32.totalorder %v1771, 3
    %vm1793 = vcmp.lt.s32.totalorder %v1771, 4
    %v1794 = vsel %vm1790, %v1774, %v1777
    %v1795 = vsel %vm1793, %v1783, 2102212464
    %v1796 = vsel %vm1792, %v1780, %v1795
    %v1797 = vsel %vm1791, %v1794, %v1796
    %v1798 = vsel %vm1790, %v1777, %v1780
    %v1799 = vsel %vm1793, %v1786, 920167782
    %v1800 = vsel %vm1792, %v1783, %v1799
    %v1801 = vsel %vm1791, %v1798, %v1800
    %v1802 = vsel %vm1790, %v1780, %v1783
    %v1803 = vsel %vm1793, %v1789, 1326507024
    %v1804 = vsel %vm1792, %v1786, %v1803
    %v1805 = vsel %vm1791, %v1802, %v1804
    %v1806 = vshll.u32 %v1766, 8
    %v1807 = vmul.u32.u64.compose %v1806, %v1805
    %v1808 = vextract.low.u32 %v1807
    %v1809 = vextract.high.u32 %v1807
    %v1810 = vmul.u32.u64.compose %v1806, %v1801
    %v1811 = vextract.low.u32 %v1810
    %v1812 = vextract.high.u32 %v1810
    %v1813 = vmul.u32 %v1806, %v1797
    %v1814 = vadd.s32 %v1809, %v1811
    %vm1815 = vc.u32 %v1809, %v1811
    %v1816 = vadd.s32 %v1812, 1
    %v1817 = vsel %vm1815, %v1816, %v1812
    %v1818 = vadd.s32 %v1813, %v1817
    %v1819 = vadd.s32 %v1818, 536870912
    %v1820 = vshrl.u32 %v1819, 30
    %v1821 = vshll.u32 %v1820, 30
    %v1822 = vsub.s32 %v1818, %v1821
    %vm1823 = vcmp.lt.s32.totalorder %v1822, 0
    %v1824 = vsub.s32 0, %v1822
    %v1825 = vsel %vm1823, %v1824, %v1822
    %v1826 = vclz %v1825
    %v1827 = vsub.s32 %v1826, 2
    %vm1828 = vcmp.gt.s32.totalorder 0, %v1827
    %v1829 = vsel %vm1828, 0, %v1827
    %v1830 = vsub.s32 32, %v1829
    %v1831 = vshll.u32 %v1822, %v1829
    %v1832 = vshrl.u32 %v1814, %v1830
    %v1833 = vor.u32 %v1831, %v1832
    %v1834 = vsub.s32 4294967266, %v1829
    %v1835 = vadd.s32 %v1834, 127
    %v1836 = vshll.u32 %v1835, 23
    %v1837 = vor.u32 4788187, %v1836
    %v1838 = vand.u32 2147483647, %v1837
    %v1840 = vcvt.s32.f32 %v1833
    %v1841 = vmul.f32 %v1840, %v1838
    %v1842 = vxor.u32 %v1841, 2147483648
    %v1843 = vsel %vm1760, %v1842, %v1841
    %v1844 = vsub.s32 4, %v1820
    %v1845 = vsel %vm1760, %v1844, %v1820
    %v1846 = vsel %vm1759, %v1641, %v1843
    %v1847 = vsel %vm1759, 0, %v1845
    %v1848 = vcosq.f32.pop %v1846
    %v1849 = vsinq.f32.pop %v1846
    %vm1850 = vweird.f32 %v1641
    %v1851 = vand.u32 %v1847, 3
    %vm1852 = vcmp.lt.s32.totalorder %v1851, 2
    %vm1853 = vcmp.eq.s32.totalorder %v1851, 0
    %v1854 = vxor.u32 %v1849, 2147483648
    %v1855 = vsel %vm1853, %v1848, %v1854
    %vm1856 = vcmp.eq.s32.totalorder %v1851, 2
    %v1857 = vxor.u32 %v1848, 2147483648
    %v1858 = vsel %vm1856, %v1857, %v1849
    %v1859 = vsel %vm1852, %v1855, %v1858
    %v1860 = vsel %vm1850, nan, %v1859
    %v1861 = vadd.f32 %v1751, 1.0
    %v1862 = vmul.f32 %v1861, 0.5
    %v1863 = vsel %vm1755, 1.0, %v1862
    %v1864 = vsel %vm1754, %v1860, %v1863
    %v1865 = vmul.f32 %v1746, %v1634
    %v1866 = vmul.f32 %v1753, %v1634
    %v1867 = vsel %vm1755, %v1640, %v1866
    %v1868 = vsel %vm1754, %v1865, %v1867
    %v1869 = vsub.f32 0.0, %v1638
    %v1870 = vmul.f32 %v1869, %v1746
    %v1871 = vmul.f32 %v1638, %v1753
    %v1872 = vsel %vm1755, 0.0, %v1871
    %v1873 = vsel %vm1754, %v1870, %v1872
    %v1874 = vand.u32 2147483647, %v1642
    %vm1875 = vcmp.le.f32.partialorder %v1874, 0.7853982
    %vm1876 = vcmp.lt.s32.totalorder %v1642, 0
    %v1877 = vand.u32 %v1642, 2139095040
    %v1878 = vshrl.u32 %v1877, 23
    %v1879 = vsub.s32 %v1878, 127
    %v1880 = vand.u32 2147483647, %v1642
    %v1881 = vand.u32 %v1880, 8388607
    %v1882 = vor.u32 %v1881, 8388608
    %v1883 = vsub.s32 0, %v1882
    %v1884 = vadd.s32 %v1879, 1
    %vm1885 = vcmp.gt.s32.totalorder %v1884, 0
    %v1886 = vsel %vm1885, %v1884, 0
    %v1887 = vshrl.u32 %v1886, 5
    %v1888 = vand.u32 %v1886, 31
    %v1889 = vsub.s32 32, %v1888
    %v1890 = vshrl.u32 683565275, %v1889
    %v1891 = vshll.u32 683565275, %v1888
    %v1892 = vshrl.u32 2475754826, %v1889
    %v1893 = vor.u32 %v1891, %v1892
    %v1894 = vshll.u32 2475754826, %v1888
    %v1895 = vshrl.u32 2131351028, %v1889
    %v1896 = vor.u32 %v1894, %v1895
    %v1897 = vshll.u32 2131351028, %v1888
    %v1898 = vshrl.u32 2102212464, %v1889
    %v1899 = vor.u32 %v1897, %v1898
    %v1900 = vshll.u32 2102212464, %v1888
    %v1901 = vshrl.u32 920167782, %v1889
    %v1902 = vor.u32 %v1900, %v1901
    %v1903 = vshll.u32 920167782, %v1888
    %v1904 = vshrl.u32 1326507024, %v1889
    %v1905 = vor.u32 %v1903, %v1904
    %vm1906 = vcmp.lt.s32.totalorder %v1887, 1
    %vm1907 = vcmp.lt.s32.totalorder %v1887, 2
    %vm1908 = vcmp.lt.s32.totalorder %v1887, 3
    %vm1909 = vcmp.lt.s32.totalorder %v1887, 4
    %v1910 = vsel %vm1906, %v1890, %v1893
    %v1911 = vsel %vm1909, %v1899, 2102212464
    %v1912 = vsel %vm1908, %v1896, %v1911
    %v1913 = vsel %vm1907, %v1910, %v1912
    %v1914 = vsel %vm1906, %v1893, %v1896
    %v1915 = vsel %vm1909, %v1902, 920167782
    %v1916 = vsel %vm1908, %v1899, %v1915
    %v1917 = vsel %vm1907, %v1914, %v1916
    %v1918 = vsel %vm1906, %v1896, %v1899
    %v1919 = vsel %vm1909, %v1905, 1326507024
    %v1920 = vsel %vm1908, %v1902, %v1919
    %v1921 = vsel %vm1907, %v1918, %v1920
    %v1922 = vshll.u32 %v1882, 8
    %v1923 = vmul.u32.u64.compose %v1922, %v1921
    %v1924 = vextract.low.u32 %v1923
    %v1925 = vextract.high.u32 %v1923
    %v1926 = vmul.u32.u64.compose %v1922, %v1917
    %v1927 = vextract.low.u32 %v1926
    %v1928 = vextract.high.u32 %v1926
    %v1929 = vmul.u32 %v1922, %v1913
    %v1930 = vadd.s32 %v1925, %v1927
    %vm1931 = vc.u32 %v1925, %v1927
    %v1932 = vadd.s32 %v1928, 1
    %v1933 = vsel %vm1931, %v1932, %v1928
    %v1934 = vadd.s32 %v1929, %v1933
    %v1935 = vadd.s32 %v1934, 536870912
    %v1936 = vshrl.u32 %v1935, 30
    %v1937 = vshll.u32 %v1936, 30
    %v1938 = vsub.s32 %v1934, %v1937
    %vm1939 = vcmp.lt.s32.totalorder %v1938, 0
    %v1940 = vsub.s32 0, %v1938
    %v1941 = vsel %vm1939, %v1940, %v1938
    %v1942 = vclz %v1941
    %v1943 = vsub.s32 %v1942, 2
    %vm1944 = vcmp.gt.s32.totalorder 0, %v1943
    %v1945 = vsel %vm1944, 0, %v1943
    %v1946 = vsub.s32 32, %v1945
    %v1947 = vshll.u32 %v1938, %v1945
    %v1948 = vshrl.u32 %v1930, %v1946
    %v1949 = vor.u32 %v1947, %v1948
    %v1950 = vsub.s32 4294967266, %v1945
    %v1951 = vadd.s32 %v1950, 127
    %v1952 = vshll.u32 %v1951, 23
    %v1953 = vor.u32 4788187, %v1952
    %v1954 = vand.u32 2147483647, %v1953
    %v1956 = vcvt.s32.f32 %v1949
    %v1957 = vmul.f32 %v1956, %v1954
    %v1958 = vxor.u32 %v1957, 2147483648
    %v1959 = vsel %vm1876, %v1958, %v1957
    %v1960 = vsub.s32 4, %v1936
    %v1961 = vsel %vm1876, %v1960, %v1936
    %v1962 = vsel %vm1875, %v1642, %v1959
    %v1963 = vsel %vm1875, 0, %v1961
    %v1964 = vcosq.f32.pop %v1962
    %v1965 = vsinq.f32.pop %v1962
    %vm1966 = vweird.f32 %v1642
    %v1967 = vadd.s32 %v1963, 3
    %v1968 = vand.u32 %v1967, 3
    %vm1969 = vcmp.lt.s32.totalorder %v1968, 2
    %vm1970 = vcmp.eq.s32.totalorder %v1968, 0
    %v1971 = vxor.u32 %v1965, 2147483648
    %v1972 = vsel %vm1970, %v1964, %v1971
    %vm1973 = vcmp.eq.s32.totalorder %v1968, 2
    %v1974 = vxor.u32 %v1964, 2147483648
    %v1975 = vsel %vm1973, %v1974, %v1965
    %v1976 = vsel %vm1969, %v1972, %v1975
    %v1977 = vsel %vm1966, nan, %v1976
    %vm1978 = vcmp.lt.f32.partialorder %v1642, 16.0
    %v1979 = vmul.f32 %v1642, -2.0
    %v1980 = vmul.f32 %v1979, 1.442695
    %v1981 = vpow.pop %v1980
    %v1982 = vsel %vm1978, %v1981, 0.0
    %v1983 = vsub.f32 1.0, %v1982
    %v1984 = vmul.f32 %v1983, 0.5
    %vm1985 = vcmp.lt.f32.partialorder %v167, %v1626
    %vm1986 = vcmp.eq.f32.partialorder %v167, %v1626
    %vm1987 = vmor %vm1985, %vm1986
    %v1988 = vsel %vm1987, 0.0, %v1642
    %v1989 = vand.u32 2147483647, %v1642
    %vm1990 = vcmp.le.f32.partialorder %v1989, 0.7853982
    %vm1991 = vcmp.lt.s32.totalorder %v1642, 0
    %v1992 = vand.u32 %v1642, 2139095040
    %v1993 = vshrl.u32 %v1992, 23
    %v1994 = vsub.s32 %v1993, 127
    %v1995 = vand.u32 2147483647, %v1642
    %v1996 = vand.u32 %v1995, 8388607
    %v1997 = vor.u32 %v1996, 8388608
    %v1998 = vsub.s32 0, %v1997
    %v1999 = vadd.s32 %v1994, 1
    %vm2000 = vcmp.gt.s32.totalorder %v1999, 0
    %v2001 = vsel %vm2000, %v1999, 0
    %v2002 = vshrl.u32 %v2001, 5
    %v2003 = vand.u32 %v2001, 31
    %v2004 = vsub.s32 32, %v2003
    %v2005 = vshrl.u32 683565275, %v2004
    %v2006 = vshll.u32 683565275, %v2003
    %v2007 = vshrl.u32 2475754826, %v2004
    %v2008 = vor.u32 %v2006, %v2007
    %v2009 = vshll.u32 2475754826, %v2003
    %v2010 = vshrl.u32 2131351028, %v2004
    %v2011 = vor.u32 %v2009, %v2010
    %v2012 = vshll.u32 2131351028, %v2003
    %v2013 = vshrl.u32 2102212464, %v2004
    %v2014 = vor.u32 %v2012, %v2013
    %v2015 = vshll.u32 2102212464, %v2003
    %v2016 = vshrl.u32 920167782, %v2004
    %v2017 = vor.u32 %v2015, %v2016
    %v2018 = vshll.u32 920167782, %v2003
    %v2019 = vshrl.u32 1326507024, %v2004
    %v2020 = vor.u32 %v2018, %v2019
    %vm2021 = vcmp.lt.s32.totalorder %v2002, 1
    %vm2022 = vcmp.lt.s32.totalorder %v2002, 2
    %vm2023 = vcmp.lt.s32.totalorder %v2002, 3
    %vm2024 = vcmp.lt.s32.totalorder %v2002, 4
    %v2025 = vsel %vm2021, %v2005, %v2008
    %v2026 = vsel %vm2024, %v2014, 2102212464
    %v2027 = vsel %vm2023, %v2011, %v2026
    %v2028 = vsel %vm2022, %v2025, %v2027
    %v2029 = vsel %vm2021, %v2008, %v2011
    %v2030 = vsel %vm2024, %v2017, 920167782
    %v2031 = vsel %vm2023, %v2014, %v2030
    %v2032 = vsel %vm2022, %v2029, %v2031
    %v2033 = vsel %vm2021, %v2011, %v2014
    %v2034 = vsel %vm2024, %v2020, 1326507024
    %v2035 = vsel %vm2023, %v2017, %v2034
    %v2036 = vsel %vm2022, %v2033, %v2035
    %v2037 = vshll.u32 %v1997, 8
    %v2038 = vmul.u32.u64.compose %v2037, %v2036
    %v2039 = vextract.low.u32 %v2038
    %v2040 = vextract.high.u32 %v2038
    %v2041 = vmul.u32.u64.compose %v2037, %v2032
    %v2042 = vextract.low.u32 %v2041
    %v2043 = vextract.high.u32 %v2041
    %v2044 = vmul.u32 %v2037, %v2028
    %v2045 = vadd.s32 %v2040, %v2042
    %vm2046 = vc.u32 %v2040, %v2042
    %v2047 = vadd.s32 %v2043, 1
    %v2048 = vsel %vm2046, %v2047, %v2043
    %v2049 = vadd.s32 %v2044, %v2048
    %v2050 = vadd.s32 %v2049, 536870912
    %v2051 = vshrl.u32 %v2050, 30
    %v2052 = vshll.u32 %v2051, 30
    %v2053 = vsub.s32 %v2049, %v2052
    %vm2054 = vcmp.lt.s32.totalorder %v2053, 0
    %v2055 = vsub.s32 0, %v2053
    %v2056 = vsel %vm2054, %v2055, %v2053
    %v2057 = vclz %v2056
    %v2058 = vsub.s32 %v2057, 2
    %vm2059 = vcmp.gt.s32.totalorder 0, %v2058
    %v2060 = vsel %vm2059, 0, %v2058
    %v2061 = vsub.s32 32, %v2060
    %v2062 = vshll.u32 %v2053, %v2060
    %v2063 = vshrl.u32 %v2045, %v2061
    %v2064 = vor.u32 %v2062, %v2063
    %v2065 = vsub.s32 4294967266, %v2060
    %v2066 = vadd.s32 %v2065, 127
    %v2067 = vshll.u32 %v2066, 23
    %v2068 = vor.u32 4788187, %v2067
    %v2069 = vand.u32 2147483647, %v2068
    %v2071 = vcvt.s32.f32 %v2064
    %v2072 = vmul.f32 %v2071, %v2069
    %v2073 = vxor.u32 %v2072, 2147483648
    %v2074 = vsel %vm1991, %v2073, %v2072
    %v2075 = vsub.s32 4, %v2051
    %v2076 = vsel %vm1991, %v2075, %v2051
    %v2077 = vsel %vm1990, %v1642, %v2074
    %v2078 = vsel %vm1990, 0, %v2076
    %v2079 = vcosq.f32.pop %v2077
    %v2080 = vsinq.f32.pop %v2077
    %vm2081 = vweird.f32 %v1642
    %v2082 = vand.u32 %v2078, 3
    %vm2083 = vcmp.lt.s32.totalorder %v2082, 2
    %vm2084 = vcmp.eq.s32.totalorder %v2082, 0
    %v2085 = vxor.u32 %v2080, 2147483648
    %v2086 = vsel %vm2084, %v2079, %v2085
    %vm2087 = vcmp.eq.s32.totalorder %v2082, 2
    %v2088 = vxor.u32 %v2079, 2147483648
    %v2089 = vsel %vm2087, %v2088, %v2080
    %v2090 = vsel %vm2083, %v2086, %v2089
    %v2091 = vsel %vm2081, nan, %v2090
    %v2092 = vadd.f32 %v1982, 1.0
    %v2093 = vmul.f32 %v2092, 0.5
    %v2094 = vsel %vm1986, 1.0, %v2093
    %v2095 = vsel %vm1985, %v2091, %v2094
    %v2096 = vmul.f32 %v1977, %v1637
    %v2097 = vmul.f32 %v1984, %v1637
    %v2098 = vsel %vm1986, %v1640, %v2097
    %v2099 = vsel %vm1985, %v2096, %v2098
    %v2100 = vsub.f32 0.0, %v1639
    %v2101 = vmul.f32 %v2100, %v1977
    %v2102 = vmul.f32 %v1639, %v1984
    %v2103 = vsel %vm1986, 0.0, %v2102
    %v2104 = vsel %vm1985, %v2101, %v2103
    %v2105 = vadd.f32 %v1757, %v1988
    %vm2106 = vcmp.lt.f32.partialorder %v2105, 60.0
    %v2107 = vsub.f32 0.0, %v2105
    %v2108 = vmul.f32 %v2107, 1.442695
    %v2109 = vpow.pop %v2108
    %v2110 = vsel %vm2106, %v2109, 0.0
    %v2111 = vmul.f32 %v1864, %v2095
    %v2112 = vmul.f32 %v1864, %v2099
    %v2113 = vmul.f32 %v1864, %v2104
    %v2114 = vmul.f32 %v2095, %v1868
    %v2115 = vmul.f32 %v2095, %v1873
    %v2116 = vmul.f32 %v1873, %v2099
    %v2117 = vmul.f32 %v1873, %v2104
    %v2118 = vmul.f32 %v1868, %v2099
    %v2119 = vmul.f32 %v1868, %v2104
    %v2120 = vadd.f32 %v1612, %v1613
    %v2121 = vmul.f32 %v1612, %v1610
    %v2122 = vmul.f32 %v1612, %v1613
    %v2123 = vmul.f32 %v1613, %v1613
    %v2124 = vsub.f32 %v2110, %v2111
    %v2125 = vmul.f32 %v2122, 2.0
    %v2126 = vmul.f32 %v2125, %v2124
    %v2127 = vsub.f32 %v2111, %v2126
    %v2128 = vmul.f32 %v2121, %v2117
    %v2129 = vsub.f32 %v2127, %v2128
    %v2130 = vmul.f32 %v168, %v2123
    %v2131 = vmul.f32 %v2130, %v2118
    %v2132 = vsub.f32 %v2129, %v2131
    %v2133 = vmul.f32 %v168, %v2112
    %v2134 = vsub.f32 %v2133, %v2115
    %v2135 = vstv %s1594
    %v2136 = vmul.f32 %v2134, %v2135
    %v2137 = vmul.f32 %v2120, %v2124
    %v2138 = vmul.f32 %v1610, %v2117
    %v2139 = vadd.f32 %v2137, %v2138
    %v2140 = vmul.f32 %v168, %v1613
    %v2141 = vmul.f32 %v2140, %v2118
    %v2142 = vadd.f32 %v2139, %v2141
    %v2143 = vmul.f32 %v2142, %v2135
    %v2144 = vsub.f32 0.0, %v2143
    %v2145 = vmul.f32 %v168, %v2114
    %v2146 = vsub.f32 %v2113, %v2145
    %v2147 = vmul.f32 %v2146, %v2135
    %v2148 = vmul.f32 %v794, %v2124
    %v2149 = vadd.f32 %v2148, %v2117
    %v2150 = vmul.f32 %v797, %v2118
    %v2151 = vadd.f32 %v2149, %v2150
    %v2152 = vstv %s1595
    %v2153 = vmul.f32 %v2151, %v2152
    %v2154 = vsub.f32 0.0, %v2153
    %v2155 = vmul.f32 %v2121, %v2113
    %v2156 = vmul.f32 %v2123, %v2114
    %v2157 = vsub.f32 %v2155, %v2156
    %v2158 = vstv %s1592
    %v2159 = vmul.f32 %v2157, %v2158
    %v2160 = vmul.f32 %v1610, %v2113
    %v2161 = vmul.f32 %v1613, %v2114
    %v2162 = vsub.f32 %v2160, %v2161
    %v2163 = vsub.f32 0.0, %v2119
    %v2164 = vmul.f32 %v2123, %v2112
    %v2165 = vmul.f32 %v2121, %v2115
    %v2166 = vsub.f32 %v2164, %v2165
    %v2167 = vmul.f32 %v2166, %v2158
    %v2168 = vsub.f32 0.0, %v2116
    %v2169 = vmul.f32 %v1613, %v2112
    %v2170 = vmul.f32 %v1610, %v2115
    %v2171 = vsub.f32 %v2169, %v2170
    %v2172 = vmul.f32 %v2121, 2.0
    %v2173 = vmul.f32 %v2172, %v2123
    %v2174 = vmul.f32 %v2173, %v2124
    %v2175 = vmul.f32 %v2121, %v2121
    %v2176 = vmul.f32 %v2175, %v2117
    %v2177 = vadd.f32 %v2174, %v2176
    %v2178 = vmul.f32 %v2123, %v2123
    %v2179 = vmul.f32 %v2178, %v2118
    %v2180 = vadd.f32 %v2177, %v2179
    %v2181 = vstv %s1593
    %v2182 = vmul.f32 %v2180, %v2181
    %v2183 = vsub.f32 0.0, %v2182
    %v2184 = vmul.f32 %v1610, %v1613
    %v2185 = vmul.f32 %v2184, %v2120
    %v2186 = vmul.f32 %v2185, %v2124
    %v2187 = vmul.f32 %v2121, %v1610
    %v2188 = vmul.f32 %v2187, %v2117
    %v2189 = vadd.f32 %v2186, %v2188
    %v2190 = vmul.f32 %v1613, %v2123
    %v2191 = vmul.f32 %v2190, %v2118
    %v2192 = vadd.f32 %v2189, %v2191
    %v2193 = vmul.f32 %v2192, %v2158
    %v2194 = vsub.f32 0.0, %v2193
    %v2195 = vmul.f32 %v770, %v2194
    %v2196 = vmul.f32 %v770, %v2171
    %v2197 = vsub.f32 %v2111, %v2132
    %v2198 = vmul.f32 %v2197, 2.0
    %v2199 = vadd.f32 %v2110, %v2198
    %v2200 = vmul.f32 %v770, %v2162
    %v2201 = vmul.f32 %v770, %v2144
    %v2202 = vmul.f32 %v1586, %v2132
    %v2203 = vmul.f32 %v1587, %v2159
    %v2204 = vadd.f32 %v2202, %v2203
    %v2205 = vmul.f32 %v1588, %v2195
    %v2206 = vadd.f32 %v2204, %v2205
    %v2207 = vmul.f32 %v1589, %v2167
    %v2208 = vadd.f32 %v2206, %v2207
    %v2209 = vmul.f32 %v1590, %v2183
    %v2210 = vadd.f32 %v2208, %v2209
    %v2211 = vmul.f32 %v1586, %v2136
    %v2212 = vmul.f32 %v1587, %v2111
    %v2213 = vadd.f32 %v2211, %v2212
    %v2214 = vmul.f32 %v1588, %v2196
    %v2215 = vadd.f32 %v2213, %v2214
    %v2216 = vmul.f32 %v1589, %v2168
    %v2217 = vadd.f32 %v2215, %v2216
    %v2218 = vmul.f32 %v1590, %v2167
    %v2219 = vadd.f32 %v2217, %v2218
    %v2220 = vmul.f32 %v1586, %v2144
    %v2221 = vmul.f32 %v1587, %v2162
    %v2222 = vadd.f32 %v2220, %v2221
    %v2223 = vmul.f32 %v1588, %v2199
    %v2224 = vadd.f32 %v2222, %v2223
    %v2225 = vmul.f32 %v1589, %v2171
    %v2226 = vadd.f32 %v2224, %v2225
    %v2227 = vmul.f32 %v1590, %v2194
    %v2228 = vadd.f32 %v2226, %v2227
    %v2229 = vmul.f32 %v1586, %v2147
    %v2230 = vmul.f32 %v1587, %v2163
    %v2231 = vadd.f32 %v2229, %v2230
    %v2232 = vmul.f32 %v1588, %v2200
    %v2233 = vadd.f32 %v2231, %v2232
    %v2234 = vmul.f32 %v1589, %v2111
    %v2235 = vadd.f32 %v2233, %v2234
    %v2236 = vmul.f32 %v1590, %v2159
    %v2237 = vadd.f32 %v2235, %v2236
    %v2238 = vmul.f32 %v1586, %v2154
    %v2239 = vmul.f32 %v1587, %v2147
    %v2240 = vadd.f32 %v2238, %v2239
    %v2241 = vmul.f32 %v1588, %v2201
    %v2242 = vadd.f32 %v2240, %v2241
    %v2243 = vmul.f32 %v1589, %v2136
    %v2244 = vadd.f32 %v2242, %v2243
    %v2245 = vmul.f32 %v1590, %v2132
    %v2246 = vadd.f32 %v2244, %v2245
    %v2247 = vand.u32 2147483647, %v2210
    %v2248 = vand.u32 2147483647, %v2219
    %v2249 = vmax.f32 %v2247, %v2248
    %v2250 = vand.u32 2147483647, %v2228
    %v2251 = vand.u32 2147483647, %v2237
    %v2252 = vmax.f32 %v2250, %v2251
    %v2253 = vmax.f32 %v2249, %v2252
    %v2254 = vand.u32 2147483647, %v2246
    %v2255 = vmax.f32 %v2253, %v2254
    %vm2256 = vcmp.lt.f32.partialorder %v2255, 1e-30
    %v2257 = vsel %vm2256, 1.0, %v2255
    %v2258 = vrcp.pop %v2257
    %v2259 = vmul.f32 %v2257, %v2258
    %v2260 = vsub.f32 2.0, %v2259
    %v2261 = vmul.f32 %v2258, %v2260
    %v2262 = vmul.f32 %v2210, %v2261
    %v2263 = vmul.f32 %v2219, %v2261
    %v2264 = vmul.f32 %v2228, %v2261
    %v2265 = vmul.f32 %v2237, %v2261
    %v2266 = vmul.f32 %v2246, %v2261
    %s2267 = sld [smem:[#allocation2 + $0x3]]
    %s2268 = sld [smem:[#allocation6 + $0x3]]
    %s2269 = sld [smem:[#allocation7 + $0x3]]
    %s2270 = sld [smem:[#allocation12 + $0x3]]
    %s2271 = sld [smem:[#allocation13 + $0x3]]
    %s2272 = sld [smem:[#allocation9 + $0x3]]
    %v2273 = vstv %s2272
    %v2274 = vmul.f32 %v138, %v2273
    %s2275 = sld [smem:[#allocation10 + $0x3]]
    %v2276 = vstv %s2275
    %v2277 = vmul.f32 %v138, %v2276
    %s2278 = sld [smem:[#allocation4 + $0x3]]
    %v2279 = vstv %s2278
    %v2280 = vmul.f32 %v2279, %v139
    %v2281 = vmul.f32 %v2280, 2.0
    %v2282 = vmul.f32 %v2281, %v2280
    %2284 = vset.pattern.permute.xlu0 0
    %2285 = vperm.xlu0 %2284, %v2282
    %v2286 = vpop.permute.xlu0 %2285
    %v2288 = vmul.f32 %v2286, %v168
    %v2289 = vsub.f32 %v2288, 1.0
    %2291 = vset.pattern.permute.xlu0 0
    %2292 = vperm.xlu0 %2291, %v2274
    %v2293 = vpop.permute.xlu0 %2292
    %v2295 = vadd.f32 %v167, %v2293
    %v2296 = vsub.f32 %v167, %v2293
    %v2297 = vand.u32 2147483647, %v2296
    %v2298 = vmul.f32 %v2295, %v2297
    %2300 = vset.pattern.permute.xlu0 0
    %2301 = vperm.xlu0 %2300, %v2277
    %v2302 = vpop.permute.xlu0 %2301
    %v2304 = vadd.f32 %v167, %v2302
    %v2305 = vsub.f32 %v167, %v2302
    %v2306 = vand.u32 2147483647, %v2305
    %v2307 = vmul.f32 %v2304, %v2306
    %vm2308 = vcmp.eq.f32.partialorder %v2298, 0.0
    %v2309 = vsel %vm2308, 1.0, %v2298
    %v2310 = vrsqrt.pop %v2309
    %vm2311 = vcmp.eq.f32.partialorder %v2307, 0.0
    %v2312 = vsel %vm2311, 1.0, %v2307
    %v2313 = vrsqrt.pop %v2312
    %v2314 = vmul.f32 %v2298, %v2310
    %v2315 = vmul.f32 %v2307, %v2313
    %v2316 = vstv %s2267
    %v2317 = vmul.f32 %v2314, %v2316
    %v2318 = vmul.f32 %v2315, %v2316
    %v2319 = vand.u32 2147483647, %v2317
    %vm2320 = vcmp.le.f32.partialorder %v2319, 0.7853982
    %vm2321 = vcmp.lt.s32.totalorder %v2317, 0
    %v2322 = vand.u32 %v2317, 2139095040
    %v2323 = vshrl.u32 %v2322, 23
    %v2324 = vsub.s32 %v2323, 127
    %v2325 = vand.u32 2147483647, %v2317
    %v2326 = vand.u32 %v2325, 8388607
    %v2327 = vor.u32 %v2326, 8388608
    %v2328 = vsub.s32 0, %v2327
    %v2329 = vadd.s32 %v2324, 1
    %vm2330 = vcmp.gt.s32.totalorder %v2329, 0
    %v2331 = vsel %vm2330, %v2329, 0
    %v2332 = vshrl.u32 %v2331, 5
    %v2333 = vand.u32 %v2331, 31
    %v2334 = vsub.s32 32, %v2333
    %v2335 = vshrl.u32 683565275, %v2334
    %v2336 = vshll.u32 683565275, %v2333
    %v2337 = vshrl.u32 2475754826, %v2334
    %v2338 = vor.u32 %v2336, %v2337
    %v2339 = vshll.u32 2475754826, %v2333
    %v2340 = vshrl.u32 2131351028, %v2334
    %v2341 = vor.u32 %v2339, %v2340
    %v2342 = vshll.u32 2131351028, %v2333
    %v2343 = vshrl.u32 2102212464, %v2334
    %v2344 = vor.u32 %v2342, %v2343
    %v2345 = vshll.u32 2102212464, %v2333
    %v2346 = vshrl.u32 920167782, %v2334
    %v2347 = vor.u32 %v2345, %v2346
    %v2348 = vshll.u32 920167782, %v2333
    %v2349 = vshrl.u32 1326507024, %v2334
    %v2350 = vor.u32 %v2348, %v2349
    %vm2351 = vcmp.lt.s32.totalorder %v2332, 1
    %vm2352 = vcmp.lt.s32.totalorder %v2332, 2
    %vm2353 = vcmp.lt.s32.totalorder %v2332, 3
    %vm2354 = vcmp.lt.s32.totalorder %v2332, 4
    %v2355 = vsel %vm2351, %v2335, %v2338
    %v2356 = vsel %vm2354, %v2344, 2102212464
    %v2357 = vsel %vm2353, %v2341, %v2356
    %v2358 = vsel %vm2352, %v2355, %v2357
    %v2359 = vsel %vm2351, %v2338, %v2341
    %v2360 = vsel %vm2354, %v2347, 920167782
    %v2361 = vsel %vm2353, %v2344, %v2360
    %v2362 = vsel %vm2352, %v2359, %v2361
    %v2363 = vsel %vm2351, %v2341, %v2344
    %v2364 = vsel %vm2354, %v2350, 1326507024
    %v2365 = vsel %vm2353, %v2347, %v2364
    %v2366 = vsel %vm2352, %v2363, %v2365
    %v2367 = vshll.u32 %v2327, 8
    %v2368 = vmul.u32.u64.compose %v2367, %v2366
    %v2369 = vextract.low.u32 %v2368
    %v2370 = vextract.high.u32 %v2368
    %v2371 = vmul.u32.u64.compose %v2367, %v2362
    %v2372 = vextract.low.u32 %v2371
    %v2373 = vextract.high.u32 %v2371
    %v2374 = vmul.u32 %v2367, %v2358
    %v2375 = vadd.s32 %v2370, %v2372
    %vm2376 = vc.u32 %v2370, %v2372
    %v2377 = vadd.s32 %v2373, 1
    %v2378 = vsel %vm2376, %v2377, %v2373
    %v2379 = vadd.s32 %v2374, %v2378
    %v2380 = vadd.s32 %v2379, 536870912
    %v2381 = vshrl.u32 %v2380, 30
    %v2382 = vshll.u32 %v2381, 30
    %v2383 = vsub.s32 %v2379, %v2382
    %vm2384 = vcmp.lt.s32.totalorder %v2383, 0
    %v2385 = vsub.s32 0, %v2383
    %v2386 = vsel %vm2384, %v2385, %v2383
    %v2387 = vclz %v2386
    %v2388 = vsub.s32 %v2387, 2
    %vm2389 = vcmp.gt.s32.totalorder 0, %v2388
    %v2390 = vsel %vm2389, 0, %v2388
    %v2391 = vsub.s32 32, %v2390
    %v2392 = vshll.u32 %v2383, %v2390
    %v2393 = vshrl.u32 %v2375, %v2391
    %v2394 = vor.u32 %v2392, %v2393
    %v2395 = vsub.s32 4294967266, %v2390
    %v2396 = vadd.s32 %v2395, 127
    %v2397 = vshll.u32 %v2396, 23
    %v2398 = vor.u32 4788187, %v2397
    %v2399 = vand.u32 2147483647, %v2398
    %v2401 = vcvt.s32.f32 %v2394
    %v2402 = vmul.f32 %v2401, %v2399
    %v2403 = vxor.u32 %v2402, 2147483648
    %v2404 = vsel %vm2321, %v2403, %v2402
    %v2405 = vsub.s32 4, %v2381
    %v2406 = vsel %vm2321, %v2405, %v2381
    %v2407 = vsel %vm2320, %v2317, %v2404
    %v2408 = vsel %vm2320, 0, %v2406
    %v2409 = vcosq.f32.pop %v2407
    %v2410 = vsinq.f32.pop %v2407
    %vm2411 = vweird.f32 %v2317
    %v2412 = vadd.s32 %v2408, 3
    %v2413 = vand.u32 %v2412, 3
    %vm2414 = vcmp.lt.s32.totalorder %v2413, 2
    %vm2415 = vcmp.eq.s32.totalorder %v2413, 0
    %v2416 = vxor.u32 %v2410, 2147483648
    %v2417 = vsel %vm2415, %v2409, %v2416
    %vm2418 = vcmp.eq.s32.totalorder %v2413, 2
    %v2419 = vxor.u32 %v2409, 2147483648
    %v2420 = vsel %vm2418, %v2419, %v2410
    %v2421 = vsel %vm2414, %v2417, %v2420
    %v2422 = vsel %vm2411, nan, %v2421
    %vm2423 = vcmp.lt.f32.partialorder %v2317, 16.0
    %v2424 = vmul.f32 %v2317, -2.0
    %v2425 = vmul.f32 %v2424, 1.442695
    %v2426 = vpow.pop %v2425
    %v2427 = vsel %vm2423, %v2426, 0.0
    %v2428 = vsub.f32 1.0, %v2427
    %v2429 = vmul.f32 %v2428, 0.5
    %vm2430 = vcmp.lt.f32.partialorder %v167, %v2293
    %vm2431 = vcmp.eq.f32.partialorder %v167, %v2293
    %vm2432 = vmor %vm2430, %vm2431
    %v2433 = vsel %vm2432, 0.0, %v2317
    %v2434 = vand.u32 2147483647, %v2317
    %vm2435 = vcmp.le.f32.partialorder %v2434, 0.7853982
    %vm2436 = vcmp.lt.s32.totalorder %v2317, 0
    %v2437 = vand.u32 %v2317, 2139095040
    %v2438 = vshrl.u32 %v2437, 23
    %v2439 = vsub.s32 %v2438, 127
    %v2440 = vand.u32 2147483647, %v2317
    %v2441 = vand.u32 %v2440, 8388607
    %v2442 = vor.u32 %v2441, 8388608
    %v2443 = vsub.s32 0, %v2442
    %v2444 = vadd.s32 %v2439, 1
    %vm2445 = vcmp.gt.s32.totalorder %v2444, 0
    %v2446 = vsel %vm2445, %v2444, 0
    %v2447 = vshrl.u32 %v2446, 5
    %v2448 = vand.u32 %v2446, 31
    %v2449 = vsub.s32 32, %v2448
    %v2450 = vshrl.u32 683565275, %v2449
    %v2451 = vshll.u32 683565275, %v2448
    %v2452 = vshrl.u32 2475754826, %v2449
    %v2453 = vor.u32 %v2451, %v2452
    %v2454 = vshll.u32 2475754826, %v2448
    %v2455 = vshrl.u32 2131351028, %v2449
    %v2456 = vor.u32 %v2454, %v2455
    %v2457 = vshll.u32 2131351028, %v2448
    %v2458 = vshrl.u32 2102212464, %v2449
    %v2459 = vor.u32 %v2457, %v2458
    %v2460 = vshll.u32 2102212464, %v2448
    %v2461 = vshrl.u32 920167782, %v2449
    %v2462 = vor.u32 %v2460, %v2461
    %v2463 = vshll.u32 920167782, %v2448
    %v2464 = vshrl.u32 1326507024, %v2449
    %v2465 = vor.u32 %v2463, %v2464
    %vm2466 = vcmp.lt.s32.totalorder %v2447, 1
    %vm2467 = vcmp.lt.s32.totalorder %v2447, 2
    %vm2468 = vcmp.lt.s32.totalorder %v2447, 3
    %vm2469 = vcmp.lt.s32.totalorder %v2447, 4
    %v2470 = vsel %vm2466, %v2450, %v2453
    %v2471 = vsel %vm2469, %v2459, 2102212464
    %v2472 = vsel %vm2468, %v2456, %v2471
    %v2473 = vsel %vm2467, %v2470, %v2472
    %v2474 = vsel %vm2466, %v2453, %v2456
    %v2475 = vsel %vm2469, %v2462, 920167782
    %v2476 = vsel %vm2468, %v2459, %v2475
    %v2477 = vsel %vm2467, %v2474, %v2476
    %v2478 = vsel %vm2466, %v2456, %v2459
    %v2479 = vsel %vm2469, %v2465, 1326507024
    %v2480 = vsel %vm2468, %v2462, %v2479
    %v2481 = vsel %vm2467, %v2478, %v2480
    %v2482 = vshll.u32 %v2442, 8
    %v2483 = vmul.u32.u64.compose %v2482, %v2481
    %v2484 = vextract.low.u32 %v2483
    %v2485 = vextract.high.u32 %v2483
    %v2486 = vmul.u32.u64.compose %v2482, %v2477
    %v2487 = vextract.low.u32 %v2486
    %v2488 = vextract.high.u32 %v2486
    %v2489 = vmul.u32 %v2482, %v2473
    %v2490 = vadd.s32 %v2485, %v2487
    %vm2491 = vc.u32 %v2485, %v2487
    %v2492 = vadd.s32 %v2488, 1
    %v2493 = vsel %vm2491, %v2492, %v2488
    %v2494 = vadd.s32 %v2489, %v2493
    %v2495 = vadd.s32 %v2494, 536870912
    %v2496 = vshrl.u32 %v2495, 30
    %v2497 = vshll.u32 %v2496, 30
    %v2498 = vsub.s32 %v2494, %v2497
    %vm2499 = vcmp.lt.s32.totalorder %v2498, 0
    %v2500 = vsub.s32 0, %v2498
    %v2501 = vsel %vm2499, %v2500, %v2498
    %v2502 = vclz %v2501
    %v2503 = vsub.s32 %v2502, 2
    %vm2504 = vcmp.gt.s32.totalorder 0, %v2503
    %v2505 = vsel %vm2504, 0, %v2503
    %v2506 = vsub.s32 32, %v2505
    %v2507 = vshll.u32 %v2498, %v2505
    %v2508 = vshrl.u32 %v2490, %v2506
    %v2509 = vor.u32 %v2507, %v2508
    %v2510 = vsub.s32 4294967266, %v2505
    %v2511 = vadd.s32 %v2510, 127
    %v2512 = vshll.u32 %v2511, 23
    %v2513 = vor.u32 4788187, %v2512
    %v2514 = vand.u32 2147483647, %v2513
    %v2516 = vcvt.s32.f32 %v2509
    %v2517 = vmul.f32 %v2516, %v2514
    %v2518 = vxor.u32 %v2517, 2147483648
    %v2519 = vsel %vm2436, %v2518, %v2517
    %v2520 = vsub.s32 4, %v2496
    %v2521 = vsel %vm2436, %v2520, %v2496
    %v2522 = vsel %vm2435, %v2317, %v2519
    %v2523 = vsel %vm2435, 0, %v2521
    %v2524 = vcosq.f32.pop %v2522
    %v2525 = vsinq.f32.pop %v2522
    %vm2526 = vweird.f32 %v2317
    %v2527 = vand.u32 %v2523, 3
    %vm2528 = vcmp.lt.s32.totalorder %v2527, 2
    %vm2529 = vcmp.eq.s32.totalorder %v2527, 0
    %v2530 = vxor.u32 %v2525, 2147483648
    %v2531 = vsel %vm2529, %v2524, %v2530
    %vm2532 = vcmp.eq.s32.totalorder %v2527, 2
    %v2533 = vxor.u32 %v2524, 2147483648
    %v2534 = vsel %vm2532, %v2533, %v2525
    %v2535 = vsel %vm2528, %v2531, %v2534
    %v2536 = vsel %vm2526, nan, %v2535
    %v2537 = vadd.f32 %v2427, 1.0
    %v2538 = vmul.f32 %v2537, 0.5
    %v2539 = vsel %vm2431, 1.0, %v2538
    %v2540 = vsel %vm2430, %v2536, %v2539
    %v2541 = vmul.f32 %v2422, %v2310
    %v2542 = vmul.f32 %v2429, %v2310
    %v2543 = vsel %vm2431, %v2316, %v2542
    %v2544 = vsel %vm2430, %v2541, %v2543
    %v2545 = vsub.f32 0.0, %v2314
    %v2546 = vmul.f32 %v2545, %v2422
    %v2547 = vmul.f32 %v2314, %v2429
    %v2548 = vsel %vm2431, 0.0, %v2547
    %v2549 = vsel %vm2430, %v2546, %v2548
    %v2550 = vand.u32 2147483647, %v2318
    %vm2551 = vcmp.le.f32.partialorder %v2550, 0.7853982
    %vm2552 = vcmp.lt.s32.totalorder %v2318, 0
    %v2553 = vand.u32 %v2318, 2139095040
    %v2554 = vshrl.u32 %v2553, 23
    %v2555 = vsub.s32 %v2554, 127
    %v2556 = vand.u32 2147483647, %v2318
    %v2557 = vand.u32 %v2556, 8388607
    %v2558 = vor.u32 %v2557, 8388608
    %v2559 = vsub.s32 0, %v2558
    %v2560 = vadd.s32 %v2555, 1
    %vm2561 = vcmp.gt.s32.totalorder %v2560, 0
    %v2562 = vsel %vm2561, %v2560, 0
    %v2563 = vshrl.u32 %v2562, 5
    %v2564 = vand.u32 %v2562, 31
    %v2565 = vsub.s32 32, %v2564
    %v2566 = vshrl.u32 683565275, %v2565
    %v2567 = vshll.u32 683565275, %v2564
    %v2568 = vshrl.u32 2475754826, %v2565
    %v2569 = vor.u32 %v2567, %v2568
    %v2570 = vshll.u32 2475754826, %v2564
    %v2571 = vshrl.u32 2131351028, %v2565
    %v2572 = vor.u32 %v2570, %v2571
    %v2573 = vshll.u32 2131351028, %v2564
    %v2574 = vshrl.u32 2102212464, %v2565
    %v2575 = vor.u32 %v2573, %v2574
    %v2576 = vshll.u32 2102212464, %v2564
    %v2577 = vshrl.u32 920167782, %v2565
    %v2578 = vor.u32 %v2576, %v2577
    %v2579 = vshll.u32 920167782, %v2564
    %v2580 = vshrl.u32 1326507024, %v2565
    %v2581 = vor.u32 %v2579, %v2580
    %vm2582 = vcmp.lt.s32.totalorder %v2563, 1
    %vm2583 = vcmp.lt.s32.totalorder %v2563, 2
    %vm2584 = vcmp.lt.s32.totalorder %v2563, 3
    %vm2585 = vcmp.lt.s32.totalorder %v2563, 4
    %v2586 = vsel %vm2582, %v2566, %v2569
    %v2587 = vsel %vm2585, %v2575, 2102212464
    %v2588 = vsel %vm2584, %v2572, %v2587
    %v2589 = vsel %vm2583, %v2586, %v2588
    %v2590 = vsel %vm2582, %v2569, %v2572
    %v2591 = vsel %vm2585, %v2578, 920167782
    %v2592 = vsel %vm2584, %v2575, %v2591
    %v2593 = vsel %vm2583, %v2590, %v2592
    %v2594 = vsel %vm2582, %v2572, %v2575
    %v2595 = vsel %vm2585, %v2581, 1326507024
    %v2596 = vsel %vm2584, %v2578, %v2595
    %v2597 = vsel %vm2583, %v2594, %v2596
    %v2598 = vshll.u32 %v2558, 8
    %v2599 = vmul.u32.u64.compose %v2598, %v2597
    %v2600 = vextract.low.u32 %v2599
    %v2601 = vextract.high.u32 %v2599
    %v2602 = vmul.u32.u64.compose %v2598, %v2593
    %v2603 = vextract.low.u32 %v2602
    %v2604 = vextract.high.u32 %v2602
    %v2605 = vmul.u32 %v2598, %v2589
    %v2606 = vadd.s32 %v2601, %v2603
    %vm2607 = vc.u32 %v2601, %v2603
    %v2608 = vadd.s32 %v2604, 1
    %v2609 = vsel %vm2607, %v2608, %v2604
    %v2610 = vadd.s32 %v2605, %v2609
    %v2611 = vadd.s32 %v2610, 536870912
    %v2612 = vshrl.u32 %v2611, 30
    %v2613 = vshll.u32 %v2612, 30
    %v2614 = vsub.s32 %v2610, %v2613
    %vm2615 = vcmp.lt.s32.totalorder %v2614, 0
    %v2616 = vsub.s32 0, %v2614
    %v2617 = vsel %vm2615, %v2616, %v2614
    %v2618 = vclz %v2617
    %v2619 = vsub.s32 %v2618, 2
    %vm2620 = vcmp.gt.s32.totalorder 0, %v2619
    %v2621 = vsel %vm2620, 0, %v2619
    %v2622 = vsub.s32 32, %v2621
    %v2623 = vshll.u32 %v2614, %v2621
    %v2624 = vshrl.u32 %v2606, %v2622
    %v2625 = vor.u32 %v2623, %v2624
    %v2626 = vsub.s32 4294967266, %v2621
    %v2627 = vadd.s32 %v2626, 127
    %v2628 = vshll.u32 %v2627, 23
    %v2629 = vor.u32 4788187, %v2628
    %v2630 = vand.u32 2147483647, %v2629
    %v2632 = vcvt.s32.f32 %v2625
    %v2633 = vmul.f32 %v2632, %v2630
    %v2634 = vxor.u32 %v2633, 2147483648
    %v2635 = vsel %vm2552, %v2634, %v2633
    %v2636 = vsub.s32 4, %v2612
    %v2637 = vsel %vm2552, %v2636, %v2612
    %v2638 = vsel %vm2551, %v2318, %v2635
    %v2639 = vsel %vm2551, 0, %v2637
    %v2640 = vcosq.f32.pop %v2638
    %v2641 = vsinq.f32.pop %v2638
    %vm2642 = vweird.f32 %v2318
    %v2643 = vadd.s32 %v2639, 3
    %v2644 = vand.u32 %v2643, 3
    %vm2645 = vcmp.lt.s32.totalorder %v2644, 2
    %vm2646 = vcmp.eq.s32.totalorder %v2644, 0
    %v2647 = vxor.u32 %v2641, 2147483648
    %v2648 = vsel %vm2646, %v2640, %v2647
    %vm2649 = vcmp.eq.s32.totalorder %v2644, 2
    %v2650 = vxor.u32 %v2640, 2147483648
    %v2651 = vsel %vm2649, %v2650, %v2641
    %v2652 = vsel %vm2645, %v2648, %v2651
    %v2653 = vsel %vm2642, nan, %v2652
    %vm2654 = vcmp.lt.f32.partialorder %v2318, 16.0
    %v2655 = vmul.f32 %v2318, -2.0
    %v2656 = vmul.f32 %v2655, 1.442695
    %v2657 = vpow.pop %v2656
    %v2658 = vsel %vm2654, %v2657, 0.0
    %v2659 = vsub.f32 1.0, %v2658
    %v2660 = vmul.f32 %v2659, 0.5
    %vm2661 = vcmp.lt.f32.partialorder %v167, %v2302
    %vm2662 = vcmp.eq.f32.partialorder %v167, %v2302
    %vm2663 = vmor %vm2661, %vm2662
    %v2664 = vsel %vm2663, 0.0, %v2318
    %v2665 = vand.u32 2147483647, %v2318
    %vm2666 = vcmp.le.f32.partialorder %v2665, 0.7853982
    %vm2667 = vcmp.lt.s32.totalorder %v2318, 0
    %v2668 = vand.u32 %v2318, 2139095040
    %v2669 = vshrl.u32 %v2668, 23
    %v2670 = vsub.s32 %v2669, 127
    %v2671 = vand.u32 2147483647, %v2318
    %v2672 = vand.u32 %v2671, 8388607
    %v2673 = vor.u32 %v2672, 8388608
    %v2674 = vsub.s32 0, %v2673
    %v2675 = vadd.s32 %v2670, 1
    %vm2676 = vcmp.gt.s32.totalorder %v2675, 0
    %v2677 = vsel %vm2676, %v2675, 0
    %v2678 = vshrl.u32 %v2677, 5
    %v2679 = vand.u32 %v2677, 31
    %v2680 = vsub.s32 32, %v2679
    %v2681 = vshrl.u32 683565275, %v2680
    %v2682 = vshll.u32 683565275, %v2679
    %v2683 = vshrl.u32 2475754826, %v2680
    %v2684 = vor.u32 %v2682, %v2683
    %v2685 = vshll.u32 2475754826, %v2679
    %v2686 = vshrl.u32 2131351028, %v2680
    %v2687 = vor.u32 %v2685, %v2686
    %v2688 = vshll.u32 2131351028, %v2679
    %v2689 = vshrl.u32 2102212464, %v2680
    %v2690 = vor.u32 %v2688, %v2689
    %v2691 = vshll.u32 2102212464, %v2679
    %v2692 = vshrl.u32 920167782, %v2680
    %v2693 = vor.u32 %v2691, %v2692
    %v2694 = vshll.u32 920167782, %v2679
    %v2695 = vshrl.u32 1326507024, %v2680
    %v2696 = vor.u32 %v2694, %v2695
    %vm2697 = vcmp.lt.s32.totalorder %v2678, 1
    %vm2698 = vcmp.lt.s32.totalorder %v2678, 2
    %vm2699 = vcmp.lt.s32.totalorder %v2678, 3
    %vm2700 = vcmp.lt.s32.totalorder %v2678, 4
    %v2701 = vsel %vm2697, %v2681, %v2684
    %v2702 = vsel %vm2700, %v2690, 2102212464
    %v2703 = vsel %vm2699, %v2687, %v2702
    %v2704 = vsel %vm2698, %v2701, %v2703
    %v2705 = vsel %vm2697, %v2684, %v2687
    %v2706 = vsel %vm2700, %v2693, 920167782
    %v2707 = vsel %vm2699, %v2690, %v2706
    %v2708 = vsel %vm2698, %v2705, %v2707
    %v2709 = vsel %vm2697, %v2687, %v2690
    %v2710 = vsel %vm2700, %v2696, 1326507024
    %v2711 = vsel %vm2699, %v2693, %v2710
    %v2712 = vsel %vm2698, %v2709, %v2711
    %v2713 = vshll.u32 %v2673, 8
    %v2714 = vmul.u32.u64.compose %v2713, %v2712
    %v2715 = vextract.low.u32 %v2714
    %v2716 = vextract.high.u32 %v2714
    %v2717 = vmul.u32.u64.compose %v2713, %v2708
    %v2718 = vextract.low.u32 %v2717
    %v2719 = vextract.high.u32 %v2717
    %v2720 = vmul.u32 %v2713, %v2704
    %v2721 = vadd.s32 %v2716, %v2718
    %vm2722 = vc.u32 %v2716, %v2718
    %v2723 = vadd.s32 %v2719, 1
    %v2724 = vsel %vm2722, %v2723, %v2719
    %v2725 = vadd.s32 %v2720, %v2724
    %v2726 = vadd.s32 %v2725, 536870912
    %v2727 = vshrl.u32 %v2726, 30
    %v2728 = vshll.u32 %v2727, 30
    %v2729 = vsub.s32 %v2725, %v2728
    %vm2730 = vcmp.lt.s32.totalorder %v2729, 0
    %v2731 = vsub.s32 0, %v2729
    %v2732 = vsel %vm2730, %v2731, %v2729
    %v2733 = vclz %v2732
    %v2734 = vsub.s32 %v2733, 2
    %vm2735 = vcmp.gt.s32.totalorder 0, %v2734
    %v2736 = vsel %vm2735, 0, %v2734
    %v2737 = vsub.s32 32, %v2736
    %v2738 = vshll.u32 %v2729, %v2736
    %v2739 = vshrl.u32 %v2721, %v2737
    %v2740 = vor.u32 %v2738, %v2739
    %v2741 = vsub.s32 4294967266, %v2736
    %v2742 = vadd.s32 %v2741, 127
    %v2743 = vshll.u32 %v2742, 23
    %v2744 = vor.u32 4788187, %v2743
    %v2745 = vand.u32 2147483647, %v2744
    %v2747 = vcvt.s32.f32 %v2740
    %v2748 = vmul.f32 %v2747, %v2745
    %v2749 = vxor.u32 %v2748, 2147483648
    %v2750 = vsel %vm2667, %v2749, %v2748
    %v2751 = vsub.s32 4, %v2727
    %v2752 = vsel %vm2667, %v2751, %v2727
    %v2753 = vsel %vm2666, %v2318, %v2750
    %v2754 = vsel %vm2666, 0, %v2752
    %v2755 = vcosq.f32.pop %v2753
    %v2756 = vsinq.f32.pop %v2753
    %vm2757 = vweird.f32 %v2318
    %v2758 = vand.u32 %v2754, 3
    %vm2759 = vcmp.lt.s32.totalorder %v2758, 2
    %vm2760 = vcmp.eq.s32.totalorder %v2758, 0
    %v2761 = vxor.u32 %v2756, 2147483648
    %v2762 = vsel %vm2760, %v2755, %v2761
    %vm2763 = vcmp.eq.s32.totalorder %v2758, 2
    %v2764 = vxor.u32 %v2755, 2147483648
    %v2765 = vsel %vm2763, %v2764, %v2756
    %v2766 = vsel %vm2759, %v2762, %v2765
    %v2767 = vsel %vm2757, nan, %v2766
    %v2768 = vadd.f32 %v2658, 1.0
    %v2769 = vmul.f32 %v2768, 0.5
    %v2770 = vsel %vm2662, 1.0, %v2769
    %v2771 = vsel %vm2661, %v2767, %v2770
    %v2772 = vmul.f32 %v2653, %v2313
    %v2773 = vmul.f32 %v2660, %v2313
    %v2774 = vsel %vm2662, %v2316, %v2773
    %v2775 = vsel %vm2661, %v2772, %v2774
    %v2776 = vsub.f32 0.0, %v2315
    %v2777 = vmul.f32 %v2776, %v2653
    %v2778 = vmul.f32 %v2315, %v2660
    %v2779 = vsel %vm2662, 0.0, %v2778
    %v2780 = vsel %vm2661, %v2777, %v2779
    %v2781 = vadd.f32 %v2433, %v2664
    %vm2782 = vcmp.lt.f32.partialorder %v2781, 60.0
    %v2783 = vsub.f32 0.0, %v2781
    %v2784 = vmul.f32 %v2783, 1.442695
    %v2785 = vpow.pop %v2784
    %v2786 = vsel %vm2782, %v2785, 0.0
    %v2787 = vmul.f32 %v2540, %v2771
    %v2788 = vmul.f32 %v2540, %v2775
    %v2789 = vmul.f32 %v2540, %v2780
    %v2790 = vmul.f32 %v2771, %v2544
    %v2791 = vmul.f32 %v2771, %v2549
    %v2792 = vmul.f32 %v2549, %v2775
    %v2793 = vmul.f32 %v2549, %v2780
    %v2794 = vmul.f32 %v2544, %v2775
    %v2795 = vmul.f32 %v2544, %v2780
    %v2796 = vadd.f32 %v2288, %v2289
    %v2797 = vmul.f32 %v2288, %v2286
    %v2798 = vmul.f32 %v2288, %v2289
    %v2799 = vmul.f32 %v2289, %v2289
    %v2800 = vsub.f32 %v2786, %v2787
    %v2801 = vmul.f32 %v2798, 2.0
    %v2802 = vmul.f32 %v2801, %v2800
    %v2803 = vsub.f32 %v2787, %v2802
    %v2804 = vmul.f32 %v2797, %v2793
    %v2805 = vsub.f32 %v2803, %v2804
    %v2806 = vmul.f32 %v168, %v2799
    %v2807 = vmul.f32 %v2806, %v2794
    %v2808 = vsub.f32 %v2805, %v2807
    %v2809 = vmul.f32 %v168, %v2788
    %v2810 = vsub.f32 %v2809, %v2791
    %v2811 = vstv %s2270
    %v2812 = vmul.f32 %v2810, %v2811
    %v2813 = vmul.f32 %v2796, %v2800
    %v2814 = vmul.f32 %v2286, %v2793
    %v2815 = vadd.f32 %v2813, %v2814
    %v2816 = vmul.f32 %v168, %v2289
    %v2817 = vmul.f32 %v2816, %v2794
    %v2818 = vadd.f32 %v2815, %v2817
    %v2819 = vmul.f32 %v2818, %v2811
    %v2820 = vsub.f32 0.0, %v2819
    %v2821 = vmul.f32 %v168, %v2790
    %v2822 = vsub.f32 %v2789, %v2821
    %v2823 = vmul.f32 %v2822, %v2811
    %v2824 = vmul.f32 %v794, %v2800
    %v2825 = vadd.f32 %v2824, %v2793
    %v2826 = vmul.f32 %v797, %v2794
    %v2827 = vadd.f32 %v2825, %v2826
    %v2828 = vstv %s2271
    %v2829 = vmul.f32 %v2827, %v2828
    %v2830 = vsub.f32 0.0, %v2829
    %v2831 = vmul.f32 %v2797, %v2789
    %v2832 = vmul.f32 %v2799, %v2790
    %v2833 = vsub.f32 %v2831, %v2832
    %v2834 = vstv %s2268
    %v2835 = vmul.f32 %v2833, %v2834
    %v2836 = vmul.f32 %v2286, %v2789
    %v2837 = vmul.f32 %v2289, %v2790
    %v2838 = vsub.f32 %v2836, %v2837
    %v2839 = vsub.f32 0.0, %v2795
    %v2840 = vmul.f32 %v2799, %v2788
    %v2841 = vmul.f32 %v2797, %v2791
    %v2842 = vsub.f32 %v2840, %v2841
    %v2843 = vmul.f32 %v2842, %v2834
    %v2844 = vsub.f32 0.0, %v2792
    %v2845 = vmul.f32 %v2289, %v2788
    %v2846 = vmul.f32 %v2286, %v2791
    %v2847 = vsub.f32 %v2845, %v2846
    %v2848 = vmul.f32 %v2797, 2.0
    %v2849 = vmul.f32 %v2848, %v2799
    %v2850 = vmul.f32 %v2849, %v2800
    %v2851 = vmul.f32 %v2797, %v2797
    %v2852 = vmul.f32 %v2851, %v2793
    %v2853 = vadd.f32 %v2850, %v2852
    %v2854 = vmul.f32 %v2799, %v2799
    %v2855 = vmul.f32 %v2854, %v2794
    %v2856 = vadd.f32 %v2853, %v2855
    %v2857 = vstv %s2269
    %v2858 = vmul.f32 %v2856, %v2857
    %v2859 = vsub.f32 0.0, %v2858
    %v2860 = vmul.f32 %v2286, %v2289
    %v2861 = vmul.f32 %v2860, %v2796
    %v2862 = vmul.f32 %v2861, %v2800
    %v2863 = vmul.f32 %v2797, %v2286
    %v2864 = vmul.f32 %v2863, %v2793
    %v2865 = vadd.f32 %v2862, %v2864
    %v2866 = vmul.f32 %v2289, %v2799
    %v2867 = vmul.f32 %v2866, %v2794
    %v2868 = vadd.f32 %v2865, %v2867
    %v2869 = vmul.f32 %v2868, %v2834
    %v2870 = vsub.f32 0.0, %v2869
    %v2871 = vmul.f32 %v770, %v2870
    %v2872 = vmul.f32 %v770, %v2847
    %v2873 = vsub.f32 %v2787, %v2808
    %v2874 = vmul.f32 %v2873, 2.0
    %v2875 = vadd.f32 %v2786, %v2874
    %v2876 = vmul.f32 %v770, %v2838
    %v2877 = vmul.f32 %v770, %v2820
    %v2878 = vmul.f32 %v2262, %v2808
    %v2879 = vmul.f32 %v2263, %v2835
    %v2880 = vadd.f32 %v2878, %v2879
    %v2881 = vmul.f32 %v2264, %v2871
    %v2882 = vadd.f32 %v2880, %v2881
    %v2883 = vmul.f32 %v2265, %v2843
    %v2884 = vadd.f32 %v2882, %v2883
    %v2885 = vmul.f32 %v2266, %v2859
    %v2886 = vadd.f32 %v2884, %v2885
    %v2887 = vmul.f32 %v2262, %v2812
    %v2888 = vmul.f32 %v2263, %v2787
    %v2889 = vadd.f32 %v2887, %v2888
    %v2890 = vmul.f32 %v2264, %v2872
    %v2891 = vadd.f32 %v2889, %v2890
    %v2892 = vmul.f32 %v2265, %v2844
    %v2893 = vadd.f32 %v2891, %v2892
    %v2894 = vmul.f32 %v2266, %v2843
    %v2895 = vadd.f32 %v2893, %v2894
    %v2896 = vmul.f32 %v2262, %v2820
    %v2897 = vmul.f32 %v2263, %v2838
    %v2898 = vadd.f32 %v2896, %v2897
    %v2899 = vmul.f32 %v2264, %v2875
    %v2900 = vadd.f32 %v2898, %v2899
    %v2901 = vmul.f32 %v2265, %v2847
    %v2902 = vadd.f32 %v2900, %v2901
    %v2903 = vmul.f32 %v2266, %v2870
    %v2904 = vadd.f32 %v2902, %v2903
    %v2905 = vmul.f32 %v2262, %v2823
    %v2906 = vmul.f32 %v2263, %v2839
    %v2907 = vadd.f32 %v2905, %v2906
    %v2908 = vmul.f32 %v2264, %v2876
    %v2909 = vadd.f32 %v2907, %v2908
    %v2910 = vmul.f32 %v2265, %v2787
    %v2911 = vadd.f32 %v2909, %v2910
    %v2912 = vmul.f32 %v2266, %v2835
    %v2913 = vadd.f32 %v2911, %v2912
    %v2914 = vmul.f32 %v2262, %v2830
    %v2915 = vmul.f32 %v2263, %v2823
    %v2916 = vadd.f32 %v2914, %v2915
    %v2917 = vmul.f32 %v2264, %v2877
    %v2918 = vadd.f32 %v2916, %v2917
    %v2919 = vmul.f32 %v2265, %v2812
    %v2920 = vadd.f32 %v2918, %v2919
    %v2921 = vmul.f32 %v2266, %v2808
    %v2922 = vadd.f32 %v2920, %v2921
    %v2923 = vand.u32 2147483647, %v2886
    %v2924 = vand.u32 2147483647, %v2895
    %v2925 = vmax.f32 %v2923, %v2924
    %v2926 = vand.u32 2147483647, %v2904
    %v2927 = vand.u32 2147483647, %v2913
    %v2928 = vmax.f32 %v2926, %v2927
    %v2929 = vmax.f32 %v2925, %v2928
    %v2930 = vand.u32 2147483647, %v2922
    %v2931 = vmax.f32 %v2929, %v2930
    %vm2932 = vcmp.lt.f32.partialorder %v2931, 1e-30
    %v2933 = vsel %vm2932, 1.0, %v2931
    %v2934 = vrcp.pop %v2933
    %v2935 = vmul.f32 %v2933, %v2934
    %v2936 = vsub.f32 2.0, %v2935
    %v2937 = vmul.f32 %v2934, %v2936
    %v2938 = vmul.f32 %v2886, %v2937
    %v2939 = vmul.f32 %v2895, %v2937
    %v2940 = vmul.f32 %v2904, %v2937
    %v2941 = vmul.f32 %v2913, %v2937
    %v2942 = vmul.f32 %v2922, %v2937
    %s2943 = sld [smem:[#allocation2 + $0x2]]
    %s2944 = sld [smem:[#allocation6 + $0x2]]
    %s2945 = sld [smem:[#allocation7 + $0x2]]
    %s2946 = sld [smem:[#allocation12 + $0x2]]
    %s2947 = sld [smem:[#allocation13 + $0x2]]
    %s2948 = sld [smem:[#allocation9 + $0x2]]
    %v2949 = vstv %s2948
    %v2950 = vmul.f32 %v138, %v2949
    %s2951 = sld [smem:[#allocation10 + $0x2]]
    %v2952 = vstv %s2951
    %v2953 = vmul.f32 %v138, %v2952
    %s2954 = sld [smem:[#allocation4 + $0x2]]
    %v2955 = vstv %s2954
    %v2956 = vmul.f32 %v2955, %v139
    %v2957 = vmul.f32 %v2956, 2.0
    %v2958 = vmul.f32 %v2957, %v2956
    %2960 = vset.pattern.permute.xlu0 0
    %2961 = vperm.xlu0 %2960, %v2958
    %v2962 = vpop.permute.xlu0 %2961
    %v2964 = vmul.f32 %v2962, %v168
    %v2965 = vsub.f32 %v2964, 1.0
    %2967 = vset.pattern.permute.xlu0 0
    %2968 = vperm.xlu0 %2967, %v2950
    %v2969 = vpop.permute.xlu0 %2968
    %v2971 = vadd.f32 %v167, %v2969
    %v2972 = vsub.f32 %v167, %v2969
    %v2973 = vand.u32 2147483647, %v2972
    %v2974 = vmul.f32 %v2971, %v2973
    %2976 = vset.pattern.permute.xlu0 0
    %2977 = vperm.xlu0 %2976, %v2953
    %v2978 = vpop.permute.xlu0 %2977
    %v2980 = vadd.f32 %v167, %v2978
    %v2981 = vsub.f32 %v167, %v2978
    %v2982 = vand.u32 2147483647, %v2981
    %v2983 = vmul.f32 %v2980, %v2982
    %vm2984 = vcmp.eq.f32.partialorder %v2974, 0.0
    %v2985 = vsel %vm2984, 1.0, %v2974
    %v2986 = vrsqrt.pop %v2985
    %vm2987 = vcmp.eq.f32.partialorder %v2983, 0.0
    %v2988 = vsel %vm2987, 1.0, %v2983
    %v2989 = vrsqrt.pop %v2988
    %v2990 = vmul.f32 %v2974, %v2986
    %v2991 = vmul.f32 %v2983, %v2989
    %v2992 = vstv %s2943
    %v2993 = vmul.f32 %v2990, %v2992
    %v2994 = vmul.f32 %v2991, %v2992
    %v2995 = vand.u32 2147483647, %v2993
    %vm2996 = vcmp.le.f32.partialorder %v2995, 0.7853982
    %vm2997 = vcmp.lt.s32.totalorder %v2993, 0
    %v2998 = vand.u32 %v2993, 2139095040
    %v2999 = vshrl.u32 %v2998, 23
    %v3000 = vsub.s32 %v2999, 127
    %v3001 = vand.u32 2147483647, %v2993
    %v3002 = vand.u32 %v3001, 8388607
    %v3003 = vor.u32 %v3002, 8388608
    %v3004 = vsub.s32 0, %v3003
    %v3005 = vadd.s32 %v3000, 1
    %vm3006 = vcmp.gt.s32.totalorder %v3005, 0
    %v3007 = vsel %vm3006, %v3005, 0
    %v3008 = vshrl.u32 %v3007, 5
    %v3009 = vand.u32 %v3007, 31
    %v3010 = vsub.s32 32, %v3009
    %v3011 = vshrl.u32 683565275, %v3010
    %v3012 = vshll.u32 683565275, %v3009
    %v3013 = vshrl.u32 2475754826, %v3010
    %v3014 = vor.u32 %v3012, %v3013
    %v3015 = vshll.u32 2475754826, %v3009
    %v3016 = vshrl.u32 2131351028, %v3010
    %v3017 = vor.u32 %v3015, %v3016
    %v3018 = vshll.u32 2131351028, %v3009
    %v3019 = vshrl.u32 2102212464, %v3010
    %v3020 = vor.u32 %v3018, %v3019
    %v3021 = vshll.u32 2102212464, %v3009
    %v3022 = vshrl.u32 920167782, %v3010
    %v3023 = vor.u32 %v3021, %v3022
    %v3024 = vshll.u32 920167782, %v3009
    %v3025 = vshrl.u32 1326507024, %v3010
    %v3026 = vor.u32 %v3024, %v3025
    %vm3027 = vcmp.lt.s32.totalorder %v3008, 1
    %vm3028 = vcmp.lt.s32.totalorder %v3008, 2
    %vm3029 = vcmp.lt.s32.totalorder %v3008, 3
    %vm3030 = vcmp.lt.s32.totalorder %v3008, 4
    %v3031 = vsel %vm3027, %v3011, %v3014
    %v3032 = vsel %vm3030, %v3020, 2102212464
    %v3033 = vsel %vm3029, %v3017, %v3032
    %v3034 = vsel %vm3028, %v3031, %v3033
    %v3035 = vsel %vm3027, %v3014, %v3017
    %v3036 = vsel %vm3030, %v3023, 920167782
    %v3037 = vsel %vm3029, %v3020, %v3036
    %v3038 = vsel %vm3028, %v3035, %v3037
    %v3039 = vsel %vm3027, %v3017, %v3020
    %v3040 = vsel %vm3030, %v3026, 1326507024
    %v3041 = vsel %vm3029, %v3023, %v3040
    %v3042 = vsel %vm3028, %v3039, %v3041
    %v3043 = vshll.u32 %v3003, 8
    %v3044 = vmul.u32.u64.compose %v3043, %v3042
    %v3045 = vextract.low.u32 %v3044
    %v3046 = vextract.high.u32 %v3044
    %v3047 = vmul.u32.u64.compose %v3043, %v3038
    %v3048 = vextract.low.u32 %v3047
    %v3049 = vextract.high.u32 %v3047
    %v3050 = vmul.u32 %v3043, %v3034
    %v3051 = vadd.s32 %v3046, %v3048
    %vm3052 = vc.u32 %v3046, %v3048
    %v3053 = vadd.s32 %v3049, 1
    %v3054 = vsel %vm3052, %v3053, %v3049
    %v3055 = vadd.s32 %v3050, %v3054
    %v3056 = vadd.s32 %v3055, 536870912
    %v3057 = vshrl.u32 %v3056, 30
    %v3058 = vshll.u32 %v3057, 30
    %v3059 = vsub.s32 %v3055, %v3058
    %vm3060 = vcmp.lt.s32.totalorder %v3059, 0
    %v3061 = vsub.s32 0, %v3059
    %v3062 = vsel %vm3060, %v3061, %v3059
    %v3063 = vclz %v3062
    %v3064 = vsub.s32 %v3063, 2
    %vm3065 = vcmp.gt.s32.totalorder 0, %v3064
    %v3066 = vsel %vm3065, 0, %v3064
    %v3067 = vsub.s32 32, %v3066
    %v3068 = vshll.u32 %v3059, %v3066
    %v3069 = vshrl.u32 %v3051, %v3067
    %v3070 = vor.u32 %v3068, %v3069
    %v3071 = vsub.s32 4294967266, %v3066
    %v3072 = vadd.s32 %v3071, 127
    %v3073 = vshll.u32 %v3072, 23
    %v3074 = vor.u32 4788187, %v3073
    %v3075 = vand.u32 2147483647, %v3074
    %v3077 = vcvt.s32.f32 %v3070
    %v3078 = vmul.f32 %v3077, %v3075
    %v3079 = vxor.u32 %v3078, 2147483648
    %v3080 = vsel %vm2997, %v3079, %v3078
    %v3081 = vsub.s32 4, %v3057
    %v3082 = vsel %vm2997, %v3081, %v3057
    %v3083 = vsel %vm2996, %v2993, %v3080
    %v3084 = vsel %vm2996, 0, %v3082
    %v3085 = vcosq.f32.pop %v3083
    %v3086 = vsinq.f32.pop %v3083
    %vm3087 = vweird.f32 %v2993
    %v3088 = vadd.s32 %v3084, 3
    %v3089 = vand.u32 %v3088, 3
    %vm3090 = vcmp.lt.s32.totalorder %v3089, 2
    %vm3091 = vcmp.eq.s32.totalorder %v3089, 0
    %v3092 = vxor.u32 %v3086, 2147483648
    %v3093 = vsel %vm3091, %v3085, %v3092
    %vm3094 = vcmp.eq.s32.totalorder %v3089, 2
    %v3095 = vxor.u32 %v3085, 2147483648
    %v3096 = vsel %vm3094, %v3095, %v3086
    %v3097 = vsel %vm3090, %v3093, %v3096
    %v3098 = vsel %vm3087, nan, %v3097
    %vm3099 = vcmp.lt.f32.partialorder %v2993, 16.0
    %v3100 = vmul.f32 %v2993, -2.0
    %v3101 = vmul.f32 %v3100, 1.442695
    %v3102 = vpow.pop %v3101
    %v3103 = vsel %vm3099, %v3102, 0.0
    %v3104 = vsub.f32 1.0, %v3103
    %v3105 = vmul.f32 %v3104, 0.5
    %vm3106 = vcmp.lt.f32.partialorder %v167, %v2969
    %vm3107 = vcmp.eq.f32.partialorder %v167, %v2969
    %vm3108 = vmor %vm3106, %vm3107
    %v3109 = vsel %vm3108, 0.0, %v2993
    %v3110 = vand.u32 2147483647, %v2993
    %vm3111 = vcmp.le.f32.partialorder %v3110, 0.7853982
    %vm3112 = vcmp.lt.s32.totalorder %v2993, 0
    %v3113 = vand.u32 %v2993, 2139095040
    %v3114 = vshrl.u32 %v3113, 23
    %v3115 = vsub.s32 %v3114, 127
    %v3116 = vand.u32 2147483647, %v2993
    %v3117 = vand.u32 %v3116, 8388607
    %v3118 = vor.u32 %v3117, 8388608
    %v3119 = vsub.s32 0, %v3118
    %v3120 = vadd.s32 %v3115, 1
    %vm3121 = vcmp.gt.s32.totalorder %v3120, 0
    %v3122 = vsel %vm3121, %v3120, 0
    %v3123 = vshrl.u32 %v3122, 5
    %v3124 = vand.u32 %v3122, 31
    %v3125 = vsub.s32 32, %v3124
    %v3126 = vshrl.u32 683565275, %v3125
    %v3127 = vshll.u32 683565275, %v3124
    %v3128 = vshrl.u32 2475754826, %v3125
    %v3129 = vor.u32 %v3127, %v3128
    %v3130 = vshll.u32 2475754826, %v3124
    %v3131 = vshrl.u32 2131351028, %v3125
    %v3132 = vor.u32 %v3130, %v3131
    %v3133 = vshll.u32 2131351028, %v3124
    %v3134 = vshrl.u32 2102212464, %v3125
    %v3135 = vor.u32 %v3133, %v3134
    %v3136 = vshll.u32 2102212464, %v3124
    %v3137 = vshrl.u32 920167782, %v3125
    %v3138 = vor.u32 %v3136, %v3137
    %v3139 = vshll.u32 920167782, %v3124
    %v3140 = vshrl.u32 1326507024, %v3125
    %v3141 = vor.u32 %v3139, %v3140
    %vm3142 = vcmp.lt.s32.totalorder %v3123, 1
    %vm3143 = vcmp.lt.s32.totalorder %v3123, 2
    %vm3144 = vcmp.lt.s32.totalorder %v3123, 3
    %vm3145 = vcmp.lt.s32.totalorder %v3123, 4
    %v3146 = vsel %vm3142, %v3126, %v3129
    %v3147 = vsel %vm3145, %v3135, 2102212464
    %v3148 = vsel %vm3144, %v3132, %v3147
    %v3149 = vsel %vm3143, %v3146, %v3148
    %v3150 = vsel %vm3142, %v3129, %v3132
    %v3151 = vsel %vm3145, %v3138, 920167782
    %v3152 = vsel %vm3144, %v3135, %v3151
    %v3153 = vsel %vm3143, %v3150, %v3152
    %v3154 = vsel %vm3142, %v3132, %v3135
    %v3155 = vsel %vm3145, %v3141, 1326507024
    %v3156 = vsel %vm3144, %v3138, %v3155
    %v3157 = vsel %vm3143, %v3154, %v3156
    %v3158 = vshll.u32 %v3118, 8
    %v3159 = vmul.u32.u64.compose %v3158, %v3157
    %v3160 = vextract.low.u32 %v3159
    %v3161 = vextract.high.u32 %v3159
    %v3162 = vmul.u32.u64.compose %v3158, %v3153
    %v3163 = vextract.low.u32 %v3162
    %v3164 = vextract.high.u32 %v3162
    %v3165 = vmul.u32 %v3158, %v3149
    %v3166 = vadd.s32 %v3161, %v3163
    %vm3167 = vc.u32 %v3161, %v3163
    %v3168 = vadd.s32 %v3164, 1
    %v3169 = vsel %vm3167, %v3168, %v3164
    %v3170 = vadd.s32 %v3165, %v3169
    %v3171 = vadd.s32 %v3170, 536870912
    %v3172 = vshrl.u32 %v3171, 30
    %v3173 = vshll.u32 %v3172, 30
    %v3174 = vsub.s32 %v3170, %v3173
    %vm3175 = vcmp.lt.s32.totalorder %v3174, 0
    %v3176 = vsub.s32 0, %v3174
    %v3177 = vsel %vm3175, %v3176, %v3174
    %v3178 = vclz %v3177
    %v3179 = vsub.s32 %v3178, 2
    %vm3180 = vcmp.gt.s32.totalorder 0, %v3179
    %v3181 = vsel %vm3180, 0, %v3179
    %v3182 = vsub.s32 32, %v3181
    %v3183 = vshll.u32 %v3174, %v3181
    %v3184 = vshrl.u32 %v3166, %v3182
    %v3185 = vor.u32 %v3183, %v3184
    %v3186 = vsub.s32 4294967266, %v3181
    %v3187 = vadd.s32 %v3186, 127
    %v3188 = vshll.u32 %v3187, 23
    %v3189 = vor.u32 4788187, %v3188
    %v3190 = vand.u32 2147483647, %v3189
    %v3192 = vcvt.s32.f32 %v3185
    %v3193 = vmul.f32 %v3192, %v3190
    %v3194 = vxor.u32 %v3193, 2147483648
    %v3195 = vsel %vm3112, %v3194, %v3193
    %v3196 = vsub.s32 4, %v3172
    %v3197 = vsel %vm3112, %v3196, %v3172
    %v3198 = vsel %vm3111, %v2993, %v3195
    %v3199 = vsel %vm3111, 0, %v3197
    %v3200 = vcosq.f32.pop %v3198
    %v3201 = vsinq.f32.pop %v3198
    %vm3202 = vweird.f32 %v2993
    %v3203 = vand.u32 %v3199, 3
    %vm3204 = vcmp.lt.s32.totalorder %v3203, 2
    %vm3205 = vcmp.eq.s32.totalorder %v3203, 0
    %v3206 = vxor.u32 %v3201, 2147483648
    %v3207 = vsel %vm3205, %v3200, %v3206
    %vm3208 = vcmp.eq.s32.totalorder %v3203, 2
    %v3209 = vxor.u32 %v3200, 2147483648
    %v3210 = vsel %vm3208, %v3209, %v3201
    %v3211 = vsel %vm3204, %v3207, %v3210
    %v3212 = vsel %vm3202, nan, %v3211
    %v3213 = vadd.f32 %v3103, 1.0
    %v3214 = vmul.f32 %v3213, 0.5
    %v3215 = vsel %vm3107, 1.0, %v3214
    %v3216 = vsel %vm3106, %v3212, %v3215
    %v3217 = vmul.f32 %v3098, %v2986
    %v3218 = vmul.f32 %v3105, %v2986
    %v3219 = vsel %vm3107, %v2992, %v3218
    %v3220 = vsel %vm3106, %v3217, %v3219
    %v3221 = vsub.f32 0.0, %v2990
    %v3222 = vmul.f32 %v3221, %v3098
    %v3223 = vmul.f32 %v2990, %v3105
    %v3224 = vsel %vm3107, 0.0, %v3223
    %v3225 = vsel %vm3106, %v3222, %v3224
    %v3226 = vand.u32 2147483647, %v2994
    %vm3227 = vcmp.le.f32.partialorder %v3226, 0.7853982
    %vm3228 = vcmp.lt.s32.totalorder %v2994, 0
    %v3229 = vand.u32 %v2994, 2139095040
    %v3230 = vshrl.u32 %v3229, 23
    %v3231 = vsub.s32 %v3230, 127
    %v3232 = vand.u32 2147483647, %v2994
    %v3233 = vand.u32 %v3232, 8388607
    %v3234 = vor.u32 %v3233, 8388608
    %v3235 = vsub.s32 0, %v3234
    %v3236 = vadd.s32 %v3231, 1
    %vm3237 = vcmp.gt.s32.totalorder %v3236, 0
    %v3238 = vsel %vm3237, %v3236, 0
    %v3239 = vshrl.u32 %v3238, 5
    %v3240 = vand.u32 %v3238, 31
    %v3241 = vsub.s32 32, %v3240
    %v3242 = vshrl.u32 683565275, %v3241
    %v3243 = vshll.u32 683565275, %v3240
    %v3244 = vshrl.u32 2475754826, %v3241
    %v3245 = vor.u32 %v3243, %v3244
    %v3246 = vshll.u32 2475754826, %v3240
    %v3247 = vshrl.u32 2131351028, %v3241
    %v3248 = vor.u32 %v3246, %v3247
    %v3249 = vshll.u32 2131351028, %v3240
    %v3250 = vshrl.u32 2102212464, %v3241
    %v3251 = vor.u32 %v3249, %v3250
    %v3252 = vshll.u32 2102212464, %v3240
    %v3253 = vshrl.u32 920167782, %v3241
    %v3254 = vor.u32 %v3252, %v3253
    %v3255 = vshll.u32 920167782, %v3240
    %v3256 = vshrl.u32 1326507024, %v3241
    %v3257 = vor.u32 %v3255, %v3256
    %vm3258 = vcmp.lt.s32.totalorder %v3239, 1
    %vm3259 = vcmp.lt.s32.totalorder %v3239, 2
    %vm3260 = vcmp.lt.s32.totalorder %v3239, 3
    %vm3261 = vcmp.lt.s32.totalorder %v3239, 4
    %v3262 = vsel %vm3258, %v3242, %v3245
    %v3263 = vsel %vm3261, %v3251, 2102212464
    %v3264 = vsel %vm3260, %v3248, %v3263
    %v3265 = vsel %vm3259, %v3262, %v3264
    %v3266 = vsel %vm3258, %v3245, %v3248
    %v3267 = vsel %vm3261, %v3254, 920167782
    %v3268 = vsel %vm3260, %v3251, %v3267
    %v3269 = vsel %vm3259, %v3266, %v3268
    %v3270 = vsel %vm3258, %v3248, %v3251
    %v3271 = vsel %vm3261, %v3257, 1326507024
    %v3272 = vsel %vm3260, %v3254, %v3271
    %v3273 = vsel %vm3259, %v3270, %v3272
    %v3274 = vshll.u32 %v3234, 8
    %v3275 = vmul.u32.u64.compose %v3274, %v3273
    %v3276 = vextract.low.u32 %v3275
    %v3277 = vextract.high.u32 %v3275
    %v3278 = vmul.u32.u64.compose %v3274, %v3269
    %v3279 = vextract.low.u32 %v3278
    %v3280 = vextract.high.u32 %v3278
    %v3281 = vmul.u32 %v3274, %v3265
    %v3282 = vadd.s32 %v3277, %v3279
    %vm3283 = vc.u32 %v3277, %v3279
    %v3284 = vadd.s32 %v3280, 1
    %v3285 = vsel %vm3283, %v3284, %v3280
    %v3286 = vadd.s32 %v3281, %v3285
    %v3287 = vadd.s32 %v3286, 536870912
    %v3288 = vshrl.u32 %v3287, 30
    %v3289 = vshll.u32 %v3288, 30
    %v3290 = vsub.s32 %v3286, %v3289
    %vm3291 = vcmp.lt.s32.totalorder %v3290, 0
    %v3292 = vsub.s32 0, %v3290
    %v3293 = vsel %vm3291, %v3292, %v3290
    %v3294 = vclz %v3293
    %v3295 = vsub.s32 %v3294, 2
    %vm3296 = vcmp.gt.s32.totalorder 0, %v3295
    %v3297 = vsel %vm3296, 0, %v3295
    %v3298 = vsub.s32 32, %v3297
    %v3299 = vshll.u32 %v3290, %v3297
    %v3300 = vshrl.u32 %v3282, %v3298
    %v3301 = vor.u32 %v3299, %v3300
    %v3302 = vsub.s32 4294967266, %v3297
    %v3303 = vadd.s32 %v3302, 127
    %v3304 = vshll.u32 %v3303, 23
    %v3305 = vor.u32 4788187, %v3304
    %v3306 = vand.u32 2147483647, %v3305
    %v3308 = vcvt.s32.f32 %v3301
    %v3309 = vmul.f32 %v3308, %v3306
    %v3310 = vxor.u32 %v3309, 2147483648
    %v3311 = vsel %vm3228, %v3310, %v3309
    %v3312 = vsub.s32 4, %v3288
    %v3313 = vsel %vm3228, %v3312, %v3288
    %v3314 = vsel %vm3227, %v2994, %v3311
    %v3315 = vsel %vm3227, 0, %v3313
    %v3316 = vcosq.f32.pop %v3314
    %v3317 = vsinq.f32.pop %v3314
    %vm3318 = vweird.f32 %v2994
    %v3319 = vadd.s32 %v3315, 3
    %v3320 = vand.u32 %v3319, 3
    %vm3321 = vcmp.lt.s32.totalorder %v3320, 2
    %vm3322 = vcmp.eq.s32.totalorder %v3320, 0
    %v3323 = vxor.u32 %v3317, 2147483648
    %v3324 = vsel %vm3322, %v3316, %v3323
    %vm3325 = vcmp.eq.s32.totalorder %v3320, 2
    %v3326 = vxor.u32 %v3316, 2147483648
    %v3327 = vsel %vm3325, %v3326, %v3317
    %v3328 = vsel %vm3321, %v3324, %v3327
    %v3329 = vsel %vm3318, nan, %v3328
    %vm3330 = vcmp.lt.f32.partialorder %v2994, 16.0
    %v3331 = vmul.f32 %v2994, -2.0
    %v3332 = vmul.f32 %v3331, 1.442695
    %v3333 = vpow.pop %v3332
    %v3334 = vsel %vm3330, %v3333, 0.0
    %v3335 = vsub.f32 1.0, %v3334
    %v3336 = vmul.f32 %v3335, 0.5
    %vm3337 = vcmp.lt.f32.partialorder %v167, %v2978
    %vm3338 = vcmp.eq.f32.partialorder %v167, %v2978
    %vm3339 = vmor %vm3337, %vm3338
    %v3340 = vsel %vm3339, 0.0, %v2994
    %v3341 = vand.u32 2147483647, %v2994
    %vm3342 = vcmp.le.f32.partialorder %v3341, 0.7853982
    %vm3343 = vcmp.lt.s32.totalorder %v2994, 0
    %v3344 = vand.u32 %v2994, 2139095040
    %v3345 = vshrl.u32 %v3344, 23
    %v3346 = vsub.s32 %v3345, 127
    %v3347 = vand.u32 2147483647, %v2994
    %v3348 = vand.u32 %v3347, 8388607
    %v3349 = vor.u32 %v3348, 8388608
    %v3350 = vsub.s32 0, %v3349
    %v3351 = vadd.s32 %v3346, 1
    %vm3352 = vcmp.gt.s32.totalorder %v3351, 0
    %v3353 = vsel %vm3352, %v3351, 0
    %v3354 = vshrl.u32 %v3353, 5
    %v3355 = vand.u32 %v3353, 31
    %v3356 = vsub.s32 32, %v3355
    %v3357 = vshrl.u32 683565275, %v3356
    %v3358 = vshll.u32 683565275, %v3355
    %v3359 = vshrl.u32 2475754826, %v3356
    %v3360 = vor.u32 %v3358, %v3359
    %v3361 = vshll.u32 2475754826, %v3355
    %v3362 = vshrl.u32 2131351028, %v3356
    %v3363 = vor.u32 %v3361, %v3362
    %v3364 = vshll.u32 2131351028, %v3355
    %v3365 = vshrl.u32 2102212464, %v3356
    %v3366 = vor.u32 %v3364, %v3365
    %v3367 = vshll.u32 2102212464, %v3355
    %v3368 = vshrl.u32 920167782, %v3356
    %v3369 = vor.u32 %v3367, %v3368
    %v3370 = vshll.u32 920167782, %v3355
    %v3371 = vshrl.u32 1326507024, %v3356
    %v3372 = vor.u32 %v3370, %v3371
    %vm3373 = vcmp.lt.s32.totalorder %v3354, 1
    %vm3374 = vcmp.lt.s32.totalorder %v3354, 2
    %vm3375 = vcmp.lt.s32.totalorder %v3354, 3
    %vm3376 = vcmp.lt.s32.totalorder %v3354, 4
    %v3377 = vsel %vm3373, %v3357, %v3360
    %v3378 = vsel %vm3376, %v3366, 2102212464
    %v3379 = vsel %vm3375, %v3363, %v3378
    %v3380 = vsel %vm3374, %v3377, %v3379
    %v3381 = vsel %vm3373, %v3360, %v3363
    %v3382 = vsel %vm3376, %v3369, 920167782
    %v3383 = vsel %vm3375, %v3366, %v3382
    %v3384 = vsel %vm3374, %v3381, %v3383
    %v3385 = vsel %vm3373, %v3363, %v3366
    %v3386 = vsel %vm3376, %v3372, 1326507024
    %v3387 = vsel %vm3375, %v3369, %v3386
    %v3388 = vsel %vm3374, %v3385, %v3387
    %v3389 = vshll.u32 %v3349, 8
    %v3390 = vmul.u32.u64.compose %v3389, %v3388
    %v3391 = vextract.low.u32 %v3390
    %v3392 = vextract.high.u32 %v3390
    %v3393 = vmul.u32.u64.compose %v3389, %v3384
    %v3394 = vextract.low.u32 %v3393
    %v3395 = vextract.high.u32 %v3393
    %v3396 = vmul.u32 %v3389, %v3380
    %v3397 = vadd.s32 %v3392, %v3394
    %vm3398 = vc.u32 %v3392, %v3394
    %v3399 = vadd.s32 %v3395, 1
    %v3400 = vsel %vm3398, %v3399, %v3395
    %v3401 = vadd.s32 %v3396, %v3400
    %v3402 = vadd.s32 %v3401, 536870912
    %v3403 = vshrl.u32 %v3402, 30
    %v3404 = vshll.u32 %v3403, 30
    %v3405 = vsub.s32 %v3401, %v3404
    %vm3406 = vcmp.lt.s32.totalorder %v3405, 0
    %v3407 = vsub.s32 0, %v3405
    %v3408 = vsel %vm3406, %v3407, %v3405
    %v3409 = vclz %v3408
    %v3410 = vsub.s32 %v3409, 2
    %vm3411 = vcmp.gt.s32.totalorder 0, %v3410
    %v3412 = vsel %vm3411, 0, %v3410
    %v3413 = vsub.s32 32, %v3412
    %v3414 = vshll.u32 %v3405, %v3412
    %v3415 = vshrl.u32 %v3397, %v3413
    %v3416 = vor.u32 %v3414, %v3415
    %v3417 = vsub.s32 4294967266, %v3412
    %v3418 = vadd.s32 %v3417, 127
    %v3419 = vshll.u32 %v3418, 23
    %v3420 = vor.u32 4788187, %v3419
    %v3421 = vand.u32 2147483647, %v3420
    %v3423 = vcvt.s32.f32 %v3416
    %v3424 = vmul.f32 %v3423, %v3421
    %v3425 = vxor.u32 %v3424, 2147483648
    %v3426 = vsel %vm3343, %v3425, %v3424
    %v3427 = vsub.s32 4, %v3403
    %v3428 = vsel %vm3343, %v3427, %v3403
    %v3429 = vsel %vm3342, %v2994, %v3426
    %v3430 = vsel %vm3342, 0, %v3428
    %v3431 = vcosq.f32.pop %v3429
    %v3432 = vsinq.f32.pop %v3429
    %vm3433 = vweird.f32 %v2994
    %v3434 = vand.u32 %v3430, 3
    %vm3435 = vcmp.lt.s32.totalorder %v3434, 2
    %vm3436 = vcmp.eq.s32.totalorder %v3434, 0
    %v3437 = vxor.u32 %v3432, 2147483648
    %v3438 = vsel %vm3436, %v3431, %v3437
    %vm3439 = vcmp.eq.s32.totalorder %v3434, 2
    %v3440 = vxor.u32 %v3431, 2147483648
    %v3441 = vsel %vm3439, %v3440, %v3432
    %v3442 = vsel %vm3435, %v3438, %v3441
    %v3443 = vsel %vm3433, nan, %v3442
    %v3444 = vadd.f32 %v3334, 1.0
    %v3445 = vmul.f32 %v3444, 0.5
    %v3446 = vsel %vm3338, 1.0, %v3445
    %v3447 = vsel %vm3337, %v3443, %v3446
    %v3448 = vmul.f32 %v3329, %v2989
    %v3449 = vmul.f32 %v3336, %v2989
    %v3450 = vsel %vm3338, %v2992, %v3449
    %v3451 = vsel %vm3337, %v3448, %v3450
    %v3452 = vsub.f32 0.0, %v2991
    %v3453 = vmul.f32 %v3452, %v3329
    %v3454 = vmul.f32 %v2991, %v3336
    %v3455 = vsel %vm3338, 0.0, %v3454
    %v3456 = vsel %vm3337, %v3453, %v3455
    %v3457 = vadd.f32 %v3109, %v3340
    %vm3458 = vcmp.lt.f32.partialorder %v3457, 60.0
    %v3459 = vsub.f32 0.0, %v3457
    %v3460 = vmul.f32 %v3459, 1.442695
    %v3461 = vpow.pop %v3460
    %v3462 = vsel %vm3458, %v3461, 0.0
    %v3463 = vmul.f32 %v3216, %v3447
    %v3464 = vmul.f32 %v3216, %v3451
    %v3465 = vmul.f32 %v3216, %v3456
    %v3466 = vmul.f32 %v3447, %v3220
    %v3467 = vmul.f32 %v3447, %v3225
    %v3468 = vmul.f32 %v3225, %v3451
    %v3469 = vmul.f32 %v3225, %v3456
    %v3470 = vmul.f32 %v3220, %v3451
    %v3471 = vmul.f32 %v3220, %v3456
    %v3472 = vadd.f32 %v2964, %v2965
    %v3473 = vmul.f32 %v2964, %v2962
    %v3474 = vmul.f32 %v2964, %v2965
    %v3475 = vmul.f32 %v2965, %v2965
    %v3476 = vsub.f32 %v3462, %v3463
    %v3477 = vmul.f32 %v3474, 2.0
    %v3478 = vmul.f32 %v3477, %v3476
    %v3479 = vsub.f32 %v3463, %v3478
    %v3480 = vmul.f32 %v3473, %v3469
    %v3481 = vsub.f32 %v3479, %v3480
    %v3482 = vmul.f32 %v168, %v3475
    %v3483 = vmul.f32 %v3482, %v3470
    %v3484 = vsub.f32 %v3481, %v3483
    %v3485 = vmul.f32 %v168, %v3464
    %v3486 = vsub.f32 %v3485, %v3467
    %v3487 = vstv %s2946
    %v3488 = vmul.f32 %v3486, %v3487
    %v3489 = vmul.f32 %v3472, %v3476
    %v3490 = vmul.f32 %v2962, %v3469
    %v3491 = vadd.f32 %v3489, %v3490
    %v3492 = vmul.f32 %v168, %v2965
    %v3493 = vmul.f32 %v3492, %v3470
    %v3494 = vadd.f32 %v3491, %v3493
    %v3495 = vmul.f32 %v3494, %v3487
    %v3496 = vsub.f32 0.0, %v3495
    %v3497 = vmul.f32 %v168, %v3466
    %v3498 = vsub.f32 %v3465, %v3497
    %v3499 = vmul.f32 %v3498, %v3487
    %v3500 = vmul.f32 %v794, %v3476
    %v3501 = vadd.f32 %v3500, %v3469
    %v3502 = vmul.f32 %v797, %v3470
    %v3503 = vadd.f32 %v3501, %v3502
    %v3504 = vstv %s2947
    %v3505 = vmul.f32 %v3503, %v3504
    %v3506 = vsub.f32 0.0, %v3505
    %v3507 = vmul.f32 %v3473, %v3465
    %v3508 = vmul.f32 %v3475, %v3466
    %v3509 = vsub.f32 %v3507, %v3508
    %v3510 = vstv %s2944
    %v3511 = vmul.f32 %v3509, %v3510
    %v3512 = vmul.f32 %v2962, %v3465
    %v3513 = vmul.f32 %v2965, %v3466
    %v3514 = vsub.f32 %v3512, %v3513
    %v3515 = vsub.f32 0.0, %v3471
    %v3516 = vmul.f32 %v3475, %v3464
    %v3517 = vmul.f32 %v3473, %v3467
    %v3518 = vsub.f32 %v3516, %v3517
    %v3519 = vmul.f32 %v3518, %v3510
    %v3520 = vsub.f32 0.0, %v3468
    %v3521 = vmul.f32 %v2965, %v3464
    %v3522 = vmul.f32 %v2962, %v3467
    %v3523 = vsub.f32 %v3521, %v3522
    %v3524 = vmul.f32 %v3473, 2.0
    %v3525 = vmul.f32 %v3524, %v3475
    %v3526 = vmul.f32 %v3525, %v3476
    %v3527 = vmul.f32 %v3473, %v3473
    %v3528 = vmul.f32 %v3527, %v3469
    %v3529 = vadd.f32 %v3526, %v3528
    %v3530 = vmul.f32 %v3475, %v3475
    %v3531 = vmul.f32 %v3530, %v3470
    %v3532 = vadd.f32 %v3529, %v3531
    %v3533 = vstv %s2945
    %v3534 = vmul.f32 %v3532, %v3533
    %v3535 = vsub.f32 0.0, %v3534
    %v3536 = vmul.f32 %v2962, %v2965
    %v3537 = vmul.f32 %v3536, %v3472
    %v3538 = vmul.f32 %v3537, %v3476
    %v3539 = vmul.f32 %v3473, %v2962
    %v3540 = vmul.f32 %v3539, %v3469
    %v3541 = vadd.f32 %v3538, %v3540
    %v3542 = vmul.f32 %v2965, %v3475
    %v3543 = vmul.f32 %v3542, %v3470
    %v3544 = vadd.f32 %v3541, %v3543
    %v3545 = vmul.f32 %v3544, %v3510
    %v3546 = vsub.f32 0.0, %v3545
    %v3547 = vmul.f32 %v770, %v3546
    %v3548 = vmul.f32 %v770, %v3523
    %v3549 = vsub.f32 %v3463, %v3484
    %v3550 = vmul.f32 %v3549, 2.0
    %v3551 = vadd.f32 %v3462, %v3550
    %v3552 = vmul.f32 %v770, %v3514
    %v3553 = vmul.f32 %v770, %v3496
    %v3554 = vmul.f32 %v2938, %v3484
    %v3555 = vmul.f32 %v2939, %v3511
    %v3556 = vadd.f32 %v3554, %v3555
    %v3557 = vmul.f32 %v2940, %v3547
    %v3558 = vadd.f32 %v3556, %v3557
    %v3559 = vmul.f32 %v2941, %v3519
    %v3560 = vadd.f32 %v3558, %v3559
    %v3561 = vmul.f32 %v2942, %v3535
    %v3562 = vadd.f32 %v3560, %v3561
    %v3563 = vmul.f32 %v2938, %v3488
    %v3564 = vmul.f32 %v2939, %v3463
    %v3565 = vadd.f32 %v3563, %v3564
    %v3566 = vmul.f32 %v2940, %v3548
    %v3567 = vadd.f32 %v3565, %v3566
    %v3568 = vmul.f32 %v2941, %v3520
    %v3569 = vadd.f32 %v3567, %v3568
    %v3570 = vmul.f32 %v2942, %v3519
    %v3571 = vadd.f32 %v3569, %v3570
    %v3572 = vmul.f32 %v2938, %v3496
    %v3573 = vmul.f32 %v2939, %v3514
    %v3574 = vadd.f32 %v3572, %v3573
    %v3575 = vmul.f32 %v2940, %v3551
    %v3576 = vadd.f32 %v3574, %v3575
    %v3577 = vmul.f32 %v2941, %v3523
    %v3578 = vadd.f32 %v3576, %v3577
    %v3579 = vmul.f32 %v2942, %v3546
    %v3580 = vadd.f32 %v3578, %v3579
    %v3581 = vmul.f32 %v2938, %v3499
    %v3582 = vmul.f32 %v2939, %v3515
    %v3583 = vadd.f32 %v3581, %v3582
    %v3584 = vmul.f32 %v2940, %v3552
    %v3585 = vadd.f32 %v3583, %v3584
    %v3586 = vmul.f32 %v2941, %v3463
    %v3587 = vadd.f32 %v3585, %v3586
    %v3588 = vmul.f32 %v2942, %v3511
    %v3589 = vadd.f32 %v3587, %v3588
    %v3590 = vmul.f32 %v2938, %v3506
    %v3591 = vmul.f32 %v2939, %v3499
    %v3592 = vadd.f32 %v3590, %v3591
    %v3593 = vmul.f32 %v2940, %v3553
    %v3594 = vadd.f32 %v3592, %v3593
    %v3595 = vmul.f32 %v2941, %v3488
    %v3596 = vadd.f32 %v3594, %v3595
    %v3597 = vmul.f32 %v2942, %v3484
    %v3598 = vadd.f32 %v3596, %v3597
    %v3599 = vand.u32 2147483647, %v3562
    %v3600 = vand.u32 2147483647, %v3571
    %v3601 = vmax.f32 %v3599, %v3600
    %v3602 = vand.u32 2147483647, %v3580
    %v3603 = vand.u32 2147483647, %v3589
    %v3604 = vmax.f32 %v3602, %v3603
    %v3605 = vmax.f32 %v3601, %v3604
    %v3606 = vand.u32 2147483647, %v3598
    %v3607 = vmax.f32 %v3605, %v3606
    %vm3608 = vcmp.lt.f32.partialorder %v3607, 1e-30
    %v3609 = vsel %vm3608, 1.0, %v3607
    %v3610 = vrcp.pop %v3609
    %v3611 = vmul.f32 %v3609, %v3610
    %v3612 = vsub.f32 2.0, %v3611
    %v3613 = vmul.f32 %v3610, %v3612
    %v3614 = vmul.f32 %v3562, %v3613
    %v3615 = vmul.f32 %v3571, %v3613
    %v3616 = vmul.f32 %v3580, %v3613
    %v3617 = vmul.f32 %v3589, %v3613
    %v3618 = vmul.f32 %v3598, %v3613
    %s3619 = sld [smem:[#allocation2 + $0x1]]
    %s3620 = sld [smem:[#allocation6 + $0x1]]
    %s3621 = sld [smem:[#allocation7 + $0x1]]
    %s3622 = sld [smem:[#allocation12 + $0x1]]
    %s3623 = sld [smem:[#allocation13 + $0x1]]
    %s3624 = sld [smem:[#allocation9 + $0x1]]
    %v3625 = vstv %s3624
    %v3626 = vmul.f32 %v138, %v3625
    %s3627 = sld [smem:[#allocation10 + $0x1]]
    %v3628 = vstv %s3627
    %v3629 = vmul.f32 %v138, %v3628
    %s3630 = sld [smem:[#allocation4 + $0x1]]
    %v3631 = vstv %s3630
    %v3632 = vmul.f32 %v3631, %v139
    %v3633 = vmul.f32 %v3632, 2.0
    %v3634 = vmul.f32 %v3633, %v3632
    %3636 = vset.pattern.permute.xlu0 0
    %3637 = vperm.xlu0 %3636, %v3634
    %v3638 = vpop.permute.xlu0 %3637
    %v3640 = vmul.f32 %v3638, %v168
    %v3641 = vsub.f32 %v3640, 1.0
    %3643 = vset.pattern.permute.xlu0 0
    %3644 = vperm.xlu0 %3643, %v3626
    %v3645 = vpop.permute.xlu0 %3644
    %v3647 = vadd.f32 %v167, %v3645
    %v3648 = vsub.f32 %v167, %v3645
    %v3649 = vand.u32 2147483647, %v3648
    %v3650 = vmul.f32 %v3647, %v3649
    %3652 = vset.pattern.permute.xlu0 0
    %3653 = vperm.xlu0 %3652, %v3629
    %v3654 = vpop.permute.xlu0 %3653
    %v3656 = vadd.f32 %v167, %v3654
    %v3657 = vsub.f32 %v167, %v3654
    %v3658 = vand.u32 2147483647, %v3657
    %v3659 = vmul.f32 %v3656, %v3658
    %vm3660 = vcmp.eq.f32.partialorder %v3650, 0.0
    %v3661 = vsel %vm3660, 1.0, %v3650
    %v3662 = vrsqrt.pop %v3661
    %vm3663 = vcmp.eq.f32.partialorder %v3659, 0.0
    %v3664 = vsel %vm3663, 1.0, %v3659
    %v3665 = vrsqrt.pop %v3664
    %v3666 = vmul.f32 %v3650, %v3662
    %v3667 = vmul.f32 %v3659, %v3665
    %v3668 = vstv %s3619
    %v3669 = vmul.f32 %v3666, %v3668
    %v3670 = vmul.f32 %v3667, %v3668
    %v3671 = vand.u32 2147483647, %v3669
    %vm3672 = vcmp.le.f32.partialorder %v3671, 0.7853982
    %vm3673 = vcmp.lt.s32.totalorder %v3669, 0
    %v3674 = vand.u32 %v3669, 2139095040
    %v3675 = vshrl.u32 %v3674, 23
    %v3676 = vsub.s32 %v3675, 127
    %v3677 = vand.u32 2147483647, %v3669
    %v3678 = vand.u32 %v3677, 8388607
    %v3679 = vor.u32 %v3678, 8388608
    %v3680 = vsub.s32 0, %v3679
    %v3681 = vadd.s32 %v3676, 1
    %vm3682 = vcmp.gt.s32.totalorder %v3681, 0
    %v3683 = vsel %vm3682, %v3681, 0
    %v3684 = vshrl.u32 %v3683, 5
    %v3685 = vand.u32 %v3683, 31
    %v3686 = vsub.s32 32, %v3685
    %v3687 = vshrl.u32 683565275, %v3686
    %v3688 = vshll.u32 683565275, %v3685
    %v3689 = vshrl.u32 2475754826, %v3686
    %v3690 = vor.u32 %v3688, %v3689
    %v3691 = vshll.u32 2475754826, %v3685
    %v3692 = vshrl.u32 2131351028, %v3686
    %v3693 = vor.u32 %v3691, %v3692
    %v3694 = vshll.u32 2131351028, %v3685
    %v3695 = vshrl.u32 2102212464, %v3686
    %v3696 = vor.u32 %v3694, %v3695
    %v3697 = vshll.u32 2102212464, %v3685
    %v3698 = vshrl.u32 920167782, %v3686
    %v3699 = vor.u32 %v3697, %v3698
    %v3700 = vshll.u32 920167782, %v3685
    %v3701 = vshrl.u32 1326507024, %v3686
    %v3702 = vor.u32 %v3700, %v3701
    %vm3703 = vcmp.lt.s32.totalorder %v3684, 1
    %vm3704 = vcmp.lt.s32.totalorder %v3684, 2
    %vm3705 = vcmp.lt.s32.totalorder %v3684, 3
    %vm3706 = vcmp.lt.s32.totalorder %v3684, 4
    %v3707 = vsel %vm3703, %v3687, %v3690
    %v3708 = vsel %vm3706, %v3696, 2102212464
    %v3709 = vsel %vm3705, %v3693, %v3708
    %v3710 = vsel %vm3704, %v3707, %v3709
    %v3711 = vsel %vm3703, %v3690, %v3693
    %v3712 = vsel %vm3706, %v3699, 920167782
    %v3713 = vsel %vm3705, %v3696, %v3712
    %v3714 = vsel %vm3704, %v3711, %v3713
    %v3715 = vsel %vm3703, %v3693, %v3696
    %v3716 = vsel %vm3706, %v3702, 1326507024
    %v3717 = vsel %vm3705, %v3699, %v3716
    %v3718 = vsel %vm3704, %v3715, %v3717
    %v3719 = vshll.u32 %v3679, 8
    %v3720 = vmul.u32.u64.compose %v3719, %v3718
    %v3721 = vextract.low.u32 %v3720
    %v3722 = vextract.high.u32 %v3720
    %v3723 = vmul.u32.u64.compose %v3719, %v3714
    %v3724 = vextract.low.u32 %v3723
    %v3725 = vextract.high.u32 %v3723
    %v3726 = vmul.u32 %v3719, %v3710
    %v3727 = vadd.s32 %v3722, %v3724
    %vm3728 = vc.u32 %v3722, %v3724
    %v3729 = vadd.s32 %v3725, 1
    %v3730 = vsel %vm3728, %v3729, %v3725
    %v3731 = vadd.s32 %v3726, %v3730
    %v3732 = vadd.s32 %v3731, 536870912
    %v3733 = vshrl.u32 %v3732, 30
    %v3734 = vshll.u32 %v3733, 30
    %v3735 = vsub.s32 %v3731, %v3734
    %vm3736 = vcmp.lt.s32.totalorder %v3735, 0
    %v3737 = vsub.s32 0, %v3735
    %v3738 = vsel %vm3736, %v3737, %v3735
    %v3739 = vclz %v3738
    %v3740 = vsub.s32 %v3739, 2
    %vm3741 = vcmp.gt.s32.totalorder 0, %v3740
    %v3742 = vsel %vm3741, 0, %v3740
    %v3743 = vsub.s32 32, %v3742
    %v3744 = vshll.u32 %v3735, %v3742
    %v3745 = vshrl.u32 %v3727, %v3743
    %v3746 = vor.u32 %v3744, %v3745
    %v3747 = vsub.s32 4294967266, %v3742
    %v3748 = vadd.s32 %v3747, 127
    %v3749 = vshll.u32 %v3748, 23
    %v3750 = vor.u32 4788187, %v3749
    %v3751 = vand.u32 2147483647, %v3750
    %v3753 = vcvt.s32.f32 %v3746
    %v3754 = vmul.f32 %v3753, %v3751
    %v3755 = vxor.u32 %v3754, 2147483648
    %v3756 = vsel %vm3673, %v3755, %v3754
    %v3757 = vsub.s32 4, %v3733
    %v3758 = vsel %vm3673, %v3757, %v3733
    %v3759 = vsel %vm3672, %v3669, %v3756
    %v3760 = vsel %vm3672, 0, %v3758
    %v3761 = vcosq.f32.pop %v3759
    %v3762 = vsinq.f32.pop %v3759
    %vm3763 = vweird.f32 %v3669
    %v3764 = vadd.s32 %v3760, 3
    %v3765 = vand.u32 %v3764, 3
    %vm3766 = vcmp.lt.s32.totalorder %v3765, 2
    %vm3767 = vcmp.eq.s32.totalorder %v3765, 0
    %v3768 = vxor.u32 %v3762, 2147483648
    %v3769 = vsel %vm3767, %v3761, %v3768
    %vm3770 = vcmp.eq.s32.totalorder %v3765, 2
    %v3771 = vxor.u32 %v3761, 2147483648
    %v3772 = vsel %vm3770, %v3771, %v3762
    %v3773 = vsel %vm3766, %v3769, %v3772
    %v3774 = vsel %vm3763, nan, %v3773
    %vm3775 = vcmp.lt.f32.partialorder %v3669, 16.0
    %v3776 = vmul.f32 %v3669, -2.0
    %v3777 = vmul.f32 %v3776, 1.442695
    %v3778 = vpow.pop %v3777
    %v3779 = vsel %vm3775, %v3778, 0.0
    %v3780 = vsub.f32 1.0, %v3779
    %v3781 = vmul.f32 %v3780, 0.5
    %vm3782 = vcmp.lt.f32.partialorder %v167, %v3645
    %vm3783 = vcmp.eq.f32.partialorder %v167, %v3645
    %vm3784 = vmor %vm3782, %vm3783
    %v3785 = vsel %vm3784, 0.0, %v3669
    %v3786 = vand.u32 2147483647, %v3669
    %vm3787 = vcmp.le.f32.partialorder %v3786, 0.7853982
    %vm3788 = vcmp.lt.s32.totalorder %v3669, 0
    %v3789 = vand.u32 %v3669, 2139095040
    %v3790 = vshrl.u32 %v3789, 23
    %v3791 = vsub.s32 %v3790, 127
    %v3792 = vand.u32 2147483647, %v3669
    %v3793 = vand.u32 %v3792, 8388607
    %v3794 = vor.u32 %v3793, 8388608
    %v3795 = vsub.s32 0, %v3794
    %v3796 = vadd.s32 %v3791, 1
    %vm3797 = vcmp.gt.s32.totalorder %v3796, 0
    %v3798 = vsel %vm3797, %v3796, 0
    %v3799 = vshrl.u32 %v3798, 5
    %v3800 = vand.u32 %v3798, 31
    %v3801 = vsub.s32 32, %v3800
    %v3802 = vshrl.u32 683565275, %v3801
    %v3803 = vshll.u32 683565275, %v3800
    %v3804 = vshrl.u32 2475754826, %v3801
    %v3805 = vor.u32 %v3803, %v3804
    %v3806 = vshll.u32 2475754826, %v3800
    %v3807 = vshrl.u32 2131351028, %v3801
    %v3808 = vor.u32 %v3806, %v3807
    %v3809 = vshll.u32 2131351028, %v3800
    %v3810 = vshrl.u32 2102212464, %v3801
    %v3811 = vor.u32 %v3809, %v3810
    %v3812 = vshll.u32 2102212464, %v3800
    %v3813 = vshrl.u32 920167782, %v3801
    %v3814 = vor.u32 %v3812, %v3813
    %v3815 = vshll.u32 920167782, %v3800
    %v3816 = vshrl.u32 1326507024, %v3801
    %v3817 = vor.u32 %v3815, %v3816
    %vm3818 = vcmp.lt.s32.totalorder %v3799, 1
    %vm3819 = vcmp.lt.s32.totalorder %v3799, 2
    %vm3820 = vcmp.lt.s32.totalorder %v3799, 3
    %vm3821 = vcmp.lt.s32.totalorder %v3799, 4
    %v3822 = vsel %vm3818, %v3802, %v3805
    %v3823 = vsel %vm3821, %v3811, 2102212464
    %v3824 = vsel %vm3820, %v3808, %v3823
    %v3825 = vsel %vm3819, %v3822, %v3824
    %v3826 = vsel %vm3818, %v3805, %v3808
    %v3827 = vsel %vm3821, %v3814, 920167782
    %v3828 = vsel %vm3820, %v3811, %v3827
    %v3829 = vsel %vm3819, %v3826, %v3828
    %v3830 = vsel %vm3818, %v3808, %v3811
    %v3831 = vsel %vm3821, %v3817, 1326507024
    %v3832 = vsel %vm3820, %v3814, %v3831
    %v3833 = vsel %vm3819, %v3830, %v3832
    %v3834 = vshll.u32 %v3794, 8
    %v3835 = vmul.u32.u64.compose %v3834, %v3833
    %v3836 = vextract.low.u32 %v3835
    %v3837 = vextract.high.u32 %v3835
    %v3838 = vmul.u32.u64.compose %v3834, %v3829
    %v3839 = vextract.low.u32 %v3838
    %v3840 = vextract.high.u32 %v3838
    %v3841 = vmul.u32 %v3834, %v3825
    %v3842 = vadd.s32 %v3837, %v3839
    %vm3843 = vc.u32 %v3837, %v3839
    %v3844 = vadd.s32 %v3840, 1
    %v3845 = vsel %vm3843, %v3844, %v3840
    %v3846 = vadd.s32 %v3841, %v3845
    %v3847 = vadd.s32 %v3846, 536870912
    %v3848 = vshrl.u32 %v3847, 30
    %v3849 = vshll.u32 %v3848, 30
    %v3850 = vsub.s32 %v3846, %v3849
    %vm3851 = vcmp.lt.s32.totalorder %v3850, 0
    %v3852 = vsub.s32 0, %v3850
    %v3853 = vsel %vm3851, %v3852, %v3850
    %v3854 = vclz %v3853
    %v3855 = vsub.s32 %v3854, 2
    %vm3856 = vcmp.gt.s32.totalorder 0, %v3855
    %v3857 = vsel %vm3856, 0, %v3855
    %v3858 = vsub.s32 32, %v3857
    %v3859 = vshll.u32 %v3850, %v3857
    %v3860 = vshrl.u32 %v3842, %v3858
    %v3861 = vor.u32 %v3859, %v3860
    %v3862 = vsub.s32 4294967266, %v3857
    %v3863 = vadd.s32 %v3862, 127
    %v3864 = vshll.u32 %v3863, 23
    %v3865 = vor.u32 4788187, %v3864
    %v3866 = vand.u32 2147483647, %v3865
    %v3868 = vcvt.s32.f32 %v3861
    %v3869 = vmul.f32 %v3868, %v3866
    %v3870 = vxor.u32 %v3869, 2147483648
    %v3871 = vsel %vm3788, %v3870, %v3869
    %v3872 = vsub.s32 4, %v3848
    %v3873 = vsel %vm3788, %v3872, %v3848
    %v3874 = vsel %vm3787, %v3669, %v3871
    %v3875 = vsel %vm3787, 0, %v3873
    %v3876 = vcosq.f32.pop %v3874
    %v3877 = vsinq.f32.pop %v3874
    %vm3878 = vweird.f32 %v3669
    %v3879 = vand.u32 %v3875, 3
    %vm3880 = vcmp.lt.s32.totalorder %v3879, 2
    %vm3881 = vcmp.eq.s32.totalorder %v3879, 0
    %v3882 = vxor.u32 %v3877, 2147483648
    %v3883 = vsel %vm3881, %v3876, %v3882
    %vm3884 = vcmp.eq.s32.totalorder %v3879, 2
    %v3885 = vxor.u32 %v3876, 2147483648
    %v3886 = vsel %vm3884, %v3885, %v3877
    %v3887 = vsel %vm3880, %v3883, %v3886
    %v3888 = vsel %vm3878, nan, %v3887
    %v3889 = vadd.f32 %v3779, 1.0
    %v3890 = vmul.f32 %v3889, 0.5
    %v3891 = vsel %vm3783, 1.0, %v3890
    %v3892 = vsel %vm3782, %v3888, %v3891
    %v3893 = vmul.f32 %v3774, %v3662
    %v3894 = vmul.f32 %v3781, %v3662
    %v3895 = vsel %vm3783, %v3668, %v3894
    %v3896 = vsel %vm3782, %v3893, %v3895
    %v3897 = vsub.f32 0.0, %v3666
    %v3898 = vmul.f32 %v3897, %v3774
    %v3899 = vmul.f32 %v3666, %v3781
    %v3900 = vsel %vm3783, 0.0, %v3899
    %v3901 = vsel %vm3782, %v3898, %v3900
    %v3902 = vand.u32 2147483647, %v3670
    %vm3903 = vcmp.le.f32.partialorder %v3902, 0.7853982
    %vm3904 = vcmp.lt.s32.totalorder %v3670, 0
    %v3905 = vand.u32 %v3670, 2139095040
    %v3906 = vshrl.u32 %v3905, 23
    %v3907 = vsub.s32 %v3906, 127
    %v3908 = vand.u32 2147483647, %v3670
    %v3909 = vand.u32 %v3908, 8388607
    %v3910 = vor.u32 %v3909, 8388608
    %v3911 = vsub.s32 0, %v3910
    %v3912 = vadd.s32 %v3907, 1
    %vm3913 = vcmp.gt.s32.totalorder %v3912, 0
    %v3914 = vsel %vm3913, %v3912, 0
    %v3915 = vshrl.u32 %v3914, 5
    %v3916 = vand.u32 %v3914, 31
    %v3917 = vsub.s32 32, %v3916
    %v3918 = vshrl.u32 683565275, %v3917
    %v3919 = vshll.u32 683565275, %v3916
    %v3920 = vshrl.u32 2475754826, %v3917
    %v3921 = vor.u32 %v3919, %v3920
    %v3922 = vshll.u32 2475754826, %v3916
    %v3923 = vshrl.u32 2131351028, %v3917
    %v3924 = vor.u32 %v3922, %v3923
    %v3925 = vshll.u32 2131351028, %v3916
    %v3926 = vshrl.u32 2102212464, %v3917
    %v3927 = vor.u32 %v3925, %v3926
    %v3928 = vshll.u32 2102212464, %v3916
    %v3929 = vshrl.u32 920167782, %v3917
    %v3930 = vor.u32 %v3928, %v3929
    %v3931 = vshll.u32 920167782, %v3916
    %v3932 = vshrl.u32 1326507024, %v3917
    %v3933 = vor.u32 %v3931, %v3932
    %vm3934 = vcmp.lt.s32.totalorder %v3915, 1
    %vm3935 = vcmp.lt.s32.totalorder %v3915, 2
    %vm3936 = vcmp.lt.s32.totalorder %v3915, 3
    %vm3937 = vcmp.lt.s32.totalorder %v3915, 4
    %v3938 = vsel %vm3934, %v3918, %v3921
    %v3939 = vsel %vm3937, %v3927, 2102212464
    %v3940 = vsel %vm3936, %v3924, %v3939
    %v3941 = vsel %vm3935, %v3938, %v3940
    %v3942 = vsel %vm3934, %v3921, %v3924
    %v3943 = vsel %vm3937, %v3930, 920167782
    %v3944 = vsel %vm3936, %v3927, %v3943
    %v3945 = vsel %vm3935, %v3942, %v3944
    %v3946 = vsel %vm3934, %v3924, %v3927
    %v3947 = vsel %vm3937, %v3933, 1326507024
    %v3948 = vsel %vm3936, %v3930, %v3947
    %v3949 = vsel %vm3935, %v3946, %v3948
    %v3950 = vshll.u32 %v3910, 8
    %v3951 = vmul.u32.u64.compose %v3950, %v3949
    %v3952 = vextract.low.u32 %v3951
    %v3953 = vextract.high.u32 %v3951
    %v3954 = vmul.u32.u64.compose %v3950, %v3945
    %v3955 = vextract.low.u32 %v3954
    %v3956 = vextract.high.u32 %v3954
    %v3957 = vmul.u32 %v3950, %v3941
    %v3958 = vadd.s32 %v3953, %v3955
    %vm3959 = vc.u32 %v3953, %v3955
    %v3960 = vadd.s32 %v3956, 1
    %v3961 = vsel %vm3959, %v3960, %v3956
    %v3962 = vadd.s32 %v3957, %v3961
    %v3963 = vadd.s32 %v3962, 536870912
    %v3964 = vshrl.u32 %v3963, 30
    %v3965 = vshll.u32 %v3964, 30
    %v3966 = vsub.s32 %v3962, %v3965
    %vm3967 = vcmp.lt.s32.totalorder %v3966, 0
    %v3968 = vsub.s32 0, %v3966
    %v3969 = vsel %vm3967, %v3968, %v3966
    %v3970 = vclz %v3969
    %v3971 = vsub.s32 %v3970, 2
    %vm3972 = vcmp.gt.s32.totalorder 0, %v3971
    %v3973 = vsel %vm3972, 0, %v3971
    %v3974 = vsub.s32 32, %v3973
    %v3975 = vshll.u32 %v3966, %v3973
    %v3976 = vshrl.u32 %v3958, %v3974
    %v3977 = vor.u32 %v3975, %v3976
    %v3978 = vsub.s32 4294967266, %v3973
    %v3979 = vadd.s32 %v3978, 127
    %v3980 = vshll.u32 %v3979, 23
    %v3981 = vor.u32 4788187, %v3980
    %v3982 = vand.u32 2147483647, %v3981
    %v3984 = vcvt.s32.f32 %v3977
    %v3985 = vmul.f32 %v3984, %v3982
    %v3986 = vxor.u32 %v3985, 2147483648
    %v3987 = vsel %vm3904, %v3986, %v3985
    %v3988 = vsub.s32 4, %v3964
    %v3989 = vsel %vm3904, %v3988, %v3964
    %v3990 = vsel %vm3903, %v3670, %v3987
    %v3991 = vsel %vm3903, 0, %v3989
    %v3992 = vcosq.f32.pop %v3990
    %v3993 = vsinq.f32.pop %v3990
    %vm3994 = vweird.f32 %v3670
    %v3995 = vadd.s32 %v3991, 3
    %v3996 = vand.u32 %v3995, 3
    %vm3997 = vcmp.lt.s32.totalorder %v3996, 2
    %vm3998 = vcmp.eq.s32.totalorder %v3996, 0
    %v3999 = vxor.u32 %v3993, 2147483648
    %v4000 = vsel %vm3998, %v3992, %v3999
    %vm4001 = vcmp.eq.s32.totalorder %v3996, 2
    %v4002 = vxor.u32 %v3992, 2147483648
    %v4003 = vsel %vm4001, %v4002, %v3993
    %v4004 = vsel %vm3997, %v4000, %v4003
    %v4005 = vsel %vm3994, nan, %v4004
    %vm4006 = vcmp.lt.f32.partialorder %v3670, 16.0
    %v4007 = vmul.f32 %v3670, -2.0
    %v4008 = vmul.f32 %v4007, 1.442695
    %v4009 = vpow.pop %v4008
    %v4010 = vsel %vm4006, %v4009, 0.0
    %v4011 = vsub.f32 1.0, %v4010
    %v4012 = vmul.f32 %v4011, 0.5
    %vm4013 = vcmp.lt.f32.partialorder %v167, %v3654
    %vm4014 = vcmp.eq.f32.partialorder %v167, %v3654
    %vm4015 = vmor %vm4013, %vm4014
    %v4016 = vsel %vm4015, 0.0, %v3670
    %v4017 = vand.u32 2147483647, %v3670
    %vm4018 = vcmp.le.f32.partialorder %v4017, 0.7853982
    %vm4019 = vcmp.lt.s32.totalorder %v3670, 0
    %v4020 = vand.u32 %v3670, 2139095040
    %v4021 = vshrl.u32 %v4020, 23
    %v4022 = vsub.s32 %v4021, 127
    %v4023 = vand.u32 2147483647, %v3670
    %v4024 = vand.u32 %v4023, 8388607
    %v4025 = vor.u32 %v4024, 8388608
    %v4026 = vsub.s32 0, %v4025
    %v4027 = vadd.s32 %v4022, 1
    %vm4028 = vcmp.gt.s32.totalorder %v4027, 0
    %v4029 = vsel %vm4028, %v4027, 0
    %v4030 = vshrl.u32 %v4029, 5
    %v4031 = vand.u32 %v4029, 31
    %v4032 = vsub.s32 32, %v4031
    %v4033 = vshrl.u32 683565275, %v4032
    %v4034 = vshll.u32 683565275, %v4031
    %v4035 = vshrl.u32 2475754826, %v4032
    %v4036 = vor.u32 %v4034, %v4035
    %v4037 = vshll.u32 2475754826, %v4031
    %v4038 = vshrl.u32 2131351028, %v4032
    %v4039 = vor.u32 %v4037, %v4038
    %v4040 = vshll.u32 2131351028, %v4031
    %v4041 = vshrl.u32 2102212464, %v4032
    %v4042 = vor.u32 %v4040, %v4041
    %v4043 = vshll.u32 2102212464, %v4031
    %v4044 = vshrl.u32 920167782, %v4032
    %v4045 = vor.u32 %v4043, %v4044
    %v4046 = vshll.u32 920167782, %v4031
    %v4047 = vshrl.u32 1326507024, %v4032
    %v4048 = vor.u32 %v4046, %v4047
    %vm4049 = vcmp.lt.s32.totalorder %v4030, 1
    %vm4050 = vcmp.lt.s32.totalorder %v4030, 2
    %vm4051 = vcmp.lt.s32.totalorder %v4030, 3
    %vm4052 = vcmp.lt.s32.totalorder %v4030, 4
    %v4053 = vsel %vm4049, %v4033, %v4036
    %v4054 = vsel %vm4052, %v4042, 2102212464
    %v4055 = vsel %vm4051, %v4039, %v4054
    %v4056 = vsel %vm4050, %v4053, %v4055
    %v4057 = vsel %vm4049, %v4036, %v4039
    %v4058 = vsel %vm4052, %v4045, 920167782
    %v4059 = vsel %vm4051, %v4042, %v4058
    %v4060 = vsel %vm4050, %v4057, %v4059
    %v4061 = vsel %vm4049, %v4039, %v4042
    %v4062 = vsel %vm4052, %v4048, 1326507024
    %v4063 = vsel %vm4051, %v4045, %v4062
    %v4064 = vsel %vm4050, %v4061, %v4063
    %v4065 = vshll.u32 %v4025, 8
    %v4066 = vmul.u32.u64.compose %v4065, %v4064
    %v4067 = vextract.low.u32 %v4066
    %v4068 = vextract.high.u32 %v4066
    %v4069 = vmul.u32.u64.compose %v4065, %v4060
    %v4070 = vextract.low.u32 %v4069
    %v4071 = vextract.high.u32 %v4069
    %v4072 = vmul.u32 %v4065, %v4056
    %v4073 = vadd.s32 %v4068, %v4070
    %vm4074 = vc.u32 %v4068, %v4070
    %v4075 = vadd.s32 %v4071, 1
    %v4076 = vsel %vm4074, %v4075, %v4071
    %v4077 = vadd.s32 %v4072, %v4076
    %v4078 = vadd.s32 %v4077, 536870912
    %v4079 = vshrl.u32 %v4078, 30
    %v4080 = vshll.u32 %v4079, 30
    %v4081 = vsub.s32 %v4077, %v4080
    %vm4082 = vcmp.lt.s32.totalorder %v4081, 0
    %v4083 = vsub.s32 0, %v4081
    %v4084 = vsel %vm4082, %v4083, %v4081
    %v4085 = vclz %v4084
    %v4086 = vsub.s32 %v4085, 2
    %vm4087 = vcmp.gt.s32.totalorder 0, %v4086
    %v4088 = vsel %vm4087, 0, %v4086
    %v4089 = vsub.s32 32, %v4088
    %v4090 = vshll.u32 %v4081, %v4088
    %v4091 = vshrl.u32 %v4073, %v4089
    %v4092 = vor.u32 %v4090, %v4091
    %v4093 = vsub.s32 4294967266, %v4088
    %v4094 = vadd.s32 %v4093, 127
    %v4095 = vshll.u32 %v4094, 23
    %v4096 = vor.u32 4788187, %v4095
    %v4097 = vand.u32 2147483647, %v4096
    %v4099 = vcvt.s32.f32 %v4092
    %v4100 = vmul.f32 %v4099, %v4097
    %v4101 = vxor.u32 %v4100, 2147483648
    %v4102 = vsel %vm4019, %v4101, %v4100
    %v4103 = vsub.s32 4, %v4079
    %v4104 = vsel %vm4019, %v4103, %v4079
    %v4105 = vsel %vm4018, %v3670, %v4102
    %v4106 = vsel %vm4018, 0, %v4104
    %v4107 = vcosq.f32.pop %v4105
    %v4108 = vsinq.f32.pop %v4105
    %vm4109 = vweird.f32 %v3670
    %v4110 = vand.u32 %v4106, 3
    %vm4111 = vcmp.lt.s32.totalorder %v4110, 2
    %vm4112 = vcmp.eq.s32.totalorder %v4110, 0
    %v4113 = vxor.u32 %v4108, 2147483648
    %v4114 = vsel %vm4112, %v4107, %v4113
    %vm4115 = vcmp.eq.s32.totalorder %v4110, 2
    %v4116 = vxor.u32 %v4107, 2147483648
    %v4117 = vsel %vm4115, %v4116, %v4108
    %v4118 = vsel %vm4111, %v4114, %v4117
    %v4119 = vsel %vm4109, nan, %v4118
    %v4120 = vadd.f32 %v4010, 1.0
    %v4121 = vmul.f32 %v4120, 0.5
    %v4122 = vsel %vm4014, 1.0, %v4121
    %v4123 = vsel %vm4013, %v4119, %v4122
    %v4124 = vmul.f32 %v4005, %v3665
    %v4125 = vmul.f32 %v4012, %v3665
    %v4126 = vsel %vm4014, %v3668, %v4125
    %v4127 = vsel %vm4013, %v4124, %v4126
    %v4128 = vsub.f32 0.0, %v3667
    %v4129 = vmul.f32 %v4128, %v4005
    %v4130 = vmul.f32 %v3667, %v4012
    %v4131 = vsel %vm4014, 0.0, %v4130
    %v4132 = vsel %vm4013, %v4129, %v4131
    %v4133 = vadd.f32 %v3785, %v4016
    %vm4134 = vcmp.lt.f32.partialorder %v4133, 60.0
    %v4135 = vsub.f32 0.0, %v4133
    %v4136 = vmul.f32 %v4135, 1.442695
    %v4137 = vpow.pop %v4136
    %v4138 = vsel %vm4134, %v4137, 0.0
    %v4139 = vmul.f32 %v3892, %v4123
    %v4140 = vmul.f32 %v3892, %v4127
    %v4141 = vmul.f32 %v3892, %v4132
    %v4142 = vmul.f32 %v4123, %v3896
    %v4143 = vmul.f32 %v4123, %v3901
    %v4144 = vmul.f32 %v3901, %v4127
    %v4145 = vmul.f32 %v3901, %v4132
    %v4146 = vmul.f32 %v3896, %v4127
    %v4147 = vmul.f32 %v3896, %v4132
    %v4148 = vadd.f32 %v3640, %v3641
    %v4149 = vmul.f32 %v3640, %v3638
    %v4150 = vmul.f32 %v3640, %v3641
    %v4151 = vmul.f32 %v3641, %v3641
    %v4152 = vsub.f32 %v4138, %v4139
    %v4153 = vmul.f32 %v4150, 2.0
    %v4154 = vmul.f32 %v4153, %v4152
    %v4155 = vsub.f32 %v4139, %v4154
    %v4156 = vmul.f32 %v4149, %v4145
    %v4157 = vsub.f32 %v4155, %v4156
    %v4158 = vmul.f32 %v168, %v4151
    %v4159 = vmul.f32 %v4158, %v4146
    %v4160 = vsub.f32 %v4157, %v4159
    %v4161 = vmul.f32 %v168, %v4140
    %v4162 = vsub.f32 %v4161, %v4143
    %v4163 = vstv %s3622
    %v4164 = vmul.f32 %v4162, %v4163
    %v4165 = vmul.f32 %v4148, %v4152
    %v4166 = vmul.f32 %v3638, %v4145
    %v4167 = vadd.f32 %v4165, %v4166
    %v4168 = vmul.f32 %v168, %v3641
    %v4169 = vmul.f32 %v4168, %v4146
    %v4170 = vadd.f32 %v4167, %v4169
    %v4171 = vmul.f32 %v4170, %v4163
    %v4172 = vsub.f32 0.0, %v4171
    %v4173 = vmul.f32 %v168, %v4142
    %v4174 = vsub.f32 %v4141, %v4173
    %v4175 = vmul.f32 %v4174, %v4163
    %v4176 = vmul.f32 %v794, %v4152
    %v4177 = vadd.f32 %v4176, %v4145
    %v4178 = vmul.f32 %v797, %v4146
    %v4179 = vadd.f32 %v4177, %v4178
    %v4180 = vstv %s3623
    %v4181 = vmul.f32 %v4179, %v4180
    %v4182 = vsub.f32 0.0, %v4181
    %v4183 = vmul.f32 %v4149, %v4141
    %v4184 = vmul.f32 %v4151, %v4142
    %v4185 = vsub.f32 %v4183, %v4184
    %v4186 = vstv %s3620
    %v4187 = vmul.f32 %v4185, %v4186
    %v4188 = vmul.f32 %v3638, %v4141
    %v4189 = vmul.f32 %v3641, %v4142
    %v4190 = vsub.f32 %v4188, %v4189
    %v4191 = vsub.f32 0.0, %v4147
    %v4192 = vmul.f32 %v4151, %v4140
    %v4193 = vmul.f32 %v4149, %v4143
    %v4194 = vsub.f32 %v4192, %v4193
    %v4195 = vmul.f32 %v4194, %v4186
    %v4196 = vsub.f32 0.0, %v4144
    %v4197 = vmul.f32 %v3641, %v4140
    %v4198 = vmul.f32 %v3638, %v4143
    %v4199 = vsub.f32 %v4197, %v4198
    %v4200 = vmul.f32 %v4149, 2.0
    %v4201 = vmul.f32 %v4200, %v4151
    %v4202 = vmul.f32 %v4201, %v4152
    %v4203 = vmul.f32 %v4149, %v4149
    %v4204 = vmul.f32 %v4203, %v4145
    %v4205 = vadd.f32 %v4202, %v4204
    %v4206 = vmul.f32 %v4151, %v4151
    %v4207 = vmul.f32 %v4206, %v4146
    %v4208 = vadd.f32 %v4205, %v4207
    %v4209 = vstv %s3621
    %v4210 = vmul.f32 %v4208, %v4209
    %v4211 = vsub.f32 0.0, %v4210
    %v4212 = vmul.f32 %v3638, %v3641
    %v4213 = vmul.f32 %v4212, %v4148
    %v4214 = vmul.f32 %v4213, %v4152
    %v4215 = vmul.f32 %v4149, %v3638
    %v4216 = vmul.f32 %v4215, %v4145
    %v4217 = vadd.f32 %v4214, %v4216
    %v4218 = vmul.f32 %v3641, %v4151
    %v4219 = vmul.f32 %v4218, %v4146
    %v4220 = vadd.f32 %v4217, %v4219
    %v4221 = vmul.f32 %v4220, %v4186
    %v4222 = vsub.f32 0.0, %v4221
    %v4223 = vmul.f32 %v770, %v4222
    %v4224 = vmul.f32 %v770, %v4199
    %v4225 = vsub.f32 %v4139, %v4160
    %v4226 = vmul.f32 %v4225, 2.0
    %v4227 = vadd.f32 %v4138, %v4226
    %v4228 = vmul.f32 %v770, %v4190
    %v4229 = vmul.f32 %v770, %v4172
    %v4230 = vmul.f32 %v3614, %v4160
    %v4231 = vmul.f32 %v3615, %v4187
    %v4232 = vadd.f32 %v4230, %v4231
    %v4233 = vmul.f32 %v3616, %v4223
    %v4234 = vadd.f32 %v4232, %v4233
    %v4235 = vmul.f32 %v3617, %v4195
    %v4236 = vadd.f32 %v4234, %v4235
    %v4237 = vmul.f32 %v3618, %v4211
    %v4238 = vadd.f32 %v4236, %v4237
    %v4239 = vmul.f32 %v3614, %v4164
    %v4240 = vmul.f32 %v3615, %v4139
    %v4241 = vadd.f32 %v4239, %v4240
    %v4242 = vmul.f32 %v3616, %v4224
    %v4243 = vadd.f32 %v4241, %v4242
    %v4244 = vmul.f32 %v3617, %v4196
    %v4245 = vadd.f32 %v4243, %v4244
    %v4246 = vmul.f32 %v3618, %v4195
    %v4247 = vadd.f32 %v4245, %v4246
    %v4248 = vmul.f32 %v3614, %v4172
    %v4249 = vmul.f32 %v3615, %v4190
    %v4250 = vadd.f32 %v4248, %v4249
    %v4251 = vmul.f32 %v3616, %v4227
    %v4252 = vadd.f32 %v4250, %v4251
    %v4253 = vmul.f32 %v3617, %v4199
    %v4254 = vadd.f32 %v4252, %v4253
    %v4255 = vmul.f32 %v3618, %v4222
    %v4256 = vadd.f32 %v4254, %v4255
    %v4257 = vmul.f32 %v3614, %v4175
    %v4258 = vmul.f32 %v3615, %v4191
    %v4259 = vadd.f32 %v4257, %v4258
    %v4260 = vmul.f32 %v3616, %v4228
    %v4261 = vadd.f32 %v4259, %v4260
    %v4262 = vmul.f32 %v3617, %v4139
    %v4263 = vadd.f32 %v4261, %v4262
    %v4264 = vmul.f32 %v3618, %v4187
    %v4265 = vadd.f32 %v4263, %v4264
    %v4266 = vmul.f32 %v3614, %v4182
    %v4267 = vmul.f32 %v3615, %v4175
    %v4268 = vadd.f32 %v4266, %v4267
    %v4269 = vmul.f32 %v3616, %v4229
    %v4270 = vadd.f32 %v4268, %v4269
    %v4271 = vmul.f32 %v3617, %v4164
    %v4272 = vadd.f32 %v4270, %v4271
    %v4273 = vmul.f32 %v3618, %v4160
    %v4274 = vadd.f32 %v4272, %v4273
    %v4275 = vand.u32 2147483647, %v4238
    %v4276 = vand.u32 2147483647, %v4247
    %v4277 = vmax.f32 %v4275, %v4276
    %v4278 = vand.u32 2147483647, %v4256
    %v4279 = vand.u32 2147483647, %v4265
    %v4280 = vmax.f32 %v4278, %v4279
    %v4281 = vmax.f32 %v4277, %v4280
    %v4282 = vand.u32 2147483647, %v4274
    %v4283 = vmax.f32 %v4281, %v4282
    %vm4284 = vcmp.lt.f32.partialorder %v4283, 1e-30
    %v4285 = vsel %vm4284, 1.0, %v4283
    %v4286 = vrcp.pop %v4285
    %v4287 = vmul.f32 %v4285, %v4286
    %v4288 = vsub.f32 2.0, %v4287
    %v4289 = vmul.f32 %v4286, %v4288
    %v4290 = vmul.f32 %v4238, %v4289
    %v4291 = vmul.f32 %v4247, %v4289
    %v4292 = vmul.f32 %v4256, %v4289
    %v4293 = vmul.f32 %v4265, %v4289
    %v4294 = vmul.f32 %v4274, %v4289
    %s4295 = sld [smem:[#allocation2]]
    %s4296 = sld [smem:[#allocation6]]
    %s4297 = sld [smem:[#allocation7]]
    %s4298 = sld [smem:[#allocation12]]
    %s4299 = sld [smem:[#allocation13]]
    %s4300 = sld [smem:[#allocation9]]
    %v4301 = vstv %s4300
    %v4302 = vmul.f32 %v138, %v4301
    %s4303 = sld [smem:[#allocation10]]
    %v4304 = vstv %s4303
    %v4305 = vmul.f32 %v138, %v4304
    %s4306 = sld [smem:[#allocation4]]
    %v4307 = vstv %s4306
    %v4308 = vmul.f32 %v4307, %v139
    %v4309 = vmul.f32 %v4308, 2.0
    %v4310 = vmul.f32 %v4309, %v4308
    %4312 = vset.pattern.permute.xlu0 0
    %4313 = vperm.xlu0 %4312, %v4310
    %v4314 = vpop.permute.xlu0 %4313
    %v4316 = vmul.f32 %v4314, %v168
    %v4317 = vsub.f32 %v4316, 1.0
    %4319 = vset.pattern.permute.xlu0 0
    %4320 = vperm.xlu0 %4319, %v4302
    %v4321 = vpop.permute.xlu0 %4320
    %v4323 = vadd.f32 %v167, %v4321
    %v4324 = vsub.f32 %v167, %v4321
    %v4325 = vand.u32 2147483647, %v4324
    %v4326 = vmul.f32 %v4323, %v4325
    %4328 = vset.pattern.permute.xlu0 0
    %4329 = vperm.xlu0 %4328, %v4305
    %v4330 = vpop.permute.xlu0 %4329
    %v4332 = vadd.f32 %v167, %v4330
    %v4333 = vsub.f32 %v167, %v4330
    %v4334 = vand.u32 2147483647, %v4333
    %v4335 = vmul.f32 %v4332, %v4334
    %vm4336 = vcmp.eq.f32.partialorder %v4326, 0.0
    %v4337 = vsel %vm4336, 1.0, %v4326
    %v4338 = vrsqrt.pop %v4337
    %vm4339 = vcmp.eq.f32.partialorder %v4335, 0.0
    %v4340 = vsel %vm4339, 1.0, %v4335
    %v4341 = vrsqrt.pop %v4340
    %v4342 = vmul.f32 %v4326, %v4338
    %v4343 = vmul.f32 %v4335, %v4341
    %v4344 = vstv %s4295
    %v4345 = vmul.f32 %v4342, %v4344
    %v4346 = vmul.f32 %v4343, %v4344
    %v4347 = vand.u32 2147483647, %v4345
    %vm4348 = vcmp.le.f32.partialorder %v4347, 0.7853982
    %vm4349 = vcmp.lt.s32.totalorder %v4345, 0
    %v4350 = vand.u32 %v4345, 2139095040
    %v4351 = vshrl.u32 %v4350, 23
    %v4352 = vsub.s32 %v4351, 127
    %v4353 = vand.u32 2147483647, %v4345
    %v4354 = vand.u32 %v4353, 8388607
    %v4355 = vor.u32 %v4354, 8388608
    %v4356 = vsub.s32 0, %v4355
    %v4357 = vadd.s32 %v4352, 1
    %vm4358 = vcmp.gt.s32.totalorder %v4357, 0
    %v4359 = vsel %vm4358, %v4357, 0
    %v4360 = vshrl.u32 %v4359, 5
    %v4361 = vand.u32 %v4359, 31
    %v4362 = vsub.s32 32, %v4361
    %v4363 = vshrl.u32 683565275, %v4362
    %v4364 = vshll.u32 683565275, %v4361
    %v4365 = vshrl.u32 2475754826, %v4362
    %v4366 = vor.u32 %v4364, %v4365
    %v4367 = vshll.u32 2475754826, %v4361
    %v4368 = vshrl.u32 2131351028, %v4362
    %v4369 = vor.u32 %v4367, %v4368
    %v4370 = vshll.u32 2131351028, %v4361
    %v4371 = vshrl.u32 2102212464, %v4362
    %v4372 = vor.u32 %v4370, %v4371
    %v4373 = vshll.u32 2102212464, %v4361
    %v4374 = vshrl.u32 920167782, %v4362
    %v4375 = vor.u32 %v4373, %v4374
    %v4376 = vshll.u32 920167782, %v4361
    %v4377 = vshrl.u32 1326507024, %v4362
    %v4378 = vor.u32 %v4376, %v4377
    %vm4379 = vcmp.lt.s32.totalorder %v4360, 1
    %vm4380 = vcmp.lt.s32.totalorder %v4360, 2
    %vm4381 = vcmp.lt.s32.totalorder %v4360, 3
    %vm4382 = vcmp.lt.s32.totalorder %v4360, 4
    %v4383 = vsel %vm4379, %v4363, %v4366
    %v4384 = vsel %vm4382, %v4372, 2102212464
    %v4385 = vsel %vm4381, %v4369, %v4384
    %v4386 = vsel %vm4380, %v4383, %v4385
    %v4387 = vsel %vm4379, %v4366, %v4369
    %v4388 = vsel %vm4382, %v4375, 920167782
    %v4389 = vsel %vm4381, %v4372, %v4388
    %v4390 = vsel %vm4380, %v4387, %v4389
    %v4391 = vsel %vm4379, %v4369, %v4372
    %v4392 = vsel %vm4382, %v4378, 1326507024
    %v4393 = vsel %vm4381, %v4375, %v4392
    %v4394 = vsel %vm4380, %v4391, %v4393
    %v4395 = vshll.u32 %v4355, 8
    %v4396 = vmul.u32.u64.compose %v4395, %v4394
    %v4397 = vextract.low.u32 %v4396
    %v4398 = vextract.high.u32 %v4396
    %v4399 = vmul.u32.u64.compose %v4395, %v4390
    %v4400 = vextract.low.u32 %v4399
    %v4401 = vextract.high.u32 %v4399
    %v4402 = vmul.u32 %v4395, %v4386
    %v4403 = vadd.s32 %v4398, %v4400
    %vm4404 = vc.u32 %v4398, %v4400
    %v4405 = vadd.s32 %v4401, 1
    %v4406 = vsel %vm4404, %v4405, %v4401
    %v4407 = vadd.s32 %v4402, %v4406
    %v4408 = vadd.s32 %v4407, 536870912
    %v4409 = vshrl.u32 %v4408, 30
    %v4410 = vshll.u32 %v4409, 30
    %v4411 = vsub.s32 %v4407, %v4410
    %vm4412 = vcmp.lt.s32.totalorder %v4411, 0
    %v4413 = vsub.s32 0, %v4411
    %v4414 = vsel %vm4412, %v4413, %v4411
    %v4415 = vclz %v4414
    %v4416 = vsub.s32 %v4415, 2
    %vm4417 = vcmp.gt.s32.totalorder 0, %v4416
    %v4418 = vsel %vm4417, 0, %v4416
    %v4419 = vsub.s32 32, %v4418
    %v4420 = vshll.u32 %v4411, %v4418
    %v4421 = vshrl.u32 %v4403, %v4419
    %v4422 = vor.u32 %v4420, %v4421
    %v4423 = vsub.s32 4294967266, %v4418
    %v4424 = vadd.s32 %v4423, 127
    %v4425 = vshll.u32 %v4424, 23
    %v4426 = vor.u32 4788187, %v4425
    %v4427 = vand.u32 2147483647, %v4426
    %v4429 = vcvt.s32.f32 %v4422
    %v4430 = vmul.f32 %v4429, %v4427
    %v4431 = vxor.u32 %v4430, 2147483648
    %v4432 = vsel %vm4349, %v4431, %v4430
    %v4433 = vsub.s32 4, %v4409
    %v4434 = vsel %vm4349, %v4433, %v4409
    %v4435 = vsel %vm4348, %v4345, %v4432
    %v4436 = vsel %vm4348, 0, %v4434
    %v4437 = vcosq.f32.pop %v4435
    %v4438 = vsinq.f32.pop %v4435
    %vm4439 = vweird.f32 %v4345
    %v4440 = vadd.s32 %v4436, 3
    %v4441 = vand.u32 %v4440, 3
    %vm4442 = vcmp.lt.s32.totalorder %v4441, 2
    %vm4443 = vcmp.eq.s32.totalorder %v4441, 0
    %v4444 = vxor.u32 %v4438, 2147483648
    %v4445 = vsel %vm4443, %v4437, %v4444
    %vm4446 = vcmp.eq.s32.totalorder %v4441, 2
    %v4447 = vxor.u32 %v4437, 2147483648
    %v4448 = vsel %vm4446, %v4447, %v4438
    %v4449 = vsel %vm4442, %v4445, %v4448
    %v4450 = vsel %vm4439, nan, %v4449
    %vm4451 = vcmp.lt.f32.partialorder %v4345, 16.0
    %v4452 = vmul.f32 %v4345, -2.0
    %v4453 = vmul.f32 %v4452, 1.442695
    %v4454 = vpow.pop %v4453
    %v4455 = vsel %vm4451, %v4454, 0.0
    %v4456 = vsub.f32 1.0, %v4455
    %v4457 = vmul.f32 %v4456, 0.5
    %vm4458 = vcmp.lt.f32.partialorder %v167, %v4321
    %vm4459 = vcmp.eq.f32.partialorder %v167, %v4321
    %vm4460 = vmor %vm4458, %vm4459
    %v4461 = vsel %vm4460, 0.0, %v4345
    %v4462 = vand.u32 2147483647, %v4345
    %vm4463 = vcmp.le.f32.partialorder %v4462, 0.7853982
    %vm4464 = vcmp.lt.s32.totalorder %v4345, 0
    %v4465 = vand.u32 %v4345, 2139095040
    %v4466 = vshrl.u32 %v4465, 23
    %v4467 = vsub.s32 %v4466, 127
    %v4468 = vand.u32 2147483647, %v4345
    %v4469 = vand.u32 %v4468, 8388607
    %v4470 = vor.u32 %v4469, 8388608
    %v4471 = vsub.s32 0, %v4470
    %v4472 = vadd.s32 %v4467, 1
    %vm4473 = vcmp.gt.s32.totalorder %v4472, 0
    %v4474 = vsel %vm4473, %v4472, 0
    %v4475 = vshrl.u32 %v4474, 5
    %v4476 = vand.u32 %v4474, 31
    %v4477 = vsub.s32 32, %v4476
    %v4478 = vshrl.u32 683565275, %v4477
    %v4479 = vshll.u32 683565275, %v4476
    %v4480 = vshrl.u32 2475754826, %v4477
    %v4481 = vor.u32 %v4479, %v4480
    %v4482 = vshll.u32 2475754826, %v4476
    %v4483 = vshrl.u32 2131351028, %v4477
    %v4484 = vor.u32 %v4482, %v4483
    %v4485 = vshll.u32 2131351028, %v4476
    %v4486 = vshrl.u32 2102212464, %v4477
    %v4487 = vor.u32 %v4485, %v4486
    %v4488 = vshll.u32 2102212464, %v4476
    %v4489 = vshrl.u32 920167782, %v4477
    %v4490 = vor.u32 %v4488, %v4489
    %v4491 = vshll.u32 920167782, %v4476
    %v4492 = vshrl.u32 1326507024, %v4477
    %v4493 = vor.u32 %v4491, %v4492
    %vm4494 = vcmp.lt.s32.totalorder %v4475, 1
    %vm4495 = vcmp.lt.s32.totalorder %v4475, 2
    %vm4496 = vcmp.lt.s32.totalorder %v4475, 3
    %vm4497 = vcmp.lt.s32.totalorder %v4475, 4
    %v4498 = vsel %vm4494, %v4478, %v4481
    %v4499 = vsel %vm4497, %v4487, 2102212464
    %v4500 = vsel %vm4496, %v4484, %v4499
    %v4501 = vsel %vm4495, %v4498, %v4500
    %v4502 = vsel %vm4494, %v4481, %v4484
    %v4503 = vsel %vm4497, %v4490, 920167782
    %v4504 = vsel %vm4496, %v4487, %v4503
    %v4505 = vsel %vm4495, %v4502, %v4504
    %v4506 = vsel %vm4494, %v4484, %v4487
    %v4507 = vsel %vm4497, %v4493, 1326507024
    %v4508 = vsel %vm4496, %v4490, %v4507
    %v4509 = vsel %vm4495, %v4506, %v4508
    %v4510 = vshll.u32 %v4470, 8
    %v4511 = vmul.u32.u64.compose %v4510, %v4509
    %v4512 = vextract.low.u32 %v4511
    %v4513 = vextract.high.u32 %v4511
    %v4514 = vmul.u32.u64.compose %v4510, %v4505
    %v4515 = vextract.low.u32 %v4514
    %v4516 = vextract.high.u32 %v4514
    %v4517 = vmul.u32 %v4510, %v4501
    %v4518 = vadd.s32 %v4513, %v4515
    %vm4519 = vc.u32 %v4513, %v4515
    %v4520 = vadd.s32 %v4516, 1
    %v4521 = vsel %vm4519, %v4520, %v4516
    %v4522 = vadd.s32 %v4517, %v4521
    %v4523 = vadd.s32 %v4522, 536870912
    %v4524 = vshrl.u32 %v4523, 30
    %v4525 = vshll.u32 %v4524, 30
    %v4526 = vsub.s32 %v4522, %v4525
    %vm4527 = vcmp.lt.s32.totalorder %v4526, 0
    %v4528 = vsub.s32 0, %v4526
    %v4529 = vsel %vm4527, %v4528, %v4526
    %v4530 = vclz %v4529
    %v4531 = vsub.s32 %v4530, 2
    %vm4532 = vcmp.gt.s32.totalorder 0, %v4531
    %v4533 = vsel %vm4532, 0, %v4531
    %v4534 = vsub.s32 32, %v4533
    %v4535 = vshll.u32 %v4526, %v4533
    %v4536 = vshrl.u32 %v4518, %v4534
    %v4537 = vor.u32 %v4535, %v4536
    %v4538 = vsub.s32 4294967266, %v4533
    %v4539 = vadd.s32 %v4538, 127
    %v4540 = vshll.u32 %v4539, 23
    %v4541 = vor.u32 4788187, %v4540
    %v4542 = vand.u32 2147483647, %v4541
    %v4544 = vcvt.s32.f32 %v4537
    %v4545 = vmul.f32 %v4544, %v4542
    %v4546 = vxor.u32 %v4545, 2147483648
    %v4547 = vsel %vm4464, %v4546, %v4545
    %v4548 = vsub.s32 4, %v4524
    %v4549 = vsel %vm4464, %v4548, %v4524
    %v4550 = vsel %vm4463, %v4345, %v4547
    %v4551 = vsel %vm4463, 0, %v4549
    %v4552 = vcosq.f32.pop %v4550
    %v4553 = vsinq.f32.pop %v4550
    %vm4554 = vweird.f32 %v4345
    %v4555 = vand.u32 %v4551, 3
    %vm4556 = vcmp.lt.s32.totalorder %v4555, 2
    %vm4557 = vcmp.eq.s32.totalorder %v4555, 0
    %v4558 = vxor.u32 %v4553, 2147483648
    %v4559 = vsel %vm4557, %v4552, %v4558
    %vm4560 = vcmp.eq.s32.totalorder %v4555, 2
    %v4561 = vxor.u32 %v4552, 2147483648
    %v4562 = vsel %vm4560, %v4561, %v4553
    %v4563 = vsel %vm4556, %v4559, %v4562
    %v4564 = vsel %vm4554, nan, %v4563
    %v4565 = vadd.f32 %v4455, 1.0
    %v4566 = vmul.f32 %v4565, 0.5
    %v4567 = vsel %vm4459, 1.0, %v4566
    %v4568 = vsel %vm4458, %v4564, %v4567
    %v4569 = vmul.f32 %v4450, %v4338
    %v4570 = vmul.f32 %v4457, %v4338
    %v4571 = vsel %vm4459, %v4344, %v4570
    %v4572 = vsel %vm4458, %v4569, %v4571
    %v4573 = vsub.f32 0.0, %v4342
    %v4574 = vmul.f32 %v4573, %v4450
    %v4575 = vmul.f32 %v4342, %v4457
    %v4576 = vsel %vm4459, 0.0, %v4575
    %v4577 = vsel %vm4458, %v4574, %v4576
    %v4578 = vand.u32 2147483647, %v4346
    %vm4579 = vcmp.le.f32.partialorder %v4578, 0.7853982
    %vm4580 = vcmp.lt.s32.totalorder %v4346, 0
    %v4581 = vand.u32 %v4346, 2139095040
    %v4582 = vshrl.u32 %v4581, 23
    %v4583 = vsub.s32 %v4582, 127
    %v4584 = vand.u32 2147483647, %v4346
    %v4585 = vand.u32 %v4584, 8388607
    %v4586 = vor.u32 %v4585, 8388608
    %v4587 = vsub.s32 0, %v4586
    %v4588 = vadd.s32 %v4583, 1
    %vm4589 = vcmp.gt.s32.totalorder %v4588, 0
    %v4590 = vsel %vm4589, %v4588, 0
    %v4591 = vshrl.u32 %v4590, 5
    %v4592 = vand.u32 %v4590, 31
    %v4593 = vsub.s32 32, %v4592
    %v4594 = vshrl.u32 683565275, %v4593
    %v4595 = vshll.u32 683565275, %v4592
    %v4596 = vshrl.u32 2475754826, %v4593
    %v4597 = vor.u32 %v4595, %v4596
    %v4598 = vshll.u32 2475754826, %v4592
    %v4599 = vshrl.u32 2131351028, %v4593
    %v4600 = vor.u32 %v4598, %v4599
    %v4601 = vshll.u32 2131351028, %v4592
    %v4602 = vshrl.u32 2102212464, %v4593
    %v4603 = vor.u32 %v4601, %v4602
    %v4604 = vshll.u32 2102212464, %v4592
    %v4605 = vshrl.u32 920167782, %v4593
    %v4606 = vor.u32 %v4604, %v4605
    %v4607 = vshll.u32 920167782, %v4592
    %v4608 = vshrl.u32 1326507024, %v4593
    %v4609 = vor.u32 %v4607, %v4608
    %vm4610 = vcmp.lt.s32.totalorder %v4591, 1
    %vm4611 = vcmp.lt.s32.totalorder %v4591, 2
    %vm4612 = vcmp.lt.s32.totalorder %v4591, 3
    %vm4613 = vcmp.lt.s32.totalorder %v4591, 4
    %v4614 = vsel %vm4610, %v4594, %v4597
    %v4615 = vsel %vm4613, %v4603, 2102212464
    %v4616 = vsel %vm4612, %v4600, %v4615
    %v4617 = vsel %vm4611, %v4614, %v4616
    %v4618 = vsel %vm4610, %v4597, %v4600
    %v4619 = vsel %vm4613, %v4606, 920167782
    %v4620 = vsel %vm4612, %v4603, %v4619
    %v4621 = vsel %vm4611, %v4618, %v4620
    %v4622 = vsel %vm4610, %v4600, %v4603
    %v4623 = vsel %vm4613, %v4609, 1326507024
    %v4624 = vsel %vm4612, %v4606, %v4623
    %v4625 = vsel %vm4611, %v4622, %v4624
    %v4626 = vshll.u32 %v4586, 8
    %v4627 = vmul.u32.u64.compose %v4626, %v4625
    %v4628 = vextract.low.u32 %v4627
    %v4629 = vextract.high.u32 %v4627
    %v4630 = vmul.u32.u64.compose %v4626, %v4621
    %v4631 = vextract.low.u32 %v4630
    %v4632 = vextract.high.u32 %v4630
    %v4633 = vmul.u32 %v4626, %v4617
    %v4634 = vadd.s32 %v4629, %v4631
    %vm4635 = vc.u32 %v4629, %v4631
    %v4636 = vadd.s32 %v4632, 1
    %v4637 = vsel %vm4635, %v4636, %v4632
    %v4638 = vadd.s32 %v4633, %v4637
    %v4639 = vadd.s32 %v4638, 536870912
    %v4640 = vshrl.u32 %v4639, 30
    %v4641 = vshll.u32 %v4640, 30
    %v4642 = vsub.s32 %v4638, %v4641
    %vm4643 = vcmp.lt.s32.totalorder %v4642, 0
    %v4644 = vsub.s32 0, %v4642
    %v4645 = vsel %vm4643, %v4644, %v4642
    %v4646 = vclz %v4645
    %v4647 = vsub.s32 %v4646, 2
    %vm4648 = vcmp.gt.s32.totalorder 0, %v4647
    %v4649 = vsel %vm4648, 0, %v4647
    %v4650 = vsub.s32 32, %v4649
    %v4651 = vshll.u32 %v4642, %v4649
    %v4652 = vshrl.u32 %v4634, %v4650
    %v4653 = vor.u32 %v4651, %v4652
    %v4654 = vsub.s32 4294967266, %v4649
    %v4655 = vadd.s32 %v4654, 127
    %v4656 = vshll.u32 %v4655, 23
    %v4657 = vor.u32 4788187, %v4656
    %v4658 = vand.u32 2147483647, %v4657
    %v4660 = vcvt.s32.f32 %v4653
    %v4661 = vmul.f32 %v4660, %v4658
    %v4662 = vxor.u32 %v4661, 2147483648
    %v4663 = vsel %vm4580, %v4662, %v4661
    %v4664 = vsub.s32 4, %v4640
    %v4665 = vsel %vm4580, %v4664, %v4640
    %v4666 = vsel %vm4579, %v4346, %v4663
    %v4667 = vsel %vm4579, 0, %v4665
    %v4668 = vcosq.f32.pop %v4666
    %v4669 = vsinq.f32.pop %v4666
    %vm4670 = vweird.f32 %v4346
    %v4671 = vadd.s32 %v4667, 3
    %v4672 = vand.u32 %v4671, 3
    %vm4673 = vcmp.lt.s32.totalorder %v4672, 2
    %vm4674 = vcmp.eq.s32.totalorder %v4672, 0
    %v4675 = vxor.u32 %v4669, 2147483648
    %v4676 = vsel %vm4674, %v4668, %v4675
    %vm4677 = vcmp.eq.s32.totalorder %v4672, 2
    %v4678 = vxor.u32 %v4668, 2147483648
    %v4679 = vsel %vm4677, %v4678, %v4669
    %v4680 = vsel %vm4673, %v4676, %v4679
    %v4681 = vsel %vm4670, nan, %v4680
    %vm4682 = vcmp.lt.f32.partialorder %v4346, 16.0
    %v4683 = vmul.f32 %v4346, -2.0
    %v4684 = vmul.f32 %v4683, 1.442695
    %v4685 = vpow.pop %v4684
    %v4686 = vsel %vm4682, %v4685, 0.0
    %v4687 = vsub.f32 1.0, %v4686
    %v4688 = vmul.f32 %v4687, 0.5
    %vm4689 = vcmp.lt.f32.partialorder %v167, %v4330
    %vm4690 = vcmp.eq.f32.partialorder %v167, %v4330
    %vm4691 = vmor %vm4689, %vm4690
    %v4692 = vsel %vm4691, 0.0, %v4346
    %v4693 = vand.u32 2147483647, %v4346
    %vm4694 = vcmp.le.f32.partialorder %v4693, 0.7853982
    %vm4695 = vcmp.lt.s32.totalorder %v4346, 0
    %v4696 = vand.u32 %v4346, 2139095040
    %v4697 = vshrl.u32 %v4696, 23
    %v4698 = vsub.s32 %v4697, 127
    %v4699 = vand.u32 2147483647, %v4346
    %v4700 = vand.u32 %v4699, 8388607
    %v4701 = vor.u32 %v4700, 8388608
    %v4702 = vsub.s32 0, %v4701
    %v4703 = vadd.s32 %v4698, 1
    %vm4704 = vcmp.gt.s32.totalorder %v4703, 0
    %v4705 = vsel %vm4704, %v4703, 0
    %v4706 = vshrl.u32 %v4705, 5
    %v4707 = vand.u32 %v4705, 31
    %v4708 = vsub.s32 32, %v4707
    %v4709 = vshrl.u32 683565275, %v4708
    %v4710 = vshll.u32 683565275, %v4707
    %v4711 = vshrl.u32 2475754826, %v4708
    %v4712 = vor.u32 %v4710, %v4711
    %v4713 = vshll.u32 2475754826, %v4707
    %v4714 = vshrl.u32 2131351028, %v4708
    %v4715 = vor.u32 %v4713, %v4714
    %v4716 = vshll.u32 2131351028, %v4707
    %v4717 = vshrl.u32 2102212464, %v4708
    %v4718 = vor.u32 %v4716, %v4717
    %v4719 = vshll.u32 2102212464, %v4707
    %v4720 = vshrl.u32 920167782, %v4708
    %v4721 = vor.u32 %v4719, %v4720
    %v4722 = vshll.u32 920167782, %v4707
    %v4723 = vshrl.u32 1326507024, %v4708
    %v4724 = vor.u32 %v4722, %v4723
    %vm4725 = vcmp.lt.s32.totalorder %v4706, 1
    %vm4726 = vcmp.lt.s32.totalorder %v4706, 2
    %vm4727 = vcmp.lt.s32.totalorder %v4706, 3
    %vm4728 = vcmp.lt.s32.totalorder %v4706, 4
    %v4729 = vsel %vm4725, %v4709, %v4712
    %v4730 = vsel %vm4728, %v4718, 2102212464
    %v4731 = vsel %vm4727, %v4715, %v4730
    %v4732 = vsel %vm4726, %v4729, %v4731
    %v4733 = vsel %vm4725, %v4712, %v4715
    %v4734 = vsel %vm4728, %v4721, 920167782
    %v4735 = vsel %vm4727, %v4718, %v4734
    %v4736 = vsel %vm4726, %v4733, %v4735
    %v4737 = vsel %vm4725, %v4715, %v4718
    %v4738 = vsel %vm4728, %v4724, 1326507024
    %v4739 = vsel %vm4727, %v4721, %v4738
    %v4740 = vsel %vm4726, %v4737, %v4739
    %v4741 = vshll.u32 %v4701, 8
    %v4742 = vmul.u32.u64.compose %v4741, %v4740
    %v4743 = vextract.low.u32 %v4742
    %v4744 = vextract.high.u32 %v4742
    %v4745 = vmul.u32.u64.compose %v4741, %v4736
    %v4746 = vextract.low.u32 %v4745
    %v4747 = vextract.high.u32 %v4745
    %v4748 = vmul.u32 %v4741, %v4732
    %v4749 = vadd.s32 %v4744, %v4746
    %vm4750 = vc.u32 %v4744, %v4746
    %v4751 = vadd.s32 %v4747, 1
    %v4752 = vsel %vm4750, %v4751, %v4747
    %v4753 = vadd.s32 %v4748, %v4752
    %v4754 = vadd.s32 %v4753, 536870912
    %v4755 = vshrl.u32 %v4754, 30
    %v4756 = vshll.u32 %v4755, 30
    %v4757 = vsub.s32 %v4753, %v4756
    %vm4758 = vcmp.lt.s32.totalorder %v4757, 0
    %v4759 = vsub.s32 0, %v4757
    %v4760 = vsel %vm4758, %v4759, %v4757
    %v4761 = vclz %v4760
    %v4762 = vsub.s32 %v4761, 2
    %vm4763 = vcmp.gt.s32.totalorder 0, %v4762
    %v4764 = vsel %vm4763, 0, %v4762
    %v4765 = vsub.s32 32, %v4764
    %v4766 = vshll.u32 %v4757, %v4764
    %v4767 = vshrl.u32 %v4749, %v4765
    %v4768 = vor.u32 %v4766, %v4767
    %v4769 = vsub.s32 4294967266, %v4764
    %v4770 = vadd.s32 %v4769, 127
    %v4771 = vshll.u32 %v4770, 23
    %v4772 = vor.u32 4788187, %v4771
    %v4773 = vand.u32 2147483647, %v4772
    %v4775 = vcvt.s32.f32 %v4768
    %v4776 = vmul.f32 %v4775, %v4773
    %v4777 = vxor.u32 %v4776, 2147483648
    %v4778 = vsel %vm4695, %v4777, %v4776
    %v4779 = vsub.s32 4, %v4755
    %v4780 = vsel %vm4695, %v4779, %v4755
    %v4781 = vsel %vm4694, %v4346, %v4778
    %v4782 = vsel %vm4694, 0, %v4780
    %v4783 = vcosq.f32.pop %v4781
    %v4784 = vsinq.f32.pop %v4781
    %vm4785 = vweird.f32 %v4346
    %v4786 = vand.u32 %v4782, 3
    %vm4787 = vcmp.lt.s32.totalorder %v4786, 2
    %vm4788 = vcmp.eq.s32.totalorder %v4786, 0
    %v4789 = vxor.u32 %v4784, 2147483648
    %v4790 = vsel %vm4788, %v4783, %v4789
    %vm4791 = vcmp.eq.s32.totalorder %v4786, 2
    %v4792 = vxor.u32 %v4783, 2147483648
    %v4793 = vsel %vm4791, %v4792, %v4784
    %v4794 = vsel %vm4787, %v4790, %v4793
    %v4795 = vsel %vm4785, nan, %v4794
    %v4796 = vadd.f32 %v4686, 1.0
    %v4797 = vmul.f32 %v4796, 0.5
    %v4798 = vsel %vm4690, 1.0, %v4797
    %v4799 = vsel %vm4689, %v4795, %v4798
    %v4800 = vmul.f32 %v4681, %v4341
    %v4801 = vmul.f32 %v4688, %v4341
    %v4802 = vsel %vm4690, %v4344, %v4801
    %v4803 = vsel %vm4689, %v4800, %v4802
    %v4804 = vsub.f32 0.0, %v4343
    %v4805 = vmul.f32 %v4804, %v4681
    %v4806 = vmul.f32 %v4343, %v4688
    %v4807 = vsel %vm4690, 0.0, %v4806
    %v4808 = vsel %vm4689, %v4805, %v4807
    %v4809 = vadd.f32 %v4461, %v4692
    %vm4810 = vcmp.lt.f32.partialorder %v4809, 60.0
    %v4811 = vsub.f32 0.0, %v4809
    %v4812 = vmul.f32 %v4811, 1.442695
    %v4813 = vpow.pop %v4812
    %v4814 = vsel %vm4810, %v4813, 0.0
    %v4815 = vmul.f32 %v4568, %v4799
    %v4816 = vmul.f32 %v4568, %v4803
    %v4817 = vmul.f32 %v4568, %v4808
    %v4818 = vmul.f32 %v4799, %v4572
    %v4819 = vmul.f32 %v4799, %v4577
    %v4820 = vmul.f32 %v4577, %v4803
    %v4821 = vmul.f32 %v4577, %v4808
    %v4822 = vmul.f32 %v4572, %v4803
    %v4823 = vmul.f32 %v4572, %v4808
    %v4824 = vadd.f32 %v4316, %v4317
    %v4825 = vmul.f32 %v4316, %v4314
    %v4826 = vmul.f32 %v4316, %v4317
    %v4827 = vmul.f32 %v4317, %v4317
    %v4828 = vsub.f32 %v4814, %v4815
    %v4829 = vmul.f32 %v4826, 2.0
    %v4830 = vmul.f32 %v4829, %v4828
    %v4831 = vsub.f32 %v4815, %v4830
    %v4832 = vmul.f32 %v4825, %v4821
    %v4833 = vsub.f32 %v4831, %v4832
    %v4834 = vmul.f32 %v168, %v4827
    %v4835 = vmul.f32 %v4834, %v4822
    %v4836 = vsub.f32 %v4833, %v4835
    %v4837 = vmul.f32 %v168, %v4816
    %v4838 = vsub.f32 %v4837, %v4819
    %v4839 = vstv %s4298
    %v4840 = vmul.f32 %v4838, %v4839
    %v4841 = vmul.f32 %v4824, %v4828
    %v4842 = vmul.f32 %v4314, %v4821
    %v4843 = vadd.f32 %v4841, %v4842
    %v4844 = vmul.f32 %v168, %v4317
    %v4845 = vmul.f32 %v4844, %v4822
    %v4846 = vadd.f32 %v4843, %v4845
    %v4847 = vmul.f32 %v4846, %v4839
    %v4848 = vsub.f32 0.0, %v4847
    %v4849 = vmul.f32 %v168, %v4818
    %v4850 = vsub.f32 %v4817, %v4849
    %v4851 = vmul.f32 %v4850, %v4839
    %v4852 = vmul.f32 %v794, %v4828
    %v4853 = vadd.f32 %v4852, %v4821
    %v4854 = vmul.f32 %v797, %v4822
    %v4855 = vadd.f32 %v4853, %v4854
    %v4856 = vstv %s4299
    %v4857 = vmul.f32 %v4855, %v4856
    %v4858 = vsub.f32 0.0, %v4857
    %v4859 = vmul.f32 %v4825, %v4817
    %v4860 = vmul.f32 %v4827, %v4818
    %v4861 = vsub.f32 %v4859, %v4860
    %v4862 = vstv %s4296
    %v4863 = vmul.f32 %v4861, %v4862
    %v4864 = vmul.f32 %v4314, %v4817
    %v4865 = vmul.f32 %v4317, %v4818
    %v4866 = vsub.f32 %v4864, %v4865
    %v4867 = vsub.f32 0.0, %v4823
    %v4868 = vmul.f32 %v4827, %v4816
    %v4869 = vmul.f32 %v4825, %v4819
    %v4870 = vsub.f32 %v4868, %v4869
    %v4871 = vmul.f32 %v4870, %v4862
    %v4872 = vsub.f32 0.0, %v4820
    %v4873 = vmul.f32 %v4317, %v4816
    %v4874 = vmul.f32 %v4314, %v4819
    %v4875 = vsub.f32 %v4873, %v4874
    %v4876 = vmul.f32 %v4825, 2.0
    %v4877 = vmul.f32 %v4876, %v4827
    %v4878 = vmul.f32 %v4877, %v4828
    %v4879 = vmul.f32 %v4825, %v4825
    %v4880 = vmul.f32 %v4879, %v4821
    %v4881 = vadd.f32 %v4878, %v4880
    %v4882 = vmul.f32 %v4827, %v4827
    %v4883 = vmul.f32 %v4882, %v4822
    %v4884 = vadd.f32 %v4881, %v4883
    %v4885 = vstv %s4297
    %v4886 = vmul.f32 %v4884, %v4885
    %v4887 = vsub.f32 0.0, %v4886
    %v4888 = vmul.f32 %v4314, %v4317
    %v4889 = vmul.f32 %v4888, %v4824
    %v4890 = vmul.f32 %v4889, %v4828
    %v4891 = vmul.f32 %v4825, %v4314
    %v4892 = vmul.f32 %v4891, %v4821
    %v4893 = vadd.f32 %v4890, %v4892
    %v4894 = vmul.f32 %v4317, %v4827
    %v4895 = vmul.f32 %v4894, %v4822
    %v4896 = vadd.f32 %v4893, %v4895
    %v4897 = vmul.f32 %v4896, %v4862
    %v4898 = vsub.f32 0.0, %v4897
    %v4899 = vmul.f32 %v770, %v4898
    %v4900 = vmul.f32 %v770, %v4875
    %v4901 = vsub.f32 %v4815, %v4836
    %v4902 = vmul.f32 %v4901, 2.0
    %v4903 = vadd.f32 %v4814, %v4902
    %v4904 = vmul.f32 %v770, %v4866
    %v4905 = vmul.f32 %v770, %v4848
    %v4906 = vmul.f32 %v4290, %v4836
    %v4907 = vmul.f32 %v4291, %v4863
    %v4908 = vadd.f32 %v4906, %v4907
    %v4909 = vmul.f32 %v4292, %v4899
    %v4910 = vadd.f32 %v4908, %v4909
    %v4911 = vmul.f32 %v4293, %v4871
    %v4912 = vadd.f32 %v4910, %v4911
    %v4913 = vmul.f32 %v4294, %v4887
    %v4914 = vadd.f32 %v4912, %v4913
    %v4915 = vmul.f32 %v4290, %v4840
    %v4916 = vmul.f32 %v4291, %v4815
    %v4917 = vadd.f32 %v4915, %v4916
    %v4918 = vmul.f32 %v4292, %v4900
    %v4919 = vadd.f32 %v4917, %v4918
    %v4920 = vmul.f32 %v4293, %v4872
    %v4921 = vadd.f32 %v4919, %v4920
    %v4922 = vmul.f32 %v4294, %v4871
    %v4923 = vadd.f32 %v4921, %v4922
    %v4924 = vmul.f32 %v4290, %v4848
    %v4925 = vmul.f32 %v4291, %v4866
    %v4926 = vadd.f32 %v4924, %v4925
    %v4927 = vmul.f32 %v4292, %v4903
    %v4928 = vadd.f32 %v4926, %v4927
    %v4929 = vmul.f32 %v4293, %v4875
    %v4930 = vadd.f32 %v4928, %v4929
    %v4931 = vmul.f32 %v4294, %v4898
    %v4932 = vadd.f32 %v4930, %v4931
    %v4933 = vmul.f32 %v4290, %v4851
    %v4934 = vmul.f32 %v4291, %v4867
    %v4935 = vadd.f32 %v4933, %v4934
    %v4936 = vmul.f32 %v4292, %v4904
    %v4937 = vadd.f32 %v4935, %v4936
    %v4938 = vmul.f32 %v4293, %v4815
    %v4939 = vadd.f32 %v4937, %v4938
    %v4940 = vmul.f32 %v4294, %v4863
    %v4941 = vadd.f32 %v4939, %v4940
    %v4942 = vmul.f32 %v4290, %v4858
    %v4943 = vmul.f32 %v4291, %v4851
    %v4944 = vadd.f32 %v4942, %v4943
    %v4945 = vmul.f32 %v4292, %v4905
    %v4946 = vadd.f32 %v4944, %v4945
    %v4947 = vmul.f32 %v4293, %v4840
    %v4948 = vadd.f32 %v4946, %v4947
    %v4949 = vmul.f32 %v4294, %v4836
    %v4950 = vadd.f32 %v4948, %v4949
    %v4951 = vand.u32 2147483647, %v4914
    %v4952 = vand.u32 2147483647, %v4923
    %v4953 = vmax.f32 %v4951, %v4952
    %v4954 = vand.u32 2147483647, %v4932
    %v4955 = vand.u32 2147483647, %v4941
    %v4956 = vmax.f32 %v4954, %v4955
    %v4957 = vmax.f32 %v4953, %v4956
    %v4958 = vand.u32 2147483647, %v4950
    %v4959 = vmax.f32 %v4957, %v4958
    %vm4960 = vcmp.lt.f32.partialorder %v4959, 1e-30
    %v4961 = vsel %vm4960, 1.0, %v4959
    %v4962 = vrcp.pop %v4961
    %v4963 = vmul.f32 %v4961, %v4962
    %v4964 = vsub.f32 2.0, %v4963
    %v4965 = vmul.f32 %v4962, %v4964
    %v4966 = vmul.f32 %v4914, %v4965
    %v4967 = vsel %vm147, inf, %v4966
    %4968 = vmin.xlane.f32.xlu0 %v4967
    %v4969 = vpop.xlane.xlu0 %4968
    %v4970 = vsel %vm147, -inf, %v4966
    %4971 = vmax.xlane.f32.xlu0 %v4970
    %v4972 = vpop.xlane.xlu0 %4971
    // Predicated region
    $region82: #{tpu_custom_call.1} parent=1 // pred_check
      %p4973 = pneg %p143
    $region83: #{tpu_custom_call.1} parent=1 // pred_check_branch
      %4975 = sbr.rel (%p4973) target = $region85
    $region84: #{tpu_custom_call.1} parent=1 // pred_region
      %vm4976 = vcmask 7168
      %4977 = vst.msk [vmem:[%s12] sm:$0xff] %vm4976, %v4966
      %4978 = vst.msk [vmem:[%s13] sm:$0xff] %vm4976, %v4969
      %4979 = vst.msk [vmem:[%s14] sm:$0xff] %vm4976, %v4972
    $region85: #{tpu_custom_call.1} parent=1 // pred_fallthru
      _
    %p4980 = scmp.gt.s32.totalorder 0, 0
    // Predicated region
    $region86: #{tpu_custom_call.1} parent=1 // pred_check
      %p4981 = pneg %p4980
    $region87: #{tpu_custom_call.1} parent=1 // pred_check_branch
      %4983 = sbr.rel (%p4981) target = $region89
    $region88: #{tpu_custom_call.1} parent=1 // pred_region
      %v4984 = vld [vmem:[%s13] sm:$0xff]
      %v4985 = vmin.f32 %v4984, %v4969
      %vm4986 = vcmask 7168
      %4987 = vst.msk [vmem:[%s13] sm:$0xff] %vm4986, %v4985
      %v4988 = vld [vmem:[%s14] sm:$0xff]
      %v4989 = vmax.f32 %v4988, %v4972
      %4990 = vst.msk [vmem:[%s14] sm:$0xff] %vm4986, %v4989
    $region89: #{tpu_custom_call.1} parent=1 // pred_fallthru
      _
    // Predicated region
    $region90: #{tpu_custom_call.1} parent=1 // pred_check
      _
    $region91: #{tpu_custom_call.1} parent=1 // pred_check_branch
      %4992 = sbr.rel (0) target = $region93
    $region92: #{tpu_custom_call.1} parent=1 // pred_region
      _
    $region93: #{tpu_custom_call.1} parent=1 // pred_fallthru
      _
    // Predicated region
    $region94: #{tpu_custom_call.1} parent=1 // pred_check
      _
    $region95: #{tpu_custom_call.1} parent=1 // pred_check_branch
      %4994 = sbr.rel (0) target = $region97
    $region96: #{tpu_custom_call.1} parent=1 // pred_region
      _
    $region97: #{tpu_custom_call.1} parent=1 // pred_fallthru
      _
    // Predicated region
    $region98: #{tpu_custom_call.1} parent=1 // pred_check
      _
    $region99: #{tpu_custom_call.1} parent=1 // pred_check_branch
      %4996 = sbr.rel (0) target = $region101
    $region100: #{tpu_custom_call.1} parent=1 // pred_region
      _
    $region101: #{tpu_custom_call.1} parent=1 // pred_fallthru
      _
    // Predicated region
    $region102: #{tpu_custom_call.1} parent=1 // pred_check
      _
    $region103: #{tpu_custom_call.1} parent=1 // pred_check_branch
      %4998 = sbr.rel (0) target = $region105
    $region104: #{tpu_custom_call.1} parent=1 // pred_region
      _
    $region105: #{tpu_custom_call.1} parent=1 // pred_fallthru
      _
    // Predicated region
    $region106: #{tpu_custom_call.1} parent=1 // pred_check
      _
    $region107: #{tpu_custom_call.1} parent=1 // pred_check_branch
      %5000 = sbr.rel (0) target = $region109
    $region108: #{tpu_custom_call.1} parent=1 // pred_region
      _
    $region109: #{tpu_custom_call.1} parent=1 // pred_fallthru
      _
    // Predicated region
    $region110: #{tpu_custom_call.1} parent=1 // pred_check
      _
    $region111: #{tpu_custom_call.1} parent=1 // pred_check_branch
      %5002 = sbr.rel (0) target = $region113
    $region112: #{tpu_custom_call.1} parent=1 // pred_region
      _
    $region113: #{tpu_custom_call.1} parent=1 // pred_fallthru
      _
    %5003 = vsyncpa [#allocation3], 1
    %5004 = vsyncpa [#allocation5], 1
    %5005 = vsyncpa [#allocation8], 1
    %5006 = vsyncpa [#allocation11], 1
    %5007 = vsyncpa [#allocation14], 1

</llo_original>
